<compile_context>
chip_gen: v7x
topology: tpu7x:2x2x1
jax: 0.10.0
libtpu: 0.0.40
codegen_flags: <defaults>
</compile_context>

<pallas_src>
import math
import functools

import jax
import jax.numpy as jnp
from jax import lax
from jax.experimental import pallas as pl
from jax.experimental.pallas import tpu as pltpu


def _encoder_layer_kernel(
    xf_ref, mask_ref,
    wq_ref, bq_ref, wk_ref, bk_ref, wv_ref, bv_ref, wo_ref, bo_ref,
    a1_ref, nb1_ref, a2_ref, nb2_ref,
    w1_ref, fb1_ref, w2_ref, fb2_ref,
    o_ref,
    k_scratch, v_scratch,
    *, heads: int, tq: int,
):
    f32 = jnp.float32
    bf16 = jnp.bfloat16
    _, S, D = xf_ref.shape
    dk = D // heads
    eps = 1e-6
    inv_dm1 = 1.0 / (D - 1)
    scale = 1.0 / math.sqrt(dk)

    def recip(x):
        # EUP approx reciprocal + one Newton step (near-exact, still cheap).
        r = pl.reciprocal(x, approx=True)
        return r * (2.0 - x * r)

    def norm_rows(z, alpha, bias):
        # PyTorch NormLayer: alpha*(x-mean)/(std+eps)+bias, std UNBIASED (N-1),
        # eps added to std (not variance).
        m = jnp.mean(z, axis=-1, keepdims=True)
        var = jnp.sum((z - m) ** 2, axis=-1, keepdims=True) * inv_dm1
        return alpha * (z - m) * recip(jnp.sqrt(var) + eps) + bias

    a1 = a1_ref[...]
    nb1 = nb1_ref[...]

    # ---- K/V for the whole sequence: computed once per batch block and kept
    # resident in bf16 VMEM scratch across all query tiles (t axis arbitrary).
    @pl.when(pl.program_id(1) == 0)
    def _():
        x2f = norm_rows(xf_ref[0], a1, nb1).astype(bf16)                    # [S, D]
        k = jnp.dot(x2f, wk_ref[...], preferred_element_type=f32) + bk_ref[...]
        v = jnp.dot(x2f, wv_ref[...], preferred_element_type=f32) + bv_ref[...]
        k_scratch[...] = k.astype(bf16)
        v_scratch[...] = v.astype(bf16)

    # ---- query tile: free slice of the resident full-seq block ----
    start = pl.multiple_of(pl.program_id(1) * tq, tq)
    x_q = xf_ref[0, pl.ds(start, tq), :]                                    # [TQ, D] f32
    x2_q = norm_rows(x_q, a1, nb1).astype(bf16)
    q = jnp.dot(x2_q, wq_ref[...], preferred_element_type=f32) + bq_ref[...]
    qb = q.astype(bf16)
    kb = k_scratch[...]
    vb = v_scratch[...]

    # Hoisted additive key mask (per key, broadcast over rows & heads).
    mask = mask_ref[0]                                                      # [1, S]
    neg_bias = jnp.where(mask == 0, -1e9, 0.0).astype(f32)

    nt_dims = (((1,), (1,)), ((), ()))            # contract last dims: A @ B^T
    acc = jnp.zeros((tq, D), f32)
    for h in range(heads):                        # static unroll over heads
        lo = h * dk
        hi = lo + dk
        s = lax.dot_general(qb[:, lo:hi], kb[:, lo:hi], nt_dims,
                            preferred_element_type=f32) * scale + neg_bias  # [TQ, S]
        s = s - jnp.max(s, axis=-1, keepdims=True)                          # stable softmax
        p = jnp.exp(s)
        p = p * recip(jnp.sum(p, axis=-1, keepdims=True))
        oh = jnp.dot(p.astype(bf16), vb[:, lo:hi],
                     preferred_element_type=f32)                            # [TQ, dk]
        # Accumulate the output projection per head: no masked lane stores,
        # no f32 scratch round trip, no concat.
        acc = acc + jnp.dot(oh.astype(bf16), wo_ref[lo:hi, :],
                            preferred_element_type=f32)

    x1 = x_q + acc + bo_ref[...]                  # dropout_1 = identity (eval)

    # ---- sub-layer 2: feed-forward on norm_2(x) ----
    x2 = norm_rows(x1, a2_ref[...], nb2_ref[...]).astype(bf16)
    h1 = jnp.dot(x2, w1_ref[...], preferred_element_type=f32) + fb1_ref[...]
    h1 = jnp.maximum(h1, 0.0).astype(bf16)        # ReLU (FF dropout = identity)
    ff = jnp.dot(h1, w2_ref[...], preferred_element_type=f32) + fb2_ref[...]

    o_ref[0] = x1 + ff                            # dropout_2 = identity (eval)


def _tpu_vmem_capacity_and_gen():
    """Best-effort (generation, VMEM capacity) query with safe fallbacks."""
    gen = 6
    try:
        kind = jax.devices()[0].device_kind.lower()
        for g in (7, 6, 5, 4, 3):
            if f"v{g}" in kind:
                gen = g
                break
    except Exception:
        pass
    cap = 64 * 2**20 if gen >= 7 else 128 * 2**20
    try:
        cap = int(pltpu.get_tpu_info().vmem_capacity_bytes)
    except Exception:
        pass
    return cap, gen


def _vmem_bytes_estimate(S, D, F, tq, weight_buffers):
    weights = weight_buffers * (2 * (4 * D * D + 2 * D * F) + 4 * (9 * D + F))
    blocks = 2 * 4 * (S * D + S + tq * D)          # double-buffered x / mask / out
    scratch = 2 * 2 * S * D                        # persistent bf16 K / V
    interm = 4 * (4 * S * D + 6 * tq * D + 3 * tq * S + 2 * tq * F)
    return weights + blocks + scratch + interm


def _weight_buffer_modes():
    """[Buffered(1), None] if available, else [None] (safe fallback)."""
    modes = []
    buffered = getattr(pl, "Buffered", None)
    if buffered is not None:
        for ctor in (lambda: buffered(1), lambda: buffered(buffer_count=1)):
            try:
                modes.append(ctor())
                break
            except Exception:
                pass
    modes.append(None)
    return modes


def encoder_layer(x, mask, params, *, heads):
    B, S, D = x.shape
    F = params["w1"].shape[1]
    assert D % heads == 0

    cap, gen = _tpu_vmem_capacity_and_gen()

    # Query-tile rows: 256 fills the 256-wide MXU on v6e/v7x; 128 on v5e.
    tq_cap = 128 if gen <= 5 else 256
    TQ = S if S <= tq_cap else tq_cap
    # Shrink TQ (generation-aware) if the estimated resident set would not fit.
    while TQ > 128 and _vmem_bytes_estimate(S, D, F, TQ, 2) > 0.8 * cap:
        TQ //= 2
    assert S % TQ == 0, "sequence length must be divisible by the query tile"
    n_q = S // TQ

    bf = jnp.bfloat16
    wq = params["wq"].astype(bf)
    wk = params["wk"].astype(bf)
    wv = params["wv"].astype(bf)
    wo = params["wo"].astype(bf)
    w1 = params["w1"].astype(bf)
    w2 = params["w2"].astype(bf)

    def _cost_estimate():
        try:
            return pl.CostEstimate(
                flops=int(B * (8 * S * D * D + 4 * S * S * D + 4 * S * D * F)),
                transcendentals=int(B * S * (heads * S + 4)),
                bytes_accessed=int(8 * B * S * D + 4 * B * S
                                   + 2 * (4 * D * D + 2 * D * F)
                                   + 4 * (9 * D + F)),
            )
        except Exception:
            return None

    def _build_and_call(weight_mode):
        def rep(shape):
            n = len(shape)
            idx = lambda b, t, _n=n: (0,) * _n
            if weight_mode is None:
                return pl.BlockSpec(shape, idx)
            return pl.BlockSpec(shape, idx, pipeline_mode=weight_mode)

        in_specs = [
            pl.BlockSpec((1, S, D), lambda b, t: (b, 0, 0)),    # x (full seq)
            pl.BlockSpec((1, 1, S), lambda b, t: (b, 0, 0)),    # mask
            rep((D, D)), rep((1, D)),                           # Wq, bq
            rep((D, D)), rep((1, D)),                           # Wk, bk
            rep((D, D)), rep((1, D)),                           # Wv, bv
            rep((D, D)), rep((1, D)),                           # Wo, bo
            rep((1, D)), rep((1, D)),                           # norm1 alpha, bias
            rep((1, D)), rep((1, D)),                           # norm2 alpha, bias
            rep((D, F)), rep((1, F)),                           # ff W1, b1
            rep((F, D)), rep((1, D)),                           # ff W2, b2
        ]

        wbuf = 1 if weight_mode is not None else 2
        need = _vmem_bytes_estimate(S, D, F, TQ, wbuf)
        vmem_limit = int(min(0.85 * cap, max(1.25 * need, 16 * 2**20)))

        return pl.pallas_call(
            functools.partial(_encoder_layer_kernel, heads=heads, tq=TQ),
            out_shape=jax.ShapeDtypeStruct((B, S, D), jnp.float32),
            grid=(B, n_q),
            in_specs=in_specs,
            out_specs=pl.BlockSpec((1, TQ, D), lambda b, t: (b, t, 0)),
            scratch_shapes=[pltpu.VMEM((S, D), jnp.bfloat16),   # persistent K
                            pltpu.VMEM((S, D), jnp.bfloat16)],  # persistent V
            compiler_params=pltpu.CompilerParams(
                # batch parallel (megacore shards it); query-tile axis must be
                # arbitrary because K/V scratch is reused across it.
                dimension_semantics=("parallel", "arbitrary"),
                vmem_limit_bytes=vmem_limit,
            ),
            cost_estimate=_cost_estimate(),
        )(
            x, mask,
            wq, params["bq"], wk, params["bk"], wv, params["bv"], wo, params["bo"],
            params["a1"], params["nb1"], params["a2"], params["nb2"],
            w1, params["fb1"], w2, params["fb2"],
        )

    last_err = None
    for mode in _weight_buffer_modes():
        try:
            return _build_and_call(mode)
        except Exception as e:          # fall back to default weight buffering
            last_err = e
    raise last_err


def encoder_layer_ref(x, mask, params, *, heads):
    """Pure-JAX (f32) reference with the module's semantics, for sanity check."""
    B, S, D = x.shape
    dk = D // heads
    eps = 1e-6

    def norm(z, a, b):
        m = jnp.mean(z, -1, keepdims=True)
        std = jnp.sqrt(jnp.sum((z - m) ** 2, -1, keepdims=True) / (D - 1))
        return a * (z - m) / (std + eps) + b

    x2 = norm(x, params["a1"][0], params["nb1"][0])
    q = x2 @ params["wq"] + params["bq"][0]
    k = x2 @ params["wk"] + params["bk"][0]
    v = x2 @ params["wv"] + params["bv"][0]
    q = q.reshape(B, S, heads, dk).transpose(0, 2, 1, 3)
    k = k.reshape(B, S, heads, dk).transpose(0, 2, 1, 3)
    v = v.reshape(B, S, heads, dk).transpose(0, 2, 1, 3)
    s = jnp.einsum("bhqd,bhkd->bhqk", q, k) / math.sqrt(dk)
    s = jnp.where(mask[:, :, None, :] == 0, -1e9, s)
    p = jax.nn.softmax(s, axis=-1)
    o = jnp.einsum("bhqk,bhkd->bhqd", p, v).transpose(0, 2, 1, 3).reshape(B, S, D)
    x = x + (o @ params["wo"] + params["bo"][0])
    x2 = norm(x, params["a2"][0], params["nb2"][0])
    h = jax.nn.relu(x2 @ params["w1"] + params["fb1"][0])
    return x + (h @ params["w2"] + params["fb2"][0])


def init_params(key, d_model, d_ff):
    ks = jax.random.split(key, 12)
    s = 0.02
    return {
        "wq": s * jax.random.normal(ks[0], (d_model, d_model), jnp.float32),
        "bq": s * jax.random.normal(ks[1], (1, d_model), jnp.float32),
        "wk": s * jax.random.normal(ks[2], (d_model, d_model), jnp.float32),
        "bk": s * jax.random.normal(ks[3], (1, d_model), jnp.float32),
        "wv": s * jax.random.normal(ks[4], (d_model, d_model), jnp.float32),
        "bv": s * jax.random.normal(ks[5], (1, d_model), jnp.float32),
        "wo": s * jax.random.normal(ks[6], (d_model, d_model), jnp.float32),
        "bo": s * jax.random.normal(ks[7], (1, d_model), jnp.float32),
        "a1": jnp.ones((1, d_model), jnp.float32),
        "nb1": jnp.zeros((1, d_model), jnp.float32),
        "a2": jnp.ones((1, d_model), jnp.float32),
        "nb2": jnp.zeros((1, d_model), jnp.float32),
        "w1": s * jax.random.normal(ks[8], (d_model, d_ff), jnp.float32),
        "fb1": s * jax.random.normal(ks[9], (1, d_ff), jnp.float32),
        "w2": s * jax.random.normal(ks[10], (d_ff, d_model), jnp.float32),
        "fb2": s * jax.random.normal(ks[11], (1, d_model), jnp.float32),
    }


if __name__ == "__main__":
    # Small demo shapes consistent with the module; D lane-dense (multiple of
    # 128).  NOTE: S=8 is per-step-overhead-bound — benchmark at S>=1024 for
    # any real perf conclusions.
    B, S, D, H, FF = 2, 8, 128, 8, 256
    key = jax.random.PRNGKey(0)
    kx, kp = jax.random.split(key)
    x = jax.random.normal(kx, (B, S, D), jnp.float32)
    mask = jnp.ones((B, 1, S), jnp.int32)
    mask = mask.at[1, 0, S - 2:].set(0)     # mask last two keys of batch 1
    params = init_params(kp, D, FF)

    out = jax.block_until_ready(encoder_layer(x, mask, params, heads=H))

    ref = encoder_layer_ref(x, mask, params, heads=H)
    assert out.shape == (B, S, D)
    assert jnp.allclose(out, ref, rtol=2e-2, atol=2e-2), "mismatch vs reference"

    print("KERNEL_OK")
</pallas_src>

<mosaic_0001>
module attributes {stable_mosaic.version = 11 : i64} {
  func.func @_encoder_layer_kernel(%arg0: i32, %arg1: i32, %arg2: memref<1x8x128xf32, #tpu.memory_space<vmem>>, %arg3: memref<1x1x8xi32, #tpu.memory_space<vmem>>, %arg4: memref<128x128xbf16, #tpu.memory_space<vmem>>, %arg5: memref<1x128xf32, #tpu.memory_space<vmem>>, %arg6: memref<128x128xbf16, #tpu.memory_space<vmem>>, %arg7: memref<1x128xf32, #tpu.memory_space<vmem>>, %arg8: memref<128x128xbf16, #tpu.memory_space<vmem>>, %arg9: memref<1x128xf32, #tpu.memory_space<vmem>>, %arg10: memref<128x128xbf16, #tpu.memory_space<vmem>>, %arg11: memref<1x128xf32, #tpu.memory_space<vmem>>, %arg12: memref<1x128xf32, #tpu.memory_space<vmem>>, %arg13: memref<1x128xf32, #tpu.memory_space<vmem>>, %arg14: memref<1x128xf32, #tpu.memory_space<vmem>>, %arg15: memref<1x128xf32, #tpu.memory_space<vmem>>, %arg16: memref<128x256xbf16, #tpu.memory_space<vmem>>, %arg17: memref<1x256xf32, #tpu.memory_space<vmem>>, %arg18: memref<256x128xbf16, #tpu.memory_space<vmem>>, %arg19: memref<1x128xf32, #tpu.memory_space<vmem>>, %arg20: memref<1x8x128xf32, #tpu.memory_space<vmem>>, %arg21: memref<8x128xbf16, #tpu.memory_space<vmem>>, %arg22: memref<8x128xbf16, #tpu.memory_space<vmem>>) attributes {dimension_semantics = [#tpu.dimension_semantics<parallel>, #tpu.dimension_semantics<arbitrary>], iteration_bounds = array<i64: 2, 1>, scalar_prefetch = 0 : i64, scratch_operands = 2 : i64, tpu.core_type = #tpu.core_type<tc>, window_params = [{transform_indices = @transform_0, window_bounds = array<i64: 1, 8, 128>}, {transform_indices = @transform_1, window_bounds = array<i64: 1, 1, 8>}, {pipeline_mode = #tpu.pipeline_mode<synchronous>, transform_indices = @transform_2, window_bounds = array<i64: 128, 128>}, {pipeline_mode = #tpu.pipeline_mode<synchronous>, transform_indices = @transform_3, window_bounds = array<i64: 1, 128>}, {pipeline_mode = #tpu.pipeline_mode<synchronous>, transform_indices = @transform_4, window_bounds = array<i64: 128, 128>}, {pipeline_mode = #tpu.pipeline_mode<synchronous>, transform_indices = @transform_5, window_bounds = array<i64: 1, 128>}, {pipeline_mode = #tpu.pipeline_mode<synchronous>, transform_indices = @transform_6, window_bounds = array<i64: 128, 128>}, {pipeline_mode = #tpu.pipeline_mode<synchronous>, transform_indices = @transform_7, window_bounds = array<i64: 1, 128>}, {pipeline_mode = #tpu.pipeline_mode<synchronous>, transform_indices = @transform_8, window_bounds = array<i64: 128, 128>}, {pipeline_mode = #tpu.pipeline_mode<synchronous>, transform_indices = @transform_9, window_bounds = array<i64: 1, 128>}, {pipeline_mode = #tpu.pipeline_mode<synchronous>, transform_indices = @transform_10, window_bounds = array<i64: 1, 128>}, {pipeline_mode = #tpu.pipeline_mode<synchronous>, transform_indices = @transform_11, window_bounds = array<i64: 1, 128>}, {pipeline_mode = #tpu.pipeline_mode<synchronous>, transform_indices = @transform_12, window_bounds = array<i64: 1, 128>}, {pipeline_mode = #tpu.pipeline_mode<synchronous>, transform_indices = @transform_13, window_bounds = array<i64: 1, 128>}, {pipeline_mode = #tpu.pipeline_mode<synchronous>, transform_indices = @transform_14, window_bounds = array<i64: 128, 256>}, {pipeline_mode = #tpu.pipeline_mode<synchronous>, transform_indices = @transform_15, window_bounds = array<i64: 1, 256>}, {pipeline_mode = #tpu.pipeline_mode<synchronous>, transform_indices = @transform_16, window_bounds = array<i64: 256, 128>}, {pipeline_mode = #tpu.pipeline_mode<synchronous>, transform_indices = @transform_17, window_bounds = array<i64: 1, 128>}, {transform_indices = @transform_18, window_bounds = array<i64: 1, 8, 128>}]} {
    %c0 = arith.constant 0 : index
    %c0_0 = arith.constant 0 : index
    %0 = vector.load %arg12[%c0, %c0_0] : memref<1x128xf32, #tpu.memory_space<vmem>>, vector<1x128xf32>
    %c0_1 = arith.constant 0 : index
    %c0_2 = arith.constant 0 : index
    %1 = vector.load %arg13[%c0_1, %c0_2] : memref<1x128xf32, #tpu.memory_space<vmem>>, vector<1x128xf32>
    %c0_i32 = arith.constant 0 : i32
    %2 = arith.cmpi eq, %arg1, %c0_i32 : i32
    %3 = arith.extui %2 : i1 to i32
    %c0_i32_3 = arith.constant 0 : i32
    %4 = arith.cmpi ne, %3, %c0_i32_3 : i32
    scf.if %4 {
      %c0_118 = arith.constant 0 : index
      %c0_119 = arith.constant 0 : index
      %c0_120 = arith.constant 0 : index
      %329 = vector.load %arg2[%c0_118, %c0_119, %c0_120] : memref<1x8x128xf32, #tpu.memory_space<vmem>>, vector<1x8x128xf32>
      %330 = vector.shape_cast %329 : vector<1x8x128xf32> to vector<8x128xf32>
      %cst_121 = arith.constant dense<0.000000e+00> : vector<8xf32>
      %331 = vector.multi_reduction <add>, %330, %cst_121 [1] : vector<8x128xf32> to vector<8xf32>
      %332 = vector.shape_cast %331 : vector<8xf32> to vector<8x1xf32>
      %cst_122 = arith.constant 1.280000e+02 : f32
      %333 = vector.broadcast %cst_122 : f32 to vector<8x1xf32>
      %334 = arith.divf %332, %333 : vector<8x1xf32>
      %335 = vector.broadcast %334 : vector<8x1xf32> to vector<8x128xf32>
      %336 = arith.subf %330, %335 : vector<8x128xf32>
      %337 = arith.mulf %336, %336 : vector<8x128xf32>
      %cst_123 = arith.constant dense<0.000000e+00> : vector<8xf32>
      %338 = vector.multi_reduction <add>, %337, %cst_123 [1] : vector<8x128xf32> to vector<8xf32>
      %339 = vector.shape_cast %338 : vector<8xf32> to vector<8x1xf32>
      %cst_124 = arith.constant 0.00787401571 : f32
      %340 = vector.broadcast %cst_124 : f32 to vector<8x1xf32>
      %341 = arith.mulf %339, %340 : vector<8x1xf32>
      %342 = vector.broadcast %334 : vector<8x1xf32> to vector<8x128xf32>
      %343 = arith.subf %330, %342 : vector<8x128xf32>
      %344 = vector.broadcast %0 : vector<1x128xf32> to vector<8x128xf32>
      %345 = arith.mulf %344, %343 : vector<8x128xf32>
      %346 = math.sqrt %341 : vector<8x1xf32>
      %cst_125 = arith.constant 9.99999997E-7 : f32
      %347 = vector.broadcast %cst_125 : f32 to vector<8x1xf32>
      %348 = arith.addf %346, %347 : vector<8x1xf32>
      %349 = tpu.reciprocal %348 {approx = true} : vector<8x1xf32> -> vector<8x1xf32>
      %350 = arith.mulf %348, %349 : vector<8x1xf32>
      %cst_126 = arith.constant 2.000000e+00 : f32
      %351 = vector.broadcast %cst_126 : f32 to vector<8x1xf32>
      %352 = arith.subf %351, %350 : vector<8x1xf32>
      %353 = arith.mulf %349, %352 : vector<8x1xf32>
      %354 = vector.broadcast %353 : vector<8x1xf32> to vector<8x128xf32>
      %355 = arith.mulf %345, %354 : vector<8x128xf32>
      %356 = vector.broadcast %1 : vector<1x128xf32> to vector<8x128xf32>
      %357 = arith.addf %355, %356 : vector<8x128xf32>
      %358 = arith.truncf %357 : vector<8x128xf32> to vector<8x128xbf16>
      %c0_127 = arith.constant 0 : index
      %c0_128 = arith.constant 0 : index
      %359 = vector.load %arg6[%c0_127, %c0_128] : memref<128x128xbf16, #tpu.memory_space<vmem>>, vector<128x128xbf16>
      %cst_129 = arith.constant dense<0.000000e+00> : vector<8x128xf32>
      %360 = tpu.matmul %358, %359, %cst_129 {dimension_numbers = #tpu.dot_dimension_numbers<[1], [0], [0], [1], [0, 0, 1, 1], [], []>} : vector<8x128xbf16>, vector<128x128xbf16>, vector<8x128xf32> -> vector<8x128xf32>
      %c0_130 = arith.constant 0 : index
      %c0_131 = arith.constant 0 : index
      %361 = vector.load %arg7[%c0_130, %c0_131] : memref<1x128xf32, #tpu.memory_space<vmem>>, vector<1x128xf32>
      %362 = vector.broadcast %361 : vector<1x128xf32> to vector<8x128xf32>
      %363 = arith.addf %360, %362 : vector<8x128xf32>
      %c0_132 = arith.constant 0 : index
      %c0_133 = arith.constant 0 : index
      %364 = vector.load %arg8[%c0_132, %c0_133] : memref<128x128xbf16, #tpu.memory_space<vmem>>, vector<128x128xbf16>
      %cst_134 = arith.constant dense<0.000000e+00> : vector<8x128xf32>
      %365 = tpu.matmul %358, %364, %cst_134 {dimension_numbers = #tpu.dot_dimension_numbers<[1], [0], [0], [1], [0, 0, 1, 1], [], []>} : vector<8x128xbf16>, vector<128x128xbf16>, vector<8x128xf32> -> vector<8x128xf32>
      %c0_135 = arith.constant 0 : index
      %c0_136 = arith.constant 0 : index
      %366 = vector.load %arg9[%c0_135, %c0_136] : memref<1x128xf32, #tpu.memory_space<vmem>>, vector<1x128xf32>
      %367 = vector.broadcast %366 : vector<1x128xf32> to vector<8x128xf32>
      %368 = arith.addf %365, %367 : vector<8x128xf32>
      %369 = arith.truncf %363 : vector<8x128xf32> to vector<8x128xbf16>
      %c0_137 = arith.constant 0 : index
      %c0_138 = arith.constant 0 : index
      %370 = vector.load %arg21[%c0_137, %c0_138] : memref<8x128xbf16, #tpu.memory_space<vmem>>, vector<8x128xbf16>
      tpu.vector_store %arg21[%c0_137, %c0_138], %369 {strides = array<i32>} : memref<8x128xbf16, #tpu.memory_space<vmem>>, vector<8x128xbf16>,
      %371 = arith.truncf %368 : vector<8x128xf32> to vector<8x128xbf16>
      %c0_139 = arith.constant 0 : index
      %c0_140 = arith.constant 0 : index
      %372 = vector.load %arg22[%c0_139, %c0_140] : memref<8x128xbf16, #tpu.memory_space<vmem>>, vector<8x128xbf16>
      tpu.vector_store %arg22[%c0_139, %c0_140], %371 {strides = array<i32>} : memref<8x128xbf16, #tpu.memory_space<vmem>>, vector<8x128xbf16>,
    } else {
    }
    %c8_i32 = arith.constant 8 : i32
    %5 = arith.muli %arg1, %c8_i32 : i32
    %6 = tpu.assume_multiple %5, 8 : i32
    %c0_4 = arith.constant 0 : index
    %7 = arith.index_cast %6 : i32 to index
    %c0_5 = arith.constant 0 : index
    %8 = vector.load %arg2[%c0_4, %7, %c0_5] : memref<1x8x128xf32, #tpu.memory_space<vmem>>, vector<1x8x128xf32>
    %9 = vector.shape_cast %8 : vector<1x8x128xf32> to vector<8x128xf32>
    %cst = arith.constant dense<0.000000e+00> : vector<8xf32>
    %10 = vector.multi_reduction <add>, %9, %cst [1] : vector<8x128xf32> to vector<8xf32>
    %11 = vector.shape_cast %10 : vector<8xf32> to vector<8x1xf32>
    %cst_6 = arith.constant 1.280000e+02 : f32
    %12 = vector.broadcast %cst_6 : f32 to vector<8x1xf32>
    %13 = arith.divf %11, %12 : vector<8x1xf32>
    %14 = vector.broadcast %13 : vector<8x1xf32> to vector<8x128xf32>
    %15 = arith.subf %9, %14 : vector<8x128xf32>
    %16 = arith.mulf %15, %15 : vector<8x128xf32>
    %cst_7 = arith.constant dense<0.000000e+00> : vector<8xf32>
    %17 = vector.multi_reduction <add>, %16, %cst_7 [1] : vector<8x128xf32> to vector<8xf32>
    %18 = vector.shape_cast %17 : vector<8xf32> to vector<8x1xf32>
    %cst_8 = arith.constant 0.00787401571 : f32
    %19 = vector.broadcast %cst_8 : f32 to vector<8x1xf32>
    %20 = arith.mulf %18, %19 : vector<8x1xf32>
    %21 = vector.broadcast %13 : vector<8x1xf32> to vector<8x128xf32>
    %22 = arith.subf %9, %21 : vector<8x128xf32>
    %23 = vector.broadcast %0 : vector<1x128xf32> to vector<8x128xf32>
    %24 = arith.mulf %23, %22 : vector<8x128xf32>
    %25 = math.sqrt %20 : vector<8x1xf32>
    %cst_9 = arith.constant 9.99999997E-7 : f32
    %26 = vector.broadcast %cst_9 : f32 to vector<8x1xf32>
    %27 = arith.addf %25, %26 : vector<8x1xf32>
    %28 = tpu.reciprocal %27 {approx = true} : vector<8x1xf32> -> vector<8x1xf32>
    %29 = arith.mulf %27, %28 : vector<8x1xf32>
    %cst_10 = arith.constant 2.000000e+00 : f32
    %30 = vector.broadcast %cst_10 : f32 to vector<8x1xf32>
    %31 = arith.subf %30, %29 : vector<8x1xf32>
    %32 = arith.mulf %28, %31 : vector<8x1xf32>
    %33 = vector.broadcast %32 : vector<8x1xf32> to vector<8x128xf32>
    %34 = arith.mulf %24, %33 : vector<8x128xf32>
    %35 = vector.broadcast %1 : vector<1x128xf32> to vector<8x128xf32>
    %36 = arith.addf %34, %35 : vector<8x128xf32>
    %37 = arith.truncf %36 : vector<8x128xf32> to vector<8x128xbf16>
    %c0_11 = arith.constant 0 : index
    %c0_12 = arith.constant 0 : index
    %38 = vector.load %arg4[%c0_11, %c0_12] : memref<128x128xbf16, #tpu.memory_space<vmem>>, vector<128x128xbf16>
    %cst_13 = arith.constant dense<0.000000e+00> : vector<8x128xf32>
    %39 = tpu.matmul %37, %38, %cst_13 {dimension_numbers = #tpu.dot_dimension_numbers<[1], [0], [0], [1], [0, 0, 1, 1], [], []>} : vector<8x128xbf16>, vector<128x128xbf16>, vector<8x128xf32> -> vector<8x128xf32>
    %c0_14 = arith.constant 0 : index
    %c0_15 = arith.constant 0 : index
    %40 = vector.load %arg5[%c0_14, %c0_15] : memref<1x128xf32, #tpu.memory_space<vmem>>, vector<1x128xf32>
    %41 = vector.broadcast %40 : vector<1x128xf32> to vector<8x128xf32>
    %42 = arith.addf %39, %41 : vector<8x128xf32>
    %43 = arith.truncf %42 : vector<8x128xf32> to vector<8x128xbf16>
    %c0_16 = arith.constant 0 : index
    %c0_17 = arith.constant 0 : index
    %44 = vector.load %arg21[%c0_16, %c0_17] : memref<8x128xbf16, #tpu.memory_space<vmem>>, vector<8x128xbf16>
    %c0_18 = arith.constant 0 : index
    %c0_19 = arith.constant 0 : index
    %45 = vector.load %arg22[%c0_18, %c0_19] : memref<8x128xbf16, #tpu.memory_space<vmem>>, vector<8x128xbf16>
    %c0_20 = arith.constant 0 : index
    %c0_21 = arith.constant 0 : index
    %c0_22 = arith.constant 0 : index
    %46 = vector.load %arg3[%c0_20, %c0_21, %c0_22] : memref<1x1x8xi32, #tpu.memory_space<vmem>>, vector<1x1x8xi32>
    %47 = vector.shape_cast %46 : vector<1x1x8xi32> to vector<1x8xi32>
    %c0_i32_23 = arith.constant 0 : i32
    %48 = vector.broadcast %c0_i32_23 : i32 to vector<1x8xi32>
    %49 = arith.cmpi eq, %47, %48 : vector<1x8xi32>
    %cst_24 = arith.constant -1.000000e+09 : f32
    %cst_25 = arith.constant 0.000000e+00 : f32
    %50 = vector.broadcast %cst_24 : f32 to vector<1x8xf32>
    %51 = vector.broadcast %cst_25 : f32 to vector<1x8xf32>
    %52 = arith.select %49, %50, %51 : vector<1x8xi1>, vector<1x8xf32>
    %cst_26 = arith.constant 0.000000e+00 : f32
    %53 = vector.broadcast %cst_26 : f32 to vector<8x128xf32>
    %54 = vector.extract_strided_slice %43 {offsets = [0, 0], sizes = [8, 16], strides = [1, 1]} : vector<8x128xbf16> to vector<8x16xbf16>
    %55 = vector.extract_strided_slice %44 {offsets = [0, 0], sizes = [8, 16], strides = [1, 1]} : vector<8x128xbf16> to vector<8x16xbf16>
    %cst_27 = arith.constant dense<0.000000e+00> : vector<8x8xf32>
    %56 = tpu.matmul %54, %55, %cst_27 {dimension_numbers = #tpu.dot_dimension_numbers<[1], [1], [0], [0], [0, 0, 1, 0], [], []>} : vector<8x16xbf16>, vector<8x16xbf16>, vector<8x8xf32> -> vector<8x8xf32>
    %cst_28 = arith.constant 2.500000e-01 : f32
    %57 = vector.broadcast %cst_28 : f32 to vector<8x8xf32>
    %58 = arith.mulf %56, %57 : vector<8x8xf32>
    %59 = vector.broadcast %52 : vector<1x8xf32> to vector<8x8xf32>
    %60 = arith.addf %58, %59 : vector<8x8xf32>
    %cst_29 = arith.constant dense<0xFF800000> : vector<8xf32>
    %61 = vector.multi_reduction <maximumf>, %60, %cst_29 [1] : vector<8x8xf32> to vector<8xf32>
    %62 = vector.shape_cast %61 : vector<8xf32> to vector<8x1xf32>
    %63 = vector.broadcast %62 : vector<8x1xf32> to vector<8x8xf32>
    %64 = arith.subf %60, %63 : vector<8x8xf32>
    %65 = math.exp %64 : vector<8x8xf32>
    %cst_30 = arith.constant dense<0.000000e+00> : vector<8xf32>
    %66 = vector.multi_reduction <add>, %65, %cst_30 [1] : vector<8x8xf32> to vector<8xf32>
    %67 = vector.shape_cast %66 : vector<8xf32> to vector<8x1xf32>
    %68 = tpu.reciprocal %67 {approx = true} : vector<8x1xf32> -> vector<8x1xf32>
    %69 = arith.mulf %67, %68 : vector<8x1xf32>
    %cst_31 = arith.constant 2.000000e+00 : f32
    %70 = vector.broadcast %cst_31 : f32 to vector<8x1xf32>
    %71 = arith.subf %70, %69 : vector<8x1xf32>
    %72 = arith.mulf %68, %71 : vector<8x1xf32>
    %73 = vector.broadcast %72 : vector<8x1xf32> to vector<8x8xf32>
    %74 = arith.mulf %65, %73 : vector<8x8xf32>
    %75 = arith.truncf %74 : vector<8x8xf32> to vector<8x8xbf16>
    %76 = vector.extract_strided_slice %45 {offsets = [0, 0], sizes = [8, 16], strides = [1, 1]} : vector<8x128xbf16> to vector<8x16xbf16>
    %cst_32 = arith.constant dense<0.000000e+00> : vector<8x16xf32>
    %77 = tpu.matmul %75, %76, %cst_32 {dimension_numbers = #tpu.dot_dimension_numbers<[1], [0], [0], [1], [0, 0, 1, 1], [], []>} : vector<8x8xbf16>, vector<8x16xbf16>, vector<8x16xf32> -> vector<8x16xf32>
    %78 = arith.truncf %77 : vector<8x16xf32> to vector<8x16xbf16>
    %c0_33 = arith.constant 0 : index
    %c0_34 = arith.constant 0 : index
    %79 = vector.load %arg10[%c0_33, %c0_34] : memref<128x128xbf16, #tpu.memory_space<vmem>>, vector<16x128xbf16>
    %cst_35 = arith.constant dense<0.000000e+00> : vector<8x128xf32>
    %80 = tpu.matmul %78, %79, %cst_35 {dimension_numbers = #tpu.dot_dimension_numbers<[1], [0], [0], [1], [0, 0, 1, 1], [], []>} : vector<8x16xbf16>, vector<16x128xbf16>, vector<8x128xf32> -> vector<8x128xf32>
    %81 = arith.addf %53, %80 : vector<8x128xf32>
    %82 = vector.extract_strided_slice %43 {offsets = [0, 16], sizes = [8, 16], strides = [1, 1]} : vector<8x128xbf16> to vector<8x16xbf16>
    %83 = vector.extract_strided_slice %44 {offsets = [0, 16], sizes = [8, 16], strides = [1, 1]} : vector<8x128xbf16> to vector<8x16xbf16>
    %cst_36 = arith.constant dense<0.000000e+00> : vector<8x8xf32>
    %84 = tpu.matmul %82, %83, %cst_36 {dimension_numbers = #tpu.dot_dimension_numbers<[1], [1], [0], [0], [0, 0, 1, 0], [], []>} : vector<8x16xbf16>, vector<8x16xbf16>, vector<8x8xf32> -> vector<8x8xf32>
    %cst_37 = arith.constant 2.500000e-01 : f32
    %85 = vector.broadcast %cst_37 : f32 to vector<8x8xf32>
    %86 = arith.mulf %84, %85 : vector<8x8xf32>
    %87 = vector.broadcast %52 : vector<1x8xf32> to vector<8x8xf32>
    %88 = arith.addf %86, %87 : vector<8x8xf32>
    %cst_38 = arith.constant dense<0xFF800000> : vector<8xf32>
    %89 = vector.multi_reduction <maximumf>, %88, %cst_38 [1] : vector<8x8xf32> to vector<8xf32>
    %90 = vector.shape_cast %89 : vector<8xf32> to vector<8x1xf32>
    %91 = vector.broadcast %90 : vector<8x1xf32> to vector<8x8xf32>
    %92 = arith.subf %88, %91 : vector<8x8xf32>
    %93 = math.exp %92 : vector<8x8xf32>
    %cst_39 = arith.constant dense<0.000000e+00> : vector<8xf32>
    %94 = vector.multi_reduction <add>, %93, %cst_39 [1] : vector<8x8xf32> to vector<8xf32>
    %95 = vector.shape_cast %94 : vector<8xf32> to vector<8x1xf32>
    %96 = tpu.reciprocal %95 {approx = true} : vector<8x1xf32> -> vector<8x1xf32>
    %97 = arith.mulf %95, %96 : vector<8x1xf32>
    %cst_40 = arith.constant 2.000000e+00 : f32
    %98 = vector.broadcast %cst_40 : f32 to vector<8x1xf32>
    %99 = arith.subf %98, %97 : vector<8x1xf32>
    %100 = arith.mulf %96, %99 : vector<8x1xf32>
    %101 = vector.broadcast %100 : vector<8x1xf32> to vector<8x8xf32>
    %102 = arith.mulf %93, %101 : vector<8x8xf32>
    %103 = arith.truncf %102 : vector<8x8xf32> to vector<8x8xbf16>
    %104 = vector.extract_strided_slice %45 {offsets = [0, 16], sizes = [8, 16], strides = [1, 1]} : vector<8x128xbf16> to vector<8x16xbf16>
    %cst_41 = arith.constant dense<0.000000e+00> : vector<8x16xf32>
    %105 = tpu.matmul %103, %104, %cst_41 {dimension_numbers = #tpu.dot_dimension_numbers<[1], [0], [0], [1], [0, 0, 1, 1], [], []>} : vector<8x8xbf16>, vector<8x16xbf16>, vector<8x16xf32> -> vector<8x16xf32>
    %106 = arith.truncf %105 : vector<8x16xf32> to vector<8x16xbf16>
    %c16 = arith.constant 16 : index
    %c0_42 = arith.constant 0 : index
    %107 = vector.load %arg10[%c16, %c0_42] : memref<128x128xbf16, #tpu.memory_space<vmem>>, vector<16x128xbf16>
    %cst_43 = arith.constant dense<0.000000e+00> : vector<8x128xf32>
    %108 = tpu.matmul %106, %107, %cst_43 {dimension_numbers = #tpu.dot_dimension_numbers<[1], [0], [0], [1], [0, 0, 1, 1], [], []>} : vector<8x16xbf16>, vector<16x128xbf16>, vector<8x128xf32> -> vector<8x128xf32>
    %109 = arith.addf %81, %108 : vector<8x128xf32>
    %110 = vector.extract_strided_slice %43 {offsets = [0, 32], sizes = [8, 16], strides = [1, 1]} : vector<8x128xbf16> to vector<8x16xbf16>
    %111 = vector.extract_strided_slice %44 {offsets = [0, 32], sizes = [8, 16], strides = [1, 1]} : vector<8x128xbf16> to vector<8x16xbf16>
    %cst_44 = arith.constant dense<0.000000e+00> : vector<8x8xf32>
    %112 = tpu.matmul %110, %111, %cst_44 {dimension_numbers = #tpu.dot_dimension_numbers<[1], [1], [0], [0], [0, 0, 1, 0], [], []>} : vector<8x16xbf16>, vector<8x16xbf16>, vector<8x8xf32> -> vector<8x8xf32>
    %cst_45 = arith.constant 2.500000e-01 : f32
    %113 = vector.broadcast %cst_45 : f32 to vector<8x8xf32>
    %114 = arith.mulf %112, %113 : vector<8x8xf32>
    %115 = vector.broadcast %52 : vector<1x8xf32> to vector<8x8xf32>
    %116 = arith.addf %114, %115 : vector<8x8xf32>
    %cst_46 = arith.constant dense<0xFF800000> : vector<8xf32>
    %117 = vector.multi_reduction <maximumf>, %116, %cst_46 [1] : vector<8x8xf32> to vector<8xf32>
    %118 = vector.shape_cast %117 : vector<8xf32> to vector<8x1xf32>
    %119 = vector.broadcast %118 : vector<8x1xf32> to vector<8x8xf32>
    %120 = arith.subf %116, %119 : vector<8x8xf32>
    %121 = math.exp %120 : vector<8x8xf32>
    %cst_47 = arith.constant dense<0.000000e+00> : vector<8xf32>
    %122 = vector.multi_reduction <add>, %121, %cst_47 [1] : vector<8x8xf32> to vector<8xf32>
    %123 = vector.shape_cast %122 : vector<8xf32> to vector<8x1xf32>
    %124 = tpu.reciprocal %123 {approx = true} : vector<8x1xf32> -> vector<8x1xf32>
    %125 = arith.mulf %123, %124 : vector<8x1xf32>
    %cst_48 = arith.constant 2.000000e+00 : f32
    %126 = vector.broadcast %cst_48 : f32 to vector<8x1xf32>
    %127 = arith.subf %126, %125 : vector<8x1xf32>
    %128 = arith.mulf %124, %127 : vector<8x1xf32>
    %129 = vector.broadcast %128 : vector<8x1xf32> to vector<8x8xf32>
    %130 = arith.mulf %121, %129 : vector<8x8xf32>
    %131 = arith.truncf %130 : vector<8x8xf32> to vector<8x8xbf16>
    %132 = vector.extract_strided_slice %45 {offsets = [0, 32], sizes = [8, 16], strides = [1, 1]} : vector<8x128xbf16> to vector<8x16xbf16>
    %cst_49 = arith.constant dense<0.000000e+00> : vector<8x16xf32>
    %133 = tpu.matmul %131, %132, %cst_49 {dimension_numbers = #tpu.dot_dimension_numbers<[1], [0], [0], [1], [0, 0, 1, 1], [], []>} : vector<8x8xbf16>, vector<8x16xbf16>, vector<8x16xf32> -> vector<8x16xf32>
    %134 = arith.truncf %133 : vector<8x16xf32> to vector<8x16xbf16>
    %c32 = arith.constant 32 : index
    %c0_50 = arith.constant 0 : index
    %135 = vector.load %arg10[%c32, %c0_50] : memref<128x128xbf16, #tpu.memory_space<vmem>>, vector<16x128xbf16>
    %cst_51 = arith.constant dense<0.000000e+00> : vector<8x128xf32>
    %136 = tpu.matmul %134, %135, %cst_51 {dimension_numbers = #tpu.dot_dimension_numbers<[1], [0], [0], [1], [0, 0, 1, 1], [], []>} : vector<8x16xbf16>, vector<16x128xbf16>, vector<8x128xf32> -> vector<8x128xf32>
    %137 = arith.addf %109, %136 : vector<8x128xf32>
    %138 = vector.extract_strided_slice %43 {offsets = [0, 48], sizes = [8, 16], strides = [1, 1]} : vector<8x128xbf16> to vector<8x16xbf16>
    %139 = vector.extract_strided_slice %44 {offsets = [0, 48], sizes = [8, 16], strides = [1, 1]} : vector<8x128xbf16> to vector<8x16xbf16>
    %cst_52 = arith.constant dense<0.000000e+00> : vector<8x8xf32>
    %140 = tpu.matmul %138, %139, %cst_52 {dimension_numbers = #tpu.dot_dimension_numbers<[1], [1], [0], [0], [0, 0, 1, 0], [], []>} : vector<8x16xbf16>, vector<8x16xbf16>, vector<8x8xf32> -> vector<8x8xf32>
    %cst_53 = arith.constant 2.500000e-01 : f32
    %141 = vector.broadcast %cst_53 : f32 to vector<8x8xf32>
    %142 = arith.mulf %140, %141 : vector<8x8xf32>
    %143 = vector.broadcast %52 : vector<1x8xf32> to vector<8x8xf32>
    %144 = arith.addf %142, %143 : vector<8x8xf32>
    %cst_54 = arith.constant dense<0xFF800000> : vector<8xf32>
    %145 = vector.multi_reduction <maximumf>, %144, %cst_54 [1] : vector<8x8xf32> to vector<8xf32>
    %146 = vector.shape_cast %145 : vector<8xf32> to vector<8x1xf32>
    %147 = vector.broadcast %146 : vector<8x1xf32> to vector<8x8xf32>
    %148 = arith.subf %144, %147 : vector<8x8xf32>
    %149 = math.exp %148 : vector<8x8xf32>
    %cst_55 = arith.constant dense<0.000000e+00> : vector<8xf32>
    %150 = vector.multi_reduction <add>, %149, %cst_55 [1] : vector<8x8xf32> to vector<8xf32>
    %151 = vector.shape_cast %150 : vector<8xf32> to vector<8x1xf32>
    %152 = tpu.reciprocal %151 {approx = true} : vector<8x1xf32> -> vector<8x1xf32>
    %153 = arith.mulf %151, %152 : vector<8x1xf32>
    %cst_56 = arith.constant 2.000000e+00 : f32
    %154 = vector.broadcast %cst_56 : f32 to vector<8x1xf32>
    %155 = arith.subf %154, %153 : vector<8x1xf32>
    %156 = arith.mulf %152, %155 : vector<8x1xf32>
    %157 = vector.broadcast %156 : vector<8x1xf32> to vector<8x8xf32>
    %158 = arith.mulf %149, %157 : vector<8x8xf32>
    %159 = arith.truncf %158 : vector<8x8xf32> to vector<8x8xbf16>
    %160 = vector.extract_strided_slice %45 {offsets = [0, 48], sizes = [8, 16], strides = [1, 1]} : vector<8x128xbf16> to vector<8x16xbf16>
    %cst_57 = arith.constant dense<0.000000e+00> : vector<8x16xf32>
    %161 = tpu.matmul %159, %160, %cst_57 {dimension_numbers = #tpu.dot_dimension_numbers<[1], [0], [0], [1], [0, 0, 1, 1], [], []>} : vector<8x8xbf16>, vector<8x16xbf16>, vector<8x16xf32> -> vector<8x16xf32>
    %162 = arith.truncf %161 : vector<8x16xf32> to vector<8x16xbf16>
    %c48 = arith.constant 48 : index
    %c0_58 = arith.constant 0 : index
    %163 = vector.load %arg10[%c48, %c0_58] : memref<128x128xbf16, #tpu.memory_space<vmem>>, vector<16x128xbf16>
    %cst_59 = arith.constant dense<0.000000e+00> : vector<8x128xf32>
    %164 = tpu.matmul %162, %163, %cst_59 {dimension_numbers = #tpu.dot_dimension_numbers<[1], [0], [0], [1], [0, 0, 1, 1], [], []>} : vector<8x16xbf16>, vector<16x128xbf16>, vector<8x128xf32> -> vector<8x128xf32>
    %165 = arith.addf %137, %164 : vector<8x128xf32>
    %166 = vector.extract_strided_slice %43 {offsets = [0, 64], sizes = [8, 16], strides = [1, 1]} : vector<8x128xbf16> to vector<8x16xbf16>
    %167 = vector.extract_strided_slice %44 {offsets = [0, 64], sizes = [8, 16], strides = [1, 1]} : vector<8x128xbf16> to vector<8x16xbf16>
    %cst_60 = arith.constant dense<0.000000e+00> : vector<8x8xf32>
    %168 = tpu.matmul %166, %167, %cst_60 {dimension_numbers = #tpu.dot_dimension_numbers<[1], [1], [0], [0], [0, 0, 1, 0], [], []>} : vector<8x16xbf16>, vector<8x16xbf16>, vector<8x8xf32> -> vector<8x8xf32>
    %cst_61 = arith.constant 2.500000e-01 : f32
    %169 = vector.broadcast %cst_61 : f32 to vector<8x8xf32>
    %170 = arith.mulf %168, %169 : vector<8x8xf32>
    %171 = vector.broadcast %52 : vector<1x8xf32> to vector<8x8xf32>
    %172 = arith.addf %170, %171 : vector<8x8xf32>
    %cst_62 = arith.constant dense<0xFF800000> : vector<8xf32>
    %173 = vector.multi_reduction <maximumf>, %172, %cst_62 [1] : vector<8x8xf32> to vector<8xf32>
    %174 = vector.shape_cast %173 : vector<8xf32> to vector<8x1xf32>
    %175 = vector.broadcast %174 : vector<8x1xf32> to vector<8x8xf32>
    %176 = arith.subf %172, %175 : vector<8x8xf32>
    %177 = math.exp %176 : vector<8x8xf32>
    %cst_63 = arith.constant dense<0.000000e+00> : vector<8xf32>
    %178 = vector.multi_reduction <add>, %177, %cst_63 [1] : vector<8x8xf32> to vector<8xf32>
    %179 = vector.shape_cast %178 : vector<8xf32> to vector<8x1xf32>
    %180 = tpu.reciprocal %179 {approx = true} : vector<8x1xf32> -> vector<8x1xf32>
    %181 = arith.mulf %179, %180 : vector<8x1xf32>
    %cst_64 = arith.constant 2.000000e+00 : f32
    %182 = vector.broadcast %cst_64 : f32 to vector<8x1xf32>
    %183 = arith.subf %182, %181 : vector<8x1xf32>
    %184 = arith.mulf %180, %183 : vector<8x1xf32>
    %185 = vector.broadcast %184 : vector<8x1xf32> to vector<8x8xf32>
    %186 = arith.mulf %177, %185 : vector<8x8xf32>
    %187 = arith.truncf %186 : vector<8x8xf32> to vector<8x8xbf16>
    %188 = vector.extract_strided_slice %45 {offsets = [0, 64], sizes = [8, 16], strides = [1, 1]} : vector<8x128xbf16> to vector<8x16xbf16>
    %cst_65 = arith.constant dense<0.000000e+00> : vector<8x16xf32>
    %189 = tpu.matmul %187, %188, %cst_65 {dimension_numbers = #tpu.dot_dimension_numbers<[1], [0], [0], [1], [0, 0, 1, 1], [], []>} : vector<8x8xbf16>, vector<8x16xbf16>, vector<8x16xf32> -> vector<8x16xf32>
    %190 = arith.truncf %189 : vector<8x16xf32> to vector<8x16xbf16>
    %c64 = arith.constant 64 : index
    %c0_66 = arith.constant 0 : index
    %191 = vector.load %arg10[%c64, %c0_66] : memref<128x128xbf16, #tpu.memory_space<vmem>>, vector<16x128xbf16>
    %cst_67 = arith.constant dense<0.000000e+00> : vector<8x128xf32>
    %192 = tpu.matmul %190, %191, %cst_67 {dimension_numbers = #tpu.dot_dimension_numbers<[1], [0], [0], [1], [0, 0, 1, 1], [], []>} : vector<8x16xbf16>, vector<16x128xbf16>, vector<8x128xf32> -> vector<8x128xf32>
    %193 = arith.addf %165, %192 : vector<8x128xf32>
    %194 = vector.extract_strided_slice %43 {offsets = [0, 80], sizes = [8, 16], strides = [1, 1]} : vector<8x128xbf16> to vector<8x16xbf16>
    %195 = vector.extract_strided_slice %44 {offsets = [0, 80], sizes = [8, 16], strides = [1, 1]} : vector<8x128xbf16> to vector<8x16xbf16>
    %cst_68 = arith.constant dense<0.000000e+00> : vector<8x8xf32>
    %196 = tpu.matmul %194, %195, %cst_68 {dimension_numbers = #tpu.dot_dimension_numbers<[1], [1], [0], [0], [0, 0, 1, 0], [], []>} : vector<8x16xbf16>, vector<8x16xbf16>, vector<8x8xf32> -> vector<8x8xf32>
    %cst_69 = arith.constant 2.500000e-01 : f32
    %197 = vector.broadcast %cst_69 : f32 to vector<8x8xf32>
    %198 = arith.mulf %196, %197 : vector<8x8xf32>
    %199 = vector.broadcast %52 : vector<1x8xf32> to vector<8x8xf32>
    %200 = arith.addf %198, %199 : vector<8x8xf32>
    %cst_70 = arith.constant dense<0xFF800000> : vector<8xf32>
    %201 = vector.multi_reduction <maximumf>, %200, %cst_70 [1] : vector<8x8xf32> to vector<8xf32>
    %202 = vector.shape_cast %201 : vector<8xf32> to vector<8x1xf32>
    %203 = vector.broadcast %202 : vector<8x1xf32> to vector<8x8xf32>
    %204 = arith.subf %200, %203 : vector<8x8xf32>
    %205 = math.exp %204 : vector<8x8xf32>
    %cst_71 = arith.constant dense<0.000000e+00> : vector<8xf32>
    %206 = vector.multi_reduction <add>, %205, %cst_71 [1] : vector<8x8xf32> to vector<8xf32>
    %207 = vector.shape_cast %206 : vector<8xf32> to vector<8x1xf32>
    %208 = tpu.reciprocal %207 {approx = true} : vector<8x1xf32> -> vector<8x1xf32>
    %209 = arith.mulf %207, %208 : vector<8x1xf32>
    %cst_72 = arith.constant 2.000000e+00 : f32
    %210 = vector.broadcast %cst_72 : f32 to vector<8x1xf32>
    %211 = arith.subf %210, %209 : vector<8x1xf32>
    %212 = arith.mulf %208, %211 : vector<8x1xf32>
    %213 = vector.broadcast %212 : vector<8x1xf32> to vector<8x8xf32>
    %214 = arith.mulf %205, %213 : vector<8x8xf32>
    %215 = arith.truncf %214 : vector<8x8xf32> to vector<8x8xbf16>
    %216 = vector.extract_strided_slice %45 {offsets = [0, 80], sizes = [8, 16], strides = [1, 1]} : vector<8x128xbf16> to vector<8x16xbf16>
    %cst_73 = arith.constant dense<0.000000e+00> : vector<8x16xf32>
    %217 = tpu.matmul %215, %216, %cst_73 {dimension_numbers = #tpu.dot_dimension_numbers<[1], [0], [0], [1], [0, 0, 1, 1], [], []>} : vector<8x8xbf16>, vector<8x16xbf16>, vector<8x16xf32> -> vector<8x16xf32>
    %218 = arith.truncf %217 : vector<8x16xf32> to vector<8x16xbf16>
    %c80 = arith.constant 80 : index
    %c0_74 = arith.constant 0 : index
    %219 = vector.load %arg10[%c80, %c0_74] : memref<128x128xbf16, #tpu.memory_space<vmem>>, vector<16x128xbf16>
    %cst_75 = arith.constant dense<0.000000e+00> : vector<8x128xf32>
    %220 = tpu.matmul %218, %219, %cst_75 {dimension_numbers = #tpu.dot_dimension_numbers<[1], [0], [0], [1], [0, 0, 1, 1], [], []>} : vector<8x16xbf16>, vector<16x128xbf16>, vector<8x128xf32> -> vector<8x128xf32>
    %221 = arith.addf %193, %220 : vector<8x128xf32>
    %222 = vector.extract_strided_slice %43 {offsets = [0, 96], sizes = [8, 16], strides = [1, 1]} : vector<8x128xbf16> to vector<8x16xbf16>
    %223 = vector.extract_strided_slice %44 {offsets = [0, 96], sizes = [8, 16], strides = [1, 1]} : vector<8x128xbf16> to vector<8x16xbf16>
    %cst_76 = arith.constant dense<0.000000e+00> : vector<8x8xf32>
    %224 = tpu.matmul %222, %223, %cst_76 {dimension_numbers = #tpu.dot_dimension_numbers<[1], [1], [0], [0], [0, 0, 1, 0], [], []>} : vector<8x16xbf16>, vector<8x16xbf16>, vector<8x8xf32> -> vector<8x8xf32>
    %cst_77 = arith.constant 2.500000e-01 : f32
    %225 = vector.broadcast %cst_77 : f32 to vector<8x8xf32>
    %226 = arith.mulf %224, %225 : vector<8x8xf32>
    %227 = vector.broadcast %52 : vector<1x8xf32> to vector<8x8xf32>
    %228 = arith.addf %226, %227 : vector<8x8xf32>
    %cst_78 = arith.constant dense<0xFF800000> : vector<8xf32>
    %229 = vector.multi_reduction <maximumf>, %228, %cst_78 [1] : vector<8x8xf32> to vector<8xf32>
    %230 = vector.shape_cast %229 : vector<8xf32> to vector<8x1xf32>
    %231 = vector.broadcast %230 : vector<8x1xf32> to vector<8x8xf32>
    %232 = arith.subf %228, %231 : vector<8x8xf32>
    %233 = math.exp %232 : vector<8x8xf32>
    %cst_79 = arith.constant dense<0.000000e+00> : vector<8xf32>
    %234 = vector.multi_reduction <add>, %233, %cst_79 [1] : vector<8x8xf32> to vector<8xf32>
    %235 = vector.shape_cast %234 : vector<8xf32> to vector<8x1xf32>
    %236 = tpu.reciprocal %235 {approx = true} : vector<8x1xf32> -> vector<8x1xf32>
    %237 = arith.mulf %235, %236 : vector<8x1xf32>
    %cst_80 = arith.constant 2.000000e+00 : f32
    %238 = vector.broadcast %cst_80 : f32 to vector<8x1xf32>
    %239 = arith.subf %238, %237 : vector<8x1xf32>
    %240 = arith.mulf %236, %239 : vector<8x1xf32>
    %241 = vector.broadcast %240 : vector<8x1xf32> to vector<8x8xf32>
    %242 = arith.mulf %233, %241 : vector<8x8xf32>
    %243 = arith.truncf %242 : vector<8x8xf32> to vector<8x8xbf16>
    %244 = vector.extract_strided_slice %45 {offsets = [0, 96], sizes = [8, 16], strides = [1, 1]} : vector<8x128xbf16> to vector<8x16xbf16>
    %cst_81 = arith.constant dense<0.000000e+00> : vector<8x16xf32>
    %245 = tpu.matmul %243, %244, %cst_81 {dimension_numbers = #tpu.dot_dimension_numbers<[1], [0], [0], [1], [0, 0, 1, 1], [], []>} : vector<8x8xbf16>, vector<8x16xbf16>, vector<8x16xf32> -> vector<8x16xf32>
    %246 = arith.truncf %245 : vector<8x16xf32> to vector<8x16xbf16>
    %c96 = arith.constant 96 : index
    %c0_82 = arith.constant 0 : index
    %247 = vector.load %arg10[%c96, %c0_82] : memref<128x128xbf16, #tpu.memory_space<vmem>>, vector<16x128xbf16>
    %cst_83 = arith.constant dense<0.000000e+00> : vector<8x128xf32>
    %248 = tpu.matmul %246, %247, %cst_83 {dimension_numbers = #tpu.dot_dimension_numbers<[1], [0], [0], [1], [0, 0, 1, 1], [], []>} : vector<8x16xbf16>, vector<16x128xbf16>, vector<8x128xf32> -> vector<8x128xf32>
    %249 = arith.addf %221, %248 : vector<8x128xf32>
    %250 = vector.extract_strided_slice %43 {offsets = [0, 112], sizes = [8, 16], strides = [1, 1]} : vector<8x128xbf16> to vector<8x16xbf16>
    %251 = vector.extract_strided_slice %44 {offsets = [0, 112], sizes = [8, 16], strides = [1, 1]} : vector<8x128xbf16> to vector<8x16xbf16>
    %cst_84 = arith.constant dense<0.000000e+00> : vector<8x8xf32>
    %252 = tpu.matmul %250, %251, %cst_84 {dimension_numbers = #tpu.dot_dimension_numbers<[1], [1], [0], [0], [0, 0, 1, 0], [], []>} : vector<8x16xbf16>, vector<8x16xbf16>, vector<8x8xf32> -> vector<8x8xf32>
    %cst_85 = arith.constant 2.500000e-01 : f32
    %253 = vector.broadcast %cst_85 : f32 to vector<8x8xf32>
    %254 = arith.mulf %252, %253 : vector<8x8xf32>
    %255 = vector.broadcast %52 : vector<1x8xf32> to vector<8x8xf32>
    %256 = arith.addf %254, %255 : vector<8x8xf32>
    %cst_86 = arith.constant dense<0xFF800000> : vector<8xf32>
    %257 = vector.multi_reduction <maximumf>, %256, %cst_86 [1] : vector<8x8xf32> to vector<8xf32>
    %258 = vector.shape_cast %257 : vector<8xf32> to vector<8x1xf32>
    %259 = vector.broadcast %258 : vector<8x1xf32> to vector<8x8xf32>
    %260 = arith.subf %256, %259 : vector<8x8xf32>
    %261 = math.exp %260 : vector<8x8xf32>
    %cst_87 = arith.constant dense<0.000000e+00> : vector<8xf32>
    %262 = vector.multi_reduction <add>, %261, %cst_87 [1] : vector<8x8xf32> to vector<8xf32>
    %263 = vector.shape_cast %262 : vector<8xf32> to vector<8x1xf32>
    %264 = tpu.reciprocal %263 {approx = true} : vector<8x1xf32> -> vector<8x1xf32>
    %265 = arith.mulf %263, %264 : vector<8x1xf32>
    %cst_88 = arith.constant 2.000000e+00 : f32
    %266 = vector.broadcast %cst_88 : f32 to vector<8x1xf32>
    %267 = arith.subf %266, %265 : vector<8x1xf32>
    %268 = arith.mulf %264, %267 : vector<8x1xf32>
    %269 = vector.broadcast %268 : vector<8x1xf32> to vector<8x8xf32>
    %270 = arith.mulf %261, %269 : vector<8x8xf32>
    %271 = arith.truncf %270 : vector<8x8xf32> to vector<8x8xbf16>
    %272 = vector.extract_strided_slice %45 {offsets = [0, 112], sizes = [8, 16], strides = [1, 1]} : vector<8x128xbf16> to vector<8x16xbf16>
    %cst_89 = arith.constant dense<0.000000e+00> : vector<8x16xf32>
    %273 = tpu.matmul %271, %272, %cst_89 {dimension_numbers = #tpu.dot_dimension_numbers<[1], [0], [0], [1], [0, 0, 1, 1], [], []>} : vector<8x8xbf16>, vector<8x16xbf16>, vector<8x16xf32> -> vector<8x16xf32>
    %274 = arith.truncf %273 : vector<8x16xf32> to vector<8x16xbf16>
    %c112 = arith.constant 112 : index
    %c0_90 = arith.constant 0 : index
    %275 = vector.load %arg10[%c112, %c0_90] : memref<128x128xbf16, #tpu.memory_space<vmem>>, vector<16x128xbf16>
    %cst_91 = arith.constant dense<0.000000e+00> : vector<8x128xf32>
    %276 = tpu.matmul %274, %275, %cst_91 {dimension_numbers = #tpu.dot_dimension_numbers<[1], [0], [0], [1], [0, 0, 1, 1], [], []>} : vector<8x16xbf16>, vector<16x128xbf16>, vector<8x128xf32> -> vector<8x128xf32>
    %277 = arith.addf %249, %276 : vector<8x128xf32>
    %278 = arith.addf %9, %277 : vector<8x128xf32>
    %c0_92 = arith.constant 0 : index
    %c0_93 = arith.constant 0 : index
    %279 = vector.load %arg11[%c0_92, %c0_93] : memref<1x128xf32, #tpu.memory_space<vmem>>, vector<1x128xf32>
    %280 = vector.broadcast %279 : vector<1x128xf32> to vector<8x128xf32>
    %281 = arith.addf %278, %280 : vector<8x128xf32>
    %c0_94 = arith.constant 0 : index
    %c0_95 = arith.constant 0 : index
    %282 = vector.load %arg14[%c0_94, %c0_95] : memref<1x128xf32, #tpu.memory_space<vmem>>, vector<1x128xf32>
    %c0_96 = arith.constant 0 : index
    %c0_97 = arith.constant 0 : index
    %283 = vector.load %arg15[%c0_96, %c0_97] : memref<1x128xf32, #tpu.memory_space<vmem>>, vector<1x128xf32>
    %cst_98 = arith.constant dense<0.000000e+00> : vector<8xf32>
    %284 = vector.multi_reduction <add>, %281, %cst_98 [1] : vector<8x128xf32> to vector<8xf32>
    %285 = vector.shape_cast %284 : vector<8xf32> to vector<8x1xf32>
    %cst_99 = arith.constant 1.280000e+02 : f32
    %286 = vector.broadcast %cst_99 : f32 to vector<8x1xf32>
    %287 = arith.divf %285, %286 : vector<8x1xf32>
    %288 = vector.broadcast %287 : vector<8x1xf32> to vector<8x128xf32>
    %289 = arith.subf %281, %288 : vector<8x128xf32>
    %290 = arith.mulf %289, %289 : vector<8x128xf32>
    %cst_100 = arith.constant dense<0.000000e+00> : vector<8xf32>
    %291 = vector.multi_reduction <add>, %290, %cst_100 [1] : vector<8x128xf32> to vector<8xf32>
    %292 = vector.shape_cast %291 : vector<8xf32> to vector<8x1xf32>
    %cst_101 = arith.constant 0.00787401571 : f32
    %293 = vector.broadcast %cst_101 : f32 to vector<8x1xf32>
    %294 = arith.mulf %292, %293 : vector<8x1xf32>
    %295 = vector.broadcast %287 : vector<8x1xf32> to vector<8x128xf32>
    %296 = arith.subf %281, %295 : vector<8x128xf32>
    %297 = vector.broadcast %282 : vector<1x128xf32> to vector<8x128xf32>
    %298 = arith.mulf %297, %296 : vector<8x128xf32>
    %299 = math.sqrt %294 : vector<8x1xf32>
    %cst_102 = arith.constant 9.99999997E-7 : f32
    %300 = vector.broadcast %cst_102 : f32 to vector<8x1xf32>
    %301 = arith.addf %299, %300 : vector<8x1xf32>
    %302 = tpu.reciprocal %301 {approx = true} : vector<8x1xf32> -> vector<8x1xf32>
    %303 = arith.mulf %301, %302 : vector<8x1xf32>
    %cst_103 = arith.constant 2.000000e+00 : f32
    %304 = vector.broadcast %cst_103 : f32 to vector<8x1xf32>
    %305 = arith.subf %304, %303 : vector<8x1xf32>
    %306 = arith.mulf %302, %305 : vector<8x1xf32>
    %307 = vector.broadcast %306 : vector<8x1xf32> to vector<8x128xf32>
    %308 = arith.mulf %298, %307 : vector<8x128xf32>
    %309 = vector.broadcast %283 : vector<1x128xf32> to vector<8x128xf32>
    %310 = arith.addf %308, %309 : vector<8x128xf32>
    %311 = arith.truncf %310 : vector<8x128xf32> to vector<8x128xbf16>
    %c0_104 = arith.constant 0 : index
    %c0_105 = arith.constant 0 : index
    %312 = vector.load %arg16[%c0_104, %c0_105] : memref<128x256xbf16, #tpu.memory_space<vmem>>, vector<128x256xbf16>
    %cst_106 = arith.constant dense<0.000000e+00> : vector<8x256xf32>
    %313 = tpu.matmul %311, %312, %cst_106 {dimension_numbers = #tpu.dot_dimension_numbers<[1], [0], [0], [1], [0, 0, 1, 1], [], []>} : vector<8x128xbf16>, vector<128x256xbf16>, vector<8x256xf32> -> vector<8x256xf32>
    %c0_107 = arith.constant 0 : index
    %c0_108 = arith.constant 0 : index
    %314 = vector.load %arg17[%c0_107, %c0_108] : memref<1x256xf32, #tpu.memory_space<vmem>>, vector<1x256xf32>
    %315 = vector.broadcast %314 : vector<1x256xf32> to vector<8x256xf32>
    %316 = arith.addf %313, %315 : vector<8x256xf32>
    %cst_109 = arith.constant 0.000000e+00 : f32
    %317 = vector.broadcast %cst_109 : f32 to vector<8x256xf32>
    %318 = arith.maximumf %316, %317 : vector<8x256xf32>
    %319 = arith.truncf %318 : vector<8x256xf32> to vector<8x256xbf16>
    %c0_110 = arith.constant 0 : index
    %c0_111 = arith.constant 0 : index
    %320 = vector.load %arg18[%c0_110, %c0_111] : memref<256x128xbf16, #tpu.memory_space<vmem>>, vector<256x128xbf16>
    %cst_112 = arith.constant dense<0.000000e+00> : vector<8x128xf32>
    %321 = tpu.matmul %319, %320, %cst_112 {dimension_numbers = #tpu.dot_dimension_numbers<[1], [0], [0], [1], [0, 0, 1, 1], [], []>} : vector<8x256xbf16>, vector<256x128xbf16>, vector<8x128xf32> -> vector<8x128xf32>
    %c0_113 = arith.constant 0 : index
    %c0_114 = arith.constant 0 : index
    %322 = vector.load %arg19[%c0_113, %c0_114] : memref<1x128xf32, #tpu.memory_space<vmem>>, vector<1x128xf32>
    %323 = vector.broadcast %322 : vector<1x128xf32> to vector<8x128xf32>
    %324 = arith.addf %321, %323 : vector<8x128xf32>
    %325 = arith.addf %281, %324 : vector<8x128xf32>
    %c0_115 = arith.constant 0 : index
    %c0_116 = arith.constant 0 : index
    %c0_117 = arith.constant 0 : index
    %326 = vector.load %arg20[%c0_115, %c0_116, %c0_117] : memref<1x8x128xf32, #tpu.memory_space<vmem>>, vector<1x8x128xf32>
    %327 = vector.shape_cast %326 : vector<1x8x128xf32> to vector<8x128xf32>
    %328 = vector.shape_cast %325 : vector<8x128xf32> to vector<1x8x128xf32>
    tpu.vector_store %arg20[%c0_115, %c0_116, %c0_117], %328 {strides = array<i32>} : memref<1x8x128xf32, #tpu.memory_space<vmem>>, vector<1x8x128xf32>,
    return
  }
  func.func @transform_0(%arg0: i32, %arg1: i32) -> (i32, i32, i32) {
    %c0_i32 = arith.constant 0 : i32
    %c0_i32_0 = arith.constant 0 : i32
    %c0_i32_1 = arith.constant 0 : i32
    return %arg0, %c0_i32, %c0_i32_0 : i32, i32, i32
  }
  func.func @transform_1(%arg0: i32, %arg1: i32) -> (i32, i32, i32) {
    %c0_i32 = arith.constant 0 : i32
    %c0_i32_0 = arith.constant 0 : i32
    %c0_i32_1 = arith.constant 0 : i32
    return %arg0, %c0_i32, %c0_i32_0 : i32, i32, i32
  }
  func.func @transform_2(%arg0: i32, %arg1: i32) -> (i32, i32) {
    %c0_i32 = arith.constant 0 : i32
    %c0_i32_0 = arith.constant 0 : i32
    %c0_i32_1 = arith.constant 0 : i32
    return %c0_i32, %c0_i32_0 : i32, i32
  }
  func.func @transform_3(%arg0: i32, %arg1: i32) -> (i32, i32) {
    %c0_i32 = arith.constant 0 : i32
    %c0_i32_0 = arith.constant 0 : i32
    %c0_i32_1 = arith.constant 0 : i32
    return %c0_i32, %c0_i32_0 : i32, i32
  }
  func.func @transform_4(%arg0: i32, %arg1: i32) -> (i32, i32) {
    %c0_i32 = arith.constant 0 : i32
    %c0_i32_0 = arith.constant 0 : i32
    %c0_i32_1 = arith.constant 0 : i32
    return %c0_i32, %c0_i32_0 : i32, i32
  }
  func.func @transform_5(%arg0: i32, %arg1: i32) -> (i32, i32) {
    %c0_i32 = arith.constant 0 : i32
    %c0_i32_0 = arith.constant 0 : i32
    %c0_i32_1 = arith.constant 0 : i32
    return %c0_i32, %c0_i32_0 : i32, i32
  }
  func.func @transform_6(%arg0: i32, %arg1: i32) -> (i32, i32) {
    %c0_i32 = arith.constant 0 : i32
    %c0_i32_0 = arith.constant 0 : i32
    %c0_i32_1 = arith.constant 0 : i32
    return %c0_i32, %c0_i32_0 : i32, i32
  }
  func.func @transform_7(%arg0: i32, %arg1: i32) -> (i32, i32) {
    %c0_i32 = arith.constant 0 : i32
    %c0_i32_0 = arith.constant 0 : i32
    %c0_i32_1 = arith.constant 0 : i32
    return %c0_i32, %c0_i32_0 : i32, i32
  }
  func.func @transform_8(%arg0: i32, %arg1: i32) -> (i32, i32) {
    %c0_i32 = arith.constant 0 : i32
    %c0_i32_0 = arith.constant 0 : i32
    %c0_i32_1 = arith.constant 0 : i32
    return %c0_i32, %c0_i32_0 : i32, i32
  }
  func.func @transform_9(%arg0: i32, %arg1: i32) -> (i32, i32) {
    %c0_i32 = arith.constant 0 : i32
    %c0_i32_0 = arith.constant 0 : i32
    %c0_i32_1 = arith.constant 0 : i32
    return %c0_i32, %c0_i32_0 : i32, i32
  }
  func.func @transform_10(%arg0: i32, %arg1: i32) -> (i32, i32) {
    %c0_i32 = arith.constant 0 : i32
    %c0_i32_0 = arith.constant 0 : i32
    %c0_i32_1 = arith.constant 0 : i32
    return %c0_i32, %c0_i32_0 : i32, i32
  }
  func.func @transform_11(%arg0: i32, %arg1: i32) -> (i32, i32) {
    %c0_i32 = arith.constant 0 : i32
    %c0_i32_0 = arith.constant 0 : i32
    %c0_i32_1 = arith.constant 0 : i32
    return %c0_i32, %c0_i32_0 : i32, i32
  }
  func.func @transform_12(%arg0: i32, %arg1: i32) -> (i32, i32) {
    %c0_i32 = arith.constant 0 : i32
    %c0_i32_0 = arith.constant 0 : i32
    %c0_i32_1 = arith.constant 0 : i32
    return %c0_i32, %c0_i32_0 : i32, i32
  }
  func.func @transform_13(%arg0: i32, %arg1: i32) -> (i32, i32) {
    %c0_i32 = arith.constant 0 : i32
    %c0_i32_0 = arith.constant 0 : i32
    %c0_i32_1 = arith.constant 0 : i32
    return %c0_i32, %c0_i32_0 : i32, i32
  }
  func.func @transform_14(%arg0: i32, %arg1: i32) -> (i32, i32) {
    %c0_i32 = arith.constant 0 : i32
    %c0_i32_0 = arith.constant 0 : i32
    %c0_i32_1 = arith.constant 0 : i32
    return %c0_i32, %c0_i32_0 : i32, i32
  }
  func.func @transform_15(%arg0: i32, %arg1: i32) -> (i32, i32) {
    %c0_i32 = arith.constant 0 : i32
    %c0_i32_0 = arith.constant 0 : i32
    %c0_i32_1 = arith.constant 0 : i32
    return %c0_i32, %c0_i32_0 : i32, i32
  }
  func.func @transform_16(%arg0: i32, %arg1: i32) -> (i32, i32) {
    %c0_i32 = arith.constant 0 : i32
    %c0_i32_0 = arith.constant 0 : i32
    %c0_i32_1 = arith.constant 0 : i32
    return %c0_i32, %c0_i32_0 : i32, i32
  }
  func.func @transform_17(%arg0: i32, %arg1: i32) -> (i32, i32) {
    %c0_i32 = arith.constant 0 : i32
    %c0_i32_0 = arith.constant 0 : i32
    %c0_i32_1 = arith.constant 0 : i32
    return %c0_i32, %c0_i32_0 : i32, i32
  }
  func.func @transform_18(%arg0: i32, %arg1: i32) -> (i32, i32, i32) {
    %c0_i32 = arith.constant 0 : i32
    %c0_i32_0 = arith.constant 0 : i32
    return %arg0, %arg1, %c0_i32 : i32, i32, i32
  }
}

module attributes {stable_mosaic.version = 11 : i64} {
  func.func @_encoder_layer_kernel(%arg0: i32, %arg1: i32, %arg2: memref<1x8x128xf32, #tpu.memory_space<vmem>>, %arg3: memref<1x1x8xi32, #tpu.memory_space<vmem>>, %arg4: memref<128x128xbf16, #tpu.memory_space<vmem>>, %arg5: memref<1x128xf32, #tpu.memory_space<vmem>>, %arg6: memref<128x128xbf16, #tpu.memory_space<vmem>>, %arg7: memref<1x128xf32, #tpu.memory_space<vmem>>, %arg8: memref<128x128xbf16, #tpu.memory_space<vmem>>, %arg9: memref<1x128xf32, #tpu.memory_space<vmem>>, %arg10: memref<128x128xbf16, #tpu.memory_space<vmem>>, %arg11: memref<1x128xf32, #tpu.memory_space<vmem>>, %arg12: memref<1x128xf32, #tpu.memory_space<vmem>>, %arg13: memref<1x128xf32, #tpu.memory_space<vmem>>, %arg14: memref<1x128xf32, #tpu.memory_space<vmem>>, %arg15: memref<1x128xf32, #tpu.memory_space<vmem>>, %arg16: memref<128x256xbf16, #tpu.memory_space<vmem>>, %arg17: memref<1x256xf32, #tpu.memory_space<vmem>>, %arg18: memref<256x128xbf16, #tpu.memory_space<vmem>>, %arg19: memref<1x128xf32, #tpu.memory_space<vmem>>, %arg20: memref<1x8x128xf32, #tpu.memory_space<vmem>>, %arg21: memref<8x128xbf16, #tpu.memory_space<vmem>>, %arg22: memref<8x128xbf16, #tpu.memory_space<vmem>>) attributes {dimension_semantics = [#tpu.dimension_semantics<parallel>, #tpu.dimension_semantics<arbitrary>], iteration_bounds = array<i64: 2, 1>, scalar_prefetch = 0 : i64, scratch_operands = 2 : i64, tpu.core_type = #tpu.core_type<tc>, window_params = [{transform_indices = @transform_0, window_bounds = array<i64: 1, 8, 128>}, {transform_indices = @transform_1, window_bounds = array<i64: 1, 1, 8>}, {pipeline_mode = #tpu.pipeline_mode<synchronous>, transform_indices = @transform_2, window_bounds = array<i64: 128, 128>}, {pipeline_mode = #tpu.pipeline_mode<synchronous>, transform_indices = @transform_3, window_bounds = array<i64: 1, 128>}, {pipeline_mode = #tpu.pipeline_mode<synchronous>, transform_indices = @transform_4, window_bounds = array<i64: 128, 128>}, {pipeline_mode = #tpu.pipeline_mode<synchronous>, transform_indices = @transform_5, window_bounds = array<i64: 1, 128>}, {pipeline_mode = #tpu.pipeline_mode<synchronous>, transform_indices = @transform_6, window_bounds = array<i64: 128, 128>}, {pipeline_mode = #tpu.pipeline_mode<synchronous>, transform_indices = @transform_7, window_bounds = array<i64: 1, 128>}, {pipeline_mode = #tpu.pipeline_mode<synchronous>, transform_indices = @transform_8, window_bounds = array<i64: 128, 128>}, {pipeline_mode = #tpu.pipeline_mode<synchronous>, transform_indices = @transform_9, window_bounds = array<i64: 1, 128>}, {pipeline_mode = #tpu.pipeline_mode<synchronous>, transform_indices = @transform_10, window_bounds = array<i64: 1, 128>}, {pipeline_mode = #tpu.pipeline_mode<synchronous>, transform_indices = @transform_11, window_bounds = array<i64: 1, 128>}, {pipeline_mode = #tpu.pipeline_mode<synchronous>, transform_indices = @transform_12, window_bounds = array<i64: 1, 128>}, {pipeline_mode = #tpu.pipeline_mode<synchronous>, transform_indices = @transform_13, window_bounds = array<i64: 1, 128>}, {pipeline_mode = #tpu.pipeline_mode<synchronous>, transform_indices = @transform_14, window_bounds = array<i64: 128, 256>}, {pipeline_mode = #tpu.pipeline_mode<synchronous>, transform_indices = @transform_15, window_bounds = array<i64: 1, 256>}, {pipeline_mode = #tpu.pipeline_mode<synchronous>, transform_indices = @transform_16, window_bounds = array<i64: 256, 128>}, {pipeline_mode = #tpu.pipeline_mode<synchronous>, transform_indices = @transform_17, window_bounds = array<i64: 1, 128>}, {transform_indices = @transform_18, window_bounds = array<i64: 1, 8, 128>}]} {
    %c0 = arith.constant 0 : index
    %c0_0 = arith.constant 0 : index
    %0 = vector.load %arg12[%c0, %c0_0] : memref<1x128xf32, #tpu.memory_space<vmem>>, vector<1x128xf32>
    %c0_1 = arith.constant 0 : index
    %c0_2 = arith.constant 0 : index
    %1 = vector.load %arg13[%c0_1, %c0_2] : memref<1x128xf32, #tpu.memory_space<vmem>>, vector<1x128xf32>
    %c0_i32 = arith.constant 0 : i32
    %2 = arith.cmpi eq, %arg1, %c0_i32 : i32
    %3 = arith.extui %2 : i1 to i32
    %c0_i32_3 = arith.constant 0 : i32
    %4 = arith.cmpi ne, %3, %c0_i32_3 : i32
    scf.if %4 {
      %c0_118 = arith.constant 0 : index
      %c0_119 = arith.constant 0 : index
      %c0_120 = arith.constant 0 : index
      %329 = vector.load %arg2[%c0_118, %c0_119, %c0_120] : memref<1x8x128xf32, #tpu.memory_space<vmem>>, vector<1x8x128xf32>
      %330 = vector.shape_cast %329 : vector<1x8x128xf32> to vector<8x128xf32>
      %cst_121 = arith.constant dense<0.000000e+00> : vector<8xf32>
      %331 = vector.multi_reduction <add>, %330, %cst_121 [1] : vector<8x128xf32> to vector<8xf32>
      %332 = vector.shape_cast %331 : vector<8xf32> to vector<8x1xf32>
      %cst_122 = arith.constant 1.280000e+02 : f32
      %333 = vector.broadcast %cst_122 : f32 to vector<8x1xf32>
      %334 = arith.divf %332, %333 : vector<8x1xf32>
      %335 = vector.broadcast %334 : vector<8x1xf32> to vector<8x128xf32>
      %336 = arith.subf %330, %335 : vector<8x128xf32>
      %337 = arith.mulf %336, %336 : vector<8x128xf32>
      %cst_123 = arith.constant dense<0.000000e+00> : vector<8xf32>
      %338 = vector.multi_reduction <add>, %337, %cst_123 [1] : vector<8x128xf32> to vector<8xf32>
      %339 = vector.shape_cast %338 : vector<8xf32> to vector<8x1xf32>
      %cst_124 = arith.constant 0.00787401571 : f32
      %340 = vector.broadcast %cst_124 : f32 to vector<8x1xf32>
      %341 = arith.mulf %339, %340 : vector<8x1xf32>
      %342 = vector.broadcast %334 : vector<8x1xf32> to vector<8x128xf32>
      %343 = arith.subf %330, %342 : vector<8x128xf32>
      %344 = vector.broadcast %0 : vector<1x128xf32> to vector<8x128xf32>
      %345 = arith.mulf %344, %343 : vector<8x128xf32>
      %346 = math.sqrt %341 : vector<8x1xf32>
      %cst_125 = arith.constant 9.99999997E-7 : f32
      %347 = vector.broadcast %cst_125 : f32 to vector<8x1xf32>
      %348 = arith.addf %346, %347 : vector<8x1xf32>
      %349 = tpu.reciprocal %348 {approx = true} : vector<8x1xf32> -> vector<8x1xf32>
      %350 = arith.mulf %348, %349 : vector<8x1xf32>
      %cst_126 = arith.constant 2.000000e+00 : f32
      %351 = vector.broadcast %cst_126 : f32 to vector<8x1xf32>
      %352 = arith.subf %351, %350 : vector<8x1xf32>
      %353 = arith.mulf %349, %352 : vector<8x1xf32>
      %354 = vector.broadcast %353 : vector<8x1xf32> to vector<8x128xf32>
      %355 = arith.mulf %345, %354 : vector<8x128xf32>
      %356 = vector.broadcast %1 : vector<1x128xf32> to vector<8x128xf32>
      %357 = arith.addf %355, %356 : vector<8x128xf32>
      %358 = arith.truncf %357 : vector<8x128xf32> to vector<8x128xbf16>
      %c0_127 = arith.constant 0 : index
      %c0_128 = arith.constant 0 : index
      %359 = vector.load %arg6[%c0_127, %c0_128] : memref<128x128xbf16, #tpu.memory_space<vmem>>, vector<128x128xbf16>
      %cst_129 = arith.constant dense<0.000000e+00> : vector<8x128xf32>
      %360 = tpu.matmul %358, %359, %cst_129 {dimension_numbers = #tpu.dot_dimension_numbers<[1], [0], [0], [1], [0, 0, 1, 1], [], []>} : vector<8x128xbf16>, vector<128x128xbf16>, vector<8x128xf32> -> vector<8x128xf32>
      %c0_130 = arith.constant 0 : index
      %c0_131 = arith.constant 0 : index
      %361 = vector.load %arg7[%c0_130, %c0_131] : memref<1x128xf32, #tpu.memory_space<vmem>>, vector<1x128xf32>
      %362 = vector.broadcast %361 : vector<1x128xf32> to vector<8x128xf32>
      %363 = arith.addf %360, %362 : vector<8x128xf32>
      %c0_132 = arith.constant 0 : index
      %c0_133 = arith.constant 0 : index
      %364 = vector.load %arg8[%c0_132, %c0_133] : memref<128x128xbf16, #tpu.memory_space<vmem>>, vector<128x128xbf16>
      %cst_134 = arith.constant dense<0.000000e+00> : vector<8x128xf32>
      %365 = tpu.matmul %358, %364, %cst_134 {dimension_numbers = #tpu.dot_dimension_numbers<[1], [0], [0], [1], [0, 0, 1, 1], [], []>} : vector<8x128xbf16>, vector<128x128xbf16>, vector<8x128xf32> -> vector<8x128xf32>
      %c0_135 = arith.constant 0 : index
      %c0_136 = arith.constant 0 : index
      %366 = vector.load %arg9[%c0_135, %c0_136] : memref<1x128xf32, #tpu.memory_space<vmem>>, vector<1x128xf32>
      %367 = vector.broadcast %366 : vector<1x128xf32> to vector<8x128xf32>
      %368 = arith.addf %365, %367 : vector<8x128xf32>
      %369 = arith.truncf %363 : vector<8x128xf32> to vector<8x128xbf16>
      %c0_137 = arith.constant 0 : index
      %c0_138 = arith.constant 0 : index
      %370 = vector.load %arg21[%c0_137, %c0_138] : memref<8x128xbf16, #tpu.memory_space<vmem>>, vector<8x128xbf16>
      tpu.vector_store %arg21[%c0_137, %c0_138], %369 {strides = array<i32>} : memref<8x128xbf16, #tpu.memory_space<vmem>>, vector<8x128xbf16>,
      %371 = arith.truncf %368 : vector<8x128xf32> to vector<8x128xbf16>
      %c0_139 = arith.constant 0 : index
      %c0_140 = arith.constant 0 : index
      %372 = vector.load %arg22[%c0_139, %c0_140] : memref<8x128xbf16, #tpu.memory_space<vmem>>, vector<8x128xbf16>
      tpu.vector_store %arg22[%c0_139, %c0_140], %371 {strides = array<i32>} : memref<8x128xbf16, #tpu.memory_space<vmem>>, vector<8x128xbf16>,
    } else {
    }
    %c8_i32 = arith.constant 8 : i32
    %5 = arith.muli %arg1, %c8_i32 : i32
    %6 = tpu.assume_multiple %5, 8 : i32
    %c0_4 = arith.constant 0 : index
    %7 = arith.index_cast %6 : i32 to index
    %c0_5 = arith.constant 0 : index
    %8 = vector.load %arg2[%c0_4, %7, %c0_5] : memref<1x8x128xf32, #tpu.memory_space<vmem>>, vector<1x8x128xf32>
    %9 = vector.shape_cast %8 : vector<1x8x128xf32> to vector<8x128xf32>
    %cst = arith.constant dense<0.000000e+00> : vector<8xf32>
    %10 = vector.multi_reduction <add>, %9, %cst [1] : vector<8x128xf32> to vector<8xf32>
    %11 = vector.shape_cast %10 : vector<8xf32> to vector<8x1xf32>
    %cst_6 = arith.constant 1.280000e+02 : f32
    %12 = vector.broadcast %cst_6 : f32 to vector<8x1xf32>
    %13 = arith.divf %11, %12 : vector<8x1xf32>
    %14 = vector.broadcast %13 : vector<8x1xf32> to vector<8x128xf32>
    %15 = arith.subf %9, %14 : vector<8x128xf32>
    %16 = arith.mulf %15, %15 : vector<8x128xf32>
    %cst_7 = arith.constant dense<0.000000e+00> : vector<8xf32>
    %17 = vector.multi_reduction <add>, %16, %cst_7 [1] : vector<8x128xf32> to vector<8xf32>
    %18 = vector.shape_cast %17 : vector<8xf32> to vector<8x1xf32>
    %cst_8 = arith.constant 0.00787401571 : f32
    %19 = vector.broadcast %cst_8 : f32 to vector<8x1xf32>
    %20 = arith.mulf %18, %19 : vector<8x1xf32>
    %21 = vector.broadcast %13 : vector<8x1xf32> to vector<8x128xf32>
    %22 = arith.subf %9, %21 : vector<8x128xf32>
    %23 = vector.broadcast %0 : vector<1x128xf32> to vector<8x128xf32>
    %24 = arith.mulf %23, %22 : vector<8x128xf32>
    %25 = math.sqrt %20 : vector<8x1xf32>
    %cst_9 = arith.constant 9.99999997E-7 : f32
    %26 = vector.broadcast %cst_9 : f32 to vector<8x1xf32>
    %27 = arith.addf %25, %26 : vector<8x1xf32>
    %28 = tpu.reciprocal %27 {approx = true} : vector<8x1xf32> -> vector<8x1xf32>
    %29 = arith.mulf %27, %28 : vector<8x1xf32>
    %cst_10 = arith.constant 2.000000e+00 : f32
    %30 = vector.broadcast %cst_10 : f32 to vector<8x1xf32>
    %31 = arith.subf %30, %29 : vector<8x1xf32>
    %32 = arith.mulf %28, %31 : vector<8x1xf32>
    %33 = vector.broadcast %32 : vector<8x1xf32> to vector<8x128xf32>
    %34 = arith.mulf %24, %33 : vector<8x128xf32>
    %35 = vector.broadcast %1 : vector<1x128xf32> to vector<8x128xf32>
    %36 = arith.addf %34, %35 : vector<8x128xf32>
    %37 = arith.truncf %36 : vector<8x128xf32> to vector<8x128xbf16>
    %c0_11 = arith.constant 0 : index
    %c0_12 = arith.constant 0 : index
    %38 = vector.load %arg4[%c0_11, %c0_12] : memref<128x128xbf16, #tpu.memory_space<vmem>>, vector<128x128xbf16>
    %cst_13 = arith.constant dense<0.000000e+00> : vector<8x128xf32>
    %39 = tpu.matmul %37, %38, %cst_13 {dimension_numbers = #tpu.dot_dimension_numbers<[1], [0], [0], [1], [0, 0, 1, 1], [], []>} : vector<8x128xbf16>, vector<128x128xbf16>, vector<8x128xf32> -> vector<8x128xf32>
    %c0_14 = arith.constant 0 : index
    %c0_15 = arith.constant 0 : index
    %40 = vector.load %arg5[%c0_14, %c0_15] : memref<1x128xf32, #tpu.memory_space<vmem>>, vector<1x128xf32>
    %41 = vector.broadcast %40 : vector<1x128xf32> to vector<8x128xf32>
    %42 = arith.addf %39, %41 : vector<8x128xf32>
    %43 = arith.truncf %42 : vector<8x128xf32> to vector<8x128xbf16>
    %c0_16 = arith.constant 0 : index
    %c0_17 = arith.constant 0 : index
    %44 = vector.load %arg21[%c0_16, %c0_17] : memref<8x128xbf16, #tpu.memory_space<vmem>>, vector<8x128xbf16>
    %c0_18 = arith.constant 0 : index
    %c0_19 = arith.constant 0 : index
    %45 = vector.load %arg22[%c0_18, %c0_19] : memref<8x128xbf16, #tpu.memory_space<vmem>>, vector<8x128xbf16>
    %c0_20 = arith.constant 0 : index
    %c0_21 = arith.constant 0 : index
    %c0_22 = arith.constant 0 : index
    %46 = vector.load %arg3[%c0_20, %c0_21, %c0_22] : memref<1x1x8xi32, #tpu.memory_space<vmem>>, vector<1x1x8xi32>
    %47 = vector.shape_cast %46 : vector<1x1x8xi32> to vector<1x8xi32>
    %c0_i32_23 = arith.constant 0 : i32
    %48 = vector.broadcast %c0_i32_23 : i32 to vector<1x8xi32>
    %49 = arith.cmpi eq, %47, %48 : vector<1x8xi32>
    %cst_24 = arith.constant -1.000000e+09 : f32
    %cst_25 = arith.constant 0.000000e+00 : f32
    %50 = vector.broadcast %cst_24 : f32 to vector<1x8xf32>
    %51 = vector.broadcast %cst_25 : f32 to vector<1x8xf32>
    %52 = arith.select %49, %50, %51 : vector<1x8xi1>, vector<1x8xf32>
    %cst_26 = arith.constant 0.000000e+00 : f32
    %53 = vector.broadcast %cst_26 : f32 to vector<8x128xf32>
    %54 = vector.extract_strided_slice %43 {offsets = [0, 0], sizes = [8, 16], strides = [1, 1]} : vector<8x128xbf16> to vector<8x16xbf16>
    %55 = vector.extract_strided_slice %44 {offsets = [0, 0], sizes = [8, 16], strides = [1, 1]} : vector<8x128xbf16> to vector<8x16xbf16>
    %cst_27 = arith.constant dense<0.000000e+00> : vector<8x8xf32>
    %56 = tpu.matmul %54, %55, %cst_27 {dimension_numbers = #tpu.dot_dimension_numbers<[1], [1], [0], [0], [0, 0, 1, 0], [], []>} : vector<8x16xbf16>, vector<8x16xbf16>, vector<8x8xf32> -> vector<8x8xf32>
    %cst_28 = arith.constant 2.500000e-01 : f32
    %57 = vector.broadcast %cst_28 : f32 to vector<8x8xf32>
    %58 = arith.mulf %56, %57 : vector<8x8xf32>
    %59 = vector.broadcast %52 : vector<1x8xf32> to vector<8x8xf32>
    %60 = arith.addf %58, %59 : vector<8x8xf32>
    %cst_29 = arith.constant dense<0xFF800000> : vector<8xf32>
    %61 = vector.multi_reduction <maximumf>, %60, %cst_29 [1] : vector<8x8xf32> to vector<8xf32>
    %62 = vector.shape_cast %61 : vector<8xf32> to vector<8x1xf32>
    %63 = vector.broadcast %62 : vector<8x1xf32> to vector<8x8xf32>
    %64 = arith.subf %60, %63 : vector<8x8xf32>
    %65 = math.exp %64 : vector<8x8xf32>
    %cst_30 = arith.constant dense<0.000000e+00> : vector<8xf32>
    %66 = vector.multi_reduction <add>, %65, %cst_30 [1] : vector<8x8xf32> to vector<8xf32>
    %67 = vector.shape_cast %66 : vector<8xf32> to vector<8x1xf32>
    %68 = tpu.reciprocal %67 {approx = true} : vector<8x1xf32> -> vector<8x1xf32>
    %69 = arith.mulf %67, %68 : vector<8x1xf32>
    %cst_31 = arith.constant 2.000000e+00 : f32
    %70 = vector.broadcast %cst_31 : f32 to vector<8x1xf32>
    %71 = arith.subf %70, %69 : vector<8x1xf32>
    %72 = arith.mulf %68, %71 : vector<8x1xf32>
    %73 = vector.broadcast %72 : vector<8x1xf32> to vector<8x8xf32>
    %74 = arith.mulf %65, %73 : vector<8x8xf32>
    %75 = arith.truncf %74 : vector<8x8xf32> to vector<8x8xbf16>
    %76 = vector.extract_strided_slice %45 {offsets = [0, 0], sizes = [8, 16], strides = [1, 1]} : vector<8x128xbf16> to vector<8x16xbf16>
    %cst_32 = arith.constant dense<0.000000e+00> : vector<8x16xf32>
    %77 = tpu.matmul %75, %76, %cst_32 {dimension_numbers = #tpu.dot_dimension_numbers<[1], [0], [0], [1], [0, 0, 1, 1], [], []>} : vector<8x8xbf16>, vector<8x16xbf16>, vector<8x16xf32> -> vector<8x16xf32>
    %78 = arith.truncf %77 : vector<8x16xf32> to vector<8x16xbf16>
    %c0_33 = arith.constant 0 : index
    %c0_34 = arith.constant 0 : index
    %79 = vector.load %arg10[%c0_33, %c0_34] : memref<128x128xbf16, #tpu.memory_space<vmem>>, vector<16x128xbf16>
    %cst_35 = arith.constant dense<0.000000e+00> : vector<8x128xf32>
    %80 = tpu.matmul %78, %79, %cst_35 {dimension_numbers = #tpu.dot_dimension_numbers<[1], [0], [0], [1], [0, 0, 1, 1], [], []>} : vector<8x16xbf16>, vector<16x128xbf16>, vector<8x128xf32> -> vector<8x128xf32>
    %81 = arith.addf %53, %80 : vector<8x128xf32>
    %82 = vector.extract_strided_slice %43 {offsets = [0, 16], sizes = [8, 16], strides = [1, 1]} : vector<8x128xbf16> to vector<8x16xbf16>
    %83 = vector.extract_strided_slice %44 {offsets = [0, 16], sizes = [8, 16], strides = [1, 1]} : vector<8x128xbf16> to vector<8x16xbf16>
    %cst_36 = arith.constant dense<0.000000e+00> : vector<8x8xf32>
    %84 = tpu.matmul %82, %83, %cst_36 {dimension_numbers = #tpu.dot_dimension_numbers<[1], [1], [0], [0], [0, 0, 1, 0], [], []>} : vector<8x16xbf16>, vector<8x16xbf16>, vector<8x8xf32> -> vector<8x8xf32>
    %cst_37 = arith.constant 2.500000e-01 : f32
    %85 = vector.broadcast %cst_37 : f32 to vector<8x8xf32>
    %86 = arith.mulf %84, %85 : vector<8x8xf32>
    %87 = vector.broadcast %52 : vector<1x8xf32> to vector<8x8xf32>
    %88 = arith.addf %86, %87 : vector<8x8xf32>
    %cst_38 = arith.constant dense<0xFF800000> : vector<8xf32>
    %89 = vector.multi_reduction <maximumf>, %88, %cst_38 [1] : vector<8x8xf32> to vector<8xf32>
    %90 = vector.shape_cast %89 : vector<8xf32> to vector<8x1xf32>
    %91 = vector.broadcast %90 : vector<8x1xf32> to vector<8x8xf32>
    %92 = arith.subf %88, %91 : vector<8x8xf32>
    %93 = math.exp %92 : vector<8x8xf32>
    %cst_39 = arith.constant dense<0.000000e+00> : vector<8xf32>
    %94 = vector.multi_reduction <add>, %93, %cst_39 [1] : vector<8x8xf32> to vector<8xf32>
    %95 = vector.shape_cast %94 : vector<8xf32> to vector<8x1xf32>
    %96 = tpu.reciprocal %95 {approx = true} : vector<8x1xf32> -> vector<8x1xf32>
    %97 = arith.mulf %95, %96 : vector<8x1xf32>
    %cst_40 = arith.constant 2.000000e+00 : f32
    %98 = vector.broadcast %cst_40 : f32 to vector<8x1xf32>
    %99 = arith.subf %98, %97 : vector<8x1xf32>
    %100 = arith.mulf %96, %99 : vector<8x1xf32>
    %101 = vector.broadcast %100 : vector<8x1xf32> to vector<8x8xf32>
    %102 = arith.mulf %93, %101 : vector<8x8xf32>
    %103 = arith.truncf %102 : vector<8x8xf32> to vector<8x8xbf16>
    %104 = vector.extract_strided_slice %45 {offsets = [0, 16], sizes = [8, 16], strides = [1, 1]} : vector<8x128xbf16> to vector<8x16xbf16>
    %cst_41 = arith.constant dense<0.000000e+00> : vector<8x16xf32>
    %105 = tpu.matmul %103, %104, %cst_41 {dimension_numbers = #tpu.dot_dimension_numbers<[1], [0], [0], [1], [0, 0, 1, 1], [], []>} : vector<8x8xbf16>, vector<8x16xbf16>, vector<8x16xf32> -> vector<8x16xf32>
    %106 = arith.truncf %105 : vector<8x16xf32> to vector<8x16xbf16>
    %c16 = arith.constant 16 : index
    %c0_42 = arith.constant 0 : index
    %107 = vector.load %arg10[%c16, %c0_42] : memref<128x128xbf16, #tpu.memory_space<vmem>>, vector<16x128xbf16>
    %cst_43 = arith.constant dense<0.000000e+00> : vector<8x128xf32>
    %108 = tpu.matmul %106, %107, %cst_43 {dimension_numbers = #tpu.dot_dimension_numbers<[1], [0], [0], [1], [0, 0, 1, 1], [], []>} : vector<8x16xbf16>, vector<16x128xbf16>, vector<8x128xf32> -> vector<8x128xf32>
    %109 = arith.addf %81, %108 : vector<8x128xf32>
    %110 = vector.extract_strided_slice %43 {offsets = [0, 32], sizes = [8, 16], strides = [1, 1]} : vector<8x128xbf16> to vector<8x16xbf16>
    %111 = vector.extract_strided_slice %44 {offsets = [0, 32], sizes = [8, 16], strides = [1, 1]} : vector<8x128xbf16> to vector<8x16xbf16>
    %cst_44 = arith.constant dense<0.000000e+00> : vector<8x8xf32>
    %112 = tpu.matmul %110, %111, %cst_44 {dimension_numbers = #tpu.dot_dimension_numbers<[1], [1], [0], [0], [0, 0, 1, 0], [], []>} : vector<8x16xbf16>, vector<8x16xbf16>, vector<8x8xf32> -> vector<8x8xf32>
    %cst_45 = arith.constant 2.500000e-01 : f32
    %113 = vector.broadcast %cst_45 : f32 to vector<8x8xf32>
    %114 = arith.mulf %112, %113 : vector<8x8xf32>
    %115 = vector.broadcast %52 : vector<1x8xf32> to vector<8x8xf32>
    %116 = arith.addf %114, %115 : vector<8x8xf32>
    %cst_46 = arith.constant dense<0xFF800000> : vector<8xf32>
    %117 = vector.multi_reduction <maximumf>, %116, %cst_46 [1] : vector<8x8xf32> to vector<8xf32>
    %118 = vector.shape_cast %117 : vector<8xf32> to vector<8x1xf32>
    %119 = vector.broadcast %118 : vector<8x1xf32> to vector<8x8xf32>
    %120 = arith.subf %116, %119 : vector<8x8xf32>
    %121 = math.exp %120 : vector<8x8xf32>
    %cst_47 = arith.constant dense<0.000000e+00> : vector<8xf32>
    %122 = vector.multi_reduction <add>, %121, %cst_47 [1] : vector<8x8xf32> to vector<8xf32>
    %123 = vector.shape_cast %122 : vector<8xf32> to vector<8x1xf32>
    %124 = tpu.reciprocal %123 {approx = true} : vector<8x1xf32> -> vector<8x1xf32>
    %125 = arith.mulf %123, %124 : vector<8x1xf32>
    %cst_48 = arith.constant 2.000000e+00 : f32
    %126 = vector.broadcast %cst_48 : f32 to vector<8x1xf32>
    %127 = arith.subf %126, %125 : vector<8x1xf32>
    %128 = arith.mulf %124, %127 : vector<8x1xf32>
    %129 = vector.broadcast %128 : vector<8x1xf32> to vector<8x8xf32>
    %130 = arith.mulf %121, %129 : vector<8x8xf32>
    %131 = arith.truncf %130 : vector<8x8xf32> to vector<8x8xbf16>
    %132 = vector.extract_strided_slice %45 {offsets = [0, 32], sizes = [8, 16], strides = [1, 1]} : vector<8x128xbf16> to vector<8x16xbf16>
    %cst_49 = arith.constant dense<0.000000e+00> : vector<8x16xf32>
    %133 = tpu.matmul %131, %132, %cst_49 {dimension_numbers = #tpu.dot_dimension_numbers<[1], [0], [0], [1], [0, 0, 1, 1], [], []>} : vector<8x8xbf16>, vector<8x16xbf16>, vector<8x16xf32> -> vector<8x16xf32>
    %134 = arith.truncf %133 : vector<8x16xf32> to vector<8x16xbf16>
    %c32 = arith.constant 32 : index
    %c0_50 = arith.constant 0 : index
    %135 = vector.load %arg10[%c32, %c0_50] : memref<128x128xbf16, #tpu.memory_space<vmem>>, vector<16x128xbf16>
    %cst_51 = arith.constant dense<0.000000e+00> : vector<8x128xf32>
    %136 = tpu.matmul %134, %135, %cst_51 {dimension_numbers = #tpu.dot_dimension_numbers<[1], [0], [0], [1], [0, 0, 1, 1], [], []>} : vector<8x16xbf16>, vector<16x128xbf16>, vector<8x128xf32> -> vector<8x128xf32>
    %137 = arith.addf %109, %136 : vector<8x128xf32>
    %138 = vector.extract_strided_slice %43 {offsets = [0, 48], sizes = [8, 16], strides = [1, 1]} : vector<8x128xbf16> to vector<8x16xbf16>
    %139 = vector.extract_strided_slice %44 {offsets = [0, 48], sizes = [8, 16], strides = [1, 1]} : vector<8x128xbf16> to vector<8x16xbf16>
    %cst_52 = arith.constant dense<0.000000e+00> : vector<8x8xf32>
    %140 = tpu.matmul %138, %139, %cst_52 {dimension_numbers = #tpu.dot_dimension_numbers<[1], [1], [0], [0], [0, 0, 1, 0], [], []>} : vector<8x16xbf16>, vector<8x16xbf16>, vector<8x8xf32> -> vector<8x8xf32>
    %cst_53 = arith.constant 2.500000e-01 : f32
    %141 = vector.broadcast %cst_53 : f32 to vector<8x8xf32>
    %142 = arith.mulf %140, %141 : vector<8x8xf32>
    %143 = vector.broadcast %52 : vector<1x8xf32> to vector<8x8xf32>
    %144 = arith.addf %142, %143 : vector<8x8xf32>
    %cst_54 = arith.constant dense<0xFF800000> : vector<8xf32>
    %145 = vector.multi_reduction <maximumf>, %144, %cst_54 [1] : vector<8x8xf32> to vector<8xf32>
    %146 = vector.shape_cast %145 : vector<8xf32> to vector<8x1xf32>
    %147 = vector.broadcast %146 : vector<8x1xf32> to vector<8x8xf32>
    %148 = arith.subf %144, %147 : vector<8x8xf32>
    %149 = math.exp %148 : vector<8x8xf32>
    %cst_55 = arith.constant dense<0.000000e+00> : vector<8xf32>
    %150 = vector.multi_reduction <add>, %149, %cst_55 [1] : vector<8x8xf32> to vector<8xf32>
    %151 = vector.shape_cast %150 : vector<8xf32> to vector<8x1xf32>
    %152 = tpu.reciprocal %151 {approx = true} : vector<8x1xf32> -> vector<8x1xf32>
    %153 = arith.mulf %151, %152 : vector<8x1xf32>
    %cst_56 = arith.constant 2.000000e+00 : f32
    %154 = vector.broadcast %cst_56 : f32 to vector<8x1xf32>
    %155 = arith.subf %154, %153 : vector<8x1xf32>
    %156 = arith.mulf %152, %155 : vector<8x1xf32>
    %157 = vector.broadcast %156 : vector<8x1xf32> to vector<8x8xf32>
    %158 = arith.mulf %149, %157 : vector<8x8xf32>
    %159 = arith.truncf %158 : vector<8x8xf32> to vector<8x8xbf16>
    %160 = vector.extract_strided_slice %45 {offsets = [0, 48], sizes = [8, 16], strides = [1, 1]} : vector<8x128xbf16> to vector<8x16xbf16>
    %cst_57 = arith.constant dense<0.000000e+00> : vector<8x16xf32>
    %161 = tpu.matmul %159, %160, %cst_57 {dimension_numbers = #tpu.dot_dimension_numbers<[1], [0], [0], [1], [0, 0, 1, 1], [], []>} : vector<8x8xbf16>, vector<8x16xbf16>, vector<8x16xf32> -> vector<8x16xf32>
    %162 = arith.truncf %161 : vector<8x16xf32> to vector<8x16xbf16>
    %c48 = arith.constant 48 : index
    %c0_58 = arith.constant 0 : index
    %163 = vector.load %arg10[%c48, %c0_58] : memref<128x128xbf16, #tpu.memory_space<vmem>>, vector<16x128xbf16>
    %cst_59 = arith.constant dense<0.000000e+00> : vector<8x128xf32>
    %164 = tpu.matmul %162, %163, %cst_59 {dimension_numbers = #tpu.dot_dimension_numbers<[1], [0], [0], [1], [0, 0, 1, 1], [], []>} : vector<8x16xbf16>, vector<16x128xbf16>, vector<8x128xf32> -> vector<8x128xf32>
    %165 = arith.addf %137, %164 : vector<8x128xf32>
    %166 = vector.extract_strided_slice %43 {offsets = [0, 64], sizes = [8, 16], strides = [1, 1]} : vector<8x128xbf16> to vector<8x16xbf16>
    %167 = vector.extract_strided_slice %44 {offsets = [0, 64], sizes = [8, 16], strides = [1, 1]} : vector<8x128xbf16> to vector<8x16xbf16>
    %cst_60 = arith.constant dense<0.000000e+00> : vector<8x8xf32>
    %168 = tpu.matmul %166, %167, %cst_60 {dimension_numbers = #tpu.dot_dimension_numbers<[1], [1], [0], [0], [0, 0, 1, 0], [], []>} : vector<8x16xbf16>, vector<8x16xbf16>, vector<8x8xf32> -> vector<8x8xf32>
    %cst_61 = arith.constant 2.500000e-01 : f32
    %169 = vector.broadcast %cst_61 : f32 to vector<8x8xf32>
    %170 = arith.mulf %168, %169 : vector<8x8xf32>
    %171 = vector.broadcast %52 : vector<1x8xf32> to vector<8x8xf32>
    %172 = arith.addf %170, %171 : vector<8x8xf32>
    %cst_62 = arith.constant dense<0xFF800000> : vector<8xf32>
    %173 = vector.multi_reduction <maximumf>, %172, %cst_62 [1] : vector<8x8xf32> to vector<8xf32>
    %174 = vector.shape_cast %173 : vector<8xf32> to vector<8x1xf32>
    %175 = vector.broadcast %174 : vector<8x1xf32> to vector<8x8xf32>
    %176 = arith.subf %172, %175 : vector<8x8xf32>
    %177 = math.exp %176 : vector<8x8xf32>
    %cst_63 = arith.constant dense<0.000000e+00> : vector<8xf32>
    %178 = vector.multi_reduction <add>, %177, %cst_63 [1] : vector<8x8xf32> to vector<8xf32>
    %179 = vector.shape_cast %178 : vector<8xf32> to vector<8x1xf32>
    %180 = tpu.reciprocal %179 {approx = true} : vector<8x1xf32> -> vector<8x1xf32>
    %181 = arith.mulf %179, %180 : vector<8x1xf32>
    %cst_64 = arith.constant 2.000000e+00 : f32
    %182 = vector.broadcast %cst_64 : f32 to vector<8x1xf32>
    %183 = arith.subf %182, %181 : vector<8x1xf32>
    %184 = arith.mulf %180, %183 : vector<8x1xf32>
    %185 = vector.broadcast %184 : vector<8x1xf32> to vector<8x8xf32>
    %186 = arith.mulf %177, %185 : vector<8x8xf32>
    %187 = arith.truncf %186 : vector<8x8xf32> to vector<8x8xbf16>
    %188 = vector.extract_strided_slice %45 {offsets = [0, 64], sizes = [8, 16], strides = [1, 1]} : vector<8x128xbf16> to vector<8x16xbf16>
    %cst_65 = arith.constant dense<0.000000e+00> : vector<8x16xf32>
    %189 = tpu.matmul %187, %188, %cst_65 {dimension_numbers = #tpu.dot_dimension_numbers<[1], [0], [0], [1], [0, 0, 1, 1], [], []>} : vector<8x8xbf16>, vector<8x16xbf16>, vector<8x16xf32> -> vector<8x16xf32>
    %190 = arith.truncf %189 : vector<8x16xf32> to vector<8x16xbf16>
    %c64 = arith.constant 64 : index
    %c0_66 = arith.constant 0 : index
    %191 = vector.load %arg10[%c64, %c0_66] : memref<128x128xbf16, #tpu.memory_space<vmem>>, vector<16x128xbf16>
    %cst_67 = arith.constant dense<0.000000e+00> : vector<8x128xf32>
    %192 = tpu.matmul %190, %191, %cst_67 {dimension_numbers = #tpu.dot_dimension_numbers<[1], [0], [0], [1], [0, 0, 1, 1], [], []>} : vector<8x16xbf16>, vector<16x128xbf16>, vector<8x128xf32> -> vector<8x128xf32>
    %193 = arith.addf %165, %192 : vector<8x128xf32>
    %194 = vector.extract_strided_slice %43 {offsets = [0, 80], sizes = [8, 16], strides = [1, 1]} : vector<8x128xbf16> to vector<8x16xbf16>
    %195 = vector.extract_strided_slice %44 {offsets = [0, 80], sizes = [8, 16], strides = [1, 1]} : vector<8x128xbf16> to vector<8x16xbf16>
    %cst_68 = arith.constant dense<0.000000e+00> : vector<8x8xf32>
    %196 = tpu.matmul %194, %195, %cst_68 {dimension_numbers = #tpu.dot_dimension_numbers<[1], [1], [0], [0], [0, 0, 1, 0], [], []>} : vector<8x16xbf16>, vector<8x16xbf16>, vector<8x8xf32> -> vector<8x8xf32>
    %cst_69 = arith.constant 2.500000e-01 : f32
    %197 = vector.broadcast %cst_69 : f32 to vector<8x8xf32>
    %198 = arith.mulf %196, %197 : vector<8x8xf32>
    %199 = vector.broadcast %52 : vector<1x8xf32> to vector<8x8xf32>
    %200 = arith.addf %198, %199 : vector<8x8xf32>
    %cst_70 = arith.constant dense<0xFF800000> : vector<8xf32>
    %201 = vector.multi_reduction <maximumf>, %200, %cst_70 [1] : vector<8x8xf32> to vector<8xf32>
    %202 = vector.shape_cast %201 : vector<8xf32> to vector<8x1xf32>
    %203 = vector.broadcast %202 : vector<8x1xf32> to vector<8x8xf32>
    %204 = arith.subf %200, %203 : vector<8x8xf32>
    %205 = math.exp %204 : vector<8x8xf32>
    %cst_71 = arith.constant dense<0.000000e+00> : vector<8xf32>
    %206 = vector.multi_reduction <add>, %205, %cst_71 [1] : vector<8x8xf32> to vector<8xf32>
    %207 = vector.shape_cast %206 : vector<8xf32> to vector<8x1xf32>
    %208 = tpu.reciprocal %207 {approx = true} : vector<8x1xf32> -> vector<8x1xf32>
    %209 = arith.mulf %207, %208 : vector<8x1xf32>
    %cst_72 = arith.constant 2.000000e+00 : f32
    %210 = vector.broadcast %cst_72 : f32 to vector<8x1xf32>
    %211 = arith.subf %210, %209 : vector<8x1xf32>
    %212 = arith.mulf %208, %211 : vector<8x1xf32>
    %213 = vector.broadcast %212 : vector<8x1xf32> to vector<8x8xf32>
    %214 = arith.mulf %205, %213 : vector<8x8xf32>
    %215 = arith.truncf %214 : vector<8x8xf32> to vector<8x8xbf16>
    %216 = vector.extract_strided_slice %45 {offsets = [0, 80], sizes = [8, 16], strides = [1, 1]} : vector<8x128xbf16> to vector<8x16xbf16>
    %cst_73 = arith.constant dense<0.000000e+00> : vector<8x16xf32>
    %217 = tpu.matmul %215, %216, %cst_73 {dimension_numbers = #tpu.dot_dimension_numbers<[1], [0], [0], [1], [0, 0, 1, 1], [], []>} : vector<8x8xbf16>, vector<8x16xbf16>, vector<8x16xf32> -> vector<8x16xf32>
    %218 = arith.truncf %217 : vector<8x16xf32> to vector<8x16xbf16>
    %c80 = arith.constant 80 : index
    %c0_74 = arith.constant 0 : index
    %219 = vector.load %arg10[%c80, %c0_74] : memref<128x128xbf16, #tpu.memory_space<vmem>>, vector<16x128xbf16>
    %cst_75 = arith.constant dense<0.000000e+00> : vector<8x128xf32>
    %220 = tpu.matmul %218, %219, %cst_75 {dimension_numbers = #tpu.dot_dimension_numbers<[1], [0], [0], [1], [0, 0, 1, 1], [], []>} : vector<8x16xbf16>, vector<16x128xbf16>, vector<8x128xf32> -> vector<8x128xf32>
    %221 = arith.addf %193, %220 : vector<8x128xf32>
    %222 = vector.extract_strided_slice %43 {offsets = [0, 96], sizes = [8, 16], strides = [1, 1]} : vector<8x128xbf16> to vector<8x16xbf16>
    %223 = vector.extract_strided_slice %44 {offsets = [0, 96], sizes = [8, 16], strides = [1, 1]} : vector<8x128xbf16> to vector<8x16xbf16>
    %cst_76 = arith.constant dense<0.000000e+00> : vector<8x8xf32>
    %224 = tpu.matmul %222, %223, %cst_76 {dimension_numbers = #tpu.dot_dimension_numbers<[1], [1], [0], [0], [0, 0, 1, 0], [], []>} : vector<8x16xbf16>, vector<8x16xbf16>, vector<8x8xf32> -> vector<8x8xf32>
    %cst_77 = arith.constant 2.500000e-01 : f32
    %225 = vector.broadcast %cst_77 : f32 to vector<8x8xf32>
    %226 = arith.mulf %224, %225 : vector<8x8xf32>
    %227 = vector.broadcast %52 : vector<1x8xf32> to vector<8x8xf32>
    %228 = arith.addf %226, %227 : vector<8x8xf32>
    %cst_78 = arith.constant dense<0xFF800000> : vector<8xf32>
    %229 = vector.multi_reduction <maximumf>, %228, %cst_78 [1] : vector<8x8xf32> to vector<8xf32>
    %230 = vector.shape_cast %229 : vector<8xf32> to vector<8x1xf32>
    %231 = vector.broadcast %230 : vector<8x1xf32> to vector<8x8xf32>
    %232 = arith.subf %228, %231 : vector<8x8xf32>
    %233 = math.exp %232 : vector<8x8xf32>
    %cst_79 = arith.constant dense<0.000000e+00> : vector<8xf32>
    %234 = vector.multi_reduction <add>, %233, %cst_79 [1] : vector<8x8xf32> to vector<8xf32>
    %235 = vector.shape_cast %234 : vector<8xf32> to vector<8x1xf32>
    %236 = tpu.reciprocal %235 {approx = true} : vector<8x1xf32> -> vector<8x1xf32>
    %237 = arith.mulf %235, %236 : vector<8x1xf32>
    %cst_80 = arith.constant 2.000000e+00 : f32
    %238 = vector.broadcast %cst_80 : f32 to vector<8x1xf32>
    %239 = arith.subf %238, %237 : vector<8x1xf32>
    %240 = arith.mulf %236, %239 : vector<8x1xf32>
    %241 = vector.broadcast %240 : vector<8x1xf32> to vector<8x8xf32>
    %242 = arith.mulf %233, %241 : vector<8x8xf32>
    %243 = arith.truncf %242 : vector<8x8xf32> to vector<8x8xbf16>
    %244 = vector.extract_strided_slice %45 {offsets = [0, 96], sizes = [8, 16], strides = [1, 1]} : vector<8x128xbf16> to vector<8x16xbf16>
    %cst_81 = arith.constant dense<0.000000e+00> : vector<8x16xf32>
    %245 = tpu.matmul %243, %244, %cst_81 {dimension_numbers = #tpu.dot_dimension_numbers<[1], [0], [0], [1], [0, 0, 1, 1], [], []>} : vector<8x8xbf16>, vector<8x16xbf16>, vector<8x16xf32> -> vector<8x16xf32>
    %246 = arith.truncf %245 : vector<8x16xf32> to vector<8x16xbf16>
    %c96 = arith.constant 96 : index
    %c0_82 = arith.constant 0 : index
    %247 = vector.load %arg10[%c96, %c0_82] : memref<128x128xbf16, #tpu.memory_space<vmem>>, vector<16x128xbf16>
    %cst_83 = arith.constant dense<0.000000e+00> : vector<8x128xf32>
    %248 = tpu.matmul %246, %247, %cst_83 {dimension_numbers = #tpu.dot_dimension_numbers<[1], [0], [0], [1], [0, 0, 1, 1], [], []>} : vector<8x16xbf16>, vector<16x128xbf16>, vector<8x128xf32> -> vector<8x128xf32>
    %249 = arith.addf %221, %248 : vector<8x128xf32>
    %250 = vector.extract_strided_slice %43 {offsets = [0, 112], sizes = [8, 16], strides = [1, 1]} : vector<8x128xbf16> to vector<8x16xbf16>
    %251 = vector.extract_strided_slice %44 {offsets = [0, 112], sizes = [8, 16], strides = [1, 1]} : vector<8x128xbf16> to vector<8x16xbf16>
    %cst_84 = arith.constant dense<0.000000e+00> : vector<8x8xf32>
    %252 = tpu.matmul %250, %251, %cst_84 {dimension_numbers = #tpu.dot_dimension_numbers<[1], [1], [0], [0], [0, 0, 1, 0], [], []>} : vector<8x16xbf16>, vector<8x16xbf16>, vector<8x8xf32> -> vector<8x8xf32>
    %cst_85 = arith.constant 2.500000e-01 : f32
    %253 = vector.broadcast %cst_85 : f32 to vector<8x8xf32>
    %254 = arith.mulf %252, %253 : vector<8x8xf32>
    %255 = vector.broadcast %52 : vector<1x8xf32> to vector<8x8xf32>
    %256 = arith.addf %254, %255 : vector<8x8xf32>
    %cst_86 = arith.constant dense<0xFF800000> : vector<8xf32>
    %257 = vector.multi_reduction <maximumf>, %256, %cst_86 [1] : vector<8x8xf32> to vector<8xf32>
    %258 = vector.shape_cast %257 : vector<8xf32> to vector<8x1xf32>
    %259 = vector.broadcast %258 : vector<8x1xf32> to vector<8x8xf32>
    %260 = arith.subf %256, %259 : vector<8x8xf32>
    %261 = math.exp %260 : vector<8x8xf32>
    %cst_87 = arith.constant dense<0.000000e+00> : vector<8xf32>
    %262 = vector.multi_reduction <add>, %261, %cst_87 [1] : vector<8x8xf32> to vector<8xf32>
    %263 = vector.shape_cast %262 : vector<8xf32> to vector<8x1xf32>
    %264 = tpu.reciprocal %263 {approx = true} : vector<8x1xf32> -> vector<8x1xf32>
    %265 = arith.mulf %263, %264 : vector<8x1xf32>
    %cst_88 = arith.constant 2.000000e+00 : f32
    %266 = vector.broadcast %cst_88 : f32 to vector<8x1xf32>
    %267 = arith.subf %266, %265 : vector<8x1xf32>
    %268 = arith.mulf %264, %267 : vector<8x1xf32>
    %269 = vector.broadcast %268 : vector<8x1xf32> to vector<8x8xf32>
    %270 = arith.mulf %261, %269 : vector<8x8xf32>
    %271 = arith.truncf %270 : vector<8x8xf32> to vector<8x8xbf16>
    %272 = vector.extract_strided_slice %45 {offsets = [0, 112], sizes = [8, 16], strides = [1, 1]} : vector<8x128xbf16> to vector<8x16xbf16>
    %cst_89 = arith.constant dense<0.000000e+00> : vector<8x16xf32>
    %273 = tpu.matmul %271, %272, %cst_89 {dimension_numbers = #tpu.dot_dimension_numbers<[1], [0], [0], [1], [0, 0, 1, 1], [], []>} : vector<8x8xbf16>, vector<8x16xbf16>, vector<8x16xf32> -> vector<8x16xf32>
    %274 = arith.truncf %273 : vector<8x16xf32> to vector<8x16xbf16>
    %c112 = arith.constant 112 : index
    %c0_90 = arith.constant 0 : index
    %275 = vector.load %arg10[%c112, %c0_90] : memref<128x128xbf16, #tpu.memory_space<vmem>>, vector<16x128xbf16>
    %cst_91 = arith.constant dense<0.000000e+00> : vector<8x128xf32>
    %276 = tpu.matmul %274, %275, %cst_91 {dimension_numbers = #tpu.dot_dimension_numbers<[1], [0], [0], [1], [0, 0, 1, 1], [], []>} : vector<8x16xbf16>, vector<16x128xbf16>, vector<8x128xf32> -> vector<8x128xf32>
    %277 = arith.addf %249, %276 : vector<8x128xf32>
    %278 = arith.addf %9, %277 : vector<8x128xf32>
    %c0_92 = arith.constant 0 : index
    %c0_93 = arith.constant 0 : index
    %279 = vector.load %arg11[%c0_92, %c0_93] : memref<1x128xf32, #tpu.memory_space<vmem>>, vector<1x128xf32>
    %280 = vector.broadcast %279 : vector<1x128xf32> to vector<8x128xf32>
    %281 = arith.addf %278, %280 : vector<8x128xf32>
    %c0_94 = arith.constant 0 : index
    %c0_95 = arith.constant 0 : index
    %282 = vector.load %arg14[%c0_94, %c0_95] : memref<1x128xf32, #tpu.memory_space<vmem>>, vector<1x128xf32>
    %c0_96 = arith.constant 0 : index
    %c0_97 = arith.constant 0 : index
    %283 = vector.load %arg15[%c0_96, %c0_97] : memref<1x128xf32, #tpu.memory_space<vmem>>, vector<1x128xf32>
    %cst_98 = arith.constant dense<0.000000e+00> : vector<8xf32>
    %284 = vector.multi_reduction <add>, %281, %cst_98 [1] : vector<8x128xf32> to vector<8xf32>
    %285 = vector.shape_cast %284 : vector<8xf32> to vector<8x1xf32>
    %cst_99 = arith.constant 1.280000e+02 : f32
    %286 = vector.broadcast %cst_99 : f32 to vector<8x1xf32>
    %287 = arith.divf %285, %286 : vector<8x1xf32>
    %288 = vector.broadcast %287 : vector<8x1xf32> to vector<8x128xf32>
    %289 = arith.subf %281, %288 : vector<8x128xf32>
    %290 = arith.mulf %289, %289 : vector<8x128xf32>
    %cst_100 = arith.constant dense<0.000000e+00> : vector<8xf32>
    %291 = vector.multi_reduction <add>, %290, %cst_100 [1] : vector<8x128xf32> to vector<8xf32>
    %292 = vector.shape_cast %291 : vector<8xf32> to vector<8x1xf32>
    %cst_101 = arith.constant 0.00787401571 : f32
    %293 = vector.broadcast %cst_101 : f32 to vector<8x1xf32>
    %294 = arith.mulf %292, %293 : vector<8x1xf32>
    %295 = vector.broadcast %287 : vector<8x1xf32> to vector<8x128xf32>
    %296 = arith.subf %281, %295 : vector<8x128xf32>
    %297 = vector.broadcast %282 : vector<1x128xf32> to vector<8x128xf32>
    %298 = arith.mulf %297, %296 : vector<8x128xf32>
    %299 = math.sqrt %294 : vector<8x1xf32>
    %cst_102 = arith.constant 9.99999997E-7 : f32
    %300 = vector.broadcast %cst_102 : f32 to vector<8x1xf32>
    %301 = arith.addf %299, %300 : vector<8x1xf32>
    %302 = tpu.reciprocal %301 {approx = true} : vector<8x1xf32> -> vector<8x1xf32>
    %303 = arith.mulf %301, %302 : vector<8x1xf32>
    %cst_103 = arith.constant 2.000000e+00 : f32
    %304 = vector.broadcast %cst_103 : f32 to vector<8x1xf32>
    %305 = arith.subf %304, %303 : vector<8x1xf32>
    %306 = arith.mulf %302, %305 : vector<8x1xf32>
    %307 = vector.broadcast %306 : vector<8x1xf32> to vector<8x128xf32>
    %308 = arith.mulf %298, %307 : vector<8x128xf32>
    %309 = vector.broadcast %283 : vector<1x128xf32> to vector<8x128xf32>
    %310 = arith.addf %308, %309 : vector<8x128xf32>
    %311 = arith.truncf %310 : vector<8x128xf32> to vector<8x128xbf16>
    %c0_104 = arith.constant 0 : index
    %c0_105 = arith.constant 0 : index
    %312 = vector.load %arg16[%c0_104, %c0_105] : memref<128x256xbf16, #tpu.memory_space<vmem>>, vector<128x256xbf16>
    %cst_106 = arith.constant dense<0.000000e+00> : vector<8x256xf32>
    %313 = tpu.matmul %311, %312, %cst_106 {dimension_numbers = #tpu.dot_dimension_numbers<[1], [0], [0], [1], [0, 0, 1, 1], [], []>} : vector<8x128xbf16>, vector<128x256xbf16>, vector<8x256xf32> -> vector<8x256xf32>
    %c0_107 = arith.constant 0 : index
    %c0_108 = arith.constant 0 : index
    %314 = vector.load %arg17[%c0_107, %c0_108] : memref<1x256xf32, #tpu.memory_space<vmem>>, vector<1x256xf32>
    %315 = vector.broadcast %314 : vector<1x256xf32> to vector<8x256xf32>
    %316 = arith.addf %313, %315 : vector<8x256xf32>
    %cst_109 = arith.constant 0.000000e+00 : f32
    %317 = vector.broadcast %cst_109 : f32 to vector<8x256xf32>
    %318 = arith.maximumf %316, %317 : vector<8x256xf32>
    %319 = arith.truncf %318 : vector<8x256xf32> to vector<8x256xbf16>
    %c0_110 = arith.constant 0 : index
    %c0_111 = arith.constant 0 : index
    %320 = vector.load %arg18[%c0_110, %c0_111] : memref<256x128xbf16, #tpu.memory_space<vmem>>, vector<256x128xbf16>
    %cst_112 = arith.constant dense<0.000000e+00> : vector<8x128xf32>
    %321 = tpu.matmul %319, %320, %cst_112 {dimension_numbers = #tpu.dot_dimension_numbers<[1], [0], [0], [1], [0, 0, 1, 1], [], []>} : vector<8x256xbf16>, vector<256x128xbf16>, vector<8x128xf32> -> vector<8x128xf32>
    %c0_113 = arith.constant 0 : index
    %c0_114 = arith.constant 0 : index
    %322 = vector.load %arg19[%c0_113, %c0_114] : memref<1x128xf32, #tpu.memory_space<vmem>>, vector<1x128xf32>
    %323 = vector.broadcast %322 : vector<1x128xf32> to vector<8x128xf32>
    %324 = arith.addf %321, %323 : vector<8x128xf32>
    %325 = arith.addf %281, %324 : vector<8x128xf32>
    %c0_115 = arith.constant 0 : index
    %c0_116 = arith.constant 0 : index
    %c0_117 = arith.constant 0 : index
    %326 = vector.load %arg20[%c0_115, %c0_116, %c0_117] : memref<1x8x128xf32, #tpu.memory_space<vmem>>, vector<1x8x128xf32>
    %327 = vector.shape_cast %326 : vector<1x8x128xf32> to vector<8x128xf32>
    %328 = vector.shape_cast %325 : vector<8x128xf32> to vector<1x8x128xf32>
    tpu.vector_store %arg20[%c0_115, %c0_116, %c0_117], %328 {strides = array<i32>} : memref<1x8x128xf32, #tpu.memory_space<vmem>>, vector<1x8x128xf32>,
    return
  }
  func.func @transform_0(%arg0: i32, %arg1: i32) -> (i32, i32, i32) {
    %c0_i32 = arith.constant 0 : i32
    %c0_i32_0 = arith.constant 0 : i32
    %c0_i32_1 = arith.constant 0 : i32
    return %arg0, %c0_i32, %c0_i32_0 : i32, i32, i32
  }
  func.func @transform_1(%arg0: i32, %arg1: i32) -> (i32, i32, i32) {
    %c0_i32 = arith.constant 0 : i32
    %c0_i32_0 = arith.constant 0 : i32
    %c0_i32_1 = arith.constant 0 : i32
    return %arg0, %c0_i32, %c0_i32_0 : i32, i32, i32
  }
  func.func @transform_2(%arg0: i32, %arg1: i32) -> (i32, i32) {
    %c0_i32 = arith.constant 0 : i32
    %c0_i32_0 = arith.constant 0 : i32
    %c0_i32_1 = arith.constant 0 : i32
    return %c0_i32, %c0_i32_0 : i32, i32
  }
  func.func @transform_3(%arg0: i32, %arg1: i32) -> (i32, i32) {
    %c0_i32 = arith.constant 0 : i32
    %c0_i32_0 = arith.constant 0 : i32
    %c0_i32_1 = arith.constant 0 : i32
    return %c0_i32, %c0_i32_0 : i32, i32
  }
  func.func @transform_4(%arg0: i32, %arg1: i32) -> (i32, i32) {
    %c0_i32 = arith.constant 0 : i32
    %c0_i32_0 = arith.constant 0 : i32
    %c0_i32_1 = arith.constant 0 : i32
    return %c0_i32, %c0_i32_0 : i32, i32
  }
  func.func @transform_5(%arg0: i32, %arg1: i32) -> (i32, i32) {
    %c0_i32 = arith.constant 0 : i32
    %c0_i32_0 = arith.constant 0 : i32
    %c0_i32_1 = arith.constant 0 : i32
    return %c0_i32, %c0_i32_0 : i32, i32
  }
  func.func @transform_6(%arg0: i32, %arg1: i32) -> (i32, i32) {
    %c0_i32 = arith.constant 0 : i32
    %c0_i32_0 = arith.constant 0 : i32
    %c0_i32_1 = arith.constant 0 : i32
    return %c0_i32, %c0_i32_0 : i32, i32
  }
  func.func @transform_7(%arg0: i32, %arg1: i32) -> (i32, i32) {
    %c0_i32 = arith.constant 0 : i32
    %c0_i32_0 = arith.constant 0 : i32
    %c0_i32_1 = arith.constant 0 : i32
    return %c0_i32, %c0_i32_0 : i32, i32
  }
  func.func @transform_8(%arg0: i32, %arg1: i32) -> (i32, i32) {
    %c0_i32 = arith.constant 0 : i32
    %c0_i32_0 = arith.constant 0 : i32
    %c0_i32_1 = arith.constant 0 : i32
    return %c0_i32, %c0_i32_0 : i32, i32
  }
  func.func @transform_9(%arg0: i32, %arg1: i32) -> (i32, i32) {
    %c0_i32 = arith.constant 0 : i32
    %c0_i32_0 = arith.constant 0 : i32
    %c0_i32_1 = arith.constant 0 : i32
    return %c0_i32, %c0_i32_0 : i32, i32
  }
  func.func @transform_10(%arg0: i32, %arg1: i32) -> (i32, i32) {
    %c0_i32 = arith.constant 0 : i32
    %c0_i32_0 = arith.constant 0 : i32
    %c0_i32_1 = arith.constant 0 : i32
    return %c0_i32, %c0_i32_0 : i32, i32
  }
  func.func @transform_11(%arg0: i32, %arg1: i32) -> (i32, i32) {
    %c0_i32 = arith.constant 0 : i32
    %c0_i32_0 = arith.constant 0 : i32
    %c0_i32_1 = arith.constant 0 : i32
    return %c0_i32, %c0_i32_0 : i32, i32
  }
  func.func @transform_12(%arg0: i32, %arg1: i32) -> (i32, i32) {
    %c0_i32 = arith.constant 0 : i32
    %c0_i32_0 = arith.constant 0 : i32
    %c0_i32_1 = arith.constant 0 : i32
    return %c0_i32, %c0_i32_0 : i32, i32
  }
  func.func @transform_13(%arg0: i32, %arg1: i32) -> (i32, i32) {
    %c0_i32 = arith.constant 0 : i32
    %c0_i32_0 = arith.constant 0 : i32
    %c0_i32_1 = arith.constant 0 : i32
    return %c0_i32, %c0_i32_0 : i32, i32
  }
  func.func @transform_14(%arg0: i32, %arg1: i32) -> (i32, i32) {
    %c0_i32 = arith.constant 0 : i32
    %c0_i32_0 = arith.constant 0 : i32
    %c0_i32_1 = arith.constant 0 : i32
    return %c0_i32, %c0_i32_0 : i32, i32
  }
  func.func @transform_15(%arg0: i32, %arg1: i32) -> (i32, i32) {
    %c0_i32 = arith.constant 0 : i32
    %c0_i32_0 = arith.constant 0 : i32
    %c0_i32_1 = arith.constant 0 : i32
    return %c0_i32, %c0_i32_0 : i32, i32
  }
  func.func @transform_16(%arg0: i32, %arg1: i32) -> (i32, i32) {
    %c0_i32 = arith.constant 0 : i32
    %c0_i32_0 = arith.constant 0 : i32
    %c0_i32_1 = arith.constant 0 : i32
    return %c0_i32, %c0_i32_0 : i32, i32
  }
  func.func @transform_17(%arg0: i32, %arg1: i32) -> (i32, i32) {
    %c0_i32 = arith.constant 0 : i32
    %c0_i32_0 = arith.constant 0 : i32
    %c0_i32_1 = arith.constant 0 : i32
    return %c0_i32, %c0_i32_0 : i32, i32
  }
  func.func @transform_18(%arg0: i32, %arg1: i32) -> (i32, i32, i32) {
    %c0_i32 = arith.constant 0 : i32
    %c0_i32_0 = arith.constant 0 : i32
    return %arg0, %arg1, %c0_i32 : i32, i32, i32
  }
}

</mosaic_0001>

<llo_original>
// kernel: tpu_custom_call.1
$region0: #{tpu_custom_call.1}
  #allocation0 [shape = 'u32[]', space=smem, size = 0x4, offset = 0x4, fixed_abs, tag = 'smem constant byte address 0x4 - core index']
  #allocation1 [shape = 'u32[144,128]{1,0:T(1,128)}', space=vmem, size = 0x12000, scoped, tag = 'internal scratch']
  #allocation2 [shape = 'bf16[8,128]{1,0:T(8,128)(2,1)}', space=vmem, size = 0x800, scoped, tag = 'scratch operand']
  #allocation3 [shape = 'bf16[8,128]{1,0:T(8,128)(2,1)}', space=vmem, size = 0x800, scoped, tag = 'scratch operand']
  %s0 = inlined_call_operand.hbm [shape: f32[2,8,128], index: 0, kind: input, shape index: {}]
  %s1 = inlined_call_operand.vmem [shape: s32[2,1,8], index: 1, kind: input, shape index: {}]
  %s2 = inlined_call_operand.hbm [shape: bf16[128,128], index: 2, kind: input, shape index: {}]
  %s3 = inlined_call_operand.vmem [shape: f32[1,128], index: 3, kind: input, shape index: {}]
  %s4 = inlined_call_operand.hbm [shape: bf16[128,128], index: 4, kind: input, shape index: {}]
  %s5 = inlined_call_operand.vmem [shape: f32[1,128], index: 5, kind: input, shape index: {}]
  %s6 = inlined_call_operand.hbm [shape: bf16[128,128], index: 6, kind: input, shape index: {}]
  %s7 = inlined_call_operand.vmem [shape: f32[1,128], index: 7, kind: input, shape index: {}]
  %s8 = inlined_call_operand.hbm [shape: bf16[128,128], index: 8, kind: input, shape index: {}]
  %s9 = inlined_call_operand.vmem [shape: f32[1,128], index: 9, kind: input, shape index: {}]
  %s10 = inlined_call_operand.vmem [shape: f32[1,128], index: 10, kind: input, shape index: {}]
  %s11 = inlined_call_operand.vmem [shape: f32[1,128], index: 11, kind: input, shape index: {}]
  %s12 = inlined_call_operand.vmem [shape: f32[1,128], index: 12, kind: input, shape index: {}]
  %s13 = inlined_call_operand.vmem [shape: f32[1,128], index: 13, kind: input, shape index: {}]
  %s14 = inlined_call_operand.hbm [shape: bf16[128,256], index: 14, kind: input, shape index: {}]
  %s15 = inlined_call_operand.vmem [shape: f32[1,256], index: 15, kind: input, shape index: {}]
  %s16 = inlined_call_operand.hbm [shape: bf16[256,128], index: 16, kind: input, shape index: {}]
  %s17 = inlined_call_operand.vmem [shape: f32[1,128], index: 17, kind: input, shape index: {}]
  %s18 = inlined_call_operand.hbm [shape: f32[2,8,128], index: 18, kind: output, shape index: {}]
  %s19 = sld [smem:[#allocation0]]
  $region137: #{tpu_custom_call.1} parent=0
    _
  %s21 = ssub.s32 1, %s19
  %s22 = scalar_select 0, %s21, %s19
  $region1: #{tpu_custom_call.1} parent=0
    #allocation4 [shape = 'u8[8192]{0}', space=vmem, size = 0x2000, scoped, tag = 'input window, operand 0']
    #allocation5 [shape = 's32[2]{0}', space=sflag, size = 0x8, scoped, tag = 'scoped memory for tpu_custom_call.1']
    #allocation6 [shape = 's32[2]{0}', space=sflag, size = 0x8, scoped, tag = 'scoped memory for tpu_custom_call.1']
    #allocation7 [shape = 'u8[32768]{0}', space=vmem, size = 0x8000, scoped, tag = 'input window, operand 2, single buffered']
    #allocation8 [shape = 's32[1]{0}', space=sflag, size = 0x4, scoped, tag = 'scoped memory for tpu_custom_call.1']
    #allocation9 [shape = 'u8[32768]{0}', space=vmem, size = 0x8000, scoped, tag = 'input window, operand 4, single buffered']
    #allocation10 [shape = 'u8[32768]{0}', space=vmem, size = 0x8000, scoped, tag = 'input window, operand 6, single buffered']
    #allocation11 [shape = 's32[1]{0}', space=sflag, size = 0x4, scoped, tag = 'scoped memory for tpu_custom_call.1']
    #allocation12 [shape = 'u8[32768]{0}', space=vmem, size = 0x8000, scoped, tag = 'input window, operand 8, single buffered']
    #allocation13 [shape = 'u8[65536]{0}', space=vmem, size = 0x10000, scoped, tag = 'input window, operand 14, single buffered']
    #allocation14 [shape = 's32[1]{0}', space=sflag, size = 0x4, scoped, tag = 'scoped memory for tpu_custom_call.1']
    #allocation15 [shape = 'u8[65536]{0}', space=vmem, size = 0x10000, scoped, tag = 'input window, operand 16, single buffered']
    #allocation16 [shape = 'u8[8192]{0}', space=vmem, size = 0x2000, scoped, tag = 'output window, operand 0']
    %23 = vsyncpa [#allocation5], 0
    %s24 = scalar_lea.sflag [#allocation5], 1
    %25 = vsyncpa %s24, 0
    %26 = vsyncpa [#allocation8], 0
    %27 = vsyncpa [#allocation11], 0
    %28 = vsyncpa [#allocation14], 0
    %29 = vsyncpa [#allocation6], 0
    %s30 = scalar_lea.sflag [#allocation6], 1
    %31 = vsyncpa %s30, 0
    loop: start=0, step=1, limit=4
    $region2: #{tpu_custom_call.1} parent=1 // loop_pre_header
      _
    $region3: #{tpu_custom_call.1} parent=1 // loop_header
      %s33 = sphi 0, %s37
      %p34 = scmp.ge.s32.totalorder %s33, 4
      %s40 = sphi 0, %s52
      %s41 = sphi 0, %s48
      %s42 = sphi 0, %s40
      %s43 = sphi 0, %s41
      %s44 = sphi 0, %s42
      %s45 = sphi 0, %s43
      %s55 = sphi 0, %s57
      %s58 = sphi 0, %s55
      %s59 = sphi 0, %s58
      %s75 = sphi 0, %s59
      %s81 = sphi 0, %s83
      %s84 = sphi 0, %s81
      %s85 = sphi 0, %s84
      %s101 = sphi 0, %s85
      %s105 = sphi 0, %s105
      %s107 = sphi 0, %s105
      %s108 = sphi 0, %s107
      %s122 = sphi 0, %s108
      %s126 = sphi 0, %s126
      %s128 = sphi 0, %s126
      %s129 = sphi 0, %s128
      %s143 = sphi 0, %s129
      %s147 = sphi 0, %s147
      %s149 = sphi 0, %s147
      %s150 = sphi 0, %s149
      %s164 = sphi 0, %s150
      %s168 = sphi 0, %s168
      %s170 = sphi 0, %s168
      %s171 = sphi 0, %s170
      %s185 = sphi 0, %s171
      %s189 = sphi 0, %s189
      %s191 = sphi 0, %s189
      %s192 = sphi 0, %s191
      %s206 = sphi 0, %s192
      %s210 = sphi 0, %s210
      %s212 = sphi 0, %s210
      %s213 = sphi 0, %s212
      %s227 = sphi 0, %s213
      %s231 = sphi 0, %s231
      %s233 = sphi 0, %s231
      %s234 = sphi 0, %s233
      %s248 = sphi 0, %s234
      %s252 = sphi 0, %s252
      %s254 = sphi 0, %s252
      %s255 = sphi 0, %s254
      %s269 = sphi 0, %s255
      %s273 = sphi 0, %s273
      %s275 = sphi 0, %s273
      %s276 = sphi 0, %s275
      %s290 = sphi 0, %s276
      %s294 = sphi 0, %s294
      %s296 = sphi 0, %s294
      %s297 = sphi 0, %s296
      %s311 = sphi 0, %s297
      %s315 = sphi 0, %s315
      %s317 = sphi 0, %s315
      %s318 = sphi 0, %s317
      %s332 = sphi 0, %s318
      %s336 = sphi 0, %s336
      %s338 = sphi 0, %s336
      %s339 = sphi 0, %s338
      %s353 = sphi 0, %s339
      %s357 = sphi 0, %s357
      %s359 = sphi 0, %s357
      %s360 = sphi 0, %s359
      %s374 = sphi 0, %s360
      %s378 = sphi 0, %s378
      %s380 = sphi 0, %s378
      %s381 = sphi 0, %s380
      %s395 = sphi 0, %s381
      %s399 = sphi 0, %s399
      %s401 = sphi 0, %s399
      %s402 = sphi 0, %s401
      %s416 = sphi 0, %s402
      %s420 = sphi 0, %s420
      %s422 = sphi 0, %s420
      %s423 = sphi 0, %s422
      %s437 = sphi 0, %s423
      %s445 = sphi 0, %s447
      %s448 = sphi 0, %s445
      %s449 = sphi 0, %s448
      %s465 = sphi 0, %s449
    $region4: #{tpu_custom_call.1} parent=1 // loop_header_branch
      %36 = sbr.rel (%p34) target = $region8
    $region5: #{tpu_custom_call.1} parent=1 // loop_body
      %s38 = ssub.s32 %s33, 1
      %s39 = ssub.s32 %s33, 2
      %s46 = sadd.s32 1, %s41
      %p47 = scmp.ge.s32.totalorder %s46, 1
      %s48 = scalar_select %p47, 0, %s46
      %s49 = sadd.s32 1, %s40
      %s50 = scalar_select %p47, %s49, %s40
      %p51 = scmp.ge.s32.totalorder %s50, 2
      %s52 = scalar_select %p51, 0, %s50
      %s53 = ssub.s32 %s40, %s52
      %p54 = scmp.eq.s32.totalorder %s53, 0
      %s56 = sadd.s32 %s55, 1
      %s57 = scalar_select %p54, %s55, %s56
      %p60 = pneg %p54
      %p61 = scmp.eq.s32.totalorder %s33, 1
      %p62 = por %p60, %p61
      %p63 = scmp.ne.s32.totalorder %s55, %s58
      %p64 = scmp.eq.s32.totalorder %s33, 0
      %p65 = por %p63, %p64
      %p66 = scmp.ne.s32.totalorder %s55, %s58
      %p67 = scmp.eq.s32.totalorder %s38, 1
      %p68 = por %p66, %p67
      %p69 = scmp.ne.s32.totalorder %s58, %s59
      %p70 = scmp.eq.s32.totalorder %s38, 0
      %p71 = por %p69, %p70
      %p72 = scmp.ne.s32.totalorder %s58, %s59
      %p73 = scmp.eq.s32.totalorder %s39, 1
      %p74 = por %p72, %p73
      %p76 = scmp.ne.s32.totalorder %s59, %s75
      %p77 = scmp.eq.s32.totalorder %s39, 0
      %p78 = por %p76, %p77
      %s79 = ssub.s32 %s40, %s52
      %p80 = scmp.eq.s32.totalorder %s79, 0
      %s82 = sadd.s32 %s81, 1
      %s83 = scalar_select %p80, %s81, %s82
      %p86 = pneg %p80
      %p87 = scmp.eq.s32.totalorder %s33, 1
      %p88 = por %p86, %p87
      %p89 = scmp.ne.s32.totalorder %s81, %s84
      %p90 = scmp.eq.s32.totalorder %s33, 0
      %p91 = por %p89, %p90
      %p92 = scmp.ne.s32.totalorder %s81, %s84
      %p93 = scmp.eq.s32.totalorder %s38, 1
      %p94 = por %p92, %p93
      %p95 = scmp.ne.s32.totalorder %s84, %s85
      %p96 = scmp.eq.s32.totalorder %s38, 0
      %p97 = por %p95, %p96
      %p98 = scmp.ne.s32.totalorder %s84, %s85
      %p99 = scmp.eq.s32.totalorder %s39, 1
      %p100 = por %p98, %p99
      %p102 = scmp.ne.s32.totalorder %s85, %s101
      %p103 = scmp.eq.s32.totalorder %s39, 0
      %p104 = por %p102, %p103
      %s106 = sadd.s32 %s105, 1
      %p109 = scmp.eq.s32.totalorder %s33, 1
      %p110 = scmp.ne.s32.totalorder %s105, %s107
      %p111 = scmp.eq.s32.totalorder %s33, 0
      %p112 = por %p110, %p111
      %p113 = scmp.ne.s32.totalorder %s105, %s107
      %p114 = scmp.eq.s32.totalorder %s38, 1
      %p115 = por %p113, %p114
      %p116 = scmp.ne.s32.totalorder %s107, %s108
      %p117 = scmp.eq.s32.totalorder %s38, 0
      %p118 = por %p116, %p117
      %p119 = scmp.ne.s32.totalorder %s107, %s108
      %p120 = scmp.eq.s32.totalorder %s39, 1
      %p121 = por %p119, %p120
      %p123 = scmp.ne.s32.totalorder %s108, %s122
      %p124 = scmp.eq.s32.totalorder %s39, 0
      %p125 = por %p123, %p124
      %s127 = sadd.s32 %s126, 1
      %p130 = scmp.eq.s32.totalorder %s33, 1
      %p131 = scmp.ne.s32.totalorder %s126, %s128
      %p132 = scmp.eq.s32.totalorder %s33, 0
      %p133 = por %p131, %p132
      %p134 = scmp.ne.s32.totalorder %s126, %s128
      %p135 = scmp.eq.s32.totalorder %s38, 1
      %p136 = por %p134, %p135
      %p137 = scmp.ne.s32.totalorder %s128, %s129
      %p138 = scmp.eq.s32.totalorder %s38, 0
      %p139 = por %p137, %p138
      %p140 = scmp.ne.s32.totalorder %s128, %s129
      %p141 = scmp.eq.s32.totalorder %s39, 1
      %p142 = por %p140, %p141
      %p144 = scmp.ne.s32.totalorder %s129, %s143
      %p145 = scmp.eq.s32.totalorder %s39, 0
      %p146 = por %p144, %p145
      %s148 = sadd.s32 %s147, 1
      %p151 = scmp.eq.s32.totalorder %s33, 1
      %p152 = scmp.ne.s32.totalorder %s147, %s149
      %p153 = scmp.eq.s32.totalorder %s33, 0
      %p154 = por %p152, %p153
      %p155 = scmp.ne.s32.totalorder %s147, %s149
      %p156 = scmp.eq.s32.totalorder %s38, 1
      %p157 = por %p155, %p156
      %p158 = scmp.ne.s32.totalorder %s149, %s150
      %p159 = scmp.eq.s32.totalorder %s38, 0
      %p160 = por %p158, %p159
      %p161 = scmp.ne.s32.totalorder %s149, %s150
      %p162 = scmp.eq.s32.totalorder %s39, 1
      %p163 = por %p161, %p162
      %p165 = scmp.ne.s32.totalorder %s150, %s164
      %p166 = scmp.eq.s32.totalorder %s39, 0
      %p167 = por %p165, %p166
      %s169 = sadd.s32 %s168, 1
      %p172 = scmp.eq.s32.totalorder %s33, 1
      %p173 = scmp.ne.s32.totalorder %s168, %s170
      %p174 = scmp.eq.s32.totalorder %s33, 0
      %p175 = por %p173, %p174
      %p176 = scmp.ne.s32.totalorder %s168, %s170
      %p177 = scmp.eq.s32.totalorder %s38, 1
      %p178 = por %p176, %p177
      %p179 = scmp.ne.s32.totalorder %s170, %s171
      %p180 = scmp.eq.s32.totalorder %s38, 0
      %p181 = por %p179, %p180
      %p182 = scmp.ne.s32.totalorder %s170, %s171
      %p183 = scmp.eq.s32.totalorder %s39, 1
      %p184 = por %p182, %p183
      %p186 = scmp.ne.s32.totalorder %s171, %s185
      %p187 = scmp.eq.s32.totalorder %s39, 0
      %p188 = por %p186, %p187
      %s190 = sadd.s32 %s189, 1
      %p193 = scmp.eq.s32.totalorder %s33, 1
      %p194 = scmp.ne.s32.totalorder %s189, %s191
      %p195 = scmp.eq.s32.totalorder %s33, 0
      %p196 = por %p194, %p195
      %p197 = scmp.ne.s32.totalorder %s189, %s191
      %p198 = scmp.eq.s32.totalorder %s38, 1
      %p199 = por %p197, %p198
      %p200 = scmp.ne.s32.totalorder %s191, %s192
      %p201 = scmp.eq.s32.totalorder %s38, 0
      %p202 = por %p200, %p201
      %p203 = scmp.ne.s32.totalorder %s191, %s192
      %p204 = scmp.eq.s32.totalorder %s39, 1
      %p205 = por %p203, %p204
      %p207 = scmp.ne.s32.totalorder %s192, %s206
      %p208 = scmp.eq.s32.totalorder %s39, 0
      %p209 = por %p207, %p208
      %s211 = sadd.s32 %s210, 1
      %p214 = scmp.eq.s32.totalorder %s33, 1
      %p215 = scmp.ne.s32.totalorder %s210, %s212
      %p216 = scmp.eq.s32.totalorder %s33, 0
      %p217 = por %p215, %p216
      %p218 = scmp.ne.s32.totalorder %s210, %s212
      %p219 = scmp.eq.s32.totalorder %s38, 1
      %p220 = por %p218, %p219
      %p221 = scmp.ne.s32.totalorder %s212, %s213
      %p222 = scmp.eq.s32.totalorder %s38, 0
      %p223 = por %p221, %p222
      %p224 = scmp.ne.s32.totalorder %s212, %s213
      %p225 = scmp.eq.s32.totalorder %s39, 1
      %p226 = por %p224, %p225
      %p228 = scmp.ne.s32.totalorder %s213, %s227
      %p229 = scmp.eq.s32.totalorder %s39, 0
      %p230 = por %p228, %p229
      %s232 = sadd.s32 %s231, 1
      %p235 = scmp.eq.s32.totalorder %s33, 1
      %p236 = scmp.ne.s32.totalorder %s231, %s233
      %p237 = scmp.eq.s32.totalorder %s33, 0
      %p238 = por %p236, %p237
      %p239 = scmp.ne.s32.totalorder %s231, %s233
      %p240 = scmp.eq.s32.totalorder %s38, 1
      %p241 = por %p239, %p240
      %p242 = scmp.ne.s32.totalorder %s233, %s234
      %p243 = scmp.eq.s32.totalorder %s38, 0
      %p244 = por %p242, %p243
      %p245 = scmp.ne.s32.totalorder %s233, %s234
      %p246 = scmp.eq.s32.totalorder %s39, 1
      %p247 = por %p245, %p246
      %p249 = scmp.ne.s32.totalorder %s234, %s248
      %p250 = scmp.eq.s32.totalorder %s39, 0
      %p251 = por %p249, %p250
      %s253 = sadd.s32 %s252, 1
      %p256 = scmp.eq.s32.totalorder %s33, 1
      %p257 = scmp.ne.s32.totalorder %s252, %s254
      %p258 = scmp.eq.s32.totalorder %s33, 0
      %p259 = por %p257, %p258
      %p260 = scmp.ne.s32.totalorder %s252, %s254
      %p261 = scmp.eq.s32.totalorder %s38, 1
      %p262 = por %p260, %p261
      %p263 = scmp.ne.s32.totalorder %s254, %s255
      %p264 = scmp.eq.s32.totalorder %s38, 0
      %p265 = por %p263, %p264
      %p266 = scmp.ne.s32.totalorder %s254, %s255
      %p267 = scmp.eq.s32.totalorder %s39, 1
      %p268 = por %p266, %p267
      %p270 = scmp.ne.s32.totalorder %s255, %s269
      %p271 = scmp.eq.s32.totalorder %s39, 0
      %p272 = por %p270, %p271
      %s274 = sadd.s32 %s273, 1
      %p277 = scmp.eq.s32.totalorder %s33, 1
      %p278 = scmp.ne.s32.totalorder %s273, %s275
      %p279 = scmp.eq.s32.totalorder %s33, 0
      %p280 = por %p278, %p279
      %p281 = scmp.ne.s32.totalorder %s273, %s275
      %p282 = scmp.eq.s32.totalorder %s38, 1
      %p283 = por %p281, %p282
      %p284 = scmp.ne.s32.totalorder %s275, %s276
      %p285 = scmp.eq.s32.totalorder %s38, 0
      %p286 = por %p284, %p285
      %p287 = scmp.ne.s32.totalorder %s275, %s276
      %p288 = scmp.eq.s32.totalorder %s39, 1
      %p289 = por %p287, %p288
      %p291 = scmp.ne.s32.totalorder %s276, %s290
      %p292 = scmp.eq.s32.totalorder %s39, 0
      %p293 = por %p291, %p292
      %s295 = sadd.s32 %s294, 1
      %p298 = scmp.eq.s32.totalorder %s33, 1
      %p299 = scmp.ne.s32.totalorder %s294, %s296
      %p300 = scmp.eq.s32.totalorder %s33, 0
      %p301 = por %p299, %p300
      %p302 = scmp.ne.s32.totalorder %s294, %s296
      %p303 = scmp.eq.s32.totalorder %s38, 1
      %p304 = por %p302, %p303
      %p305 = scmp.ne.s32.totalorder %s296, %s297
      %p306 = scmp.eq.s32.totalorder %s38, 0
      %p307 = por %p305, %p306
      %p308 = scmp.ne.s32.totalorder %s296, %s297
      %p309 = scmp.eq.s32.totalorder %s39, 1
      %p310 = por %p308, %p309
      %p312 = scmp.ne.s32.totalorder %s297, %s311
      %p313 = scmp.eq.s32.totalorder %s39, 0
      %p314 = por %p312, %p313
      %s316 = sadd.s32 %s315, 1
      %p319 = scmp.eq.s32.totalorder %s33, 1
      %p320 = scmp.ne.s32.totalorder %s315, %s317
      %p321 = scmp.eq.s32.totalorder %s33, 0
      %p322 = por %p320, %p321
      %p323 = scmp.ne.s32.totalorder %s315, %s317
      %p324 = scmp.eq.s32.totalorder %s38, 1
      %p325 = por %p323, %p324
      %p326 = scmp.ne.s32.totalorder %s317, %s318
      %p327 = scmp.eq.s32.totalorder %s38, 0
      %p328 = por %p326, %p327
      %p329 = scmp.ne.s32.totalorder %s317, %s318
      %p330 = scmp.eq.s32.totalorder %s39, 1
      %p331 = por %p329, %p330
      %p333 = scmp.ne.s32.totalorder %s318, %s332
      %p334 = scmp.eq.s32.totalorder %s39, 0
      %p335 = por %p333, %p334
      %s337 = sadd.s32 %s336, 1
      %p340 = scmp.eq.s32.totalorder %s33, 1
      %p341 = scmp.ne.s32.totalorder %s336, %s338
      %p342 = scmp.eq.s32.totalorder %s33, 0
      %p343 = por %p341, %p342
      %p344 = scmp.ne.s32.totalorder %s336, %s338
      %p345 = scmp.eq.s32.totalorder %s38, 1
      %p346 = por %p344, %p345
      %p347 = scmp.ne.s32.totalorder %s338, %s339
      %p348 = scmp.eq.s32.totalorder %s38, 0
      %p349 = por %p347, %p348
      %p350 = scmp.ne.s32.totalorder %s338, %s339
      %p351 = scmp.eq.s32.totalorder %s39, 1
      %p352 = por %p350, %p351
      %p354 = scmp.ne.s32.totalorder %s339, %s353
      %p355 = scmp.eq.s32.totalorder %s39, 0
      %p356 = por %p354, %p355
      %s358 = sadd.s32 %s357, 1
      %p361 = scmp.eq.s32.totalorder %s33, 1
      %p362 = scmp.ne.s32.totalorder %s357, %s359
      %p363 = scmp.eq.s32.totalorder %s33, 0
      %p364 = por %p362, %p363
      %p365 = scmp.ne.s32.totalorder %s357, %s359
      %p366 = scmp.eq.s32.totalorder %s38, 1
      %p367 = por %p365, %p366
      %p368 = scmp.ne.s32.totalorder %s359, %s360
      %p369 = scmp.eq.s32.totalorder %s38, 0
      %p370 = por %p368, %p369
      %p371 = scmp.ne.s32.totalorder %s359, %s360
      %p372 = scmp.eq.s32.totalorder %s39, 1
      %p373 = por %p371, %p372
      %p375 = scmp.ne.s32.totalorder %s360, %s374
      %p376 = scmp.eq.s32.totalorder %s39, 0
      %p377 = por %p375, %p376
      %s379 = sadd.s32 %s378, 1
      %p382 = scmp.eq.s32.totalorder %s33, 1
      %p383 = scmp.ne.s32.totalorder %s378, %s380
      %p384 = scmp.eq.s32.totalorder %s33, 0
      %p385 = por %p383, %p384
      %p386 = scmp.ne.s32.totalorder %s378, %s380
      %p387 = scmp.eq.s32.totalorder %s38, 1
      %p388 = por %p386, %p387
      %p389 = scmp.ne.s32.totalorder %s380, %s381
      %p390 = scmp.eq.s32.totalorder %s38, 0
      %p391 = por %p389, %p390
      %p392 = scmp.ne.s32.totalorder %s380, %s381
      %p393 = scmp.eq.s32.totalorder %s39, 1
      %p394 = por %p392, %p393
      %p396 = scmp.ne.s32.totalorder %s381, %s395
      %p397 = scmp.eq.s32.totalorder %s39, 0
      %p398 = por %p396, %p397
      %s400 = sadd.s32 %s399, 1
      %p403 = scmp.eq.s32.totalorder %s33, 1
      %p404 = scmp.ne.s32.totalorder %s399, %s401
      %p405 = scmp.eq.s32.totalorder %s33, 0
      %p406 = por %p404, %p405
      %p407 = scmp.ne.s32.totalorder %s399, %s401
      %p408 = scmp.eq.s32.totalorder %s38, 1
      %p409 = por %p407, %p408
      %p410 = scmp.ne.s32.totalorder %s401, %s402
      %p411 = scmp.eq.s32.totalorder %s38, 0
      %p412 = por %p410, %p411
      %p413 = scmp.ne.s32.totalorder %s401, %s402
      %p414 = scmp.eq.s32.totalorder %s39, 1
      %p415 = por %p413, %p414
      %p417 = scmp.ne.s32.totalorder %s402, %s416
      %p418 = scmp.eq.s32.totalorder %s39, 0
      %p419 = por %p417, %p418
      %s421 = sadd.s32 %s420, 1
      %p424 = scmp.eq.s32.totalorder %s33, 1
      %p425 = scmp.ne.s32.totalorder %s420, %s422
      %p426 = scmp.eq.s32.totalorder %s33, 0
      %p427 = por %p425, %p426
      %p428 = scmp.ne.s32.totalorder %s420, %s422
      %p429 = scmp.eq.s32.totalorder %s38, 1
      %p430 = por %p428, %p429
      %p431 = scmp.ne.s32.totalorder %s422, %s423
      %p432 = scmp.eq.s32.totalorder %s38, 0
      %p433 = por %p431, %p432
      %p434 = scmp.ne.s32.totalorder %s422, %s423
      %p435 = scmp.eq.s32.totalorder %s39, 1
      %p436 = por %p434, %p435
      %p438 = scmp.ne.s32.totalorder %s423, %s437
      %p439 = scmp.eq.s32.totalorder %s39, 0
      %p440 = por %p438, %p439
      %s441 = ssub.s32 %s40, %s52
      %s442 = ssub.s32 %s41, %s48
      %s443 = sor.u32 %s441, %s442
      %p444 = scmp.eq.s32.totalorder %s443, 0
      %s446 = sadd.s32 %s445, 1
      %s447 = scalar_select %p444, %s445, %s446
      %p450 = pneg %p444
      %p451 = scmp.eq.s32.totalorder %s33, 1
      %p452 = por %p450, %p451
      %p453 = scmp.ne.s32.totalorder %s445, %s448
      %p454 = scmp.eq.s32.totalorder %s33, 0
      %p455 = por %p453, %p454
      %p456 = scmp.ne.s32.totalorder %s445, %s448
      %p457 = scmp.eq.s32.totalorder %s38, 1
      %p458 = por %p456, %p457
      %p459 = scmp.ne.s32.totalorder %s448, %s449
      %p460 = scmp.eq.s32.totalorder %s38, 0
      %p461 = por %p459, %p460
      %p462 = scmp.ne.s32.totalorder %s448, %s449
      %p463 = scmp.eq.s32.totalorder %s39, 1
      %p464 = por %p462, %p463
      %p466 = scmp.ne.s32.totalorder %s449, %s465
      %p467 = scmp.eq.s32.totalorder %s39, 0
      %p468 = por %p466, %p467
      %p469 = scmp.le.s32.totalorder 1, %s33
      %p470 = scmp.lt.s32.totalorder %s33, 3
      %p471 = pnand %p469, %p470
      %p472 = pneg %p471
      // Predicated region
      $region9: #{tpu_custom_call.1} parent=5 // pred_check
        _
      $region10: #{tpu_custom_call.1} parent=5 // pred_check_branch
        %474 = sbr.rel (%p471) target = $region12
      $region11: #{tpu_custom_call.1} parent=5 // pred_region
        %s475 = ssub.s32 %s33, 1
        // Predicated region
        $region13: #{tpu_custom_call.1} parent=11 // pred_check
          %p476 = pneg %p118
        $region14: #{tpu_custom_call.1} parent=11 // pred_check_branch
          %478 = sbr.rel (%p476) target = $region16
        $region15: #{tpu_custom_call.1} parent=11 // pred_region
          %s480 = ssub.s32 1024, 1024
          %481 = vsyncadd [#allocation8], %s480
          %s482 = sshll.u32 [#allocation7], 4
          %s483 = int_to_ptr.vmem [resolvable:$true] %s482
          %488 = dma.hbm_to_vmem [thread:$0]  %s2, 1024, %s483, [#allocation8], 64, 64, 4
        $region16: #{tpu_custom_call.1} parent=11 // pred_fallthru
          _
        // Predicated region
        $region17: #{tpu_custom_call.1} parent=11 // pred_check
          %p489 = pneg %p139
        $region18: #{tpu_custom_call.1} parent=11 // pred_check_branch
          %491 = sbr.rel (%p489) target = $region20
        $region19: #{tpu_custom_call.1} parent=11 // pred_region
          _
        $region20: #{tpu_custom_call.1} parent=11 // pred_fallthru
          _
        // Predicated region
        $region21: #{tpu_custom_call.1} parent=11 // pred_check
          %p492 = pneg %p160
        $region22: #{tpu_custom_call.1} parent=11 // pred_check_branch
          %494 = sbr.rel (%p492) target = $region24
        $region23: #{tpu_custom_call.1} parent=11 // pred_region
          %s496 = ssub.s32 1024, 1024
          %497 = vsyncadd [#allocation8], %s496
          %s498 = sshll.u32 [#allocation9], 4
          %s499 = int_to_ptr.vmem [resolvable:$true] %s498
          %504 = dma.hbm_to_vmem [thread:$0]  %s4, 1024, %s499, [#allocation8], 64, 64, 4
        $region24: #{tpu_custom_call.1} parent=11 // pred_fallthru
          _
        // Predicated region
        $region25: #{tpu_custom_call.1} parent=11 // pred_check
          %p505 = pneg %p181
        $region26: #{tpu_custom_call.1} parent=11 // pred_check_branch
          %507 = sbr.rel (%p505) target = $region28
        $region27: #{tpu_custom_call.1} parent=11 // pred_region
          _
        $region28: #{tpu_custom_call.1} parent=11 // pred_fallthru
          _
        // Predicated region
        $region29: #{tpu_custom_call.1} parent=11 // pred_check
          %p508 = pneg %p202
        $region30: #{tpu_custom_call.1} parent=11 // pred_check_branch
          %510 = sbr.rel (%p508) target = $region32
        $region31: #{tpu_custom_call.1} parent=11 // pred_region
          %s512 = ssub.s32 1024, 1024
          %513 = vsyncadd [#allocation11], %s512
          %s514 = sshll.u32 [#allocation10], 4
          %s515 = int_to_ptr.vmem [resolvable:$true] %s514
          %520 = dma.hbm_to_vmem [thread:$0]  %s6, 1024, %s515, [#allocation11], 64, 64, 4
        $region32: #{tpu_custom_call.1} parent=11 // pred_fallthru
          _
        // Predicated region
        $region33: #{tpu_custom_call.1} parent=11 // pred_check
          %p521 = pneg %p223
        $region34: #{tpu_custom_call.1} parent=11 // pred_check_branch
          %523 = sbr.rel (%p521) target = $region36
        $region35: #{tpu_custom_call.1} parent=11 // pred_region
          _
        $region36: #{tpu_custom_call.1} parent=11 // pred_fallthru
          _
        // Predicated region
        $region37: #{tpu_custom_call.1} parent=11 // pred_check
          %p524 = pneg %p244
        $region38: #{tpu_custom_call.1} parent=11 // pred_check_branch
          %526 = sbr.rel (%p524) target = $region40
        $region39: #{tpu_custom_call.1} parent=11 // pred_region
          %s528 = ssub.s32 1024, 1024
          %529 = vsyncadd [#allocation11], %s528
          %s530 = sshll.u32 [#allocation12], 4
          %s531 = int_to_ptr.vmem [resolvable:$true] %s530
          %536 = dma.hbm_to_vmem [thread:$0]  %s8, 1024, %s531, [#allocation11], 64, 64, 4
        $region40: #{tpu_custom_call.1} parent=11 // pred_fallthru
          _
        // Predicated region
        $region41: #{tpu_custom_call.1} parent=11 // pred_check
          %p537 = pneg %p265
        $region42: #{tpu_custom_call.1} parent=11 // pred_check_branch
          %539 = sbr.rel (%p537) target = $region44
        $region43: #{tpu_custom_call.1} parent=11 // pred_region
          _
        $region44: #{tpu_custom_call.1} parent=11 // pred_fallthru
          _
        // Predicated region
        $region45: #{tpu_custom_call.1} parent=11 // pred_check
          %p540 = pneg %p286
        $region46: #{tpu_custom_call.1} parent=11 // pred_check_branch
          %542 = sbr.rel (%p540) target = $region48
        $region47: #{tpu_custom_call.1} parent=11 // pred_region
          _
        $region48: #{tpu_custom_call.1} parent=11 // pred_fallthru
          _
        // Predicated region
        $region49: #{tpu_custom_call.1} parent=11 // pred_check
          %p543 = pneg %p307
        $region50: #{tpu_custom_call.1} parent=11 // pred_check_branch
          %545 = sbr.rel (%p543) target = $region52
        $region51: #{tpu_custom_call.1} parent=11 // pred_region
          _
        $region52: #{tpu_custom_call.1} parent=11 // pred_fallthru
          _
        // Predicated region
        $region53: #{tpu_custom_call.1} parent=11 // pred_check
          %p546 = pneg %p328
        $region54: #{tpu_custom_call.1} parent=11 // pred_check_branch
          %548 = sbr.rel (%p546) target = $region56
        $region55: #{tpu_custom_call.1} parent=11 // pred_region
          _
        $region56: #{tpu_custom_call.1} parent=11 // pred_fallthru
          _
        // Predicated region
        $region57: #{tpu_custom_call.1} parent=11 // pred_check
          %p549 = pneg %p349
        $region58: #{tpu_custom_call.1} parent=11 // pred_check_branch
          %551 = sbr.rel (%p549) target = $region60
        $region59: #{tpu_custom_call.1} parent=11 // pred_region
          _
        $region60: #{tpu_custom_call.1} parent=11 // pred_fallthru
          _
        // Predicated region
        $region61: #{tpu_custom_call.1} parent=11 // pred_check
          %p552 = pneg %p370
        $region62: #{tpu_custom_call.1} parent=11 // pred_check_branch
          %554 = sbr.rel (%p552) target = $region64
        $region63: #{tpu_custom_call.1} parent=11 // pred_region
          %s556 = ssub.s32 2048, 2048
          %557 = vsyncadd [#allocation14], %s556
          %s558 = sshll.u32 [#allocation13], 4
          %s559 = int_to_ptr.vmem [resolvable:$true] %s558
          %564 = dma.hbm_to_vmem [thread:$0]  %s14, 2048, %s559, [#allocation14], 128, 128, 8
        $region64: #{tpu_custom_call.1} parent=11 // pred_fallthru
          _
        // Predicated region
        $region65: #{tpu_custom_call.1} parent=11 // pred_check
          %p565 = pneg %p391
        $region66: #{tpu_custom_call.1} parent=11 // pred_check_branch
          %567 = sbr.rel (%p565) target = $region68
        $region67: #{tpu_custom_call.1} parent=11 // pred_region
          _
        $region68: #{tpu_custom_call.1} parent=11 // pred_fallthru
          _
        // Predicated region
        $region69: #{tpu_custom_call.1} parent=11 // pred_check
          %p568 = pneg %p412
        $region70: #{tpu_custom_call.1} parent=11 // pred_check_branch
          %570 = sbr.rel (%p568) target = $region72
        $region71: #{tpu_custom_call.1} parent=11 // pred_region
          %s572 = ssub.s32 2048, 2048
          %573 = vsyncadd [#allocation14], %s572
          %s574 = sshll.u32 [#allocation15], 4
          %s575 = int_to_ptr.vmem [resolvable:$true] %s574
          %580 = dma.hbm_to_vmem [thread:$0]  %s16, 2048, %s575, [#allocation14], 64, 64, 4
        $region72: #{tpu_custom_call.1} parent=11 // pred_fallthru
          _
        // Predicated region
        $region73: #{tpu_custom_call.1} parent=11 // pred_check
          %p581 = pneg %p433
        $region74: #{tpu_custom_call.1} parent=11 // pred_check_branch
          %583 = sbr.rel (%p581) target = $region76
        $region75: #{tpu_custom_call.1} parent=11 // pred_region
          _
        $region76: #{tpu_custom_call.1} parent=11 // pred_fallthru
          _
      $region12: #{tpu_custom_call.1} parent=5 // pred_fallthru
        _
      %p584 = scmp.lt.s32.totalorder %s33, 2
      // Predicated region
      $region77: #{tpu_custom_call.1} parent=5 // pred_check
        %p585 = pneg %p584
      $region78: #{tpu_custom_call.1} parent=5 // pred_check_branch
        %587 = sbr.rel (%p585) target = $region80
      $region79: #{tpu_custom_call.1} parent=5 // pred_region
        // Predicated region
        $region81: #{tpu_custom_call.1} parent=79 // pred_check
          %p588 = pneg %p65
        $region82: #{tpu_custom_call.1} parent=79 // pred_check_branch
          %590 = sbr.rel (%p588) target = $region84
        $region83: #{tpu_custom_call.1} parent=79 // pred_region
          %s591 = sand.u32 %s55, 1
          %s592 = scalar_lea.sflag [#allocation5], %s591
          %s593 = sand.u32 %s55, 1
          %s594 = smul.addr %s593, 8
          %s595 = scalar_lea.vmem [#allocation4], %s594
          %s597 = ssub.s32 128, 128
          %598 = vsyncadd %s592, %s597
          %s599 = smul.addr %s40, 128
          %s600 = scalar_lea.hbm %s0, %s599
          %s602 = sshll.u32 %s595, 4
          %s603 = int_to_ptr.vmem [resolvable:$true] %s602
          %605 = dma.hbm_to_vmem [thread:$0]  %s600, 128, %s603, %s592
        $region84: #{tpu_custom_call.1} parent=79 // pred_fallthru
          _
        // Predicated region
        $region85: #{tpu_custom_call.1} parent=79 // pred_check
          %p606 = pneg %p91
        $region86: #{tpu_custom_call.1} parent=79 // pred_check_branch
          %608 = sbr.rel (%p606) target = $region88
        $region87: #{tpu_custom_call.1} parent=79 // pred_region
          %p609 = scmp.lt.s32.totalorder %s40, 1
          %s610 = scalar_select %p609, %s40, 1
          %s611 = scalar_lea.vmem %s1, %s610
        $region88: #{tpu_custom_call.1} parent=79 // pred_fallthru
          _
      $region80: #{tpu_custom_call.1} parent=5 // pred_fallthru
        _
      %p612 = scmp.le.s32.totalorder 1, %s33
      %p613 = scmp.lt.s32.totalorder %s33, 3
      %p614 = pnand %p612, %p613
      %p615 = pneg %p614
      // Predicated region
      $region89: #{tpu_custom_call.1} parent=5 // pred_check
        _
      $region90: #{tpu_custom_call.1} parent=5 // pred_check_branch
        %617 = sbr.rel (%p614) target = $region92
      $region91: #{tpu_custom_call.1} parent=5 // pred_region
        %s618 = ssub.s32 %s33, 1
        %s619 = sand.u32 %s58, 1
        %s620 = scalar_lea.sflag [#allocation5], %s619
        %s621 = sand.u32 %s58, 1
        %s622 = smul.addr %s621, 8
        %s623 = scalar_lea.vmem [#allocation4], %s622
        // Predicated region
        $region93: #{tpu_custom_call.1} parent=91 // pred_check
          %p624 = pneg %p71
        $region94: #{tpu_custom_call.1} parent=91 // pred_check_branch
          %626 = sbr.rel (%p624) target = $region96
        $region95: #{tpu_custom_call.1} parent=91 // pred_region
          %627 = dma.done %s620, 128
        $region96: #{tpu_custom_call.1} parent=91 // pred_fallthru
          _
        // Predicated region
        $region97: #{tpu_custom_call.1} parent=91 // pred_check
          %p628 = pneg %p118
        $region98: #{tpu_custom_call.1} parent=91 // pred_check_branch
          %630 = sbr.rel (%p628) target = $region100
        $region99: #{tpu_custom_call.1} parent=91 // pred_region
          %631 = dma.done [#allocation8], 1024
        $region100: #{tpu_custom_call.1} parent=91 // pred_fallthru
          _
        // Predicated region
        $region101: #{tpu_custom_call.1} parent=91 // pred_check
          %p632 = pneg %p160
        $region102: #{tpu_custom_call.1} parent=91 // pred_check_branch
          %634 = sbr.rel (%p632) target = $region104
        $region103: #{tpu_custom_call.1} parent=91 // pred_region
          %635 = dma.done [#allocation8], 1024
        $region104: #{tpu_custom_call.1} parent=91 // pred_fallthru
          _
        // Predicated region
        $region105: #{tpu_custom_call.1} parent=91 // pred_check
          %p636 = pneg %p202
        $region106: #{tpu_custom_call.1} parent=91 // pred_check_branch
          %638 = sbr.rel (%p636) target = $region108
        $region107: #{tpu_custom_call.1} parent=91 // pred_region
          %639 = dma.done [#allocation11], 1024
        $region108: #{tpu_custom_call.1} parent=91 // pred_fallthru
          _
        // Predicated region
        $region109: #{tpu_custom_call.1} parent=91 // pred_check
          %p640 = pneg %p244
        $region110: #{tpu_custom_call.1} parent=91 // pred_check_branch
          %642 = sbr.rel (%p640) target = $region112
        $region111: #{tpu_custom_call.1} parent=91 // pred_region
          %643 = dma.done [#allocation11], 1024
        $region112: #{tpu_custom_call.1} parent=91 // pred_fallthru
          _
        // Predicated region
        $region113: #{tpu_custom_call.1} parent=91 // pred_check
          %p644 = pneg %p370
        $region114: #{tpu_custom_call.1} parent=91 // pred_check_branch
          %646 = sbr.rel (%p644) target = $region116
        $region115: #{tpu_custom_call.1} parent=91 // pred_region
          %647 = dma.done [#allocation14], 2048
        $region116: #{tpu_custom_call.1} parent=91 // pred_fallthru
          _
        // Predicated region
        $region117: #{tpu_custom_call.1} parent=91 // pred_check
          %p648 = pneg %p412
        $region118: #{tpu_custom_call.1} parent=91 // pred_check_branch
          %650 = sbr.rel (%p648) target = $region120
        $region119: #{tpu_custom_call.1} parent=91 // pred_region
          %651 = dma.done [#allocation14], 2048
        $region120: #{tpu_custom_call.1} parent=91 // pred_fallthru
          _
        %s652 = sand.u32 %s58, 1
        %s653 = scalar_lea.sflag [#allocation5], %s652
        %s654 = sand.u32 %s58, 1
        %s655 = smul.addr %s654, 8
        %s656 = scalar_lea.vmem [#allocation4], %s655
        %p657 = pneg %p71
        %p658 = pneg %p68
        %p659 = scmp.lt.s32.totalorder %s42, 1
        %s660 = scalar_select %p659, %s42, 1
        %s661 = scalar_lea.vmem %s1, %s660
        %p662 = pneg %p97
        %p663 = pneg %p94
        %p664 = pneg %p118
        %p665 = pneg %p115
        %p666 = pneg %p139
        %p667 = pneg %p136
        %p668 = pneg %p160
        %p669 = pneg %p157
        %p670 = pneg %p181
        %p671 = pneg %p178
        %p672 = pneg %p202
        %p673 = pneg %p199
        %p674 = pneg %p223
        %p675 = pneg %p220
        %p676 = pneg %p244
        %p677 = pneg %p241
        %p678 = pneg %p265
        %p679 = pneg %p262
        %p680 = pneg %p286
        %p681 = pneg %p283
        %p682 = pneg %p307
        %p683 = pneg %p304
        %p684 = pneg %p328
        %p685 = pneg %p325
        %p686 = pneg %p349
        %p687 = pneg %p346
        %p688 = pneg %p370
        %p689 = pneg %p367
        %p690 = pneg %p391
        %p691 = pneg %p388
        %p692 = pneg %p412
        %p693 = pneg %p409
        %p694 = pneg %p433
        %p695 = pneg %p430
        %p696 = pneg %p461
        %p697 = pneg %p458
        %s698 = sand.u32 %s448, 1
        %s699 = scalar_lea.sflag [#allocation6], %s698
        %s700 = sand.u32 %s448, 1
        %s701 = smul.addr %s700, 8
        %s702 = scalar_lea.vmem [#allocation16], %s701
        %p703 = scmp.lt.s32.totalorder %s42, 1
        %s704 = scalar_select %p703, %s42, 1
        %s705 = scalar_lea.vmem %s1, %s704
        %v707 = vld [vmem:[%s10] sm:$0x1]
        %v708 = vld [vmem:[%s11] sm:$0x1]
        %p709 = scmp.eq.s32.totalorder %s43, 0
        // Predicated region
        $region121: #{tpu_custom_call.1} parent=91 // pred_check
          %p710 = pneg %p709
        $region122: #{tpu_custom_call.1} parent=91 // pred_check_branch
          %712 = sbr.rel (%p710) target = $region124
        $region123: #{tpu_custom_call.1} parent=91 // pred_region
          %v713 = vld [vmem:[%s623] sm:$0xff]
          %714 = vadd.xlane.f32.xlu0 %v713
          %v715 = vpop.xlane.xlu0 %714
          %v716 = vrcp.pop 128.0
          %v717 = vmul.f32 %v715, %v716
          %v718 = vsub.f32 %v713, %v717
          %v719 = vmul.f32 %v718, %v718
          %720 = vadd.xlane.f32.xlu0 %v719
          %v721 = vpop.xlane.xlu0 %720
          %v722 = vmul.f32 %v721, 0.007874016
          %v724 = vlaneseq
          %v725 = vshrl.u32 %v724, 7
          %v726 = vsub.s32 0, %v725
          %v727 = vrot.slane %v707, %v726
          %v729 = vmul.f32 %v727, %v718
          %v730 = vrsqrt.pop %v722
          %v731 = vmul.f32 %v722, %v730
          %vm732 = vcmp.eq.f32.partialorder %v722, inf
          %v733 = vsel %vm732, %v722, %v731
          %vm734 = vcmp.eq.f32.partialorder %v722, 0.0
          %v735 = vand.u32 %v722, 2147483648
          %v736 = vsel %vm734, %v735, %v733
          %v737 = vadd.f32 %v736, 1e-06
          %v738 = vrcp.pop %v737
          %v739 = vmul.f32 %v737, %v738
          %v740 = vsub.f32 2.0, %v739
          %v741 = vmul.f32 %v738, %v740
          %v742 = vmul.f32 %v729, %v741
          %v744 = vlaneseq
          %v745 = vshrl.u32 %v744, 7
          %v746 = vsub.s32 0, %v745
          %v747 = vrot.slane %v708, %v746
          %v749 = vadd.f32 %v742, %v747
          %v750 = vpack.c.bf16 %v749, %v749
          %v751 = vld [vmem:[#allocation9] sm:$0xf]
          %v752 = vld [vmem:[#allocation9 + $0x4] sm:$0xf]
          %v753 = vld [vmem:[#allocation9 + $0x8] sm:$0xf]
          %v754 = vld [vmem:[#allocation9 + $0xc] sm:$0xf]
          %v755 = vld [vmem:[#allocation9 + $0x10] sm:$0xf]
          %v756 = vld [vmem:[#allocation9 + $0x14] sm:$0xf]
          %v757 = vld [vmem:[#allocation9 + $0x18] sm:$0xf]
          %v758 = vld [vmem:[#allocation9 + $0x1c] sm:$0xf]
          %v759 = vld [vmem:[#allocation9 + $0x20] sm:$0xf]
          %v760 = vld [vmem:[#allocation9 + $0x24] sm:$0xf]
          %v761 = vld [vmem:[#allocation9 + $0x28] sm:$0xf]
          %v762 = vld [vmem:[#allocation9 + $0x2c] sm:$0xf]
          %v763 = vld [vmem:[#allocation9 + $0x30] sm:$0xf]
          %v764 = vld [vmem:[#allocation9 + $0x34] sm:$0xf]
          %v765 = vld [vmem:[#allocation9 + $0x38] sm:$0xf]
          %v766 = vld [vmem:[#allocation9 + $0x3c] sm:$0xf]
          %v767 = vld [vmem:[%s5] sm:$0x1]
          %v769 = vlaneseq
          %v770 = vshrl.u32 %v769, 7
          %v771 = vsub.s32 0, %v770
          %v772 = vrot.slane %v767, %v771
          %v790 = vunpack.c.l.b16 %v751
          %v791 = vunpack.c.l.b16 %v752
          %v792 = vunpack.c.l.b16 %v753
          %v793 = vunpack.c.l.b16 %v754
          %v794 = vunpack.c.l.b16 %v755
          %v795 = vunpack.c.l.b16 %v756
          %v796 = vunpack.c.l.b16 %v757
          %v797 = vunpack.c.l.b16 %v758
          %v798 = vunpack.c.l.b16 %v759
          %v799 = vunpack.c.l.b16 %v760
          %v800 = vunpack.c.l.b16 %v761
          %v801 = vunpack.c.l.b16 %v762
          %v802 = vunpack.c.l.b16 %v763
          %v803 = vunpack.c.l.b16 %v764
          %v804 = vunpack.c.l.b16 %v765
          %v805 = vunpack.c.l.b16 %v766
          %v806 = vpack.c.b16 %v791, %v790
          %v807 = vpack.c.b16 %v793, %v792
          %v808 = vpack.c.b16 %v795, %v794
          %v809 = vpack.c.b16 %v797, %v796
          %v810 = vpack.c.b16 %v799, %v798
          %v811 = vpack.c.b16 %v801, %v800
          %v812 = vpack.c.b16 %v803, %v802
          %v813 = vpack.c.b16 %v805, %v804
          %822 = vmatprep.subr.bf16.mxu0 0
          %823 = vmatpush1.bf16.msra.mxu0 %v806
          %824 = vmatprep.subr.bf16.mxu0 0
          %825 = vmatpush1.bf16.msra.mxu0 %v807
          %826 = vmatprep.subr.bf16.mxu0 0
          %827 = vmatpush1.bf16.msra.mxu0 %v808
          %828 = vmatprep.subr.bf16.mxu0 0
          %829 = vmatpush1.bf16.msra.mxu0 %v809
          %830 = vmatprep.subr.bf16.mxu0 0
          %831 = vmatpush1.bf16.msra.mxu0 %v810
          %832 = vmatprep.subr.bf16.mxu0 0
          %833 = vmatpush1.bf16.msra.mxu0 %v811
          %834 = vmatprep.subr.bf16.mxu0 0
          %835 = vmatpush1.bf16.msra.mxu0 %v812
          %836 = vmatprep.subr.bf16.mxu0 0
          %837 = vmatpush1.bf16.msra.mxu0 %v813
          %838 = vmatprep.subr.bf16.mxu0 0
          %839 = vmatpush1.bf16.msra.mxu0 0
          %840 = vmatprep.subr.bf16.mxu0 0
          %841 = vmatpush1.bf16.msra.mxu0 0
          %842 = vmatprep.subr.bf16.mxu0 0
          %843 = vmatpush1.bf16.msra.mxu0 0
          %844 = vmatprep.subr.bf16.mxu0 0
          %845 = vmatpush1.bf16.msra.mxu0 0
          %846 = vmatprep.subr.bf16.mxu0 0
          %847 = vmatpush1.bf16.msra.mxu0 0
          %848 = vmatprep.subr.bf16.mxu0 0
          %849 = vmatpush1.bf16.msra.mxu0 0
          %850 = vmatprep.subr.bf16.mxu0 0
          %851 = vmatpush1.bf16.msra.mxu0 0
          %852 = vmatprep.subr.bf16.mxu0 0
          %853 = vmatpush1.bf16.msra.mxu0 0
          %854 = vmatprep.mubr.bf16.mxu0 0
          %855 = vmatmul.mubr.bf16.gmra.mrb[0].mxu0 %v750
          %v856 = vpop.f32.mrb[0].mxu0
          %v857 = vadd.f32 %v772, %v856
          %v858 = vpop.f32.mrb[0].mxu0
          %v859 = vpop.f32.mrb[0].mxu0
          %v860 = vpop.f32.mrb[0].mxu0
          %861 = vdwg.mxu0
          %v862 = vld [vmem:[#allocation10] sm:$0xf]
          %v863 = vld [vmem:[#allocation10 + $0x4] sm:$0xf]
          %v864 = vld [vmem:[#allocation10 + $0x8] sm:$0xf]
          %v865 = vld [vmem:[#allocation10 + $0xc] sm:$0xf]
          %v866 = vld [vmem:[#allocation10 + $0x10] sm:$0xf]
          %v867 = vld [vmem:[#allocation10 + $0x14] sm:$0xf]
          %v868 = vld [vmem:[#allocation10 + $0x18] sm:$0xf]
          %v869 = vld [vmem:[#allocation10 + $0x1c] sm:$0xf]
          %v870 = vld [vmem:[#allocation10 + $0x20] sm:$0xf]
          %v871 = vld [vmem:[#allocation10 + $0x24] sm:$0xf]
          %v872 = vld [vmem:[#allocation10 + $0x28] sm:$0xf]
          %v873 = vld [vmem:[#allocation10 + $0x2c] sm:$0xf]
          %v874 = vld [vmem:[#allocation10 + $0x30] sm:$0xf]
          %v875 = vld [vmem:[#allocation10 + $0x34] sm:$0xf]
          %v876 = vld [vmem:[#allocation10 + $0x38] sm:$0xf]
          %v877 = vld [vmem:[#allocation10 + $0x3c] sm:$0xf]
          %v878 = vld [vmem:[%s7] sm:$0x1]
          %v880 = vlaneseq
          %v881 = vshrl.u32 %v880, 7
          %v882 = vsub.s32 0, %v881
          %v883 = vrot.slane %v878, %v882
          %v901 = vunpack.c.l.b16 %v862
          %v902 = vunpack.c.l.b16 %v863
          %v903 = vunpack.c.l.b16 %v864
          %v904 = vunpack.c.l.b16 %v865
          %v905 = vunpack.c.l.b16 %v866
          %v906 = vunpack.c.l.b16 %v867
          %v907 = vunpack.c.l.b16 %v868
          %v908 = vunpack.c.l.b16 %v869
          %v909 = vunpack.c.l.b16 %v870
          %v910 = vunpack.c.l.b16 %v871
          %v911 = vunpack.c.l.b16 %v872
          %v912 = vunpack.c.l.b16 %v873
          %v913 = vunpack.c.l.b16 %v874
          %v914 = vunpack.c.l.b16 %v875
          %v915 = vunpack.c.l.b16 %v876
          %v916 = vunpack.c.l.b16 %v877
          %v917 = vpack.c.b16 %v902, %v901
          %v918 = vpack.c.b16 %v904, %v903
          %v919 = vpack.c.b16 %v906, %v905
          %v920 = vpack.c.b16 %v908, %v907
          %v921 = vpack.c.b16 %v910, %v909
          %v922 = vpack.c.b16 %v912, %v911
          %v923 = vpack.c.b16 %v914, %v913
          %v924 = vpack.c.b16 %v916, %v915
          %933 = vmatprep.subr.bf16.mxu0 0
          %934 = vmatpush1.bf16.msra.mxu0 %v917
          %935 = vmatprep.subr.bf16.mxu0 0
          %936 = vmatpush1.bf16.msra.mxu0 %v918
          %937 = vmatprep.subr.bf16.mxu0 0
          %938 = vmatpush1.bf16.msra.mxu0 %v919
          %939 = vmatprep.subr.bf16.mxu0 0
          %940 = vmatpush1.bf16.msra.mxu0 %v920
          %941 = vmatprep.subr.bf16.mxu0 0
          %942 = vmatpush1.bf16.msra.mxu0 %v921
          %943 = vmatprep.subr.bf16.mxu0 0
          %944 = vmatpush1.bf16.msra.mxu0 %v922
          %945 = vmatprep.subr.bf16.mxu0 0
          %946 = vmatpush1.bf16.msra.mxu0 %v923
          %947 = vmatprep.subr.bf16.mxu0 0
          %948 = vmatpush1.bf16.msra.mxu0 %v924
          %949 = vmatprep.subr.bf16.mxu0 0
          %950 = vmatpush1.bf16.msra.mxu0 0
          %951 = vmatprep.subr.bf16.mxu0 0
          %952 = vmatpush1.bf16.msra.mxu0 0
          %953 = vmatprep.subr.bf16.mxu0 0
          %954 = vmatpush1.bf16.msra.mxu0 0
          %955 = vmatprep.subr.bf16.mxu0 0
          %956 = vmatpush1.bf16.msra.mxu0 0
          %957 = vmatprep.subr.bf16.mxu0 0
          %958 = vmatpush1.bf16.msra.mxu0 0
          %959 = vmatprep.subr.bf16.mxu0 0
          %960 = vmatpush1.bf16.msra.mxu0 0
          %961 = vmatprep.subr.bf16.mxu0 0
          %962 = vmatpush1.bf16.msra.mxu0 0
          %963 = vmatprep.subr.bf16.mxu0 0
          %964 = vmatpush1.bf16.msra.mxu0 0
          %965 = vmatprep.mubr.bf16.mxu0 0
          %966 = vmatmul.mubr.bf16.gmra.mrb[0].mxu0 %v750
          %v967 = vpop.f32.mrb[0].mxu0
          %v968 = vadd.f32 %v883, %v967
          %v969 = vpop.f32.mrb[0].mxu0
          %v970 = vpop.f32.mrb[0].mxu0
          %v971 = vpop.f32.mrb[0].mxu0
          %972 = vdwg.mxu0
          %v973 = vpack.c.bf16 %v857, %v857
          %974 = vst [vmem:[#allocation2] sm:$0xf] %v973
          %v975 = vpack.c.bf16 %v968, %v968
          %976 = vst [vmem:[#allocation3] sm:$0xf] %v975
        $region124: #{tpu_custom_call.1} parent=91 // pred_fallthru
          _
        %s977 = smul.u32 %s43, 8
        %s978 = scalar_lea.vmem %s623, %s977 [#allocation4]
        %v979 = vld [vmem:[%s978] sm:$0xff]
        %980 = vadd.xlane.f32.xlu0 %v979
        %v981 = vpop.xlane.xlu0 %980
        %v982 = vrcp.pop 128.0
        %v983 = vmul.f32 %v981, %v982
        %v984 = vsub.f32 %v979, %v983
        %v985 = vmul.f32 %v984, %v984
        %986 = vadd.xlane.f32.xlu0 %v985
        %v987 = vpop.xlane.xlu0 %986
        %v988 = vmul.f32 %v987, 0.007874016
        %v990 = vlaneseq
        %v991 = vshrl.u32 %v990, 7
        %v992 = vsub.s32 0, %v991
        %v993 = vrot.slane %v707, %v992
        %v995 = vmul.f32 %v993, %v984
        %v996 = vrsqrt.pop %v988
        %v997 = vmul.f32 %v988, %v996
        %vm998 = vcmp.eq.f32.partialorder %v988, inf
        %v999 = vsel %vm998, %v988, %v997
        %vm1000 = vcmp.eq.f32.partialorder %v988, 0.0
        %v1001 = vand.u32 %v988, 2147483648
        %v1002 = vsel %vm1000, %v1001, %v999
        %v1003 = vadd.f32 %v1002, 1e-06
        %v1004 = vrcp.pop %v1003
        %v1005 = vmul.f32 %v1003, %v1004
        %v1006 = vsub.f32 2.0, %v1005
        %v1007 = vmul.f32 %v1004, %v1006
        %v1008 = vmul.f32 %v995, %v1007
        %v1010 = vlaneseq
        %v1011 = vshrl.u32 %v1010, 7
        %v1012 = vsub.s32 0, %v1011
        %v1013 = vrot.slane %v708, %v1012
        %v1015 = vadd.f32 %v1008, %v1013
        %v1016 = vpack.c.bf16 %v1015, %v1015
        %v1017 = vld [vmem:[#allocation7] sm:$0xf]
        %v1018 = vld [vmem:[#allocation7 + $0x4] sm:$0xf]
        %v1019 = vld [vmem:[#allocation7 + $0x8] sm:$0xf]
        %v1020 = vld [vmem:[#allocation7 + $0xc] sm:$0xf]
        %v1021 = vld [vmem:[#allocation7 + $0x10] sm:$0xf]
        %v1022 = vld [vmem:[#allocation7 + $0x14] sm:$0xf]
        %v1023 = vld [vmem:[#allocation7 + $0x18] sm:$0xf]
        %v1024 = vld [vmem:[#allocation7 + $0x1c] sm:$0xf]
        %v1025 = vld [vmem:[#allocation7 + $0x20] sm:$0xf]
        %v1026 = vld [vmem:[#allocation7 + $0x24] sm:$0xf]
        %v1027 = vld [vmem:[#allocation7 + $0x28] sm:$0xf]
        %v1028 = vld [vmem:[#allocation7 + $0x2c] sm:$0xf]
        %v1029 = vld [vmem:[#allocation7 + $0x30] sm:$0xf]
        %v1030 = vld [vmem:[#allocation7 + $0x34] sm:$0xf]
        %v1031 = vld [vmem:[#allocation7 + $0x38] sm:$0xf]
        %v1032 = vld [vmem:[#allocation7 + $0x3c] sm:$0xf]
        %v1033 = vld [vmem:[%s3] sm:$0x1]
        %v1035 = vlaneseq
        %v1036 = vshrl.u32 %v1035, 7
        %v1037 = vsub.s32 0, %v1036
        %v1038 = vrot.slane %v1033, %v1037
        %v1056 = vunpack.c.l.b16 %v1017
        %v1057 = vunpack.c.l.b16 %v1018
        %v1058 = vunpack.c.l.b16 %v1019
        %v1059 = vunpack.c.l.b16 %v1020
        %v1060 = vunpack.c.l.b16 %v1021
        %v1061 = vunpack.c.l.b16 %v1022
        %v1062 = vunpack.c.l.b16 %v1023
        %v1063 = vunpack.c.l.b16 %v1024
        %v1064 = vunpack.c.l.b16 %v1025
        %v1065 = vunpack.c.l.b16 %v1026
        %v1066 = vunpack.c.l.b16 %v1027
        %v1067 = vunpack.c.l.b16 %v1028
        %v1068 = vunpack.c.l.b16 %v1029
        %v1069 = vunpack.c.l.b16 %v1030
        %v1070 = vunpack.c.l.b16 %v1031
        %v1071 = vunpack.c.l.b16 %v1032
        %v1072 = vpack.c.b16 %v1057, %v1056
        %v1073 = vpack.c.b16 %v1059, %v1058
        %v1074 = vpack.c.b16 %v1061, %v1060
        %v1075 = vpack.c.b16 %v1063, %v1062
        %v1076 = vpack.c.b16 %v1065, %v1064
        %v1077 = vpack.c.b16 %v1067, %v1066
        %v1078 = vpack.c.b16 %v1069, %v1068
        %v1079 = vpack.c.b16 %v1071, %v1070
        %1088 = vmatprep.subr.bf16.mxu0 0
        %1089 = vmatpush1.bf16.msra.mxu0 %v1072
        %1090 = vmatprep.subr.bf16.mxu0 0
        %1091 = vmatpush1.bf16.msra.mxu0 %v1073
        %1092 = vmatprep.subr.bf16.mxu0 0
        %1093 = vmatpush1.bf16.msra.mxu0 %v1074
        %1094 = vmatprep.subr.bf16.mxu0 0
        %1095 = vmatpush1.bf16.msra.mxu0 %v1075
        %1096 = vmatprep.subr.bf16.mxu0 0
        %1097 = vmatpush1.bf16.msra.mxu0 %v1076
        %1098 = vmatprep.subr.bf16.mxu0 0
        %1099 = vmatpush1.bf16.msra.mxu0 %v1077
        %1100 = vmatprep.subr.bf16.mxu0 0
        %1101 = vmatpush1.bf16.msra.mxu0 %v1078
        %1102 = vmatprep.subr.bf16.mxu0 0
        %1103 = vmatpush1.bf16.msra.mxu0 %v1079
        %1104 = vmatprep.subr.bf16.mxu0 0
        %1105 = vmatpush1.bf16.msra.mxu0 0
        %1106 = vmatprep.subr.bf16.mxu0 0
        %1107 = vmatpush1.bf16.msra.mxu0 0
        %1108 = vmatprep.subr.bf16.mxu0 0
        %1109 = vmatpush1.bf16.msra.mxu0 0
        %1110 = vmatprep.subr.bf16.mxu0 0
        %1111 = vmatpush1.bf16.msra.mxu0 0
        %1112 = vmatprep.subr.bf16.mxu0 0
        %1113 = vmatpush1.bf16.msra.mxu0 0
        %1114 = vmatprep.subr.bf16.mxu0 0
        %1115 = vmatpush1.bf16.msra.mxu0 0
        %1116 = vmatprep.subr.bf16.mxu0 0
        %1117 = vmatpush1.bf16.msra.mxu0 0
        %1118 = vmatprep.subr.bf16.mxu0 0
        %1119 = vmatpush1.bf16.msra.mxu0 0
        %1120 = vmatprep.mubr.bf16.mxu0 0
        %1121 = vmatmul.mubr.bf16.gmra.mrb[0].mxu0 %v1016
        %v1122 = vpop.f32.mrb[0].mxu0
        %v1123 = vadd.f32 %v1038, %v1122
        %v1124 = vpop.f32.mrb[0].mxu0
        %v1125 = vpop.f32.mrb[0].mxu0
        %v1126 = vpop.f32.mrb[0].mxu0
        %1127 = vdwg.mxu0
        %v1128 = vpack.c.bf16 %v1123, %v1123
        %v1129 = vld [vmem:[#allocation2] sm:$0xf]
        %v1130 = vld [vmem:[#allocation3] sm:$0xf]
        %v1131 = vld [vmem:[%s705] sm:$0x1]
        %vm1132 = vcmp.eq.s32.totalorder %v1131, 0
        %v1133 = vsel %vm1132, -1e+09, 0.0
        %vm1134 = vcmask 130048
        %v1136 = vsel %vm1134, %v1128, 0
        %v1139 = vsel %vm1134, %v1129, 0
        %1141 = vmatprep.subr.bf16.mxu0 0
        %1142 = vmatpush1.bf16.xpose.msra.mxu0 %v1139
        %1143 = vmatprep.subr.bf16.mxu0 0
        %1144 = vmatpush1.bf16.xpose.msra.mxu0 0
        %1145 = vmatprep.subr.bf16.mxu0 0
        %1146 = vmatpush1.bf16.xpose.msra.mxu0 0
        %1147 = vmatprep.subr.bf16.mxu0 0
        %1148 = vmatpush1.bf16.xpose.msra.mxu0 0
        %1149 = vmatprep.subr.bf16.mxu0 0
        %1150 = vmatpush1.bf16.xpose.msra.mxu0 0
        %1151 = vmatprep.subr.bf16.mxu0 0
        %1152 = vmatpush1.bf16.xpose.msra.mxu0 0
        %1153 = vmatprep.subr.bf16.mxu0 0
        %1154 = vmatpush1.bf16.xpose.msra.mxu0 0
        %1155 = vmatprep.subr.bf16.mxu0 0
        %1156 = vmatpush1.bf16.xpose.msra.mxu0 0
        %1157 = vmatprep.subr.bf16.mxu0 0
        %1158 = vmatpush1.bf16.xpose.msra.mxu0 0
        %1159 = vmatprep.subr.bf16.mxu0 0
        %1160 = vmatpush1.bf16.xpose.msra.mxu0 0
        %1161 = vmatprep.subr.bf16.mxu0 0
        %1162 = vmatpush1.bf16.xpose.msra.mxu0 0
        %1163 = vmatprep.subr.bf16.mxu0 0
        %1164 = vmatpush1.bf16.xpose.msra.mxu0 0
        %1165 = vmatprep.subr.bf16.mxu0 0
        %1166 = vmatpush1.bf16.xpose.msra.mxu0 0
        %1167 = vmatprep.subr.bf16.mxu0 0
        %1168 = vmatpush1.bf16.xpose.msra.mxu0 0
        %1169 = vmatprep.subr.bf16.mxu0 0
        %1170 = vmatpush1.bf16.xpose.msra.mxu0 0
        %1171 = vmatprep.subr.bf16.mxu0 0
        %1172 = vmatpush1.bf16.xpose.msra.mxu0 0
        %1173 = vmatprep.mubr.bf16.mxu0 0
        %1174 = vmatmul.mubr.bf16.gmra.mrb[0].mxu0 %v1136
        %v1175 = vpop.f32.mrb[0].mxu0
        %v1176 = vadd.f32 0.0, %v1175
        %v1177 = vpop.f32.mrb[0].mxu0
        %v1178 = vpop.f32.mrb[0].mxu0
        %v1179 = vpop.f32.mrb[0].mxu0
        %1180 = vdwg.mxu0
        %v1181 = vmul.f32 %v1176, 0.25
        %v1183 = vlaneseq
        %v1184 = vshrl.u32 %v1183, 7
        %v1185 = vsub.s32 0, %v1184
        %v1186 = vrot.slane %v1133, %v1185
        %v1188 = vadd.f32 %v1181, %v1186
        %vm1189 = vcmask 64512
        %v1190 = vsel %vm1189, %v1188, -inf
        %1191 = vmax.xlane.f32.xlu0 %v1190
        %v1192 = vpop.xlane.xlu0 %1191
        %v1193 = vsub.f32 %v1188, %v1192
        %v1194 = vmul.f32 %v1193, 1.442695
        %v1195 = vpow.pop %v1194
        %v1196 = vsel %vm1189, %v1195, 0.0
        %1197 = vadd.xlane.f32.xlu0 %v1196
        %v1198 = vpop.xlane.xlu0 %1197
        %v1199 = vrcp.pop %v1198
        %v1200 = vmul.f32 %v1198, %v1199
        %v1201 = vsub.f32 2.0, %v1200
        %v1202 = vmul.f32 %v1199, %v1201
        %v1203 = vmul.f32 %v1195, %v1202
        %v1204 = vpack.c.bf16 %v1203, %v1203
        %v1206 = vsel %vm1189, %v1204, 0
        %vm1208 = vcmask 1043456
        %v1210 = vsel %vm1208, %v1130, 0
        %1212 = vmatprep.subr.bf16.mxu0 0
        %1213 = vmatpush1.bf16.msra.mxu0 %v1210
        %1214 = vmatprep.subr.bf16.mxu0 0
        %1215 = vmatpush1.bf16.msra.mxu0 0
        %1216 = vmatprep.subr.bf16.mxu0 0
        %1217 = vmatpush1.bf16.msra.mxu0 0
        %1218 = vmatprep.subr.bf16.mxu0 0
        %1219 = vmatpush1.bf16.msra.mxu0 0
        %1220 = vmatprep.subr.bf16.mxu0 0
        %1221 = vmatpush1.bf16.msra.mxu0 0
        %1222 = vmatprep.subr.bf16.mxu0 0
        %1223 = vmatpush1.bf16.msra.mxu0 0
        %1224 = vmatprep.subr.bf16.mxu0 0
        %1225 = vmatpush1.bf16.msra.mxu0 0
        %1226 = vmatprep.subr.bf16.mxu0 0
        %1227 = vmatpush1.bf16.msra.mxu0 0
        %1228 = vmatprep.subr.bf16.mxu0 0
        %1229 = vmatpush1.bf16.msra.mxu0 0
        %1230 = vmatprep.subr.bf16.mxu0 0
        %1231 = vmatpush1.bf16.msra.mxu0 0
        %1232 = vmatprep.subr.bf16.mxu0 0
        %1233 = vmatpush1.bf16.msra.mxu0 0
        %1234 = vmatprep.subr.bf16.mxu0 0
        %1235 = vmatpush1.bf16.msra.mxu0 0
        %1236 = vmatprep.subr.bf16.mxu0 0
        %1237 = vmatpush1.bf16.msra.mxu0 0
        %1238 = vmatprep.subr.bf16.mxu0 0
        %1239 = vmatpush1.bf16.msra.mxu0 0
        %1240 = vmatprep.subr.bf16.mxu0 0
        %1241 = vmatpush1.bf16.msra.mxu0 0
        %1242 = vmatprep.subr.bf16.mxu0 0
        %1243 = vmatpush1.bf16.msra.mxu0 0
        %1244 = vmatprep.mubr.bf16.mxu0 0
        %1245 = vmatmul.mubr.bf16.gmra.mrb[0].mxu0 %v1206
        %v1246 = vpop.f32.mrb[0].mxu0
        %v1247 = vadd.f32 0.0, %v1246
        %v1248 = vpop.f32.mrb[0].mxu0
        %v1249 = vpop.f32.mrb[0].mxu0
        %v1250 = vpop.f32.mrb[0].mxu0
        %1251 = vdwg.mxu0
        %v1252 = vpack.c.bf16 %v1247, %v1247
        %v1253 = vld [vmem:[#allocation12] sm:$0xf]
        %v1254 = vld [vmem:[#allocation12 + $0x4] sm:$0xf]
        %1256 = vrot.lane.b32.xlu0 %v1128, 112
        %v1257 = vpop.permute.xlu0 %1256
        %v1259 = vunpack.c.l.b16 %v1129
        %v1260 = vpack.c.b16 %v1259, %v1259
        %1261 = vrot.lane.b32.xlu0 %v1260, 112
        %v1262 = vpop.permute.xlu0 %1261
        %v1264 = vsel %vm1134, %v1257, 0
        %v1267 = vsel %vm1134, %v1262, 0
        %1269 = vmatprep.subr.bf16.mxu0 0
        %1270 = vmatpush1.bf16.xpose.msra.mxu0 %v1267
        %1271 = vmatprep.subr.bf16.mxu0 0
        %1272 = vmatpush1.bf16.xpose.msra.mxu0 0
        %1273 = vmatprep.subr.bf16.mxu0 0
        %1274 = vmatpush1.bf16.xpose.msra.mxu0 0
        %1275 = vmatprep.subr.bf16.mxu0 0
        %1276 = vmatpush1.bf16.xpose.msra.mxu0 0
        %1277 = vmatprep.subr.bf16.mxu0 0
        %1278 = vmatpush1.bf16.xpose.msra.mxu0 0
        %1279 = vmatprep.subr.bf16.mxu0 0
        %1280 = vmatpush1.bf16.xpose.msra.mxu0 0
        %1281 = vmatprep.subr.bf16.mxu0 0
        %1282 = vmatpush1.bf16.xpose.msra.mxu0 0
        %1283 = vmatprep.subr.bf16.mxu0 0
        %1284 = vmatpush1.bf16.xpose.msra.mxu0 0
        %1285 = vmatprep.subr.bf16.mxu0 0
        %1286 = vmatpush1.bf16.xpose.msra.mxu0 0
        %1287 = vmatprep.subr.bf16.mxu0 0
        %1288 = vmatpush1.bf16.xpose.msra.mxu0 0
        %1289 = vmatprep.subr.bf16.mxu0 0
        %1290 = vmatpush1.bf16.xpose.msra.mxu0 0
        %1291 = vmatprep.subr.bf16.mxu0 0
        %1292 = vmatpush1.bf16.xpose.msra.mxu0 0
        %1293 = vmatprep.subr.bf16.mxu0 0
        %1294 = vmatpush1.bf16.xpose.msra.mxu0 0
        %1295 = vmatprep.subr.bf16.mxu0 0
        %1296 = vmatpush1.bf16.xpose.msra.mxu0 0
        %1297 = vmatprep.subr.bf16.mxu0 0
        %1298 = vmatpush1.bf16.xpose.msra.mxu0 0
        %1299 = vmatprep.subr.bf16.mxu0 0
        %1300 = vmatpush1.bf16.xpose.msra.mxu0 0
        %1301 = vmatprep.mubr.bf16.mxu0 0
        %1302 = vmatmul.mubr.bf16.gmra.mrb[0].mxu0 %v1264
        %v1303 = vpop.f32.mrb[0].mxu0
        %v1304 = vadd.f32 0.0, %v1303
        %v1305 = vpop.f32.mrb[0].mxu0
        %v1306 = vpop.f32.mrb[0].mxu0
        %v1307 = vpop.f32.mrb[0].mxu0
        %1308 = vdwg.mxu0
        %v1309 = vmul.f32 %v1304, 0.25
        %v1310 = vadd.f32 %v1309, %v1186
        %v1311 = vsel %vm1189, %v1310, -inf
        %1312 = vmax.xlane.f32.xlu0 %v1311
        %v1313 = vpop.xlane.xlu0 %1312
        %v1314 = vsub.f32 %v1310, %v1313
        %v1315 = vmul.f32 %v1314, 1.442695
        %v1316 = vpow.pop %v1315
        %v1317 = vsel %vm1189, %v1316, 0.0
        %1318 = vadd.xlane.f32.xlu0 %v1317
        %v1319 = vpop.xlane.xlu0 %1318
        %v1320 = vrcp.pop %v1319
        %v1321 = vmul.f32 %v1319, %v1320
        %v1322 = vsub.f32 2.0, %v1321
        %v1323 = vmul.f32 %v1320, %v1322
        %v1324 = vmul.f32 %v1316, %v1323
        %v1325 = vpack.c.bf16 %v1324, %v1324
        %v1327 = vunpack.c.l.b16 %v1130
        %v1328 = vpack.c.b16 %v1327, %v1327
        %1329 = vrot.lane.b32.xlu0 %v1328, 112
        %v1330 = vpop.permute.xlu0 %1329
        %v1332 = vsel %vm1189, %v1325, 0
        %v1335 = vsel %vm1208, %v1330, 0
        %1337 = vmatprep.subr.bf16.mxu0 0
        %1338 = vmatpush1.bf16.msra.mxu0 %v1335
        %1339 = vmatprep.subr.bf16.mxu0 0
        %1340 = vmatpush1.bf16.msra.mxu0 0
        %1341 = vmatprep.subr.bf16.mxu0 0
        %1342 = vmatpush1.bf16.msra.mxu0 0
        %1343 = vmatprep.subr.bf16.mxu0 0
        %1344 = vmatpush1.bf16.msra.mxu0 0
        %1345 = vmatprep.subr.bf16.mxu0 0
        %1346 = vmatpush1.bf16.msra.mxu0 0
        %1347 = vmatprep.subr.bf16.mxu0 0
        %1348 = vmatpush1.bf16.msra.mxu0 0
        %1349 = vmatprep.subr.bf16.mxu0 0
        %1350 = vmatpush1.bf16.msra.mxu0 0
        %1351 = vmatprep.subr.bf16.mxu0 0
        %1352 = vmatpush1.bf16.msra.mxu0 0
        %1353 = vmatprep.subr.bf16.mxu0 0
        %1354 = vmatpush1.bf16.msra.mxu0 0
        %1355 = vmatprep.subr.bf16.mxu0 0
        %1356 = vmatpush1.bf16.msra.mxu0 0
        %1357 = vmatprep.subr.bf16.mxu0 0
        %1358 = vmatpush1.bf16.msra.mxu0 0
        %1359 = vmatprep.subr.bf16.mxu0 0
        %1360 = vmatpush1.bf16.msra.mxu0 0
        %1361 = vmatprep.subr.bf16.mxu0 0
        %1362 = vmatpush1.bf16.msra.mxu0 0
        %1363 = vmatprep.subr.bf16.mxu0 0
        %1364 = vmatpush1.bf16.msra.mxu0 0
        %1365 = vmatprep.subr.bf16.mxu0 0
        %1366 = vmatpush1.bf16.msra.mxu0 0
        %1367 = vmatprep.subr.bf16.mxu0 0
        %1368 = vmatpush1.bf16.msra.mxu0 0
        %1369 = vmatprep.mubr.bf16.mxu0 0
        %1370 = vmatmul.mubr.bf16.gmra.mrb[0].mxu0 %v1332
        %v1371 = vpop.f32.mrb[0].mxu0
        %v1372 = vadd.f32 0.0, %v1371
        %v1373 = vpop.f32.mrb[0].mxu0
        %v1374 = vpop.f32.mrb[0].mxu0
        %v1375 = vpop.f32.mrb[0].mxu0
        %1376 = vdwg.mxu0
        %v1377 = vpack.c.bf16 %v1372, %v1372
        %v1378 = vld [vmem:[#allocation12 + $0x8] sm:$0xf]
        %v1379 = vld [vmem:[#allocation12 + $0xc] sm:$0xf]
        %v1382 = vunpack.c.l.b16 %v1378
        %v1383 = vunpack.c.l.b16 %v1379
        %v1384 = vpack.c.b16 %v1383, %v1382
        %v1387 = vsel %vm1134, %v1377, 0
        %1389 = vmatprep.subr.bf16.mxu0 0
        %1390 = vmatpush1.bf16.msra.mxu0 %v1384
        %1391 = vmatprep.subr.bf16.mxu0 0
        %1392 = vmatpush1.bf16.msra.mxu0 0
        %1393 = vmatprep.subr.bf16.mxu0 0
        %1394 = vmatpush1.bf16.msra.mxu0 0
        %1395 = vmatprep.subr.bf16.mxu0 0
        %1396 = vmatpush1.bf16.msra.mxu0 0
        %1397 = vmatprep.subr.bf16.mxu0 0
        %1398 = vmatpush1.bf16.msra.mxu0 0
        %1399 = vmatprep.subr.bf16.mxu0 0
        %1400 = vmatpush1.bf16.msra.mxu0 0
        %1401 = vmatprep.subr.bf16.mxu0 0
        %1402 = vmatpush1.bf16.msra.mxu0 0
        %1403 = vmatprep.subr.bf16.mxu0 0
        %1404 = vmatpush1.bf16.msra.mxu0 0
        %1405 = vmatprep.subr.bf16.mxu0 0
        %1406 = vmatpush1.bf16.msra.mxu0 0
        %1407 = vmatprep.subr.bf16.mxu0 0
        %1408 = vmatpush1.bf16.msra.mxu0 0
        %1409 = vmatprep.subr.bf16.mxu0 0
        %1410 = vmatpush1.bf16.msra.mxu0 0
        %1411 = vmatprep.subr.bf16.mxu0 0
        %1412 = vmatpush1.bf16.msra.mxu0 0
        %1413 = vmatprep.subr.bf16.mxu0 0
        %1414 = vmatpush1.bf16.msra.mxu0 0
        %1415 = vmatprep.subr.bf16.mxu0 0
        %1416 = vmatpush1.bf16.msra.mxu0 0
        %1417 = vmatprep.subr.bf16.mxu0 0
        %1418 = vmatpush1.bf16.msra.mxu0 0
        %1419 = vmatprep.subr.bf16.mxu0 0
        %1420 = vmatpush1.bf16.msra.mxu0 0
        %1421 = vmatprep.mubr.bf16.mxu0 0
        %1422 = vmatmul.mubr.bf16.gmra.mrb[0].mxu0 %v1387
        %v1423 = vpop.f32.mrb[0].mxu0
        %v1424 = vadd.f32 0.0, %v1423
        %v1425 = vpop.f32.mrb[0].mxu0
        %v1426 = vpop.f32.mrb[0].mxu0
        %v1427 = vpop.f32.mrb[0].mxu0
        %1428 = vdwg.mxu0
        %v1431 = vunpack.c.l.b16 %v1253
        %v1432 = vunpack.c.l.b16 %v1254
        %v1433 = vpack.c.b16 %v1432, %v1431
        %v1436 = vsel %vm1134, %v1252, 0
        %1438 = vmatprep.subr.bf16.mxu0 0
        %1439 = vmatpush1.bf16.msra.mxu0 %v1433
        %1440 = vmatprep.subr.bf16.mxu0 0
        %1441 = vmatpush1.bf16.msra.mxu0 0
        %1442 = vmatprep.subr.bf16.mxu0 0
        %1443 = vmatpush1.bf16.msra.mxu0 0
        %1444 = vmatprep.subr.bf16.mxu0 0
        %1445 = vmatpush1.bf16.msra.mxu0 0
        %1446 = vmatprep.subr.bf16.mxu0 0
        %1447 = vmatpush1.bf16.msra.mxu0 0
        %1448 = vmatprep.subr.bf16.mxu0 0
        %1449 = vmatpush1.bf16.msra.mxu0 0
        %1450 = vmatprep.subr.bf16.mxu0 0
        %1451 = vmatpush1.bf16.msra.mxu0 0
        %1452 = vmatprep.subr.bf16.mxu0 0
        %1453 = vmatpush1.bf16.msra.mxu0 0
        %1454 = vmatprep.subr.bf16.mxu0 0
        %1455 = vmatpush1.bf16.msra.mxu0 0
        %1456 = vmatprep.subr.bf16.mxu0 0
        %1457 = vmatpush1.bf16.msra.mxu0 0
        %1458 = vmatprep.subr.bf16.mxu0 0
        %1459 = vmatpush1.bf16.msra.mxu0 0
        %1460 = vmatprep.subr.bf16.mxu0 0
        %1461 = vmatpush1.bf16.msra.mxu0 0
        %1462 = vmatprep.subr.bf16.mxu0 0
        %1463 = vmatpush1.bf16.msra.mxu0 0
        %1464 = vmatprep.subr.bf16.mxu0 0
        %1465 = vmatpush1.bf16.msra.mxu0 0
        %1466 = vmatprep.subr.bf16.mxu0 0
        %1467 = vmatpush1.bf16.msra.mxu0 0
        %1468 = vmatprep.subr.bf16.mxu0 0
        %1469 = vmatpush1.bf16.msra.mxu0 0
        %1470 = vmatprep.mubr.bf16.mxu0 0
        %1471 = vmatmul.mubr.bf16.gmra.mrb[0].mxu0 %v1436
        %v1472 = vpop.f32.mrb[0].mxu0
        %v1473 = vadd.f32 %v1424, %v1472
        %v1474 = vpop.f32.mrb[0].mxu0
        %v1475 = vpop.f32.mrb[0].mxu0
        %v1476 = vpop.f32.mrb[0].mxu0
        %1477 = vdwg.mxu0
        %1478 = vrot.lane.b32.xlu0 %v1128, 96
        %v1479 = vpop.permute.xlu0 %1478
        %1480 = vrot.lane.b32.xlu0 %v1260, 96
        %v1481 = vpop.permute.xlu0 %1480
        %v1483 = vsel %vm1134, %v1479, 0
        %v1486 = vsel %vm1134, %v1481, 0
        %1488 = vmatprep.subr.bf16.mxu0 0
        %1489 = vmatpush1.bf16.xpose.msra.mxu0 %v1486
        %1490 = vmatprep.subr.bf16.mxu0 0
        %1491 = vmatpush1.bf16.xpose.msra.mxu0 0
        %1492 = vmatprep.subr.bf16.mxu0 0
        %1493 = vmatpush1.bf16.xpose.msra.mxu0 0
        %1494 = vmatprep.subr.bf16.mxu0 0
        %1495 = vmatpush1.bf16.xpose.msra.mxu0 0
        %1496 = vmatprep.subr.bf16.mxu0 0
        %1497 = vmatpush1.bf16.xpose.msra.mxu0 0
        %1498 = vmatprep.subr.bf16.mxu0 0
        %1499 = vmatpush1.bf16.xpose.msra.mxu0 0
        %1500 = vmatprep.subr.bf16.mxu0 0
        %1501 = vmatpush1.bf16.xpose.msra.mxu0 0
        %1502 = vmatprep.subr.bf16.mxu0 0
        %1503 = vmatpush1.bf16.xpose.msra.mxu0 0
        %1504 = vmatprep.subr.bf16.mxu0 0
        %1505 = vmatpush1.bf16.xpose.msra.mxu0 0
        %1506 = vmatprep.subr.bf16.mxu0 0
        %1507 = vmatpush1.bf16.xpose.msra.mxu0 0
        %1508 = vmatprep.subr.bf16.mxu0 0
        %1509 = vmatpush1.bf16.xpose.msra.mxu0 0
        %1510 = vmatprep.subr.bf16.mxu0 0
        %1511 = vmatpush1.bf16.xpose.msra.mxu0 0
        %1512 = vmatprep.subr.bf16.mxu0 0
        %1513 = vmatpush1.bf16.xpose.msra.mxu0 0
        %1514 = vmatprep.subr.bf16.mxu0 0
        %1515 = vmatpush1.bf16.xpose.msra.mxu0 0
        %1516 = vmatprep.subr.bf16.mxu0 0
        %1517 = vmatpush1.bf16.xpose.msra.mxu0 0
        %1518 = vmatprep.subr.bf16.mxu0 0
        %1519 = vmatpush1.bf16.xpose.msra.mxu0 0
        %1520 = vmatprep.mubr.bf16.mxu0 0
        %1521 = vmatmul.mubr.bf16.gmra.mrb[0].mxu0 %v1483
        %v1522 = vpop.f32.mrb[0].mxu0
        %v1523 = vadd.f32 0.0, %v1522
        %v1524 = vpop.f32.mrb[0].mxu0
        %v1525 = vpop.f32.mrb[0].mxu0
        %v1526 = vpop.f32.mrb[0].mxu0
        %1527 = vdwg.mxu0
        %v1528 = vmul.f32 %v1523, 0.25
        %v1529 = vadd.f32 %v1528, %v1186
        %v1530 = vsel %vm1189, %v1529, -inf
        %1531 = vmax.xlane.f32.xlu0 %v1530
        %v1532 = vpop.xlane.xlu0 %1531
        %v1533 = vsub.f32 %v1529, %v1532
        %v1534 = vmul.f32 %v1533, 1.442695
        %v1535 = vpow.pop %v1534
        %v1536 = vsel %vm1189, %v1535, 0.0
        %1537 = vadd.xlane.f32.xlu0 %v1536
        %v1538 = vpop.xlane.xlu0 %1537
        %v1539 = vrcp.pop %v1538
        %v1540 = vmul.f32 %v1538, %v1539
        %v1541 = vsub.f32 2.0, %v1540
        %v1542 = vmul.f32 %v1539, %v1541
        %v1543 = vmul.f32 %v1535, %v1542
        %v1544 = vpack.c.bf16 %v1543, %v1543
        %1545 = vrot.lane.b32.xlu0 %v1328, 96
        %v1546 = vpop.permute.xlu0 %1545
        %v1548 = vsel %vm1189, %v1544, 0
        %v1551 = vsel %vm1208, %v1546, 0
        %1553 = vmatprep.subr.bf16.mxu0 0
        %1554 = vmatpush1.bf16.msra.mxu0 %v1551
        %1555 = vmatprep.subr.bf16.mxu0 0
        %1556 = vmatpush1.bf16.msra.mxu0 0
        %1557 = vmatprep.subr.bf16.mxu0 0
        %1558 = vmatpush1.bf16.msra.mxu0 0
        %1559 = vmatprep.subr.bf16.mxu0 0
        %1560 = vmatpush1.bf16.msra.mxu0 0
        %1561 = vmatprep.subr.bf16.mxu0 0
        %1562 = vmatpush1.bf16.msra.mxu0 0
        %1563 = vmatprep.subr.bf16.mxu0 0
        %1564 = vmatpush1.bf16.msra.mxu0 0
        %1565 = vmatprep.subr.bf16.mxu0 0
        %1566 = vmatpush1.bf16.msra.mxu0 0
        %1567 = vmatprep.subr.bf16.mxu0 0
        %1568 = vmatpush1.bf16.msra.mxu0 0
        %1569 = vmatprep.subr.bf16.mxu0 0
        %1570 = vmatpush1.bf16.msra.mxu0 0
        %1571 = vmatprep.subr.bf16.mxu0 0
        %1572 = vmatpush1.bf16.msra.mxu0 0
        %1573 = vmatprep.subr.bf16.mxu0 0
        %1574 = vmatpush1.bf16.msra.mxu0 0
        %1575 = vmatprep.subr.bf16.mxu0 0
        %1576 = vmatpush1.bf16.msra.mxu0 0
        %1577 = vmatprep.subr.bf16.mxu0 0
        %1578 = vmatpush1.bf16.msra.mxu0 0
        %1579 = vmatprep.subr.bf16.mxu0 0
        %1580 = vmatpush1.bf16.msra.mxu0 0
        %1581 = vmatprep.subr.bf16.mxu0 0
        %1582 = vmatpush1.bf16.msra.mxu0 0
        %1583 = vmatprep.subr.bf16.mxu0 0
        %1584 = vmatpush1.bf16.msra.mxu0 0
        %1585 = vmatprep.mubr.bf16.mxu0 0
        %1586 = vmatmul.mubr.bf16.gmra.mrb[0].mxu0 %v1548
        %v1587 = vpop.f32.mrb[0].mxu0
        %v1588 = vadd.f32 0.0, %v1587
        %v1589 = vpop.f32.mrb[0].mxu0
        %v1590 = vpop.f32.mrb[0].mxu0
        %v1591 = vpop.f32.mrb[0].mxu0
        %1592 = vdwg.mxu0
        %v1593 = vpack.c.bf16 %v1588, %v1588
        %v1594 = vld [vmem:[#allocation12 + $0x10] sm:$0xf]
        %v1595 = vld [vmem:[#allocation12 + $0x14] sm:$0xf]
        %v1598 = vunpack.c.l.b16 %v1594
        %v1599 = vunpack.c.l.b16 %v1595
        %v1600 = vpack.c.b16 %v1599, %v1598
        %v1603 = vsel %vm1134, %v1593, 0
        %1605 = vmatprep.subr.bf16.mxu0 0
        %1606 = vmatpush1.bf16.msra.mxu0 %v1600
        %1607 = vmatprep.subr.bf16.mxu0 0
        %1608 = vmatpush1.bf16.msra.mxu0 0
        %1609 = vmatprep.subr.bf16.mxu0 0
        %1610 = vmatpush1.bf16.msra.mxu0 0
        %1611 = vmatprep.subr.bf16.mxu0 0
        %1612 = vmatpush1.bf16.msra.mxu0 0
        %1613 = vmatprep.subr.bf16.mxu0 0
        %1614 = vmatpush1.bf16.msra.mxu0 0
        %1615 = vmatprep.subr.bf16.mxu0 0
        %1616 = vmatpush1.bf16.msra.mxu0 0
        %1617 = vmatprep.subr.bf16.mxu0 0
        %1618 = vmatpush1.bf16.msra.mxu0 0
        %1619 = vmatprep.subr.bf16.mxu0 0
        %1620 = vmatpush1.bf16.msra.mxu0 0
        %1621 = vmatprep.subr.bf16.mxu0 0
        %1622 = vmatpush1.bf16.msra.mxu0 0
        %1623 = vmatprep.subr.bf16.mxu0 0
        %1624 = vmatpush1.bf16.msra.mxu0 0
        %1625 = vmatprep.subr.bf16.mxu0 0
        %1626 = vmatpush1.bf16.msra.mxu0 0
        %1627 = vmatprep.subr.bf16.mxu0 0
        %1628 = vmatpush1.bf16.msra.mxu0 0
        %1629 = vmatprep.subr.bf16.mxu0 0
        %1630 = vmatpush1.bf16.msra.mxu0 0
        %1631 = vmatprep.subr.bf16.mxu0 0
        %1632 = vmatpush1.bf16.msra.mxu0 0
        %1633 = vmatprep.subr.bf16.mxu0 0
        %1634 = vmatpush1.bf16.msra.mxu0 0
        %1635 = vmatprep.subr.bf16.mxu0 0
        %1636 = vmatpush1.bf16.msra.mxu0 0
        %1637 = vmatprep.mubr.bf16.mxu0 0
        %1638 = vmatmul.mubr.bf16.gmra.mrb[0].mxu0 %v1603
        %v1639 = vpop.f32.mrb[0].mxu0
        %v1640 = vadd.f32 0.0, %v1639
        %v1641 = vpop.f32.mrb[0].mxu0
        %v1642 = vpop.f32.mrb[0].mxu0
        %v1643 = vpop.f32.mrb[0].mxu0
        %1644 = vdwg.mxu0
        %v1645 = vadd.f32 %v1473, %v1640
        %1646 = vrot.lane.b32.xlu0 %v1128, 80
        %v1647 = vpop.permute.xlu0 %1646
        %1648 = vrot.lane.b32.xlu0 %v1260, 80
        %v1649 = vpop.permute.xlu0 %1648
        %v1651 = vsel %vm1134, %v1647, 0
        %v1654 = vsel %vm1134, %v1649, 0
        %1656 = vmatprep.subr.bf16.mxu0 0
        %1657 = vmatpush1.bf16.xpose.msra.mxu0 %v1654
        %1658 = vmatprep.subr.bf16.mxu0 0
        %1659 = vmatpush1.bf16.xpose.msra.mxu0 0
        %1660 = vmatprep.subr.bf16.mxu0 0
        %1661 = vmatpush1.bf16.xpose.msra.mxu0 0
        %1662 = vmatprep.subr.bf16.mxu0 0
        %1663 = vmatpush1.bf16.xpose.msra.mxu0 0
        %1664 = vmatprep.subr.bf16.mxu0 0
        %1665 = vmatpush1.bf16.xpose.msra.mxu0 0
        %1666 = vmatprep.subr.bf16.mxu0 0
        %1667 = vmatpush1.bf16.xpose.msra.mxu0 0
        %1668 = vmatprep.subr.bf16.mxu0 0
        %1669 = vmatpush1.bf16.xpose.msra.mxu0 0
        %1670 = vmatprep.subr.bf16.mxu0 0
        %1671 = vmatpush1.bf16.xpose.msra.mxu0 0
        %1672 = vmatprep.subr.bf16.mxu0 0
        %1673 = vmatpush1.bf16.xpose.msra.mxu0 0
        %1674 = vmatprep.subr.bf16.mxu0 0
        %1675 = vmatpush1.bf16.xpose.msra.mxu0 0
        %1676 = vmatprep.subr.bf16.mxu0 0
        %1677 = vmatpush1.bf16.xpose.msra.mxu0 0
        %1678 = vmatprep.subr.bf16.mxu0 0
        %1679 = vmatpush1.bf16.xpose.msra.mxu0 0
        %1680 = vmatprep.subr.bf16.mxu0 0
        %1681 = vmatpush1.bf16.xpose.msra.mxu0 0
        %1682 = vmatprep.subr.bf16.mxu0 0
        %1683 = vmatpush1.bf16.xpose.msra.mxu0 0
        %1684 = vmatprep.subr.bf16.mxu0 0
        %1685 = vmatpush1.bf16.xpose.msra.mxu0 0
        %1686 = vmatprep.subr.bf16.mxu0 0
        %1687 = vmatpush1.bf16.xpose.msra.mxu0 0
        %1688 = vmatprep.mubr.bf16.mxu0 0
        %1689 = vmatmul.mubr.bf16.gmra.mrb[0].mxu0 %v1651
        %v1690 = vpop.f32.mrb[0].mxu0
        %v1691 = vadd.f32 0.0, %v1690
        %v1692 = vpop.f32.mrb[0].mxu0
        %v1693 = vpop.f32.mrb[0].mxu0
        %v1694 = vpop.f32.mrb[0].mxu0
        %1695 = vdwg.mxu0
        %v1696 = vmul.f32 %v1691, 0.25
        %v1697 = vadd.f32 %v1696, %v1186
        %v1698 = vsel %vm1189, %v1697, -inf
        %1699 = vmax.xlane.f32.xlu0 %v1698
        %v1700 = vpop.xlane.xlu0 %1699
        %v1701 = vsub.f32 %v1697, %v1700
        %v1702 = vmul.f32 %v1701, 1.442695
        %v1703 = vpow.pop %v1702
        %v1704 = vsel %vm1189, %v1703, 0.0
        %1705 = vadd.xlane.f32.xlu0 %v1704
        %v1706 = vpop.xlane.xlu0 %1705
        %v1707 = vrcp.pop %v1706
        %v1708 = vmul.f32 %v1706, %v1707
        %v1709 = vsub.f32 2.0, %v1708
        %v1710 = vmul.f32 %v1707, %v1709
        %v1711 = vmul.f32 %v1703, %v1710
        %v1712 = vpack.c.bf16 %v1711, %v1711
        %1713 = vrot.lane.b32.xlu0 %v1328, 80
        %v1714 = vpop.permute.xlu0 %1713
        %v1716 = vsel %vm1189, %v1712, 0
        %v1719 = vsel %vm1208, %v1714, 0
        %1721 = vmatprep.subr.bf16.mxu0 0
        %1722 = vmatpush1.bf16.msra.mxu0 %v1719
        %1723 = vmatprep.subr.bf16.mxu0 0
        %1724 = vmatpush1.bf16.msra.mxu0 0
        %1725 = vmatprep.subr.bf16.mxu0 0
        %1726 = vmatpush1.bf16.msra.mxu0 0
        %1727 = vmatprep.subr.bf16.mxu0 0
        %1728 = vmatpush1.bf16.msra.mxu0 0
        %1729 = vmatprep.subr.bf16.mxu0 0
        %1730 = vmatpush1.bf16.msra.mxu0 0
        %1731 = vmatprep.subr.bf16.mxu0 0
        %1732 = vmatpush1.bf16.msra.mxu0 0
        %1733 = vmatprep.subr.bf16.mxu0 0
        %1734 = vmatpush1.bf16.msra.mxu0 0
        %1735 = vmatprep.subr.bf16.mxu0 0
        %1736 = vmatpush1.bf16.msra.mxu0 0
        %1737 = vmatprep.subr.bf16.mxu0 0
        %1738 = vmatpush1.bf16.msra.mxu0 0
        %1739 = vmatprep.subr.bf16.mxu0 0
        %1740 = vmatpush1.bf16.msra.mxu0 0
        %1741 = vmatprep.subr.bf16.mxu0 0
        %1742 = vmatpush1.bf16.msra.mxu0 0
        %1743 = vmatprep.subr.bf16.mxu0 0
        %1744 = vmatpush1.bf16.msra.mxu0 0
        %1745 = vmatprep.subr.bf16.mxu0 0
        %1746 = vmatpush1.bf16.msra.mxu0 0
        %1747 = vmatprep.subr.bf16.mxu0 0
        %1748 = vmatpush1.bf16.msra.mxu0 0
        %1749 = vmatprep.subr.bf16.mxu0 0
        %1750 = vmatpush1.bf16.msra.mxu0 0
        %1751 = vmatprep.subr.bf16.mxu0 0
        %1752 = vmatpush1.bf16.msra.mxu0 0
        %1753 = vmatprep.mubr.bf16.mxu0 0
        %1754 = vmatmul.mubr.bf16.gmra.mrb[0].mxu0 %v1716
        %v1755 = vpop.f32.mrb[0].mxu0
        %v1756 = vadd.f32 0.0, %v1755
        %v1757 = vpop.f32.mrb[0].mxu0
        %v1758 = vpop.f32.mrb[0].mxu0
        %v1759 = vpop.f32.mrb[0].mxu0
        %1760 = vdwg.mxu0
        %v1761 = vpack.c.bf16 %v1756, %v1756
        %v1762 = vld [vmem:[#allocation12 + $0x18] sm:$0xf]
        %v1763 = vld [vmem:[#allocation12 + $0x1c] sm:$0xf]
        %v1766 = vunpack.c.l.b16 %v1762
        %v1767 = vunpack.c.l.b16 %v1763
        %v1768 = vpack.c.b16 %v1767, %v1766
        %v1771 = vsel %vm1134, %v1761, 0
        %1773 = vmatprep.subr.bf16.mxu0 0
        %1774 = vmatpush1.bf16.msra.mxu0 %v1768
        %1775 = vmatprep.subr.bf16.mxu0 0
        %1776 = vmatpush1.bf16.msra.mxu0 0
        %1777 = vmatprep.subr.bf16.mxu0 0
        %1778 = vmatpush1.bf16.msra.mxu0 0
        %1779 = vmatprep.subr.bf16.mxu0 0
        %1780 = vmatpush1.bf16.msra.mxu0 0
        %1781 = vmatprep.subr.bf16.mxu0 0
        %1782 = vmatpush1.bf16.msra.mxu0 0
        %1783 = vmatprep.subr.bf16.mxu0 0
        %1784 = vmatpush1.bf16.msra.mxu0 0
        %1785 = vmatprep.subr.bf16.mxu0 0
        %1786 = vmatpush1.bf16.msra.mxu0 0
        %1787 = vmatprep.subr.bf16.mxu0 0
        %1788 = vmatpush1.bf16.msra.mxu0 0
        %1789 = vmatprep.subr.bf16.mxu0 0
        %1790 = vmatpush1.bf16.msra.mxu0 0
        %1791 = vmatprep.subr.bf16.mxu0 0
        %1792 = vmatpush1.bf16.msra.mxu0 0
        %1793 = vmatprep.subr.bf16.mxu0 0
        %1794 = vmatpush1.bf16.msra.mxu0 0
        %1795 = vmatprep.subr.bf16.mxu0 0
        %1796 = vmatpush1.bf16.msra.mxu0 0
        %1797 = vmatprep.subr.bf16.mxu0 0
        %1798 = vmatpush1.bf16.msra.mxu0 0
        %1799 = vmatprep.subr.bf16.mxu0 0
        %1800 = vmatpush1.bf16.msra.mxu0 0
        %1801 = vmatprep.subr.bf16.mxu0 0
        %1802 = vmatpush1.bf16.msra.mxu0 0
        %1803 = vmatprep.subr.bf16.mxu0 0
        %1804 = vmatpush1.bf16.msra.mxu0 0
        %1805 = vmatprep.mubr.bf16.mxu0 0
        %1806 = vmatmul.mubr.bf16.gmra.mrb[0].mxu0 %v1771
        %v1807 = vpop.f32.mrb[0].mxu0
        %v1808 = vadd.f32 0.0, %v1807
        %v1809 = vpop.f32.mrb[0].mxu0
        %v1810 = vpop.f32.mrb[0].mxu0
        %v1811 = vpop.f32.mrb[0].mxu0
        %1812 = vdwg.mxu0
        %v1813 = vadd.f32 %v1645, %v1808
        %1814 = vrot.lane.b32.xlu0 %v1128, 64
        %v1815 = vpop.permute.xlu0 %1814
        %1816 = vrot.lane.b32.xlu0 %v1260, 64
        %v1817 = vpop.permute.xlu0 %1816
        %v1819 = vsel %vm1134, %v1815, 0
        %v1822 = vsel %vm1134, %v1817, 0
        %1824 = vmatprep.subr.bf16.mxu0 0
        %1825 = vmatpush1.bf16.xpose.msra.mxu0 %v1822
        %1826 = vmatprep.subr.bf16.mxu0 0
        %1827 = vmatpush1.bf16.xpose.msra.mxu0 0
        %1828 = vmatprep.subr.bf16.mxu0 0
        %1829 = vmatpush1.bf16.xpose.msra.mxu0 0
        %1830 = vmatprep.subr.bf16.mxu0 0
        %1831 = vmatpush1.bf16.xpose.msra.mxu0 0
        %1832 = vmatprep.subr.bf16.mxu0 0
        %1833 = vmatpush1.bf16.xpose.msra.mxu0 0
        %1834 = vmatprep.subr.bf16.mxu0 0
        %1835 = vmatpush1.bf16.xpose.msra.mxu0 0
        %1836 = vmatprep.subr.bf16.mxu0 0
        %1837 = vmatpush1.bf16.xpose.msra.mxu0 0
        %1838 = vmatprep.subr.bf16.mxu0 0
        %1839 = vmatpush1.bf16.xpose.msra.mxu0 0
        %1840 = vmatprep.subr.bf16.mxu0 0
        %1841 = vmatpush1.bf16.xpose.msra.mxu0 0
        %1842 = vmatprep.subr.bf16.mxu0 0
        %1843 = vmatpush1.bf16.xpose.msra.mxu0 0
        %1844 = vmatprep.subr.bf16.mxu0 0
        %1845 = vmatpush1.bf16.xpose.msra.mxu0 0
        %1846 = vmatprep.subr.bf16.mxu0 0
        %1847 = vmatpush1.bf16.xpose.msra.mxu0 0
        %1848 = vmatprep.subr.bf16.mxu0 0
        %1849 = vmatpush1.bf16.xpose.msra.mxu0 0
        %1850 = vmatprep.subr.bf16.mxu0 0
        %1851 = vmatpush1.bf16.xpose.msra.mxu0 0
        %1852 = vmatprep.subr.bf16.mxu0 0
        %1853 = vmatpush1.bf16.xpose.msra.mxu0 0
        %1854 = vmatprep.subr.bf16.mxu0 0
        %1855 = vmatpush1.bf16.xpose.msra.mxu0 0
        %1856 = vmatprep.mubr.bf16.mxu0 0
        %1857 = vmatmul.mubr.bf16.gmra.mrb[0].mxu0 %v1819
        %v1858 = vpop.f32.mrb[0].mxu0
        %v1859 = vadd.f32 0.0, %v1858
        %v1860 = vpop.f32.mrb[0].mxu0
        %v1861 = vpop.f32.mrb[0].mxu0
        %v1862 = vpop.f32.mrb[0].mxu0
        %1863 = vdwg.mxu0
        %v1864 = vmul.f32 %v1859, 0.25
        %v1865 = vadd.f32 %v1864, %v1186
        %v1866 = vsel %vm1189, %v1865, -inf
        %1867 = vmax.xlane.f32.xlu0 %v1866
        %v1868 = vpop.xlane.xlu0 %1867
        %v1869 = vsub.f32 %v1865, %v1868
        %v1870 = vmul.f32 %v1869, 1.442695
        %v1871 = vpow.pop %v1870
        %v1872 = vsel %vm1189, %v1871, 0.0
        %1873 = vadd.xlane.f32.xlu0 %v1872
        %v1874 = vpop.xlane.xlu0 %1873
        %v1875 = vrcp.pop %v1874
        %v1876 = vmul.f32 %v1874, %v1875
        %v1877 = vsub.f32 2.0, %v1876
        %v1878 = vmul.f32 %v1875, %v1877
        %v1879 = vmul.f32 %v1871, %v1878
        %v1880 = vpack.c.bf16 %v1879, %v1879
        %1881 = vrot.lane.b32.xlu0 %v1328, 64
        %v1882 = vpop.permute.xlu0 %1881
        %v1884 = vsel %vm1189, %v1880, 0
        %v1887 = vsel %vm1208, %v1882, 0
        %1889 = vmatprep.subr.bf16.mxu0 0
        %1890 = vmatpush1.bf16.msra.mxu0 %v1887
        %1891 = vmatprep.subr.bf16.mxu0 0
        %1892 = vmatpush1.bf16.msra.mxu0 0
        %1893 = vmatprep.subr.bf16.mxu0 0
        %1894 = vmatpush1.bf16.msra.mxu0 0
        %1895 = vmatprep.subr.bf16.mxu0 0
        %1896 = vmatpush1.bf16.msra.mxu0 0
        %1897 = vmatprep.subr.bf16.mxu0 0
        %1898 = vmatpush1.bf16.msra.mxu0 0
        %1899 = vmatprep.subr.bf16.mxu0 0
        %1900 = vmatpush1.bf16.msra.mxu0 0
        %1901 = vmatprep.subr.bf16.mxu0 0
        %1902 = vmatpush1.bf16.msra.mxu0 0
        %1903 = vmatprep.subr.bf16.mxu0 0
        %1904 = vmatpush1.bf16.msra.mxu0 0
        %1905 = vmatprep.subr.bf16.mxu0 0
        %1906 = vmatpush1.bf16.msra.mxu0 0
        %1907 = vmatprep.subr.bf16.mxu0 0
        %1908 = vmatpush1.bf16.msra.mxu0 0
        %1909 = vmatprep.subr.bf16.mxu0 0
        %1910 = vmatpush1.bf16.msra.mxu0 0
        %1911 = vmatprep.subr.bf16.mxu0 0
        %1912 = vmatpush1.bf16.msra.mxu0 0
        %1913 = vmatprep.subr.bf16.mxu0 0
        %1914 = vmatpush1.bf16.msra.mxu0 0
        %1915 = vmatprep.subr.bf16.mxu0 0
        %1916 = vmatpush1.bf16.msra.mxu0 0
        %1917 = vmatprep.subr.bf16.mxu0 0
        %1918 = vmatpush1.bf16.msra.mxu0 0
        %1919 = vmatprep.subr.bf16.mxu0 0
        %1920 = vmatpush1.bf16.msra.mxu0 0
        %1921 = vmatprep.mubr.bf16.mxu0 0
        %1922 = vmatmul.mubr.bf16.gmra.mrb[0].mxu0 %v1884
        %v1923 = vpop.f32.mrb[0].mxu0
        %v1924 = vadd.f32 0.0, %v1923
        %v1925 = vpop.f32.mrb[0].mxu0
        %v1926 = vpop.f32.mrb[0].mxu0
        %v1927 = vpop.f32.mrb[0].mxu0
        %1928 = vdwg.mxu0
        %v1929 = vpack.c.bf16 %v1924, %v1924
        %v1930 = vld [vmem:[#allocation12 + $0x20] sm:$0xf]
        %v1931 = vld [vmem:[#allocation12 + $0x24] sm:$0xf]
        %v1934 = vunpack.c.l.b16 %v1930
        %v1935 = vunpack.c.l.b16 %v1931
        %v1936 = vpack.c.b16 %v1935, %v1934
        %v1939 = vsel %vm1134, %v1929, 0
        %1941 = vmatprep.subr.bf16.mxu0 0
        %1942 = vmatpush1.bf16.msra.mxu0 %v1936
        %1943 = vmatprep.subr.bf16.mxu0 0
        %1944 = vmatpush1.bf16.msra.mxu0 0
        %1945 = vmatprep.subr.bf16.mxu0 0
        %1946 = vmatpush1.bf16.msra.mxu0 0
        %1947 = vmatprep.subr.bf16.mxu0 0
        %1948 = vmatpush1.bf16.msra.mxu0 0
        %1949 = vmatprep.subr.bf16.mxu0 0
        %1950 = vmatpush1.bf16.msra.mxu0 0
        %1951 = vmatprep.subr.bf16.mxu0 0
        %1952 = vmatpush1.bf16.msra.mxu0 0
        %1953 = vmatprep.subr.bf16.mxu0 0
        %1954 = vmatpush1.bf16.msra.mxu0 0
        %1955 = vmatprep.subr.bf16.mxu0 0
        %1956 = vmatpush1.bf16.msra.mxu0 0
        %1957 = vmatprep.subr.bf16.mxu0 0
        %1958 = vmatpush1.bf16.msra.mxu0 0
        %1959 = vmatprep.subr.bf16.mxu0 0
        %1960 = vmatpush1.bf16.msra.mxu0 0
        %1961 = vmatprep.subr.bf16.mxu0 0
        %1962 = vmatpush1.bf16.msra.mxu0 0
        %1963 = vmatprep.subr.bf16.mxu0 0
        %1964 = vmatpush1.bf16.msra.mxu0 0
        %1965 = vmatprep.subr.bf16.mxu0 0
        %1966 = vmatpush1.bf16.msra.mxu0 0
        %1967 = vmatprep.subr.bf16.mxu0 0
        %1968 = vmatpush1.bf16.msra.mxu0 0
        %1969 = vmatprep.subr.bf16.mxu0 0
        %1970 = vmatpush1.bf16.msra.mxu0 0
        %1971 = vmatprep.subr.bf16.mxu0 0
        %1972 = vmatpush1.bf16.msra.mxu0 0
        %1973 = vmatprep.mubr.bf16.mxu0 0
        %1974 = vmatmul.mubr.bf16.gmra.mrb[0].mxu0 %v1939
        %v1975 = vpop.f32.mrb[0].mxu0
        %v1976 = vadd.f32 0.0, %v1975
        %v1977 = vpop.f32.mrb[0].mxu0
        %v1978 = vpop.f32.mrb[0].mxu0
        %v1979 = vpop.f32.mrb[0].mxu0
        %1980 = vdwg.mxu0
        %v1981 = vadd.f32 %v1813, %v1976
        %1982 = vrot.lane.b32.xlu0 %v1128, 48
        %v1983 = vpop.permute.xlu0 %1982
        %1984 = vrot.lane.b32.xlu0 %v1260, 48
        %v1985 = vpop.permute.xlu0 %1984
        %v1987 = vsel %vm1134, %v1983, 0
        %v1990 = vsel %vm1134, %v1985, 0
        %1992 = vmatprep.subr.bf16.mxu0 0
        %1993 = vmatpush1.bf16.xpose.msra.mxu0 %v1990
        %1994 = vmatprep.subr.bf16.mxu0 0
        %1995 = vmatpush1.bf16.xpose.msra.mxu0 0
        %1996 = vmatprep.subr.bf16.mxu0 0
        %1997 = vmatpush1.bf16.xpose.msra.mxu0 0
        %1998 = vmatprep.subr.bf16.mxu0 0
        %1999 = vmatpush1.bf16.xpose.msra.mxu0 0
        %2000 = vmatprep.subr.bf16.mxu0 0
        %2001 = vmatpush1.bf16.xpose.msra.mxu0 0
        %2002 = vmatprep.subr.bf16.mxu0 0
        %2003 = vmatpush1.bf16.xpose.msra.mxu0 0
        %2004 = vmatprep.subr.bf16.mxu0 0
        %2005 = vmatpush1.bf16.xpose.msra.mxu0 0
        %2006 = vmatprep.subr.bf16.mxu0 0
        %2007 = vmatpush1.bf16.xpose.msra.mxu0 0
        %2008 = vmatprep.subr.bf16.mxu0 0
        %2009 = vmatpush1.bf16.xpose.msra.mxu0 0
        %2010 = vmatprep.subr.bf16.mxu0 0
        %2011 = vmatpush1.bf16.xpose.msra.mxu0 0
        %2012 = vmatprep.subr.bf16.mxu0 0
        %2013 = vmatpush1.bf16.xpose.msra.mxu0 0
        %2014 = vmatprep.subr.bf16.mxu0 0
        %2015 = vmatpush1.bf16.xpose.msra.mxu0 0
        %2016 = vmatprep.subr.bf16.mxu0 0
        %2017 = vmatpush1.bf16.xpose.msra.mxu0 0
        %2018 = vmatprep.subr.bf16.mxu0 0
        %2019 = vmatpush1.bf16.xpose.msra.mxu0 0
        %2020 = vmatprep.subr.bf16.mxu0 0
        %2021 = vmatpush1.bf16.xpose.msra.mxu0 0
        %2022 = vmatprep.subr.bf16.mxu0 0
        %2023 = vmatpush1.bf16.xpose.msra.mxu0 0
        %2024 = vmatprep.mubr.bf16.mxu0 0
        %2025 = vmatmul.mubr.bf16.gmra.mrb[0].mxu0 %v1987
        %v2026 = vpop.f32.mrb[0].mxu0
        %v2027 = vadd.f32 0.0, %v2026
        %v2028 = vpop.f32.mrb[0].mxu0
        %v2029 = vpop.f32.mrb[0].mxu0
        %v2030 = vpop.f32.mrb[0].mxu0
        %2031 = vdwg.mxu0
        %v2032 = vmul.f32 %v2027, 0.25
        %v2033 = vadd.f32 %v2032, %v1186
        %v2034 = vsel %vm1189, %v2033, -inf
        %2035 = vmax.xlane.f32.xlu0 %v2034
        %v2036 = vpop.xlane.xlu0 %2035
        %v2037 = vsub.f32 %v2033, %v2036
        %v2038 = vmul.f32 %v2037, 1.442695
        %v2039 = vpow.pop %v2038
        %v2040 = vsel %vm1189, %v2039, 0.0
        %2041 = vadd.xlane.f32.xlu0 %v2040
        %v2042 = vpop.xlane.xlu0 %2041
        %v2043 = vrcp.pop %v2042
        %v2044 = vmul.f32 %v2042, %v2043
        %v2045 = vsub.f32 2.0, %v2044
        %v2046 = vmul.f32 %v2043, %v2045
        %v2047 = vmul.f32 %v2039, %v2046
        %v2048 = vpack.c.bf16 %v2047, %v2047
        %2049 = vrot.lane.b32.xlu0 %v1328, 48
        %v2050 = vpop.permute.xlu0 %2049
        %v2052 = vsel %vm1189, %v2048, 0
        %v2055 = vsel %vm1208, %v2050, 0
        %2057 = vmatprep.subr.bf16.mxu0 0
        %2058 = vmatpush1.bf16.msra.mxu0 %v2055
        %2059 = vmatprep.subr.bf16.mxu0 0
        %2060 = vmatpush1.bf16.msra.mxu0 0
        %2061 = vmatprep.subr.bf16.mxu0 0
        %2062 = vmatpush1.bf16.msra.mxu0 0
        %2063 = vmatprep.subr.bf16.mxu0 0
        %2064 = vmatpush1.bf16.msra.mxu0 0
        %2065 = vmatprep.subr.bf16.mxu0 0
        %2066 = vmatpush1.bf16.msra.mxu0 0
        %2067 = vmatprep.subr.bf16.mxu0 0
        %2068 = vmatpush1.bf16.msra.mxu0 0
        %2069 = vmatprep.subr.bf16.mxu0 0
        %2070 = vmatpush1.bf16.msra.mxu0 0
        %2071 = vmatprep.subr.bf16.mxu0 0
        %2072 = vmatpush1.bf16.msra.mxu0 0
        %2073 = vmatprep.subr.bf16.mxu0 0
        %2074 = vmatpush1.bf16.msra.mxu0 0
        %2075 = vmatprep.subr.bf16.mxu0 0
        %2076 = vmatpush1.bf16.msra.mxu0 0
        %2077 = vmatprep.subr.bf16.mxu0 0
        %2078 = vmatpush1.bf16.msra.mxu0 0
        %2079 = vmatprep.subr.bf16.mxu0 0
        %2080 = vmatpush1.bf16.msra.mxu0 0
        %2081 = vmatprep.subr.bf16.mxu0 0
        %2082 = vmatpush1.bf16.msra.mxu0 0
        %2083 = vmatprep.subr.bf16.mxu0 0
        %2084 = vmatpush1.bf16.msra.mxu0 0
        %2085 = vmatprep.subr.bf16.mxu0 0
        %2086 = vmatpush1.bf16.msra.mxu0 0
        %2087 = vmatprep.subr.bf16.mxu0 0
        %2088 = vmatpush1.bf16.msra.mxu0 0
        %2089 = vmatprep.mubr.bf16.mxu0 0
        %2090 = vmatmul.mubr.bf16.gmra.mrb[0].mxu0 %v2052
        %v2091 = vpop.f32.mrb[0].mxu0
        %v2092 = vadd.f32 0.0, %v2091
        %v2093 = vpop.f32.mrb[0].mxu0
        %v2094 = vpop.f32.mrb[0].mxu0
        %v2095 = vpop.f32.mrb[0].mxu0
        %2096 = vdwg.mxu0
        %v2097 = vpack.c.bf16 %v2092, %v2092
        %v2098 = vld [vmem:[#allocation12 + $0x28] sm:$0xf]
        %v2099 = vld [vmem:[#allocation12 + $0x2c] sm:$0xf]
        %v2102 = vunpack.c.l.b16 %v2098
        %v2103 = vunpack.c.l.b16 %v2099
        %v2104 = vpack.c.b16 %v2103, %v2102
        %v2107 = vsel %vm1134, %v2097, 0
        %2109 = vmatprep.subr.bf16.mxu0 0
        %2110 = vmatpush1.bf16.msra.mxu0 %v2104
        %2111 = vmatprep.subr.bf16.mxu0 0
        %2112 = vmatpush1.bf16.msra.mxu0 0
        %2113 = vmatprep.subr.bf16.mxu0 0
        %2114 = vmatpush1.bf16.msra.mxu0 0
        %2115 = vmatprep.subr.bf16.mxu0 0
        %2116 = vmatpush1.bf16.msra.mxu0 0
        %2117 = vmatprep.subr.bf16.mxu0 0
        %2118 = vmatpush1.bf16.msra.mxu0 0
        %2119 = vmatprep.subr.bf16.mxu0 0
        %2120 = vmatpush1.bf16.msra.mxu0 0
        %2121 = vmatprep.subr.bf16.mxu0 0
        %2122 = vmatpush1.bf16.msra.mxu0 0
        %2123 = vmatprep.subr.bf16.mxu0 0
        %2124 = vmatpush1.bf16.msra.mxu0 0
        %2125 = vmatprep.subr.bf16.mxu0 0
        %2126 = vmatpush1.bf16.msra.mxu0 0
        %2127 = vmatprep.subr.bf16.mxu0 0
        %2128 = vmatpush1.bf16.msra.mxu0 0
        %2129 = vmatprep.subr.bf16.mxu0 0
        %2130 = vmatpush1.bf16.msra.mxu0 0
        %2131 = vmatprep.subr.bf16.mxu0 0
        %2132 = vmatpush1.bf16.msra.mxu0 0
        %2133 = vmatprep.subr.bf16.mxu0 0
        %2134 = vmatpush1.bf16.msra.mxu0 0
        %2135 = vmatprep.subr.bf16.mxu0 0
        %2136 = vmatpush1.bf16.msra.mxu0 0
        %2137 = vmatprep.subr.bf16.mxu0 0
        %2138 = vmatpush1.bf16.msra.mxu0 0
        %2139 = vmatprep.subr.bf16.mxu0 0
        %2140 = vmatpush1.bf16.msra.mxu0 0
        %2141 = vmatprep.mubr.bf16.mxu0 0
        %2142 = vmatmul.mubr.bf16.gmra.mrb[0].mxu0 %v2107
        %v2143 = vpop.f32.mrb[0].mxu0
        %v2144 = vadd.f32 0.0, %v2143
        %v2145 = vpop.f32.mrb[0].mxu0
        %v2146 = vpop.f32.mrb[0].mxu0
        %v2147 = vpop.f32.mrb[0].mxu0
        %2148 = vdwg.mxu0
        %v2149 = vadd.f32 %v1981, %v2144
        %2150 = vrot.lane.b32.xlu0 %v1128, 32
        %v2151 = vpop.permute.xlu0 %2150
        %2152 = vrot.lane.b32.xlu0 %v1260, 32
        %v2153 = vpop.permute.xlu0 %2152
        %v2155 = vsel %vm1134, %v2151, 0
        %v2158 = vsel %vm1134, %v2153, 0
        %2160 = vmatprep.subr.bf16.mxu0 0
        %2161 = vmatpush1.bf16.xpose.msra.mxu0 %v2158
        %2162 = vmatprep.subr.bf16.mxu0 0
        %2163 = vmatpush1.bf16.xpose.msra.mxu0 0
        %2164 = vmatprep.subr.bf16.mxu0 0
        %2165 = vmatpush1.bf16.xpose.msra.mxu0 0
        %2166 = vmatprep.subr.bf16.mxu0 0
        %2167 = vmatpush1.bf16.xpose.msra.mxu0 0
        %2168 = vmatprep.subr.bf16.mxu0 0
        %2169 = vmatpush1.bf16.xpose.msra.mxu0 0
        %2170 = vmatprep.subr.bf16.mxu0 0
        %2171 = vmatpush1.bf16.xpose.msra.mxu0 0
        %2172 = vmatprep.subr.bf16.mxu0 0
        %2173 = vmatpush1.bf16.xpose.msra.mxu0 0
        %2174 = vmatprep.subr.bf16.mxu0 0
        %2175 = vmatpush1.bf16.xpose.msra.mxu0 0
        %2176 = vmatprep.subr.bf16.mxu0 0
        %2177 = vmatpush1.bf16.xpose.msra.mxu0 0
        %2178 = vmatprep.subr.bf16.mxu0 0
        %2179 = vmatpush1.bf16.xpose.msra.mxu0 0
        %2180 = vmatprep.subr.bf16.mxu0 0
        %2181 = vmatpush1.bf16.xpose.msra.mxu0 0
        %2182 = vmatprep.subr.bf16.mxu0 0
        %2183 = vmatpush1.bf16.xpose.msra.mxu0 0
        %2184 = vmatprep.subr.bf16.mxu0 0
        %2185 = vmatpush1.bf16.xpose.msra.mxu0 0
        %2186 = vmatprep.subr.bf16.mxu0 0
        %2187 = vmatpush1.bf16.xpose.msra.mxu0 0
        %2188 = vmatprep.subr.bf16.mxu0 0
        %2189 = vmatpush1.bf16.xpose.msra.mxu0 0
        %2190 = vmatprep.subr.bf16.mxu0 0
        %2191 = vmatpush1.bf16.xpose.msra.mxu0 0
        %2192 = vmatprep.mubr.bf16.mxu0 0
        %2193 = vmatmul.mubr.bf16.gmra.mrb[0].mxu0 %v2155
        %v2194 = vpop.f32.mrb[0].mxu0
        %v2195 = vadd.f32 0.0, %v2194
        %v2196 = vpop.f32.mrb[0].mxu0
        %v2197 = vpop.f32.mrb[0].mxu0
        %v2198 = vpop.f32.mrb[0].mxu0
        %2199 = vdwg.mxu0
        %v2200 = vmul.f32 %v2195, 0.25
        %v2201 = vadd.f32 %v2200, %v1186
        %v2202 = vsel %vm1189, %v2201, -inf
        %2203 = vmax.xlane.f32.xlu0 %v2202
        %v2204 = vpop.xlane.xlu0 %2203
        %v2205 = vsub.f32 %v2201, %v2204
        %v2206 = vmul.f32 %v2205, 1.442695
        %v2207 = vpow.pop %v2206
        %v2208 = vsel %vm1189, %v2207, 0.0
        %2209 = vadd.xlane.f32.xlu0 %v2208
        %v2210 = vpop.xlane.xlu0 %2209
        %v2211 = vrcp.pop %v2210
        %v2212 = vmul.f32 %v2210, %v2211
        %v2213 = vsub.f32 2.0, %v2212
        %v2214 = vmul.f32 %v2211, %v2213
        %v2215 = vmul.f32 %v2207, %v2214
        %v2216 = vpack.c.bf16 %v2215, %v2215
        %2217 = vrot.lane.b32.xlu0 %v1328, 32
        %v2218 = vpop.permute.xlu0 %2217
        %v2220 = vsel %vm1189, %v2216, 0
        %v2223 = vsel %vm1208, %v2218, 0
        %2225 = vmatprep.subr.bf16.mxu0 0
        %2226 = vmatpush1.bf16.msra.mxu0 %v2223
        %2227 = vmatprep.subr.bf16.mxu0 0
        %2228 = vmatpush1.bf16.msra.mxu0 0
        %2229 = vmatprep.subr.bf16.mxu0 0
        %2230 = vmatpush1.bf16.msra.mxu0 0
        %2231 = vmatprep.subr.bf16.mxu0 0
        %2232 = vmatpush1.bf16.msra.mxu0 0
        %2233 = vmatprep.subr.bf16.mxu0 0
        %2234 = vmatpush1.bf16.msra.mxu0 0
        %2235 = vmatprep.subr.bf16.mxu0 0
        %2236 = vmatpush1.bf16.msra.mxu0 0
        %2237 = vmatprep.subr.bf16.mxu0 0
        %2238 = vmatpush1.bf16.msra.mxu0 0
        %2239 = vmatprep.subr.bf16.mxu0 0
        %2240 = vmatpush1.bf16.msra.mxu0 0
        %2241 = vmatprep.subr.bf16.mxu0 0
        %2242 = vmatpush1.bf16.msra.mxu0 0
        %2243 = vmatprep.subr.bf16.mxu0 0
        %2244 = vmatpush1.bf16.msra.mxu0 0
        %2245 = vmatprep.subr.bf16.mxu0 0
        %2246 = vmatpush1.bf16.msra.mxu0 0
        %2247 = vmatprep.subr.bf16.mxu0 0
        %2248 = vmatpush1.bf16.msra.mxu0 0
        %2249 = vmatprep.subr.bf16.mxu0 0
        %2250 = vmatpush1.bf16.msra.mxu0 0
        %2251 = vmatprep.subr.bf16.mxu0 0
        %2252 = vmatpush1.bf16.msra.mxu0 0
        %2253 = vmatprep.subr.bf16.mxu0 0
        %2254 = vmatpush1.bf16.msra.mxu0 0
        %2255 = vmatprep.subr.bf16.mxu0 0
        %2256 = vmatpush1.bf16.msra.mxu0 0
        %2257 = vmatprep.mubr.bf16.mxu0 0
        %2258 = vmatmul.mubr.bf16.gmra.mrb[0].mxu0 %v2220
        %v2259 = vpop.f32.mrb[0].mxu0
        %v2260 = vadd.f32 0.0, %v2259
        %v2261 = vpop.f32.mrb[0].mxu0
        %v2262 = vpop.f32.mrb[0].mxu0
        %v2263 = vpop.f32.mrb[0].mxu0
        %2264 = vdwg.mxu0
        %v2265 = vpack.c.bf16 %v2260, %v2260
        %v2266 = vld [vmem:[#allocation12 + $0x30] sm:$0xf]
        %v2267 = vld [vmem:[#allocation12 + $0x34] sm:$0xf]
        %v2270 = vunpack.c.l.b16 %v2266
        %v2271 = vunpack.c.l.b16 %v2267
        %v2272 = vpack.c.b16 %v2271, %v2270
        %v2275 = vsel %vm1134, %v2265, 0
        %2277 = vmatprep.subr.bf16.mxu0 0
        %2278 = vmatpush1.bf16.msra.mxu0 %v2272
        %2279 = vmatprep.subr.bf16.mxu0 0
        %2280 = vmatpush1.bf16.msra.mxu0 0
        %2281 = vmatprep.subr.bf16.mxu0 0
        %2282 = vmatpush1.bf16.msra.mxu0 0
        %2283 = vmatprep.subr.bf16.mxu0 0
        %2284 = vmatpush1.bf16.msra.mxu0 0
        %2285 = vmatprep.subr.bf16.mxu0 0
        %2286 = vmatpush1.bf16.msra.mxu0 0
        %2287 = vmatprep.subr.bf16.mxu0 0
        %2288 = vmatpush1.bf16.msra.mxu0 0
        %2289 = vmatprep.subr.bf16.mxu0 0
        %2290 = vmatpush1.bf16.msra.mxu0 0
        %2291 = vmatprep.subr.bf16.mxu0 0
        %2292 = vmatpush1.bf16.msra.mxu0 0
        %2293 = vmatprep.subr.bf16.mxu0 0
        %2294 = vmatpush1.bf16.msra.mxu0 0
        %2295 = vmatprep.subr.bf16.mxu0 0
        %2296 = vmatpush1.bf16.msra.mxu0 0
        %2297 = vmatprep.subr.bf16.mxu0 0
        %2298 = vmatpush1.bf16.msra.mxu0 0
        %2299 = vmatprep.subr.bf16.mxu0 0
        %2300 = vmatpush1.bf16.msra.mxu0 0
        %2301 = vmatprep.subr.bf16.mxu0 0
        %2302 = vmatpush1.bf16.msra.mxu0 0
        %2303 = vmatprep.subr.bf16.mxu0 0
        %2304 = vmatpush1.bf16.msra.mxu0 0
        %2305 = vmatprep.subr.bf16.mxu0 0
        %2306 = vmatpush1.bf16.msra.mxu0 0
        %2307 = vmatprep.subr.bf16.mxu0 0
        %2308 = vmatpush1.bf16.msra.mxu0 0
        %2309 = vmatprep.mubr.bf16.mxu0 0
        %2310 = vmatmul.mubr.bf16.gmra.mrb[0].mxu0 %v2275
        %v2311 = vpop.f32.mrb[0].mxu0
        %v2312 = vadd.f32 0.0, %v2311
        %v2313 = vpop.f32.mrb[0].mxu0
        %v2314 = vpop.f32.mrb[0].mxu0
        %v2315 = vpop.f32.mrb[0].mxu0
        %2316 = vdwg.mxu0
        %v2317 = vadd.f32 %v2149, %v2312
        %2318 = vrot.lane.b32.xlu0 %v1128, 16
        %v2319 = vpop.permute.xlu0 %2318
        %2320 = vrot.lane.b32.xlu0 %v1260, 16
        %v2321 = vpop.permute.xlu0 %2320
        %v2323 = vsel %vm1134, %v2319, 0
        %v2326 = vsel %vm1134, %v2321, 0
        %2328 = vmatprep.subr.bf16.mxu0 0
        %2329 = vmatpush1.bf16.xpose.msra.mxu0 %v2326
        %2330 = vmatprep.subr.bf16.mxu0 0
        %2331 = vmatpush1.bf16.xpose.msra.mxu0 0
        %2332 = vmatprep.subr.bf16.mxu0 0
        %2333 = vmatpush1.bf16.xpose.msra.mxu0 0
        %2334 = vmatprep.subr.bf16.mxu0 0
        %2335 = vmatpush1.bf16.xpose.msra.mxu0 0
        %2336 = vmatprep.subr.bf16.mxu0 0
        %2337 = vmatpush1.bf16.xpose.msra.mxu0 0
        %2338 = vmatprep.subr.bf16.mxu0 0
        %2339 = vmatpush1.bf16.xpose.msra.mxu0 0
        %2340 = vmatprep.subr.bf16.mxu0 0
        %2341 = vmatpush1.bf16.xpose.msra.mxu0 0
        %2342 = vmatprep.subr.bf16.mxu0 0
        %2343 = vmatpush1.bf16.xpose.msra.mxu0 0
        %2344 = vmatprep.subr.bf16.mxu0 0
        %2345 = vmatpush1.bf16.xpose.msra.mxu0 0
        %2346 = vmatprep.subr.bf16.mxu0 0
        %2347 = vmatpush1.bf16.xpose.msra.mxu0 0
        %2348 = vmatprep.subr.bf16.mxu0 0
        %2349 = vmatpush1.bf16.xpose.msra.mxu0 0
        %2350 = vmatprep.subr.bf16.mxu0 0
        %2351 = vmatpush1.bf16.xpose.msra.mxu0 0
        %2352 = vmatprep.subr.bf16.mxu0 0
        %2353 = vmatpush1.bf16.xpose.msra.mxu0 0
        %2354 = vmatprep.subr.bf16.mxu0 0
        %2355 = vmatpush1.bf16.xpose.msra.mxu0 0
        %2356 = vmatprep.subr.bf16.mxu0 0
        %2357 = vmatpush1.bf16.xpose.msra.mxu0 0
        %2358 = vmatprep.subr.bf16.mxu0 0
        %2359 = vmatpush1.bf16.xpose.msra.mxu0 0
        %2360 = vmatprep.mubr.bf16.mxu0 0
        %2361 = vmatmul.mubr.bf16.gmra.mrb[0].mxu0 %v2323
        %v2362 = vpop.f32.mrb[0].mxu0
        %v2363 = vadd.f32 0.0, %v2362
        %v2364 = vpop.f32.mrb[0].mxu0
        %v2365 = vpop.f32.mrb[0].mxu0
        %v2366 = vpop.f32.mrb[0].mxu0
        %2367 = vdwg.mxu0
        %v2368 = vmul.f32 %v2363, 0.25
        %v2369 = vadd.f32 %v2368, %v1186
        %v2370 = vsel %vm1189, %v2369, -inf
        %2371 = vmax.xlane.f32.xlu0 %v2370
        %v2372 = vpop.xlane.xlu0 %2371
        %v2373 = vsub.f32 %v2369, %v2372
        %v2374 = vmul.f32 %v2373, 1.442695
        %v2375 = vpow.pop %v2374
        %v2376 = vsel %vm1189, %v2375, 0.0
        %2377 = vadd.xlane.f32.xlu0 %v2376
        %v2378 = vpop.xlane.xlu0 %2377
        %v2379 = vrcp.pop %v2378
        %v2380 = vmul.f32 %v2378, %v2379
        %v2381 = vsub.f32 2.0, %v2380
        %v2382 = vmul.f32 %v2379, %v2381
        %v2383 = vmul.f32 %v2375, %v2382
        %v2384 = vpack.c.bf16 %v2383, %v2383
        %2385 = vrot.lane.b32.xlu0 %v1328, 16
        %v2386 = vpop.permute.xlu0 %2385
        %v2388 = vsel %vm1189, %v2384, 0
        %v2391 = vsel %vm1208, %v2386, 0
        %2393 = vmatprep.subr.bf16.mxu0 0
        %2394 = vmatpush1.bf16.msra.mxu0 %v2391
        %2395 = vmatprep.subr.bf16.mxu0 0
        %2396 = vmatpush1.bf16.msra.mxu0 0
        %2397 = vmatprep.subr.bf16.mxu0 0
        %2398 = vmatpush1.bf16.msra.mxu0 0
        %2399 = vmatprep.subr.bf16.mxu0 0
        %2400 = vmatpush1.bf16.msra.mxu0 0
        %2401 = vmatprep.subr.bf16.mxu0 0
        %2402 = vmatpush1.bf16.msra.mxu0 0
        %2403 = vmatprep.subr.bf16.mxu0 0
        %2404 = vmatpush1.bf16.msra.mxu0 0
        %2405 = vmatprep.subr.bf16.mxu0 0
        %2406 = vmatpush1.bf16.msra.mxu0 0
        %2407 = vmatprep.subr.bf16.mxu0 0
        %2408 = vmatpush1.bf16.msra.mxu0 0
        %2409 = vmatprep.subr.bf16.mxu0 0
        %2410 = vmatpush1.bf16.msra.mxu0 0
        %2411 = vmatprep.subr.bf16.mxu0 0
        %2412 = vmatpush1.bf16.msra.mxu0 0
        %2413 = vmatprep.subr.bf16.mxu0 0
        %2414 = vmatpush1.bf16.msra.mxu0 0
        %2415 = vmatprep.subr.bf16.mxu0 0
        %2416 = vmatpush1.bf16.msra.mxu0 0
        %2417 = vmatprep.subr.bf16.mxu0 0
        %2418 = vmatpush1.bf16.msra.mxu0 0
        %2419 = vmatprep.subr.bf16.mxu0 0
        %2420 = vmatpush1.bf16.msra.mxu0 0
        %2421 = vmatprep.subr.bf16.mxu0 0
        %2422 = vmatpush1.bf16.msra.mxu0 0
        %2423 = vmatprep.subr.bf16.mxu0 0
        %2424 = vmatpush1.bf16.msra.mxu0 0
        %2425 = vmatprep.mubr.bf16.mxu0 0
        %2426 = vmatmul.mubr.bf16.gmra.mrb[0].mxu0 %v2388
        %v2427 = vpop.f32.mrb[0].mxu0
        %v2428 = vadd.f32 0.0, %v2427
        %v2429 = vpop.f32.mrb[0].mxu0
        %v2430 = vpop.f32.mrb[0].mxu0
        %v2431 = vpop.f32.mrb[0].mxu0
        %2432 = vdwg.mxu0
        %v2433 = vpack.c.bf16 %v2428, %v2428
        %v2434 = vld [vmem:[#allocation12 + $0x38] sm:$0xf]
        %v2435 = vld [vmem:[#allocation12 + $0x3c] sm:$0xf]
        %v2438 = vunpack.c.l.b16 %v2434
        %v2439 = vunpack.c.l.b16 %v2435
        %v2440 = vpack.c.b16 %v2439, %v2438
        %v2443 = vsel %vm1134, %v2433, 0
        %2445 = vmatprep.subr.bf16.mxu0 0
        %2446 = vmatpush1.bf16.msra.mxu0 %v2440
        %2447 = vmatprep.subr.bf16.mxu0 0
        %2448 = vmatpush1.bf16.msra.mxu0 0
        %2449 = vmatprep.subr.bf16.mxu0 0
        %2450 = vmatpush1.bf16.msra.mxu0 0
        %2451 = vmatprep.subr.bf16.mxu0 0
        %2452 = vmatpush1.bf16.msra.mxu0 0
        %2453 = vmatprep.subr.bf16.mxu0 0
        %2454 = vmatpush1.bf16.msra.mxu0 0
        %2455 = vmatprep.subr.bf16.mxu0 0
        %2456 = vmatpush1.bf16.msra.mxu0 0
        %2457 = vmatprep.subr.bf16.mxu0 0
        %2458 = vmatpush1.bf16.msra.mxu0 0
        %2459 = vmatprep.subr.bf16.mxu0 0
        %2460 = vmatpush1.bf16.msra.mxu0 0
        %2461 = vmatprep.subr.bf16.mxu0 0
        %2462 = vmatpush1.bf16.msra.mxu0 0
        %2463 = vmatprep.subr.bf16.mxu0 0
        %2464 = vmatpush1.bf16.msra.mxu0 0
        %2465 = vmatprep.subr.bf16.mxu0 0
        %2466 = vmatpush1.bf16.msra.mxu0 0
        %2467 = vmatprep.subr.bf16.mxu0 0
        %2468 = vmatpush1.bf16.msra.mxu0 0
        %2469 = vmatprep.subr.bf16.mxu0 0
        %2470 = vmatpush1.bf16.msra.mxu0 0
        %2471 = vmatprep.subr.bf16.mxu0 0
        %2472 = vmatpush1.bf16.msra.mxu0 0
        %2473 = vmatprep.subr.bf16.mxu0 0
        %2474 = vmatpush1.bf16.msra.mxu0 0
        %2475 = vmatprep.subr.bf16.mxu0 0
        %2476 = vmatpush1.bf16.msra.mxu0 0
        %2477 = vmatprep.mubr.bf16.mxu0 0
        %2478 = vmatmul.mubr.bf16.gmra.mrb[0].mxu0 %v2443
        %v2479 = vpop.f32.mrb[0].mxu0
        %v2480 = vadd.f32 0.0, %v2479
        %v2481 = vpop.f32.mrb[0].mxu0
        %v2482 = vpop.f32.mrb[0].mxu0
        %v2483 = vpop.f32.mrb[0].mxu0
        %2484 = vdwg.mxu0
        %v2485 = vadd.f32 %v2317, %v2480
        %v2486 = vadd.f32 %v979, %v2485
        %v2487 = vld [vmem:[%s9] sm:$0x1]
        %v2489 = vlaneseq
        %v2490 = vshrl.u32 %v2489, 7
        %v2491 = vsub.s32 0, %v2490
        %v2492 = vrot.slane %v2487, %v2491
        %v2494 = vadd.f32 %v2486, %v2492
        %v2495 = vld [vmem:[%s12] sm:$0x1]
        %v2496 = vld [vmem:[%s13] sm:$0x1]
        %2497 = vadd.xlane.f32.xlu0 %v2494
        %v2498 = vpop.xlane.xlu0 %2497
        %v2499 = vmul.f32 %v2498, %v982
        %v2500 = vsub.f32 %v2494, %v2499
        %v2501 = vmul.f32 %v2500, %v2500
        %2502 = vadd.xlane.f32.xlu0 %v2501
        %v2503 = vpop.xlane.xlu0 %2502
        %v2504 = vmul.f32 %v2503, 0.007874016
        %v2506 = vlaneseq
        %v2507 = vshrl.u32 %v2506, 7
        %v2508 = vsub.s32 0, %v2507
        %v2509 = vrot.slane %v2495, %v2508
        %v2511 = vmul.f32 %v2509, %v2500
        %v2512 = vrsqrt.pop %v2504
        %v2513 = vmul.f32 %v2504, %v2512
        %vm2514 = vcmp.eq.f32.partialorder %v2504, inf
        %v2515 = vsel %vm2514, %v2504, %v2513
        %vm2516 = vcmp.eq.f32.partialorder %v2504, 0.0
        %v2517 = vand.u32 %v2504, 2147483648
        %v2518 = vsel %vm2516, %v2517, %v2515
        %v2519 = vadd.f32 %v2518, 1e-06
        %v2520 = vrcp.pop %v2519
        %v2521 = vmul.f32 %v2519, %v2520
        %v2522 = vsub.f32 2.0, %v2521
        %v2523 = vmul.f32 %v2520, %v2522
        %v2524 = vmul.f32 %v2511, %v2523
        %v2526 = vlaneseq
        %v2527 = vshrl.u32 %v2526, 7
        %v2528 = vsub.s32 0, %v2527
        %v2529 = vrot.slane %v2496, %v2528
        %v2531 = vadd.f32 %v2524, %v2529
        %v2532 = vpack.c.bf16 %v2531, %v2531
        %v2533 = vld [vmem:[#allocation13] sm:$0xff]
        %v2534 = vld [vmem:[#allocation13 + $0x8] sm:$0xff]
        %v2535 = vld [vmem:[#allocation13 + $0x10] sm:$0xff]
        %v2536 = vld [vmem:[#allocation13 + $0x18] sm:$0xff]
        %v2537 = vld [vmem:[#allocation13 + $0x20] sm:$0xff]
        %v2538 = vld [vmem:[#allocation13 + $0x28] sm:$0xff]
        %v2539 = vld [vmem:[#allocation13 + $0x30] sm:$0xff]
        %v2540 = vld [vmem:[#allocation13 + $0x38] sm:$0xff]
        %v2541 = vld [vmem:[#allocation13 + $0x40] sm:$0xff]
        %v2542 = vld [vmem:[#allocation13 + $0x48] sm:$0xff]
        %v2543 = vld [vmem:[#allocation13 + $0x50] sm:$0xff]
        %v2544 = vld [vmem:[#allocation13 + $0x58] sm:$0xff]
        %v2545 = vld [vmem:[#allocation13 + $0x60] sm:$0xff]
        %v2546 = vld [vmem:[#allocation13 + $0x68] sm:$0xff]
        %v2547 = vld [vmem:[#allocation13 + $0x70] sm:$0xff]
        %v2548 = vld [vmem:[#allocation13 + $0x78] sm:$0xff]
        %v2549 = vld [vmem:[%s15] sm:$0x3]
        %v2551 = vlaneseq
        %v2552 = vshrl.u32 %v2551, 7
        %v2553 = vsub.s32 0, %v2552
        %v2554 = vrot.slane %v2549, %v2553
        %v2555 = vlaneseq
        %v2556 = vshrl.u32 %v2555, 7
        %v2557 = vsub.s32 1, %v2556
        %v2558 = vrot.slane %v2549, %v2557
        %v2577 = vunpack.c.l.b16 %v2533
        %v2578 = vunpack.c.h.b16 %v2533
        %v2579 = vunpack.c.l.b16 %v2534
        %v2580 = vunpack.c.h.b16 %v2534
        %v2581 = vunpack.c.l.b16 %v2535
        %v2582 = vunpack.c.h.b16 %v2535
        %v2583 = vunpack.c.l.b16 %v2536
        %v2584 = vunpack.c.h.b16 %v2536
        %v2585 = vunpack.c.l.b16 %v2537
        %v2586 = vunpack.c.h.b16 %v2537
        %v2587 = vunpack.c.l.b16 %v2538
        %v2588 = vunpack.c.h.b16 %v2538
        %v2589 = vunpack.c.l.b16 %v2539
        %v2590 = vunpack.c.h.b16 %v2539
        %v2591 = vunpack.c.l.b16 %v2540
        %v2592 = vunpack.c.h.b16 %v2540
        %v2593 = vunpack.c.l.b16 %v2541
        %v2594 = vunpack.c.h.b16 %v2541
        %v2595 = vunpack.c.l.b16 %v2542
        %v2596 = vunpack.c.h.b16 %v2542
        %v2597 = vunpack.c.l.b16 %v2543
        %v2598 = vunpack.c.h.b16 %v2543
        %v2599 = vunpack.c.l.b16 %v2544
        %v2600 = vunpack.c.h.b16 %v2544
        %v2601 = vunpack.c.l.b16 %v2545
        %v2602 = vunpack.c.h.b16 %v2545
        %v2603 = vunpack.c.l.b16 %v2546
        %v2604 = vunpack.c.h.b16 %v2546
        %v2605 = vunpack.c.l.b16 %v2547
        %v2606 = vunpack.c.h.b16 %v2547
        %v2607 = vunpack.c.l.b16 %v2548
        %v2608 = vunpack.c.h.b16 %v2548
        %v2609 = vpack.c.b16 %v2579, %v2577
        %v2610 = vpack.c.b16 %v2580, %v2578
        %v2611 = vpack.c.b16 %v2583, %v2581
        %v2612 = vpack.c.b16 %v2584, %v2582
        %v2613 = vpack.c.b16 %v2587, %v2585
        %v2614 = vpack.c.b16 %v2588, %v2586
        %v2615 = vpack.c.b16 %v2591, %v2589
        %v2616 = vpack.c.b16 %v2592, %v2590
        %v2617 = vpack.c.b16 %v2595, %v2593
        %v2618 = vpack.c.b16 %v2596, %v2594
        %v2619 = vpack.c.b16 %v2599, %v2597
        %v2620 = vpack.c.b16 %v2600, %v2598
        %v2621 = vpack.c.b16 %v2603, %v2601
        %v2622 = vpack.c.b16 %v2604, %v2602
        %v2623 = vpack.c.b16 %v2607, %v2605
        %v2624 = vpack.c.b16 %v2608, %v2606
        %2641 = vmatprep.subr.bf16.mxu0 %v2610
        %2642 = vmatpush1.bf16.msra.mxu0 %v2609
        %2643 = vmatprep.subr.bf16.mxu0 %v2612
        %2644 = vmatpush1.bf16.msra.mxu0 %v2611
        %2645 = vmatprep.subr.bf16.mxu0 %v2614
        %2646 = vmatpush1.bf16.msra.mxu0 %v2613
        %2647 = vmatprep.subr.bf16.mxu0 %v2616
        %2648 = vmatpush1.bf16.msra.mxu0 %v2615
        %2649 = vmatprep.subr.bf16.mxu0 %v2618
        %2650 = vmatpush1.bf16.msra.mxu0 %v2617
        %2651 = vmatprep.subr.bf16.mxu0 %v2620
        %2652 = vmatpush1.bf16.msra.mxu0 %v2619
        %2653 = vmatprep.subr.bf16.mxu0 %v2622
        %2654 = vmatpush1.bf16.msra.mxu0 %v2621
        %2655 = vmatprep.subr.bf16.mxu0 %v2624
        %2656 = vmatpush1.bf16.msra.mxu0 %v2623
        %2657 = vmatprep.subr.bf16.mxu0 0
        %2658 = vmatpush1.bf16.msra.mxu0 0
        %2659 = vmatprep.subr.bf16.mxu0 0
        %2660 = vmatpush1.bf16.msra.mxu0 0
        %2661 = vmatprep.subr.bf16.mxu0 0
        %2662 = vmatpush1.bf16.msra.mxu0 0
        %2663 = vmatprep.subr.bf16.mxu0 0
        %2664 = vmatpush1.bf16.msra.mxu0 0
        %2665 = vmatprep.subr.bf16.mxu0 0
        %2666 = vmatpush1.bf16.msra.mxu0 0
        %2667 = vmatprep.subr.bf16.mxu0 0
        %2668 = vmatpush1.bf16.msra.mxu0 0
        %2669 = vmatprep.subr.bf16.mxu0 0
        %2670 = vmatpush1.bf16.msra.mxu0 0
        %2671 = vmatprep.subr.bf16.mxu0 0
        %2672 = vmatpush1.bf16.msra.mxu0 0
        %2673 = vmatprep.mubr.bf16.mxu0 0
        %2674 = vmatmul.mubr.bf16.gmra.mrb[0].mxu0 %v2532
        %v2675 = vpop.f32.mrb[0].mxu0
        %v2676 = vadd.f32 %v2554, %v2675
        %v2677 = vpop.f32.mrb[0].mxu0
        %v2678 = vadd.f32 %v2558, %v2677
        %v2679 = vpop.f32.mrb[0].mxu0
        %v2680 = vpop.f32.mrb[0].mxu0
        %2681 = vdwg.mxu0
        %v2682 = vmax.f32 %v2676, 0.0
        %v2683 = vmax.f32 %v2678, 0.0
        %v2684 = vpack.c.bf16 %v2682, %v2682
        %v2685 = vpack.c.bf16 %v2683, %v2683
        %v2686 = vld [vmem:[#allocation15] sm:$0xf]
        %v2687 = vld [vmem:[#allocation15 + $0x4] sm:$0xf]
        %v2688 = vld [vmem:[#allocation15 + $0x8] sm:$0xf]
        %v2689 = vld [vmem:[#allocation15 + $0xc] sm:$0xf]
        %v2690 = vld [vmem:[#allocation15 + $0x10] sm:$0xf]
        %v2691 = vld [vmem:[#allocation15 + $0x14] sm:$0xf]
        %v2692 = vld [vmem:[#allocation15 + $0x18] sm:$0xf]
        %v2693 = vld [vmem:[#allocation15 + $0x1c] sm:$0xf]
        %v2694 = vld [vmem:[#allocation15 + $0x20] sm:$0xf]
        %v2695 = vld [vmem:[#allocation15 + $0x24] sm:$0xf]
        %v2696 = vld [vmem:[#allocation15 + $0x28] sm:$0xf]
        %v2697 = vld [vmem:[#allocation15 + $0x2c] sm:$0xf]
        %v2698 = vld [vmem:[#allocation15 + $0x30] sm:$0xf]
        %v2699 = vld [vmem:[#allocation15 + $0x34] sm:$0xf]
        %v2700 = vld [vmem:[#allocation15 + $0x38] sm:$0xf]
        %v2701 = vld [vmem:[#allocation15 + $0x3c] sm:$0xf]
        %v2702 = vld [vmem:[#allocation15 + $0x40] sm:$0xf]
        %v2703 = vld [vmem:[#allocation15 + $0x44] sm:$0xf]
        %v2704 = vld [vmem:[#allocation15 + $0x48] sm:$0xf]
        %v2705 = vld [vmem:[#allocation15 + $0x4c] sm:$0xf]
        %v2706 = vld [vmem:[#allocation15 + $0x50] sm:$0xf]
        %v2707 = vld [vmem:[#allocation15 + $0x54] sm:$0xf]
        %v2708 = vld [vmem:[#allocation15 + $0x58] sm:$0xf]
        %v2709 = vld [vmem:[#allocation15 + $0x5c] sm:$0xf]
        %v2710 = vld [vmem:[#allocation15 + $0x60] sm:$0xf]
        %v2711 = vld [vmem:[#allocation15 + $0x64] sm:$0xf]
        %v2712 = vld [vmem:[#allocation15 + $0x68] sm:$0xf]
        %v2713 = vld [vmem:[#allocation15 + $0x6c] sm:$0xf]
        %v2714 = vld [vmem:[#allocation15 + $0x70] sm:$0xf]
        %v2715 = vld [vmem:[#allocation15 + $0x74] sm:$0xf]
        %v2716 = vld [vmem:[#allocation15 + $0x78] sm:$0xf]
        %v2717 = vld [vmem:[#allocation15 + $0x7c] sm:$0xf]
        %v2718 = vld [vmem:[%s17] sm:$0x1]
        %v2720 = vlaneseq
        %v2721 = vshrl.u32 %v2720, 7
        %v2722 = vsub.s32 0, %v2721
        %v2723 = vrot.slane %v2718, %v2722
        %v2757 = vunpack.c.l.b16 %v2686
        %v2758 = vunpack.c.l.b16 %v2687
        %v2759 = vunpack.c.l.b16 %v2688
        %v2760 = vunpack.c.l.b16 %v2689
        %v2761 = vunpack.c.l.b16 %v2690
        %v2762 = vunpack.c.l.b16 %v2691
        %v2763 = vunpack.c.l.b16 %v2692
        %v2764 = vunpack.c.l.b16 %v2693
        %v2765 = vunpack.c.l.b16 %v2694
        %v2766 = vunpack.c.l.b16 %v2695
        %v2767 = vunpack.c.l.b16 %v2696
        %v2768 = vunpack.c.l.b16 %v2697
        %v2769 = vunpack.c.l.b16 %v2698
        %v2770 = vunpack.c.l.b16 %v2699
        %v2771 = vunpack.c.l.b16 %v2700
        %v2772 = vunpack.c.l.b16 %v2701
        %v2773 = vunpack.c.l.b16 %v2702
        %v2774 = vunpack.c.l.b16 %v2703
        %v2775 = vunpack.c.l.b16 %v2704
        %v2776 = vunpack.c.l.b16 %v2705
        %v2777 = vunpack.c.l.b16 %v2706
        %v2778 = vunpack.c.l.b16 %v2707
        %v2779 = vunpack.c.l.b16 %v2708
        %v2780 = vunpack.c.l.b16 %v2709
        %v2781 = vunpack.c.l.b16 %v2710
        %v2782 = vunpack.c.l.b16 %v2711
        %v2783 = vunpack.c.l.b16 %v2712
        %v2784 = vunpack.c.l.b16 %v2713
        %v2785 = vunpack.c.l.b16 %v2714
        %v2786 = vunpack.c.l.b16 %v2715
        %v2787 = vunpack.c.l.b16 %v2716
        %v2788 = vunpack.c.l.b16 %v2717
        %v2789 = vpack.c.b16 %v2758, %v2757
        %v2790 = vpack.c.b16 %v2760, %v2759
        %v2791 = vpack.c.b16 %v2762, %v2761
        %v2792 = vpack.c.b16 %v2764, %v2763
        %v2793 = vpack.c.b16 %v2766, %v2765
        %v2794 = vpack.c.b16 %v2768, %v2767
        %v2795 = vpack.c.b16 %v2770, %v2769
        %v2796 = vpack.c.b16 %v2772, %v2771
        %v2797 = vpack.c.b16 %v2774, %v2773
        %v2798 = vpack.c.b16 %v2776, %v2775
        %v2799 = vpack.c.b16 %v2778, %v2777
        %v2800 = vpack.c.b16 %v2780, %v2779
        %v2801 = vpack.c.b16 %v2782, %v2781
        %v2802 = vpack.c.b16 %v2784, %v2783
        %v2803 = vpack.c.b16 %v2786, %v2785
        %v2804 = vpack.c.b16 %v2788, %v2787
        %2821 = vmatprep.subr.bf16.mxu0 0
        %2822 = vmatpush1.bf16.msra.mxu0 %v2789
        %2823 = vmatprep.subr.bf16.mxu0 0
        %2824 = vmatpush1.bf16.msra.mxu0 %v2790
        %2825 = vmatprep.subr.bf16.mxu0 0
        %2826 = vmatpush1.bf16.msra.mxu0 %v2791
        %2827 = vmatprep.subr.bf16.mxu0 0
        %2828 = vmatpush1.bf16.msra.mxu0 %v2792
        %2829 = vmatprep.subr.bf16.mxu0 0
        %2830 = vmatpush1.bf16.msra.mxu0 %v2793
        %2831 = vmatprep.subr.bf16.mxu0 0
        %2832 = vmatpush1.bf16.msra.mxu0 %v2794
        %2833 = vmatprep.subr.bf16.mxu0 0
        %2834 = vmatpush1.bf16.msra.mxu0 %v2795
        %2835 = vmatprep.subr.bf16.mxu0 0
        %2836 = vmatpush1.bf16.msra.mxu0 %v2796
        %2837 = vmatprep.subr.bf16.mxu0 0
        %2838 = vmatpush1.bf16.msra.mxu0 %v2797
        %2839 = vmatprep.subr.bf16.mxu0 0
        %2840 = vmatpush1.bf16.msra.mxu0 %v2798
        %2841 = vmatprep.subr.bf16.mxu0 0
        %2842 = vmatpush1.bf16.msra.mxu0 %v2799
        %2843 = vmatprep.subr.bf16.mxu0 0
        %2844 = vmatpush1.bf16.msra.mxu0 %v2800
        %2845 = vmatprep.subr.bf16.mxu0 0
        %2846 = vmatpush1.bf16.msra.mxu0 %v2801
        %2847 = vmatprep.subr.bf16.mxu0 0
        %2848 = vmatpush1.bf16.msra.mxu0 %v2802
        %2849 = vmatprep.subr.bf16.mxu0 0
        %2850 = vmatpush1.bf16.msra.mxu0 %v2803
        %2851 = vmatprep.subr.bf16.mxu0 0
        %2852 = vmatpush1.bf16.msra.mxu0 %v2804
        %2853 = vmatprep.mubr.bf16.mxu0 %v2685
        %2854 = vmatmul.mubr.bf16.gmra.mrb[0].mxu0 %v2684
        %v2855 = vpop.f32.mrb[0].mxu0
        %v2856 = vadd.f32 %v2723, %v2855
        %v2857 = vpop.f32.mrb[0].mxu0
        %v2858 = vpop.f32.mrb[0].mxu0
        %v2859 = vpop.f32.mrb[0].mxu0
        %2860 = vdwg.mxu0
        %v2861 = vadd.f32 %v2494, %v2856
        %2862 = vst [vmem:[%s702] sm:$0xff] %v2861
        %s2863 = sand.u32 %s448, 1
        %s2864 = scalar_lea.sflag [#allocation6], %s2863
        %s2865 = sand.u32 %s448, 1
        %s2866 = smul.addr %s2865, 8
        %s2867 = scalar_lea.vmem [#allocation16], %s2866
        // Predicated region
        $region125: #{tpu_custom_call.1} parent=91 // pred_check
          %p2868 = pneg %p458
        $region126: #{tpu_custom_call.1} parent=91 // pred_check_branch
          %2870 = sbr.rel (%p2868) target = $region128
        $region127: #{tpu_custom_call.1} parent=91 // pred_region
          %s2872 = ssub.s32 128, 128
          %2873 = vsyncadd %s2864, %s2872
          %s2874 = sadd.s32 %s43, %s42
          %s2875 = smul.addr %s2874, 128
          %s2876 = scalar_lea.hbm %s18, %s2875
          %s2878 = sshll.u32 %s2867, 4
          %s2879 = int_to_ptr.vmem [resolvable:$true] %s2878
          %2881 = dma.vmem_to_hbm [thread:$0]  %s2879, 128, %s2876, %s2864
        $region128: #{tpu_custom_call.1} parent=91 // pred_fallthru
          _
      $region92: #{tpu_custom_call.1} parent=5 // pred_fallthru
        _
      %p2882 = scmp.le.s32.totalorder 2, %s33
      // Predicated region
      $region129: #{tpu_custom_call.1} parent=5 // pred_check
        %p2883 = pneg %p2882
      $region130: #{tpu_custom_call.1} parent=5 // pred_check_branch
        %2885 = sbr.rel (%p2883) target = $region132
      $region131: #{tpu_custom_call.1} parent=5 // pred_region
        %s2886 = ssub.s32 %s33, 2
        // Predicated region
        $region133: #{tpu_custom_call.1} parent=131 // pred_check
          %p2887 = pneg %p464
        $region134: #{tpu_custom_call.1} parent=131 // pred_check_branch
          %2889 = sbr.rel (%p2887) target = $region136
        $region135: #{tpu_custom_call.1} parent=131 // pred_region
          %s2890 = sand.u32 %s449, 1
          %s2891 = scalar_lea.sflag [#allocation6], %s2890
          %s2892 = sand.u32 %s449, 1
          %s2893 = smul.addr %s2892, 8
          %s2894 = scalar_lea.vmem [#allocation16], %s2893
          %2895 = dma.done %s2891, 128
        $region136: #{tpu_custom_call.1} parent=131 // pred_fallthru
          _
      $region132: #{tpu_custom_call.1} parent=5 // pred_fallthru
        _
    $region6: #{tpu_custom_call.1} parent=1 // loop_footer
      %s37 = sadd.s32 1, %s33
    $region7: #{tpu_custom_call.1} parent=1 // loop_footer_branch
      %32 = sbr.rel target = $region3
    $region8: #{tpu_custom_call.1} parent=1 // loop_exit
      _
    %2896 = vsyncpa [#allocation5], 1
    %s2897 = scalar_lea.sflag [#allocation5], 1
    %2898 = vsyncpa %s2897, 1
    %2899 = vsyncpa [#allocation8], 1
    %2900 = vsyncpa [#allocation11], 1
    %2901 = vsyncpa [#allocation14], 1
    %2902 = vsyncpa [#allocation6], 1
    %s2903 = scalar_lea.sflag [#allocation6], 1
    %2904 = vsyncpa %s2903, 1

// kernel: tpu_custom_call.1
$region0: #{tpu_custom_call.1}
  #allocation0 [shape = 'u32[]', space=smem, size = 0x4, offset = 0x4, fixed_abs, tag = 'smem constant byte address 0x4 - core index']
  #allocation1 [shape = 'u32[144,128]{1,0:T(1,128)}', space=vmem, size = 0x12000, scoped, tag = 'internal scratch']
  #allocation2 [shape = 'bf16[8,128]{1,0:T(8,128)(2,1)}', space=vmem, size = 0x800, scoped, tag = 'scratch operand']
  #allocation3 [shape = 'bf16[8,128]{1,0:T(8,128)(2,1)}', space=vmem, size = 0x800, scoped, tag = 'scratch operand']
  %s0 = inlined_call_operand.hbm [shape: f32[2,8,128], index: 0, kind: input, shape index: {}]
  %s1 = inlined_call_operand.vmem [shape: s32[2,1,8], index: 1, kind: input, shape index: {}]
  %s2 = inlined_call_operand.hbm [shape: bf16[128,128], index: 2, kind: input, shape index: {}]
  %s3 = inlined_call_operand.vmem [shape: f32[1,128], index: 3, kind: input, shape index: {}]
  %s4 = inlined_call_operand.hbm [shape: bf16[128,128], index: 4, kind: input, shape index: {}]
  %s5 = inlined_call_operand.vmem [shape: f32[1,128], index: 5, kind: input, shape index: {}]
  %s6 = inlined_call_operand.hbm [shape: bf16[128,128], index: 6, kind: input, shape index: {}]
  %s7 = inlined_call_operand.vmem [shape: f32[1,128], index: 7, kind: input, shape index: {}]
  %s8 = inlined_call_operand.hbm [shape: bf16[128,128], index: 8, kind: input, shape index: {}]
  %s9 = inlined_call_operand.vmem [shape: f32[1,128], index: 9, kind: input, shape index: {}]
  %s10 = inlined_call_operand.vmem [shape: f32[1,128], index: 10, kind: input, shape index: {}]
  %s11 = inlined_call_operand.vmem [shape: f32[1,128], index: 11, kind: input, shape index: {}]
  %s12 = inlined_call_operand.vmem [shape: f32[1,128], index: 12, kind: input, shape index: {}]
  %s13 = inlined_call_operand.vmem [shape: f32[1,128], index: 13, kind: input, shape index: {}]
  %s14 = inlined_call_operand.hbm [shape: bf16[128,256], index: 14, kind: input, shape index: {}]
  %s15 = inlined_call_operand.vmem [shape: f32[1,256], index: 15, kind: input, shape index: {}]
  %s16 = inlined_call_operand.hbm [shape: bf16[256,128], index: 16, kind: input, shape index: {}]
  %s17 = inlined_call_operand.vmem [shape: f32[1,128], index: 17, kind: input, shape index: {}]
  %s18 = inlined_call_operand.hbm [shape: f32[2,8,128], index: 18, kind: output, shape index: {}]
  %s19 = sld [smem:[#allocation0]]
  $region137: #{tpu_custom_call.1} parent=0
    _
  %s21 = ssub.s32 1, %s19
  %s22 = scalar_select 0, %s21, %s19
  $region1: #{tpu_custom_call.1} parent=0
    #allocation4 [shape = 'u8[8192]{0}', space=vmem, size = 0x2000, scoped, tag = 'input window, operand 0']
    #allocation5 [shape = 's32[2]{0}', space=sflag, size = 0x8, scoped, tag = 'scoped memory for tpu_custom_call.1']
    #allocation6 [shape = 's32[2]{0}', space=sflag, size = 0x8, scoped, tag = 'scoped memory for tpu_custom_call.1']
    #allocation7 [shape = 'u8[32768]{0}', space=vmem, size = 0x8000, scoped, tag = 'input window, operand 2, single buffered']
    #allocation8 [shape = 's32[1]{0}', space=sflag, size = 0x4, scoped, tag = 'scoped memory for tpu_custom_call.1']
    #allocation9 [shape = 'u8[32768]{0}', space=vmem, size = 0x8000, scoped, tag = 'input window, operand 4, single buffered']
    #allocation10 [shape = 'u8[32768]{0}', space=vmem, size = 0x8000, scoped, tag = 'input window, operand 6, single buffered']
    #allocation11 [shape = 's32[1]{0}', space=sflag, size = 0x4, scoped, tag = 'scoped memory for tpu_custom_call.1']
    #allocation12 [shape = 'u8[32768]{0}', space=vmem, size = 0x8000, scoped, tag = 'input window, operand 8, single buffered']
    #allocation13 [shape = 'u8[65536]{0}', space=vmem, size = 0x10000, scoped, tag = 'input window, operand 14, single buffered']
    #allocation14 [shape = 's32[1]{0}', space=sflag, size = 0x4, scoped, tag = 'scoped memory for tpu_custom_call.1']
    #allocation15 [shape = 'u8[65536]{0}', space=vmem, size = 0x10000, scoped, tag = 'input window, operand 16, single buffered']
    #allocation16 [shape = 'u8[8192]{0}', space=vmem, size = 0x2000, scoped, tag = 'output window, operand 0']
    %23 = vsyncpa [#allocation5], 0
    %s24 = scalar_lea.sflag [#allocation5], 1
    %25 = vsyncpa %s24, 0
    %26 = vsyncpa [#allocation8], 0
    %27 = vsyncpa [#allocation11], 0
    %28 = vsyncpa [#allocation14], 0
    %29 = vsyncpa [#allocation6], 0
    %s30 = scalar_lea.sflag [#allocation6], 1
    %31 = vsyncpa %s30, 0
    loop: start=0, step=1, limit=4
    $region2: #{tpu_custom_call.1} parent=1 // loop_pre_header
      _
    $region3: #{tpu_custom_call.1} parent=1 // loop_header
      %s33 = sphi 0, %s37
      %p34 = scmp.ge.s32.totalorder %s33, 4
      %s40 = sphi 0, %s52
      %s41 = sphi 0, %s48
      %s42 = sphi 0, %s40
      %s43 = sphi 0, %s41
      %s44 = sphi 0, %s42
      %s45 = sphi 0, %s43
      %s55 = sphi 0, %s57
      %s58 = sphi 0, %s55
      %s59 = sphi 0, %s58
      %s75 = sphi 0, %s59
      %s81 = sphi 0, %s83
      %s84 = sphi 0, %s81
      %s85 = sphi 0, %s84
      %s101 = sphi 0, %s85
      %s105 = sphi 0, %s105
      %s107 = sphi 0, %s105
      %s108 = sphi 0, %s107
      %s122 = sphi 0, %s108
      %s126 = sphi 0, %s126
      %s128 = sphi 0, %s126
      %s129 = sphi 0, %s128
      %s143 = sphi 0, %s129
      %s147 = sphi 0, %s147
      %s149 = sphi 0, %s147
      %s150 = sphi 0, %s149
      %s164 = sphi 0, %s150
      %s168 = sphi 0, %s168
      %s170 = sphi 0, %s168
      %s171 = sphi 0, %s170
      %s185 = sphi 0, %s171
      %s189 = sphi 0, %s189
      %s191 = sphi 0, %s189
      %s192 = sphi 0, %s191
      %s206 = sphi 0, %s192
      %s210 = sphi 0, %s210
      %s212 = sphi 0, %s210
      %s213 = sphi 0, %s212
      %s227 = sphi 0, %s213
      %s231 = sphi 0, %s231
      %s233 = sphi 0, %s231
      %s234 = sphi 0, %s233
      %s248 = sphi 0, %s234
      %s252 = sphi 0, %s252
      %s254 = sphi 0, %s252
      %s255 = sphi 0, %s254
      %s269 = sphi 0, %s255
      %s273 = sphi 0, %s273
      %s275 = sphi 0, %s273
      %s276 = sphi 0, %s275
      %s290 = sphi 0, %s276
      %s294 = sphi 0, %s294
      %s296 = sphi 0, %s294
      %s297 = sphi 0, %s296
      %s311 = sphi 0, %s297
      %s315 = sphi 0, %s315
      %s317 = sphi 0, %s315
      %s318 = sphi 0, %s317
      %s332 = sphi 0, %s318
      %s336 = sphi 0, %s336
      %s338 = sphi 0, %s336
      %s339 = sphi 0, %s338
      %s353 = sphi 0, %s339
      %s357 = sphi 0, %s357
      %s359 = sphi 0, %s357
      %s360 = sphi 0, %s359
      %s374 = sphi 0, %s360
      %s378 = sphi 0, %s378
      %s380 = sphi 0, %s378
      %s381 = sphi 0, %s380
      %s395 = sphi 0, %s381
      %s399 = sphi 0, %s399
      %s401 = sphi 0, %s399
      %s402 = sphi 0, %s401
      %s416 = sphi 0, %s402
      %s420 = sphi 0, %s420
      %s422 = sphi 0, %s420
      %s423 = sphi 0, %s422
      %s437 = sphi 0, %s423
      %s445 = sphi 0, %s447
      %s448 = sphi 0, %s445
      %s449 = sphi 0, %s448
      %s465 = sphi 0, %s449
    $region4: #{tpu_custom_call.1} parent=1 // loop_header_branch
      %36 = sbr.rel (%p34) target = $region8
    $region5: #{tpu_custom_call.1} parent=1 // loop_body
      %s38 = ssub.s32 %s33, 1
      %s39 = ssub.s32 %s33, 2
      %s46 = sadd.s32 1, %s41
      %p47 = scmp.ge.s32.totalorder %s46, 1
      %s48 = scalar_select %p47, 0, %s46
      %s49 = sadd.s32 1, %s40
      %s50 = scalar_select %p47, %s49, %s40
      %p51 = scmp.ge.s32.totalorder %s50, 2
      %s52 = scalar_select %p51, 0, %s50
      %s53 = ssub.s32 %s40, %s52
      %p54 = scmp.eq.s32.totalorder %s53, 0
      %s56 = sadd.s32 %s55, 1
      %s57 = scalar_select %p54, %s55, %s56
      %p60 = pneg %p54
      %p61 = scmp.eq.s32.totalorder %s33, 1
      %p62 = por %p60, %p61
      %p63 = scmp.ne.s32.totalorder %s55, %s58
      %p64 = scmp.eq.s32.totalorder %s33, 0
      %p65 = por %p63, %p64
      %p66 = scmp.ne.s32.totalorder %s55, %s58
      %p67 = scmp.eq.s32.totalorder %s38, 1
      %p68 = por %p66, %p67
      %p69 = scmp.ne.s32.totalorder %s58, %s59
      %p70 = scmp.eq.s32.totalorder %s38, 0
      %p71 = por %p69, %p70
      %p72 = scmp.ne.s32.totalorder %s58, %s59
      %p73 = scmp.eq.s32.totalorder %s39, 1
      %p74 = por %p72, %p73
      %p76 = scmp.ne.s32.totalorder %s59, %s75
      %p77 = scmp.eq.s32.totalorder %s39, 0
      %p78 = por %p76, %p77
      %s79 = ssub.s32 %s40, %s52
      %p80 = scmp.eq.s32.totalorder %s79, 0
      %s82 = sadd.s32 %s81, 1
      %s83 = scalar_select %p80, %s81, %s82
      %p86 = pneg %p80
      %p87 = scmp.eq.s32.totalorder %s33, 1
      %p88 = por %p86, %p87
      %p89 = scmp.ne.s32.totalorder %s81, %s84
      %p90 = scmp.eq.s32.totalorder %s33, 0
      %p91 = por %p89, %p90
      %p92 = scmp.ne.s32.totalorder %s81, %s84
      %p93 = scmp.eq.s32.totalorder %s38, 1
      %p94 = por %p92, %p93
      %p95 = scmp.ne.s32.totalorder %s84, %s85
      %p96 = scmp.eq.s32.totalorder %s38, 0
      %p97 = por %p95, %p96
      %p98 = scmp.ne.s32.totalorder %s84, %s85
      %p99 = scmp.eq.s32.totalorder %s39, 1
      %p100 = por %p98, %p99
      %p102 = scmp.ne.s32.totalorder %s85, %s101
      %p103 = scmp.eq.s32.totalorder %s39, 0
      %p104 = por %p102, %p103
      %s106 = sadd.s32 %s105, 1
      %p109 = scmp.eq.s32.totalorder %s33, 1
      %p110 = scmp.ne.s32.totalorder %s105, %s107
      %p111 = scmp.eq.s32.totalorder %s33, 0
      %p112 = por %p110, %p111
      %p113 = scmp.ne.s32.totalorder %s105, %s107
      %p114 = scmp.eq.s32.totalorder %s38, 1
      %p115 = por %p113, %p114
      %p116 = scmp.ne.s32.totalorder %s107, %s108
      %p117 = scmp.eq.s32.totalorder %s38, 0
      %p118 = por %p116, %p117
      %p119 = scmp.ne.s32.totalorder %s107, %s108
      %p120 = scmp.eq.s32.totalorder %s39, 1
      %p121 = por %p119, %p120
      %p123 = scmp.ne.s32.totalorder %s108, %s122
      %p124 = scmp.eq.s32.totalorder %s39, 0
      %p125 = por %p123, %p124
      %s127 = sadd.s32 %s126, 1
      %p130 = scmp.eq.s32.totalorder %s33, 1
      %p131 = scmp.ne.s32.totalorder %s126, %s128
      %p132 = scmp.eq.s32.totalorder %s33, 0
      %p133 = por %p131, %p132
      %p134 = scmp.ne.s32.totalorder %s126, %s128
      %p135 = scmp.eq.s32.totalorder %s38, 1
      %p136 = por %p134, %p135
      %p137 = scmp.ne.s32.totalorder %s128, %s129
      %p138 = scmp.eq.s32.totalorder %s38, 0
      %p139 = por %p137, %p138
      %p140 = scmp.ne.s32.totalorder %s128, %s129
      %p141 = scmp.eq.s32.totalorder %s39, 1
      %p142 = por %p140, %p141
      %p144 = scmp.ne.s32.totalorder %s129, %s143
      %p145 = scmp.eq.s32.totalorder %s39, 0
      %p146 = por %p144, %p145
      %s148 = sadd.s32 %s147, 1
      %p151 = scmp.eq.s32.totalorder %s33, 1
      %p152 = scmp.ne.s32.totalorder %s147, %s149
      %p153 = scmp.eq.s32.totalorder %s33, 0
      %p154 = por %p152, %p153
      %p155 = scmp.ne.s32.totalorder %s147, %s149
      %p156 = scmp.eq.s32.totalorder %s38, 1
      %p157 = por %p155, %p156
      %p158 = scmp.ne.s32.totalorder %s149, %s150
      %p159 = scmp.eq.s32.totalorder %s38, 0
      %p160 = por %p158, %p159
      %p161 = scmp.ne.s32.totalorder %s149, %s150
      %p162 = scmp.eq.s32.totalorder %s39, 1
      %p163 = por %p161, %p162
      %p165 = scmp.ne.s32.totalorder %s150, %s164
      %p166 = scmp.eq.s32.totalorder %s39, 0
      %p167 = por %p165, %p166
      %s169 = sadd.s32 %s168, 1
      %p172 = scmp.eq.s32.totalorder %s33, 1
      %p173 = scmp.ne.s32.totalorder %s168, %s170
      %p174 = scmp.eq.s32.totalorder %s33, 0
      %p175 = por %p173, %p174
      %p176 = scmp.ne.s32.totalorder %s168, %s170
      %p177 = scmp.eq.s32.totalorder %s38, 1
      %p178 = por %p176, %p177
      %p179 = scmp.ne.s32.totalorder %s170, %s171
      %p180 = scmp.eq.s32.totalorder %s38, 0
      %p181 = por %p179, %p180
      %p182 = scmp.ne.s32.totalorder %s170, %s171
      %p183 = scmp.eq.s32.totalorder %s39, 1
      %p184 = por %p182, %p183
      %p186 = scmp.ne.s32.totalorder %s171, %s185
      %p187 = scmp.eq.s32.totalorder %s39, 0
      %p188 = por %p186, %p187
      %s190 = sadd.s32 %s189, 1
      %p193 = scmp.eq.s32.totalorder %s33, 1
      %p194 = scmp.ne.s32.totalorder %s189, %s191
      %p195 = scmp.eq.s32.totalorder %s33, 0
      %p196 = por %p194, %p195
      %p197 = scmp.ne.s32.totalorder %s189, %s191
      %p198 = scmp.eq.s32.totalorder %s38, 1
      %p199 = por %p197, %p198
      %p200 = scmp.ne.s32.totalorder %s191, %s192
      %p201 = scmp.eq.s32.totalorder %s38, 0
      %p202 = por %p200, %p201
      %p203 = scmp.ne.s32.totalorder %s191, %s192
      %p204 = scmp.eq.s32.totalorder %s39, 1
      %p205 = por %p203, %p204
      %p207 = scmp.ne.s32.totalorder %s192, %s206
      %p208 = scmp.eq.s32.totalorder %s39, 0
      %p209 = por %p207, %p208
      %s211 = sadd.s32 %s210, 1
      %p214 = scmp.eq.s32.totalorder %s33, 1
      %p215 = scmp.ne.s32.totalorder %s210, %s212
      %p216 = scmp.eq.s32.totalorder %s33, 0
      %p217 = por %p215, %p216
      %p218 = scmp.ne.s32.totalorder %s210, %s212
      %p219 = scmp.eq.s32.totalorder %s38, 1
      %p220 = por %p218, %p219
      %p221 = scmp.ne.s32.totalorder %s212, %s213
      %p222 = scmp.eq.s32.totalorder %s38, 0
      %p223 = por %p221, %p222
      %p224 = scmp.ne.s32.totalorder %s212, %s213
      %p225 = scmp.eq.s32.totalorder %s39, 1
      %p226 = por %p224, %p225
      %p228 = scmp.ne.s32.totalorder %s213, %s227
      %p229 = scmp.eq.s32.totalorder %s39, 0
      %p230 = por %p228, %p229
      %s232 = sadd.s32 %s231, 1
      %p235 = scmp.eq.s32.totalorder %s33, 1
      %p236 = scmp.ne.s32.totalorder %s231, %s233
      %p237 = scmp.eq.s32.totalorder %s33, 0
      %p238 = por %p236, %p237
      %p239 = scmp.ne.s32.totalorder %s231, %s233
      %p240 = scmp.eq.s32.totalorder %s38, 1
      %p241 = por %p239, %p240
      %p242 = scmp.ne.s32.totalorder %s233, %s234
      %p243 = scmp.eq.s32.totalorder %s38, 0
      %p244 = por %p242, %p243
      %p245 = scmp.ne.s32.totalorder %s233, %s234
      %p246 = scmp.eq.s32.totalorder %s39, 1
      %p247 = por %p245, %p246
      %p249 = scmp.ne.s32.totalorder %s234, %s248
      %p250 = scmp.eq.s32.totalorder %s39, 0
      %p251 = por %p249, %p250
      %s253 = sadd.s32 %s252, 1
      %p256 = scmp.eq.s32.totalorder %s33, 1
      %p257 = scmp.ne.s32.totalorder %s252, %s254
      %p258 = scmp.eq.s32.totalorder %s33, 0
      %p259 = por %p257, %p258
      %p260 = scmp.ne.s32.totalorder %s252, %s254
      %p261 = scmp.eq.s32.totalorder %s38, 1
      %p262 = por %p260, %p261
      %p263 = scmp.ne.s32.totalorder %s254, %s255
      %p264 = scmp.eq.s32.totalorder %s38, 0
      %p265 = por %p263, %p264
      %p266 = scmp.ne.s32.totalorder %s254, %s255
      %p267 = scmp.eq.s32.totalorder %s39, 1
      %p268 = por %p266, %p267
      %p270 = scmp.ne.s32.totalorder %s255, %s269
      %p271 = scmp.eq.s32.totalorder %s39, 0
      %p272 = por %p270, %p271
      %s274 = sadd.s32 %s273, 1
      %p277 = scmp.eq.s32.totalorder %s33, 1
      %p278 = scmp.ne.s32.totalorder %s273, %s275
      %p279 = scmp.eq.s32.totalorder %s33, 0
      %p280 = por %p278, %p279
      %p281 = scmp.ne.s32.totalorder %s273, %s275
      %p282 = scmp.eq.s32.totalorder %s38, 1
      %p283 = por %p281, %p282
      %p284 = scmp.ne.s32.totalorder %s275, %s276
      %p285 = scmp.eq.s32.totalorder %s38, 0
      %p286 = por %p284, %p285
      %p287 = scmp.ne.s32.totalorder %s275, %s276
      %p288 = scmp.eq.s32.totalorder %s39, 1
      %p289 = por %p287, %p288
      %p291 = scmp.ne.s32.totalorder %s276, %s290
      %p292 = scmp.eq.s32.totalorder %s39, 0
      %p293 = por %p291, %p292
      %s295 = sadd.s32 %s294, 1
      %p298 = scmp.eq.s32.totalorder %s33, 1
      %p299 = scmp.ne.s32.totalorder %s294, %s296
      %p300 = scmp.eq.s32.totalorder %s33, 0
      %p301 = por %p299, %p300
      %p302 = scmp.ne.s32.totalorder %s294, %s296
      %p303 = scmp.eq.s32.totalorder %s38, 1
      %p304 = por %p302, %p303
      %p305 = scmp.ne.s32.totalorder %s296, %s297
      %p306 = scmp.eq.s32.totalorder %s38, 0
      %p307 = por %p305, %p306
      %p308 = scmp.ne.s32.totalorder %s296, %s297
      %p309 = scmp.eq.s32.totalorder %s39, 1
      %p310 = por %p308, %p309
      %p312 = scmp.ne.s32.totalorder %s297, %s311
      %p313 = scmp.eq.s32.totalorder %s39, 0
      %p314 = por %p312, %p313
      %s316 = sadd.s32 %s315, 1
      %p319 = scmp.eq.s32.totalorder %s33, 1
      %p320 = scmp.ne.s32.totalorder %s315, %s317
      %p321 = scmp.eq.s32.totalorder %s33, 0
      %p322 = por %p320, %p321
      %p323 = scmp.ne.s32.totalorder %s315, %s317
      %p324 = scmp.eq.s32.totalorder %s38, 1
      %p325 = por %p323, %p324
      %p326 = scmp.ne.s32.totalorder %s317, %s318
      %p327 = scmp.eq.s32.totalorder %s38, 0
      %p328 = por %p326, %p327
      %p329 = scmp.ne.s32.totalorder %s317, %s318
      %p330 = scmp.eq.s32.totalorder %s39, 1
      %p331 = por %p329, %p330
      %p333 = scmp.ne.s32.totalorder %s318, %s332
      %p334 = scmp.eq.s32.totalorder %s39, 0
      %p335 = por %p333, %p334
      %s337 = sadd.s32 %s336, 1
      %p340 = scmp.eq.s32.totalorder %s33, 1
      %p341 = scmp.ne.s32.totalorder %s336, %s338
      %p342 = scmp.eq.s32.totalorder %s33, 0
      %p343 = por %p341, %p342
      %p344 = scmp.ne.s32.totalorder %s336, %s338
      %p345 = scmp.eq.s32.totalorder %s38, 1
      %p346 = por %p344, %p345
      %p347 = scmp.ne.s32.totalorder %s338, %s339
      %p348 = scmp.eq.s32.totalorder %s38, 0
      %p349 = por %p347, %p348
      %p350 = scmp.ne.s32.totalorder %s338, %s339
      %p351 = scmp.eq.s32.totalorder %s39, 1
      %p352 = por %p350, %p351
      %p354 = scmp.ne.s32.totalorder %s339, %s353
      %p355 = scmp.eq.s32.totalorder %s39, 0
      %p356 = por %p354, %p355
      %s358 = sadd.s32 %s357, 1
      %p361 = scmp.eq.s32.totalorder %s33, 1
      %p362 = scmp.ne.s32.totalorder %s357, %s359
      %p363 = scmp.eq.s32.totalorder %s33, 0
      %p364 = por %p362, %p363
      %p365 = scmp.ne.s32.totalorder %s357, %s359
      %p366 = scmp.eq.s32.totalorder %s38, 1
      %p367 = por %p365, %p366
      %p368 = scmp.ne.s32.totalorder %s359, %s360
      %p369 = scmp.eq.s32.totalorder %s38, 0
      %p370 = por %p368, %p369
      %p371 = scmp.ne.s32.totalorder %s359, %s360
      %p372 = scmp.eq.s32.totalorder %s39, 1
      %p373 = por %p371, %p372
      %p375 = scmp.ne.s32.totalorder %s360, %s374
      %p376 = scmp.eq.s32.totalorder %s39, 0
      %p377 = por %p375, %p376
      %s379 = sadd.s32 %s378, 1
      %p382 = scmp.eq.s32.totalorder %s33, 1
      %p383 = scmp.ne.s32.totalorder %s378, %s380
      %p384 = scmp.eq.s32.totalorder %s33, 0
      %p385 = por %p383, %p384
      %p386 = scmp.ne.s32.totalorder %s378, %s380
      %p387 = scmp.eq.s32.totalorder %s38, 1
      %p388 = por %p386, %p387
      %p389 = scmp.ne.s32.totalorder %s380, %s381
      %p390 = scmp.eq.s32.totalorder %s38, 0
      %p391 = por %p389, %p390
      %p392 = scmp.ne.s32.totalorder %s380, %s381
      %p393 = scmp.eq.s32.totalorder %s39, 1
      %p394 = por %p392, %p393
      %p396 = scmp.ne.s32.totalorder %s381, %s395
      %p397 = scmp.eq.s32.totalorder %s39, 0
      %p398 = por %p396, %p397
      %s400 = sadd.s32 %s399, 1
      %p403 = scmp.eq.s32.totalorder %s33, 1
      %p404 = scmp.ne.s32.totalorder %s399, %s401
      %p405 = scmp.eq.s32.totalorder %s33, 0
      %p406 = por %p404, %p405
      %p407 = scmp.ne.s32.totalorder %s399, %s401
      %p408 = scmp.eq.s32.totalorder %s38, 1
      %p409 = por %p407, %p408
      %p410 = scmp.ne.s32.totalorder %s401, %s402
      %p411 = scmp.eq.s32.totalorder %s38, 0
      %p412 = por %p410, %p411
      %p413 = scmp.ne.s32.totalorder %s401, %s402
      %p414 = scmp.eq.s32.totalorder %s39, 1
      %p415 = por %p413, %p414
      %p417 = scmp.ne.s32.totalorder %s402, %s416
      %p418 = scmp.eq.s32.totalorder %s39, 0
      %p419 = por %p417, %p418
      %s421 = sadd.s32 %s420, 1
      %p424 = scmp.eq.s32.totalorder %s33, 1
      %p425 = scmp.ne.s32.totalorder %s420, %s422
      %p426 = scmp.eq.s32.totalorder %s33, 0
      %p427 = por %p425, %p426
      %p428 = scmp.ne.s32.totalorder %s420, %s422
      %p429 = scmp.eq.s32.totalorder %s38, 1
      %p430 = por %p428, %p429
      %p431 = scmp.ne.s32.totalorder %s422, %s423
      %p432 = scmp.eq.s32.totalorder %s38, 0
      %p433 = por %p431, %p432
      %p434 = scmp.ne.s32.totalorder %s422, %s423
      %p435 = scmp.eq.s32.totalorder %s39, 1
      %p436 = por %p434, %p435
      %p438 = scmp.ne.s32.totalorder %s423, %s437
      %p439 = scmp.eq.s32.totalorder %s39, 0
      %p440 = por %p438, %p439
      %s441 = ssub.s32 %s40, %s52
      %s442 = ssub.s32 %s41, %s48
      %s443 = sor.u32 %s441, %s442
      %p444 = scmp.eq.s32.totalorder %s443, 0
      %s446 = sadd.s32 %s445, 1
      %s447 = scalar_select %p444, %s445, %s446
      %p450 = pneg %p444
      %p451 = scmp.eq.s32.totalorder %s33, 1
      %p452 = por %p450, %p451
      %p453 = scmp.ne.s32.totalorder %s445, %s448
      %p454 = scmp.eq.s32.totalorder %s33, 0
      %p455 = por %p453, %p454
      %p456 = scmp.ne.s32.totalorder %s445, %s448
      %p457 = scmp.eq.s32.totalorder %s38, 1
      %p458 = por %p456, %p457
      %p459 = scmp.ne.s32.totalorder %s448, %s449
      %p460 = scmp.eq.s32.totalorder %s38, 0
      %p461 = por %p459, %p460
      %p462 = scmp.ne.s32.totalorder %s448, %s449
      %p463 = scmp.eq.s32.totalorder %s39, 1
      %p464 = por %p462, %p463
      %p466 = scmp.ne.s32.totalorder %s449, %s465
      %p467 = scmp.eq.s32.totalorder %s39, 0
      %p468 = por %p466, %p467
      %p469 = scmp.le.s32.totalorder 1, %s33
      %p470 = scmp.lt.s32.totalorder %s33, 3
      %p471 = pnand %p469, %p470
      %p472 = pneg %p471
      // Predicated region
      $region9: #{tpu_custom_call.1} parent=5 // pred_check
        _
      $region10: #{tpu_custom_call.1} parent=5 // pred_check_branch
        %474 = sbr.rel (%p471) target = $region12
      $region11: #{tpu_custom_call.1} parent=5 // pred_region
        %s475 = ssub.s32 %s33, 1
        // Predicated region
        $region13: #{tpu_custom_call.1} parent=11 // pred_check
          %p476 = pneg %p118
        $region14: #{tpu_custom_call.1} parent=11 // pred_check_branch
          %478 = sbr.rel (%p476) target = $region16
        $region15: #{tpu_custom_call.1} parent=11 // pred_region
          %s480 = ssub.s32 1024, 1024
          %481 = vsyncadd [#allocation8], %s480
          %s482 = sshll.u32 [#allocation7], 4
          %s483 = int_to_ptr.vmem [resolvable:$true] %s482
          %488 = dma.hbm_to_vmem [thread:$0]  %s2, 1024, %s483, [#allocation8], 64, 64, 4
        $region16: #{tpu_custom_call.1} parent=11 // pred_fallthru
          _
        // Predicated region
        $region17: #{tpu_custom_call.1} parent=11 // pred_check
          %p489 = pneg %p139
        $region18: #{tpu_custom_call.1} parent=11 // pred_check_branch
          %491 = sbr.rel (%p489) target = $region20
        $region19: #{tpu_custom_call.1} parent=11 // pred_region
          _
        $region20: #{tpu_custom_call.1} parent=11 // pred_fallthru
          _
        // Predicated region
        $region21: #{tpu_custom_call.1} parent=11 // pred_check
          %p492 = pneg %p160
        $region22: #{tpu_custom_call.1} parent=11 // pred_check_branch
          %494 = sbr.rel (%p492) target = $region24
        $region23: #{tpu_custom_call.1} parent=11 // pred_region
          %s496 = ssub.s32 1024, 1024
          %497 = vsyncadd [#allocation8], %s496
          %s498 = sshll.u32 [#allocation9], 4
          %s499 = int_to_ptr.vmem [resolvable:$true] %s498
          %504 = dma.hbm_to_vmem [thread:$0]  %s4, 1024, %s499, [#allocation8], 64, 64, 4
        $region24: #{tpu_custom_call.1} parent=11 // pred_fallthru
          _
        // Predicated region
        $region25: #{tpu_custom_call.1} parent=11 // pred_check
          %p505 = pneg %p181
        $region26: #{tpu_custom_call.1} parent=11 // pred_check_branch
          %507 = sbr.rel (%p505) target = $region28
        $region27: #{tpu_custom_call.1} parent=11 // pred_region
          _
        $region28: #{tpu_custom_call.1} parent=11 // pred_fallthru
          _
        // Predicated region
        $region29: #{tpu_custom_call.1} parent=11 // pred_check
          %p508 = pneg %p202
        $region30: #{tpu_custom_call.1} parent=11 // pred_check_branch
          %510 = sbr.rel (%p508) target = $region32
        $region31: #{tpu_custom_call.1} parent=11 // pred_region
          %s512 = ssub.s32 1024, 1024
          %513 = vsyncadd [#allocation11], %s512
          %s514 = sshll.u32 [#allocation10], 4
          %s515 = int_to_ptr.vmem [resolvable:$true] %s514
          %520 = dma.hbm_to_vmem [thread:$0]  %s6, 1024, %s515, [#allocation11], 64, 64, 4
        $region32: #{tpu_custom_call.1} parent=11 // pred_fallthru
          _
        // Predicated region
        $region33: #{tpu_custom_call.1} parent=11 // pred_check
          %p521 = pneg %p223
        $region34: #{tpu_custom_call.1} parent=11 // pred_check_branch
          %523 = sbr.rel (%p521) target = $region36
        $region35: #{tpu_custom_call.1} parent=11 // pred_region
          _
        $region36: #{tpu_custom_call.1} parent=11 // pred_fallthru
          _
        // Predicated region
        $region37: #{tpu_custom_call.1} parent=11 // pred_check
          %p524 = pneg %p244
        $region38: #{tpu_custom_call.1} parent=11 // pred_check_branch
          %526 = sbr.rel (%p524) target = $region40
        $region39: #{tpu_custom_call.1} parent=11 // pred_region
          %s528 = ssub.s32 1024, 1024
          %529 = vsyncadd [#allocation11], %s528
          %s530 = sshll.u32 [#allocation12], 4
          %s531 = int_to_ptr.vmem [resolvable:$true] %s530
          %536 = dma.hbm_to_vmem [thread:$0]  %s8, 1024, %s531, [#allocation11], 64, 64, 4
        $region40: #{tpu_custom_call.1} parent=11 // pred_fallthru
          _
        // Predicated region
        $region41: #{tpu_custom_call.1} parent=11 // pred_check
          %p537 = pneg %p265
        $region42: #{tpu_custom_call.1} parent=11 // pred_check_branch
          %539 = sbr.rel (%p537) target = $region44
        $region43: #{tpu_custom_call.1} parent=11 // pred_region
          _
        $region44: #{tpu_custom_call.1} parent=11 // pred_fallthru
          _
        // Predicated region
        $region45: #{tpu_custom_call.1} parent=11 // pred_check
          %p540 = pneg %p286
        $region46: #{tpu_custom_call.1} parent=11 // pred_check_branch
          %542 = sbr.rel (%p540) target = $region48
        $region47: #{tpu_custom_call.1} parent=11 // pred_region
          _
        $region48: #{tpu_custom_call.1} parent=11 // pred_fallthru
          _
        // Predicated region
        $region49: #{tpu_custom_call.1} parent=11 // pred_check
          %p543 = pneg %p307
        $region50: #{tpu_custom_call.1} parent=11 // pred_check_branch
          %545 = sbr.rel (%p543) target = $region52
        $region51: #{tpu_custom_call.1} parent=11 // pred_region
          _
        $region52: #{tpu_custom_call.1} parent=11 // pred_fallthru
          _
        // Predicated region
        $region53: #{tpu_custom_call.1} parent=11 // pred_check
          %p546 = pneg %p328
        $region54: #{tpu_custom_call.1} parent=11 // pred_check_branch
          %548 = sbr.rel (%p546) target = $region56
        $region55: #{tpu_custom_call.1} parent=11 // pred_region
          _
        $region56: #{tpu_custom_call.1} parent=11 // pred_fallthru
          _
        // Predicated region
        $region57: #{tpu_custom_call.1} parent=11 // pred_check
          %p549 = pneg %p349
        $region58: #{tpu_custom_call.1} parent=11 // pred_check_branch
          %551 = sbr.rel (%p549) target = $region60
        $region59: #{tpu_custom_call.1} parent=11 // pred_region
          _
        $region60: #{tpu_custom_call.1} parent=11 // pred_fallthru
          _
        // Predicated region
        $region61: #{tpu_custom_call.1} parent=11 // pred_check
          %p552 = pneg %p370
        $region62: #{tpu_custom_call.1} parent=11 // pred_check_branch
          %554 = sbr.rel (%p552) target = $region64
        $region63: #{tpu_custom_call.1} parent=11 // pred_region
          %s556 = ssub.s32 2048, 2048
          %557 = vsyncadd [#allocation14], %s556
          %s558 = sshll.u32 [#allocation13], 4
          %s559 = int_to_ptr.vmem [resolvable:$true] %s558
          %564 = dma.hbm_to_vmem [thread:$0]  %s14, 2048, %s559, [#allocation14], 128, 128, 8
        $region64: #{tpu_custom_call.1} parent=11 // pred_fallthru
          _
        // Predicated region
        $region65: #{tpu_custom_call.1} parent=11 // pred_check
          %p565 = pneg %p391
        $region66: #{tpu_custom_call.1} parent=11 // pred_check_branch
          %567 = sbr.rel (%p565) target = $region68
        $region67: #{tpu_custom_call.1} parent=11 // pred_region
          _
        $region68: #{tpu_custom_call.1} parent=11 // pred_fallthru
          _
        // Predicated region
        $region69: #{tpu_custom_call.1} parent=11 // pred_check
          %p568 = pneg %p412
        $region70: #{tpu_custom_call.1} parent=11 // pred_check_branch
          %570 = sbr.rel (%p568) target = $region72
        $region71: #{tpu_custom_call.1} parent=11 // pred_region
          %s572 = ssub.s32 2048, 2048
          %573 = vsyncadd [#allocation14], %s572
          %s574 = sshll.u32 [#allocation15], 4
          %s575 = int_to_ptr.vmem [resolvable:$true] %s574
          %580 = dma.hbm_to_vmem [thread:$0]  %s16, 2048, %s575, [#allocation14], 64, 64, 4
        $region72: #{tpu_custom_call.1} parent=11 // pred_fallthru
          _
        // Predicated region
        $region73: #{tpu_custom_call.1} parent=11 // pred_check
          %p581 = pneg %p433
        $region74: #{tpu_custom_call.1} parent=11 // pred_check_branch
          %583 = sbr.rel (%p581) target = $region76
        $region75: #{tpu_custom_call.1} parent=11 // pred_region
          _
        $region76: #{tpu_custom_call.1} parent=11 // pred_fallthru
          _
      $region12: #{tpu_custom_call.1} parent=5 // pred_fallthru
        _
      %p584 = scmp.lt.s32.totalorder %s33, 2
      // Predicated region
      $region77: #{tpu_custom_call.1} parent=5 // pred_check
        %p585 = pneg %p584
      $region78: #{tpu_custom_call.1} parent=5 // pred_check_branch
        %587 = sbr.rel (%p585) target = $region80
      $region79: #{tpu_custom_call.1} parent=5 // pred_region
        // Predicated region
        $region81: #{tpu_custom_call.1} parent=79 // pred_check
          %p588 = pneg %p65
        $region82: #{tpu_custom_call.1} parent=79 // pred_check_branch
          %590 = sbr.rel (%p588) target = $region84
        $region83: #{tpu_custom_call.1} parent=79 // pred_region
          %s591 = sand.u32 %s55, 1
          %s592 = scalar_lea.sflag [#allocation5], %s591
          %s593 = sand.u32 %s55, 1
          %s594 = smul.addr %s593, 8
          %s595 = scalar_lea.vmem [#allocation4], %s594
          %s597 = ssub.s32 128, 128
          %598 = vsyncadd %s592, %s597
          %s599 = smul.addr %s40, 128
          %s600 = scalar_lea.hbm %s0, %s599
          %s602 = sshll.u32 %s595, 4
          %s603 = int_to_ptr.vmem [resolvable:$true] %s602
          %605 = dma.hbm_to_vmem [thread:$0]  %s600, 128, %s603, %s592
        $region84: #{tpu_custom_call.1} parent=79 // pred_fallthru
          _
        // Predicated region
        $region85: #{tpu_custom_call.1} parent=79 // pred_check
          %p606 = pneg %p91
        $region86: #{tpu_custom_call.1} parent=79 // pred_check_branch
          %608 = sbr.rel (%p606) target = $region88
        $region87: #{tpu_custom_call.1} parent=79 // pred_region
          %p609 = scmp.lt.s32.totalorder %s40, 1
          %s610 = scalar_select %p609, %s40, 1
          %s611 = scalar_lea.vmem %s1, %s610
        $region88: #{tpu_custom_call.1} parent=79 // pred_fallthru
          _
      $region80: #{tpu_custom_call.1} parent=5 // pred_fallthru
        _
      %p612 = scmp.le.s32.totalorder 1, %s33
      %p613 = scmp.lt.s32.totalorder %s33, 3
      %p614 = pnand %p612, %p613
      %p615 = pneg %p614
      // Predicated region
      $region89: #{tpu_custom_call.1} parent=5 // pred_check
        _
      $region90: #{tpu_custom_call.1} parent=5 // pred_check_branch
        %617 = sbr.rel (%p614) target = $region92
      $region91: #{tpu_custom_call.1} parent=5 // pred_region
        %s618 = ssub.s32 %s33, 1
        %s619 = sand.u32 %s58, 1
        %s620 = scalar_lea.sflag [#allocation5], %s619
        %s621 = sand.u32 %s58, 1
        %s622 = smul.addr %s621, 8
        %s623 = scalar_lea.vmem [#allocation4], %s622
        // Predicated region
        $region93: #{tpu_custom_call.1} parent=91 // pred_check
          %p624 = pneg %p71
        $region94: #{tpu_custom_call.1} parent=91 // pred_check_branch
          %626 = sbr.rel (%p624) target = $region96
        $region95: #{tpu_custom_call.1} parent=91 // pred_region
          %627 = dma.done %s620, 128
        $region96: #{tpu_custom_call.1} parent=91 // pred_fallthru
          _
        // Predicated region
        $region97: #{tpu_custom_call.1} parent=91 // pred_check
          %p628 = pneg %p118
        $region98: #{tpu_custom_call.1} parent=91 // pred_check_branch
          %630 = sbr.rel (%p628) target = $region100
        $region99: #{tpu_custom_call.1} parent=91 // pred_region
          %631 = dma.done [#allocation8], 1024
        $region100: #{tpu_custom_call.1} parent=91 // pred_fallthru
          _
        // Predicated region
        $region101: #{tpu_custom_call.1} parent=91 // pred_check
          %p632 = pneg %p160
        $region102: #{tpu_custom_call.1} parent=91 // pred_check_branch
          %634 = sbr.rel (%p632) target = $region104
        $region103: #{tpu_custom_call.1} parent=91 // pred_region
          %635 = dma.done [#allocation8], 1024
        $region104: #{tpu_custom_call.1} parent=91 // pred_fallthru
          _
        // Predicated region
        $region105: #{tpu_custom_call.1} parent=91 // pred_check
          %p636 = pneg %p202
        $region106: #{tpu_custom_call.1} parent=91 // pred_check_branch
          %638 = sbr.rel (%p636) target = $region108
        $region107: #{tpu_custom_call.1} parent=91 // pred_region
          %639 = dma.done [#allocation11], 1024
        $region108: #{tpu_custom_call.1} parent=91 // pred_fallthru
          _
        // Predicated region
        $region109: #{tpu_custom_call.1} parent=91 // pred_check
          %p640 = pneg %p244
        $region110: #{tpu_custom_call.1} parent=91 // pred_check_branch
          %642 = sbr.rel (%p640) target = $region112
        $region111: #{tpu_custom_call.1} parent=91 // pred_region
          %643 = dma.done [#allocation11], 1024
        $region112: #{tpu_custom_call.1} parent=91 // pred_fallthru
          _
        // Predicated region
        $region113: #{tpu_custom_call.1} parent=91 // pred_check
          %p644 = pneg %p370
        $region114: #{tpu_custom_call.1} parent=91 // pred_check_branch
          %646 = sbr.rel (%p644) target = $region116
        $region115: #{tpu_custom_call.1} parent=91 // pred_region
          %647 = dma.done [#allocation14], 2048
        $region116: #{tpu_custom_call.1} parent=91 // pred_fallthru
          _
        // Predicated region
        $region117: #{tpu_custom_call.1} parent=91 // pred_check
          %p648 = pneg %p412
        $region118: #{tpu_custom_call.1} parent=91 // pred_check_branch
          %650 = sbr.rel (%p648) target = $region120
        $region119: #{tpu_custom_call.1} parent=91 // pred_region
          %651 = dma.done [#allocation14], 2048
        $region120: #{tpu_custom_call.1} parent=91 // pred_fallthru
          _
        %s652 = sand.u32 %s58, 1
        %s653 = scalar_lea.sflag [#allocation5], %s652
        %s654 = sand.u32 %s58, 1
        %s655 = smul.addr %s654, 8
        %s656 = scalar_lea.vmem [#allocation4], %s655
        %p657 = pneg %p71
        %p658 = pneg %p68
        %p659 = scmp.lt.s32.totalorder %s42, 1
        %s660 = scalar_select %p659, %s42, 1
        %s661 = scalar_lea.vmem %s1, %s660
        %p662 = pneg %p97
        %p663 = pneg %p94
        %p664 = pneg %p118
        %p665 = pneg %p115
        %p666 = pneg %p139
        %p667 = pneg %p136
        %p668 = pneg %p160
        %p669 = pneg %p157
        %p670 = pneg %p181
        %p671 = pneg %p178
        %p672 = pneg %p202
        %p673 = pneg %p199
        %p674 = pneg %p223
        %p675 = pneg %p220
        %p676 = pneg %p244
        %p677 = pneg %p241
        %p678 = pneg %p265
        %p679 = pneg %p262
        %p680 = pneg %p286
        %p681 = pneg %p283
        %p682 = pneg %p307
        %p683 = pneg %p304
        %p684 = pneg %p328
        %p685 = pneg %p325
        %p686 = pneg %p349
        %p687 = pneg %p346
        %p688 = pneg %p370
        %p689 = pneg %p367
        %p690 = pneg %p391
        %p691 = pneg %p388
        %p692 = pneg %p412
        %p693 = pneg %p409
        %p694 = pneg %p433
        %p695 = pneg %p430
        %p696 = pneg %p461
        %p697 = pneg %p458
        %s698 = sand.u32 %s448, 1
        %s699 = scalar_lea.sflag [#allocation6], %s698
        %s700 = sand.u32 %s448, 1
        %s701 = smul.addr %s700, 8
        %s702 = scalar_lea.vmem [#allocation16], %s701
        %p703 = scmp.lt.s32.totalorder %s42, 1
        %s704 = scalar_select %p703, %s42, 1
        %s705 = scalar_lea.vmem %s1, %s704
        %v707 = vld [vmem:[%s10] sm:$0x1]
        %v708 = vld [vmem:[%s11] sm:$0x1]
        %p709 = scmp.eq.s32.totalorder %s43, 0
        // Predicated region
        $region121: #{tpu_custom_call.1} parent=91 // pred_check
          %p710 = pneg %p709
        $region122: #{tpu_custom_call.1} parent=91 // pred_check_branch
          %712 = sbr.rel (%p710) target = $region124
        $region123: #{tpu_custom_call.1} parent=91 // pred_region
          %v713 = vld [vmem:[%s623] sm:$0xff]
          %714 = vadd.xlane.f32.xlu0 %v713
          %v715 = vpop.xlane.xlu0 %714
          %v716 = vrcp.pop 128.0
          %v717 = vmul.f32 %v715, %v716
          %v718 = vsub.f32 %v713, %v717
          %v719 = vmul.f32 %v718, %v718
          %720 = vadd.xlane.f32.xlu0 %v719
          %v721 = vpop.xlane.xlu0 %720
          %v722 = vmul.f32 %v721, 0.007874016
          %v724 = vlaneseq
          %v725 = vshrl.u32 %v724, 7
          %v726 = vsub.s32 0, %v725
          %v727 = vrot.slane %v707, %v726
          %v729 = vmul.f32 %v727, %v718
          %v730 = vrsqrt.pop %v722
          %v731 = vmul.f32 %v722, %v730
          %vm732 = vcmp.eq.f32.partialorder %v722, inf
          %v733 = vsel %vm732, %v722, %v731
          %vm734 = vcmp.eq.f32.partialorder %v722, 0.0
          %v735 = vand.u32 %v722, 2147483648
          %v736 = vsel %vm734, %v735, %v733
          %v737 = vadd.f32 %v736, 1e-06
          %v738 = vrcp.pop %v737
          %v739 = vmul.f32 %v737, %v738
          %v740 = vsub.f32 2.0, %v739
          %v741 = vmul.f32 %v738, %v740
          %v742 = vmul.f32 %v729, %v741
          %v744 = vlaneseq
          %v745 = vshrl.u32 %v744, 7
          %v746 = vsub.s32 0, %v745
          %v747 = vrot.slane %v708, %v746
          %v749 = vadd.f32 %v742, %v747
          %v750 = vpack.c.bf16 %v749, %v749
          %v751 = vld [vmem:[#allocation9] sm:$0xf]
          %v752 = vld [vmem:[#allocation9 + $0x4] sm:$0xf]
          %v753 = vld [vmem:[#allocation9 + $0x8] sm:$0xf]
          %v754 = vld [vmem:[#allocation9 + $0xc] sm:$0xf]
          %v755 = vld [vmem:[#allocation9 + $0x10] sm:$0xf]
          %v756 = vld [vmem:[#allocation9 + $0x14] sm:$0xf]
          %v757 = vld [vmem:[#allocation9 + $0x18] sm:$0xf]
          %v758 = vld [vmem:[#allocation9 + $0x1c] sm:$0xf]
          %v759 = vld [vmem:[#allocation9 + $0x20] sm:$0xf]
          %v760 = vld [vmem:[#allocation9 + $0x24] sm:$0xf]
          %v761 = vld [vmem:[#allocation9 + $0x28] sm:$0xf]
          %v762 = vld [vmem:[#allocation9 + $0x2c] sm:$0xf]
          %v763 = vld [vmem:[#allocation9 + $0x30] sm:$0xf]
          %v764 = vld [vmem:[#allocation9 + $0x34] sm:$0xf]
          %v765 = vld [vmem:[#allocation9 + $0x38] sm:$0xf]
          %v766 = vld [vmem:[#allocation9 + $0x3c] sm:$0xf]
          %v767 = vld [vmem:[%s5] sm:$0x1]
          %v769 = vlaneseq
          %v770 = vshrl.u32 %v769, 7
          %v771 = vsub.s32 0, %v770
          %v772 = vrot.slane %v767, %v771
          %v790 = vunpack.c.l.b16 %v751
          %v791 = vunpack.c.l.b16 %v752
          %v792 = vunpack.c.l.b16 %v753
          %v793 = vunpack.c.l.b16 %v754
          %v794 = vunpack.c.l.b16 %v755
          %v795 = vunpack.c.l.b16 %v756
          %v796 = vunpack.c.l.b16 %v757
          %v797 = vunpack.c.l.b16 %v758
          %v798 = vunpack.c.l.b16 %v759
          %v799 = vunpack.c.l.b16 %v760
          %v800 = vunpack.c.l.b16 %v761
          %v801 = vunpack.c.l.b16 %v762
          %v802 = vunpack.c.l.b16 %v763
          %v803 = vunpack.c.l.b16 %v764
          %v804 = vunpack.c.l.b16 %v765
          %v805 = vunpack.c.l.b16 %v766
          %v806 = vpack.c.b16 %v791, %v790
          %v807 = vpack.c.b16 %v793, %v792
          %v808 = vpack.c.b16 %v795, %v794
          %v809 = vpack.c.b16 %v797, %v796
          %v810 = vpack.c.b16 %v799, %v798
          %v811 = vpack.c.b16 %v801, %v800
          %v812 = vpack.c.b16 %v803, %v802
          %v813 = vpack.c.b16 %v805, %v804
          %822 = vmatprep.subr.bf16.mxu0 0
          %823 = vmatpush1.bf16.msra.mxu0 %v806
          %824 = vmatprep.subr.bf16.mxu0 0
          %825 = vmatpush1.bf16.msra.mxu0 %v807
          %826 = vmatprep.subr.bf16.mxu0 0
          %827 = vmatpush1.bf16.msra.mxu0 %v808
          %828 = vmatprep.subr.bf16.mxu0 0
          %829 = vmatpush1.bf16.msra.mxu0 %v809
          %830 = vmatprep.subr.bf16.mxu0 0
          %831 = vmatpush1.bf16.msra.mxu0 %v810
          %832 = vmatprep.subr.bf16.mxu0 0
          %833 = vmatpush1.bf16.msra.mxu0 %v811
          %834 = vmatprep.subr.bf16.mxu0 0
          %835 = vmatpush1.bf16.msra.mxu0 %v812
          %836 = vmatprep.subr.bf16.mxu0 0
          %837 = vmatpush1.bf16.msra.mxu0 %v813
          %838 = vmatprep.subr.bf16.mxu0 0
          %839 = vmatpush1.bf16.msra.mxu0 0
          %840 = vmatprep.subr.bf16.mxu0 0
          %841 = vmatpush1.bf16.msra.mxu0 0
          %842 = vmatprep.subr.bf16.mxu0 0
          %843 = vmatpush1.bf16.msra.mxu0 0
          %844 = vmatprep.subr.bf16.mxu0 0
          %845 = vmatpush1.bf16.msra.mxu0 0
          %846 = vmatprep.subr.bf16.mxu0 0
          %847 = vmatpush1.bf16.msra.mxu0 0
          %848 = vmatprep.subr.bf16.mxu0 0
          %849 = vmatpush1.bf16.msra.mxu0 0
          %850 = vmatprep.subr.bf16.mxu0 0
          %851 = vmatpush1.bf16.msra.mxu0 0
          %852 = vmatprep.subr.bf16.mxu0 0
          %853 = vmatpush1.bf16.msra.mxu0 0
          %854 = vmatprep.mubr.bf16.mxu0 0
          %855 = vmatmul.mubr.bf16.gmra.mrb[0].mxu0 %v750
          %v856 = vpop.f32.mrb[0].mxu0
          %v857 = vadd.f32 %v772, %v856
          %v858 = vpop.f32.mrb[0].mxu0
          %v859 = vpop.f32.mrb[0].mxu0
          %v860 = vpop.f32.mrb[0].mxu0
          %861 = vdwg.mxu0
          %v862 = vld [vmem:[#allocation10] sm:$0xf]
          %v863 = vld [vmem:[#allocation10 + $0x4] sm:$0xf]
          %v864 = vld [vmem:[#allocation10 + $0x8] sm:$0xf]
          %v865 = vld [vmem:[#allocation10 + $0xc] sm:$0xf]
          %v866 = vld [vmem:[#allocation10 + $0x10] sm:$0xf]
          %v867 = vld [vmem:[#allocation10 + $0x14] sm:$0xf]
          %v868 = vld [vmem:[#allocation10 + $0x18] sm:$0xf]
          %v869 = vld [vmem:[#allocation10 + $0x1c] sm:$0xf]
          %v870 = vld [vmem:[#allocation10 + $0x20] sm:$0xf]
          %v871 = vld [vmem:[#allocation10 + $0x24] sm:$0xf]
          %v872 = vld [vmem:[#allocation10 + $0x28] sm:$0xf]
          %v873 = vld [vmem:[#allocation10 + $0x2c] sm:$0xf]
          %v874 = vld [vmem:[#allocation10 + $0x30] sm:$0xf]
          %v875 = vld [vmem:[#allocation10 + $0x34] sm:$0xf]
          %v876 = vld [vmem:[#allocation10 + $0x38] sm:$0xf]
          %v877 = vld [vmem:[#allocation10 + $0x3c] sm:$0xf]
          %v878 = vld [vmem:[%s7] sm:$0x1]
          %v880 = vlaneseq
          %v881 = vshrl.u32 %v880, 7
          %v882 = vsub.s32 0, %v881
          %v883 = vrot.slane %v878, %v882
          %v901 = vunpack.c.l.b16 %v862
          %v902 = vunpack.c.l.b16 %v863
          %v903 = vunpack.c.l.b16 %v864
          %v904 = vunpack.c.l.b16 %v865
          %v905 = vunpack.c.l.b16 %v866
          %v906 = vunpack.c.l.b16 %v867
          %v907 = vunpack.c.l.b16 %v868
          %v908 = vunpack.c.l.b16 %v869
          %v909 = vunpack.c.l.b16 %v870
          %v910 = vunpack.c.l.b16 %v871
          %v911 = vunpack.c.l.b16 %v872
          %v912 = vunpack.c.l.b16 %v873
          %v913 = vunpack.c.l.b16 %v874
          %v914 = vunpack.c.l.b16 %v875
          %v915 = vunpack.c.l.b16 %v876
          %v916 = vunpack.c.l.b16 %v877
          %v917 = vpack.c.b16 %v902, %v901
          %v918 = vpack.c.b16 %v904, %v903
          %v919 = vpack.c.b16 %v906, %v905
          %v920 = vpack.c.b16 %v908, %v907
          %v921 = vpack.c.b16 %v910, %v909
          %v922 = vpack.c.b16 %v912, %v911
          %v923 = vpack.c.b16 %v914, %v913
          %v924 = vpack.c.b16 %v916, %v915
          %933 = vmatprep.subr.bf16.mxu0 0
          %934 = vmatpush1.bf16.msra.mxu0 %v917
          %935 = vmatprep.subr.bf16.mxu0 0
          %936 = vmatpush1.bf16.msra.mxu0 %v918
          %937 = vmatprep.subr.bf16.mxu0 0
          %938 = vmatpush1.bf16.msra.mxu0 %v919
          %939 = vmatprep.subr.bf16.mxu0 0
          %940 = vmatpush1.bf16.msra.mxu0 %v920
          %941 = vmatprep.subr.bf16.mxu0 0
          %942 = vmatpush1.bf16.msra.mxu0 %v921
          %943 = vmatprep.subr.bf16.mxu0 0
          %944 = vmatpush1.bf16.msra.mxu0 %v922
          %945 = vmatprep.subr.bf16.mxu0 0
          %946 = vmatpush1.bf16.msra.mxu0 %v923
          %947 = vmatprep.subr.bf16.mxu0 0
          %948 = vmatpush1.bf16.msra.mxu0 %v924
          %949 = vmatprep.subr.bf16.mxu0 0
          %950 = vmatpush1.bf16.msra.mxu0 0
          %951 = vmatprep.subr.bf16.mxu0 0
          %952 = vmatpush1.bf16.msra.mxu0 0
          %953 = vmatprep.subr.bf16.mxu0 0
          %954 = vmatpush1.bf16.msra.mxu0 0
          %955 = vmatprep.subr.bf16.mxu0 0
          %956 = vmatpush1.bf16.msra.mxu0 0
          %957 = vmatprep.subr.bf16.mxu0 0
          %958 = vmatpush1.bf16.msra.mxu0 0
          %959 = vmatprep.subr.bf16.mxu0 0
          %960 = vmatpush1.bf16.msra.mxu0 0
          %961 = vmatprep.subr.bf16.mxu0 0
          %962 = vmatpush1.bf16.msra.mxu0 0
          %963 = vmatprep.subr.bf16.mxu0 0
          %964 = vmatpush1.bf16.msra.mxu0 0
          %965 = vmatprep.mubr.bf16.mxu0 0
          %966 = vmatmul.mubr.bf16.gmra.mrb[0].mxu0 %v750
          %v967 = vpop.f32.mrb[0].mxu0
          %v968 = vadd.f32 %v883, %v967
          %v969 = vpop.f32.mrb[0].mxu0
          %v970 = vpop.f32.mrb[0].mxu0
          %v971 = vpop.f32.mrb[0].mxu0
          %972 = vdwg.mxu0
          %v973 = vpack.c.bf16 %v857, %v857
          %974 = vst [vmem:[#allocation2] sm:$0xf] %v973
          %v975 = vpack.c.bf16 %v968, %v968
          %976 = vst [vmem:[#allocation3] sm:$0xf] %v975
        $region124: #{tpu_custom_call.1} parent=91 // pred_fallthru
          _
        %s977 = smul.u32 %s43, 8
        %s978 = scalar_lea.vmem %s623, %s977 [#allocation4]
        %v979 = vld [vmem:[%s978] sm:$0xff]
        %980 = vadd.xlane.f32.xlu0 %v979
        %v981 = vpop.xlane.xlu0 %980
        %v982 = vrcp.pop 128.0
        %v983 = vmul.f32 %v981, %v982
        %v984 = vsub.f32 %v979, %v983
        %v985 = vmul.f32 %v984, %v984
        %986 = vadd.xlane.f32.xlu0 %v985
        %v987 = vpop.xlane.xlu0 %986
        %v988 = vmul.f32 %v987, 0.007874016
        %v990 = vlaneseq
        %v991 = vshrl.u32 %v990, 7
        %v992 = vsub.s32 0, %v991
        %v993 = vrot.slane %v707, %v992
        %v995 = vmul.f32 %v993, %v984
        %v996 = vrsqrt.pop %v988
        %v997 = vmul.f32 %v988, %v996
        %vm998 = vcmp.eq.f32.partialorder %v988, inf
        %v999 = vsel %vm998, %v988, %v997
        %vm1000 = vcmp.eq.f32.partialorder %v988, 0.0
        %v1001 = vand.u32 %v988, 2147483648
        %v1002 = vsel %vm1000, %v1001, %v999
        %v1003 = vadd.f32 %v1002, 1e-06
        %v1004 = vrcp.pop %v1003
        %v1005 = vmul.f32 %v1003, %v1004
        %v1006 = vsub.f32 2.0, %v1005
        %v1007 = vmul.f32 %v1004, %v1006
        %v1008 = vmul.f32 %v995, %v1007
        %v1010 = vlaneseq
        %v1011 = vshrl.u32 %v1010, 7
        %v1012 = vsub.s32 0, %v1011
        %v1013 = vrot.slane %v708, %v1012
        %v1015 = vadd.f32 %v1008, %v1013
        %v1016 = vpack.c.bf16 %v1015, %v1015
        %v1017 = vld [vmem:[#allocation7] sm:$0xf]
        %v1018 = vld [vmem:[#allocation7 + $0x4] sm:$0xf]
        %v1019 = vld [vmem:[#allocation7 + $0x8] sm:$0xf]
        %v1020 = vld [vmem:[#allocation7 + $0xc] sm:$0xf]
        %v1021 = vld [vmem:[#allocation7 + $0x10] sm:$0xf]
        %v1022 = vld [vmem:[#allocation7 + $0x14] sm:$0xf]
        %v1023 = vld [vmem:[#allocation7 + $0x18] sm:$0xf]
        %v1024 = vld [vmem:[#allocation7 + $0x1c] sm:$0xf]
        %v1025 = vld [vmem:[#allocation7 + $0x20] sm:$0xf]
        %v1026 = vld [vmem:[#allocation7 + $0x24] sm:$0xf]
        %v1027 = vld [vmem:[#allocation7 + $0x28] sm:$0xf]
        %v1028 = vld [vmem:[#allocation7 + $0x2c] sm:$0xf]
        %v1029 = vld [vmem:[#allocation7 + $0x30] sm:$0xf]
        %v1030 = vld [vmem:[#allocation7 + $0x34] sm:$0xf]
        %v1031 = vld [vmem:[#allocation7 + $0x38] sm:$0xf]
        %v1032 = vld [vmem:[#allocation7 + $0x3c] sm:$0xf]
        %v1033 = vld [vmem:[%s3] sm:$0x1]
        %v1035 = vlaneseq
        %v1036 = vshrl.u32 %v1035, 7
        %v1037 = vsub.s32 0, %v1036
        %v1038 = vrot.slane %v1033, %v1037
        %v1056 = vunpack.c.l.b16 %v1017
        %v1057 = vunpack.c.l.b16 %v1018
        %v1058 = vunpack.c.l.b16 %v1019
        %v1059 = vunpack.c.l.b16 %v1020
        %v1060 = vunpack.c.l.b16 %v1021
        %v1061 = vunpack.c.l.b16 %v1022
        %v1062 = vunpack.c.l.b16 %v1023
        %v1063 = vunpack.c.l.b16 %v1024
        %v1064 = vunpack.c.l.b16 %v1025
        %v1065 = vunpack.c.l.b16 %v1026
        %v1066 = vunpack.c.l.b16 %v1027
        %v1067 = vunpack.c.l.b16 %v1028
        %v1068 = vunpack.c.l.b16 %v1029
        %v1069 = vunpack.c.l.b16 %v1030
        %v1070 = vunpack.c.l.b16 %v1031
        %v1071 = vunpack.c.l.b16 %v1032
        %v1072 = vpack.c.b16 %v1057, %v1056
        %v1073 = vpack.c.b16 %v1059, %v1058
        %v1074 = vpack.c.b16 %v1061, %v1060
        %v1075 = vpack.c.b16 %v1063, %v1062
        %v1076 = vpack.c.b16 %v1065, %v1064
        %v1077 = vpack.c.b16 %v1067, %v1066
        %v1078 = vpack.c.b16 %v1069, %v1068
        %v1079 = vpack.c.b16 %v1071, %v1070
        %1088 = vmatprep.subr.bf16.mxu0 0
        %1089 = vmatpush1.bf16.msra.mxu0 %v1072
        %1090 = vmatprep.subr.bf16.mxu0 0
        %1091 = vmatpush1.bf16.msra.mxu0 %v1073
        %1092 = vmatprep.subr.bf16.mxu0 0
        %1093 = vmatpush1.bf16.msra.mxu0 %v1074
        %1094 = vmatprep.subr.bf16.mxu0 0
        %1095 = vmatpush1.bf16.msra.mxu0 %v1075
        %1096 = vmatprep.subr.bf16.mxu0 0
        %1097 = vmatpush1.bf16.msra.mxu0 %v1076
        %1098 = vmatprep.subr.bf16.mxu0 0
        %1099 = vmatpush1.bf16.msra.mxu0 %v1077
        %1100 = vmatprep.subr.bf16.mxu0 0
        %1101 = vmatpush1.bf16.msra.mxu0 %v1078
        %1102 = vmatprep.subr.bf16.mxu0 0
        %1103 = vmatpush1.bf16.msra.mxu0 %v1079
        %1104 = vmatprep.subr.bf16.mxu0 0
        %1105 = vmatpush1.bf16.msra.mxu0 0
        %1106 = vmatprep.subr.bf16.mxu0 0
        %1107 = vmatpush1.bf16.msra.mxu0 0
        %1108 = vmatprep.subr.bf16.mxu0 0
        %1109 = vmatpush1.bf16.msra.mxu0 0
        %1110 = vmatprep.subr.bf16.mxu0 0
        %1111 = vmatpush1.bf16.msra.mxu0 0
        %1112 = vmatprep.subr.bf16.mxu0 0
        %1113 = vmatpush1.bf16.msra.mxu0 0
        %1114 = vmatprep.subr.bf16.mxu0 0
        %1115 = vmatpush1.bf16.msra.mxu0 0
        %1116 = vmatprep.subr.bf16.mxu0 0
        %1117 = vmatpush1.bf16.msra.mxu0 0
        %1118 = vmatprep.subr.bf16.mxu0 0
        %1119 = vmatpush1.bf16.msra.mxu0 0
        %1120 = vmatprep.mubr.bf16.mxu0 0
        %1121 = vmatmul.mubr.bf16.gmra.mrb[0].mxu0 %v1016
        %v1122 = vpop.f32.mrb[0].mxu0
        %v1123 = vadd.f32 %v1038, %v1122
        %v1124 = vpop.f32.mrb[0].mxu0
        %v1125 = vpop.f32.mrb[0].mxu0
        %v1126 = vpop.f32.mrb[0].mxu0
        %1127 = vdwg.mxu0
        %v1128 = vpack.c.bf16 %v1123, %v1123
        %v1129 = vld [vmem:[#allocation2] sm:$0xf]
        %v1130 = vld [vmem:[#allocation3] sm:$0xf]
        %v1131 = vld [vmem:[%s705] sm:$0x1]
        %vm1132 = vcmp.eq.s32.totalorder %v1131, 0
        %v1133 = vsel %vm1132, -1e+09, 0.0
        %vm1134 = vcmask 130048
        %v1136 = vsel %vm1134, %v1128, 0
        %v1139 = vsel %vm1134, %v1129, 0
        %1141 = vmatprep.subr.bf16.mxu0 0
        %1142 = vmatpush1.bf16.xpose.msra.mxu0 %v1139
        %1143 = vmatprep.subr.bf16.mxu0 0
        %1144 = vmatpush1.bf16.xpose.msra.mxu0 0
        %1145 = vmatprep.subr.bf16.mxu0 0
        %1146 = vmatpush1.bf16.xpose.msra.mxu0 0
        %1147 = vmatprep.subr.bf16.mxu0 0
        %1148 = vmatpush1.bf16.xpose.msra.mxu0 0
        %1149 = vmatprep.subr.bf16.mxu0 0
        %1150 = vmatpush1.bf16.xpose.msra.mxu0 0
        %1151 = vmatprep.subr.bf16.mxu0 0
        %1152 = vmatpush1.bf16.xpose.msra.mxu0 0
        %1153 = vmatprep.subr.bf16.mxu0 0
        %1154 = vmatpush1.bf16.xpose.msra.mxu0 0
        %1155 = vmatprep.subr.bf16.mxu0 0
        %1156 = vmatpush1.bf16.xpose.msra.mxu0 0
        %1157 = vmatprep.subr.bf16.mxu0 0
        %1158 = vmatpush1.bf16.xpose.msra.mxu0 0
        %1159 = vmatprep.subr.bf16.mxu0 0
        %1160 = vmatpush1.bf16.xpose.msra.mxu0 0
        %1161 = vmatprep.subr.bf16.mxu0 0
        %1162 = vmatpush1.bf16.xpose.msra.mxu0 0
        %1163 = vmatprep.subr.bf16.mxu0 0
        %1164 = vmatpush1.bf16.xpose.msra.mxu0 0
        %1165 = vmatprep.subr.bf16.mxu0 0
        %1166 = vmatpush1.bf16.xpose.msra.mxu0 0
        %1167 = vmatprep.subr.bf16.mxu0 0
        %1168 = vmatpush1.bf16.xpose.msra.mxu0 0
        %1169 = vmatprep.subr.bf16.mxu0 0
        %1170 = vmatpush1.bf16.xpose.msra.mxu0 0
        %1171 = vmatprep.subr.bf16.mxu0 0
        %1172 = vmatpush1.bf16.xpose.msra.mxu0 0
        %1173 = vmatprep.mubr.bf16.mxu0 0
        %1174 = vmatmul.mubr.bf16.gmra.mrb[0].mxu0 %v1136
        %v1175 = vpop.f32.mrb[0].mxu0
        %v1176 = vadd.f32 0.0, %v1175
        %v1177 = vpop.f32.mrb[0].mxu0
        %v1178 = vpop.f32.mrb[0].mxu0
        %v1179 = vpop.f32.mrb[0].mxu0
        %1180 = vdwg.mxu0
        %v1181 = vmul.f32 %v1176, 0.25
        %v1183 = vlaneseq
        %v1184 = vshrl.u32 %v1183, 7
        %v1185 = vsub.s32 0, %v1184
        %v1186 = vrot.slane %v1133, %v1185
        %v1188 = vadd.f32 %v1181, %v1186
        %vm1189 = vcmask 64512
        %v1190 = vsel %vm1189, %v1188, -inf
        %1191 = vmax.xlane.f32.xlu0 %v1190
        %v1192 = vpop.xlane.xlu0 %1191
        %v1193 = vsub.f32 %v1188, %v1192
        %v1194 = vmul.f32 %v1193, 1.442695
        %v1195 = vpow.pop %v1194
        %v1196 = vsel %vm1189, %v1195, 0.0
        %1197 = vadd.xlane.f32.xlu0 %v1196
        %v1198 = vpop.xlane.xlu0 %1197
        %v1199 = vrcp.pop %v1198
        %v1200 = vmul.f32 %v1198, %v1199
        %v1201 = vsub.f32 2.0, %v1200
        %v1202 = vmul.f32 %v1199, %v1201
        %v1203 = vmul.f32 %v1195, %v1202
        %v1204 = vpack.c.bf16 %v1203, %v1203
        %v1206 = vsel %vm1189, %v1204, 0
        %vm1208 = vcmask 1043456
        %v1210 = vsel %vm1208, %v1130, 0
        %1212 = vmatprep.subr.bf16.mxu0 0
        %1213 = vmatpush1.bf16.msra.mxu0 %v1210
        %1214 = vmatprep.subr.bf16.mxu0 0
        %1215 = vmatpush1.bf16.msra.mxu0 0
        %1216 = vmatprep.subr.bf16.mxu0 0
        %1217 = vmatpush1.bf16.msra.mxu0 0
        %1218 = vmatprep.subr.bf16.mxu0 0
        %1219 = vmatpush1.bf16.msra.mxu0 0
        %1220 = vmatprep.subr.bf16.mxu0 0
        %1221 = vmatpush1.bf16.msra.mxu0 0
        %1222 = vmatprep.subr.bf16.mxu0 0
        %1223 = vmatpush1.bf16.msra.mxu0 0
        %1224 = vmatprep.subr.bf16.mxu0 0
        %1225 = vmatpush1.bf16.msra.mxu0 0
        %1226 = vmatprep.subr.bf16.mxu0 0
        %1227 = vmatpush1.bf16.msra.mxu0 0
        %1228 = vmatprep.subr.bf16.mxu0 0
        %1229 = vmatpush1.bf16.msra.mxu0 0
        %1230 = vmatprep.subr.bf16.mxu0 0
        %1231 = vmatpush1.bf16.msra.mxu0 0
        %1232 = vmatprep.subr.bf16.mxu0 0
        %1233 = vmatpush1.bf16.msra.mxu0 0
        %1234 = vmatprep.subr.bf16.mxu0 0
        %1235 = vmatpush1.bf16.msra.mxu0 0
        %1236 = vmatprep.subr.bf16.mxu0 0
        %1237 = vmatpush1.bf16.msra.mxu0 0
        %1238 = vmatprep.subr.bf16.mxu0 0
        %1239 = vmatpush1.bf16.msra.mxu0 0
        %1240 = vmatprep.subr.bf16.mxu0 0
        %1241 = vmatpush1.bf16.msra.mxu0 0
        %1242 = vmatprep.subr.bf16.mxu0 0
        %1243 = vmatpush1.bf16.msra.mxu0 0
        %1244 = vmatprep.mubr.bf16.mxu0 0
        %1245 = vmatmul.mubr.bf16.gmra.mrb[0].mxu0 %v1206
        %v1246 = vpop.f32.mrb[0].mxu0
        %v1247 = vadd.f32 0.0, %v1246
        %v1248 = vpop.f32.mrb[0].mxu0
        %v1249 = vpop.f32.mrb[0].mxu0
        %v1250 = vpop.f32.mrb[0].mxu0
        %1251 = vdwg.mxu0
        %v1252 = vpack.c.bf16 %v1247, %v1247
        %v1253 = vld [vmem:[#allocation12] sm:$0xf]
        %v1254 = vld [vmem:[#allocation12 + $0x4] sm:$0xf]
        %1256 = vrot.lane.b32.xlu0 %v1128, 112
        %v1257 = vpop.permute.xlu0 %1256
        %v1259 = vunpack.c.l.b16 %v1129
        %v1260 = vpack.c.b16 %v1259, %v1259
        %1261 = vrot.lane.b32.xlu0 %v1260, 112
        %v1262 = vpop.permute.xlu0 %1261
        %v1264 = vsel %vm1134, %v1257, 0
        %v1267 = vsel %vm1134, %v1262, 0
        %1269 = vmatprep.subr.bf16.mxu0 0
        %1270 = vmatpush1.bf16.xpose.msra.mxu0 %v1267
        %1271 = vmatprep.subr.bf16.mxu0 0
        %1272 = vmatpush1.bf16.xpose.msra.mxu0 0
        %1273 = vmatprep.subr.bf16.mxu0 0
        %1274 = vmatpush1.bf16.xpose.msra.mxu0 0
        %1275 = vmatprep.subr.bf16.mxu0 0
        %1276 = vmatpush1.bf16.xpose.msra.mxu0 0
        %1277 = vmatprep.subr.bf16.mxu0 0
        %1278 = vmatpush1.bf16.xpose.msra.mxu0 0
        %1279 = vmatprep.subr.bf16.mxu0 0
        %1280 = vmatpush1.bf16.xpose.msra.mxu0 0
        %1281 = vmatprep.subr.bf16.mxu0 0
        %1282 = vmatpush1.bf16.xpose.msra.mxu0 0
        %1283 = vmatprep.subr.bf16.mxu0 0
        %1284 = vmatpush1.bf16.xpose.msra.mxu0 0
        %1285 = vmatprep.subr.bf16.mxu0 0
        %1286 = vmatpush1.bf16.xpose.msra.mxu0 0
        %1287 = vmatprep.subr.bf16.mxu0 0
        %1288 = vmatpush1.bf16.xpose.msra.mxu0 0
        %1289 = vmatprep.subr.bf16.mxu0 0
        %1290 = vmatpush1.bf16.xpose.msra.mxu0 0
        %1291 = vmatprep.subr.bf16.mxu0 0
        %1292 = vmatpush1.bf16.xpose.msra.mxu0 0
        %1293 = vmatprep.subr.bf16.mxu0 0
        %1294 = vmatpush1.bf16.xpose.msra.mxu0 0
        %1295 = vmatprep.subr.bf16.mxu0 0
        %1296 = vmatpush1.bf16.xpose.msra.mxu0 0
        %1297 = vmatprep.subr.bf16.mxu0 0
        %1298 = vmatpush1.bf16.xpose.msra.mxu0 0
        %1299 = vmatprep.subr.bf16.mxu0 0
        %1300 = vmatpush1.bf16.xpose.msra.mxu0 0
        %1301 = vmatprep.mubr.bf16.mxu0 0
        %1302 = vmatmul.mubr.bf16.gmra.mrb[0].mxu0 %v1264
        %v1303 = vpop.f32.mrb[0].mxu0
        %v1304 = vadd.f32 0.0, %v1303
        %v1305 = vpop.f32.mrb[0].mxu0
        %v1306 = vpop.f32.mrb[0].mxu0
        %v1307 = vpop.f32.mrb[0].mxu0
        %1308 = vdwg.mxu0
        %v1309 = vmul.f32 %v1304, 0.25
        %v1310 = vadd.f32 %v1309, %v1186
        %v1311 = vsel %vm1189, %v1310, -inf
        %1312 = vmax.xlane.f32.xlu0 %v1311
        %v1313 = vpop.xlane.xlu0 %1312
        %v1314 = vsub.f32 %v1310, %v1313
        %v1315 = vmul.f32 %v1314, 1.442695
        %v1316 = vpow.pop %v1315
        %v1317 = vsel %vm1189, %v1316, 0.0
        %1318 = vadd.xlane.f32.xlu0 %v1317
        %v1319 = vpop.xlane.xlu0 %1318
        %v1320 = vrcp.pop %v1319
        %v1321 = vmul.f32 %v1319, %v1320
        %v1322 = vsub.f32 2.0, %v1321
        %v1323 = vmul.f32 %v1320, %v1322
        %v1324 = vmul.f32 %v1316, %v1323
        %v1325 = vpack.c.bf16 %v1324, %v1324
        %v1327 = vunpack.c.l.b16 %v1130
        %v1328 = vpack.c.b16 %v1327, %v1327
        %1329 = vrot.lane.b32.xlu0 %v1328, 112
        %v1330 = vpop.permute.xlu0 %1329
        %v1332 = vsel %vm1189, %v1325, 0
        %v1335 = vsel %vm1208, %v1330, 0
        %1337 = vmatprep.subr.bf16.mxu0 0
        %1338 = vmatpush1.bf16.msra.mxu0 %v1335
        %1339 = vmatprep.subr.bf16.mxu0 0
        %1340 = vmatpush1.bf16.msra.mxu0 0
        %1341 = vmatprep.subr.bf16.mxu0 0
        %1342 = vmatpush1.bf16.msra.mxu0 0
        %1343 = vmatprep.subr.bf16.mxu0 0
        %1344 = vmatpush1.bf16.msra.mxu0 0
        %1345 = vmatprep.subr.bf16.mxu0 0
        %1346 = vmatpush1.bf16.msra.mxu0 0
        %1347 = vmatprep.subr.bf16.mxu0 0
        %1348 = vmatpush1.bf16.msra.mxu0 0
        %1349 = vmatprep.subr.bf16.mxu0 0
        %1350 = vmatpush1.bf16.msra.mxu0 0
        %1351 = vmatprep.subr.bf16.mxu0 0
        %1352 = vmatpush1.bf16.msra.mxu0 0
        %1353 = vmatprep.subr.bf16.mxu0 0
        %1354 = vmatpush1.bf16.msra.mxu0 0
        %1355 = vmatprep.subr.bf16.mxu0 0
        %1356 = vmatpush1.bf16.msra.mxu0 0
        %1357 = vmatprep.subr.bf16.mxu0 0
        %1358 = vmatpush1.bf16.msra.mxu0 0
        %1359 = vmatprep.subr.bf16.mxu0 0
        %1360 = vmatpush1.bf16.msra.mxu0 0
        %1361 = vmatprep.subr.bf16.mxu0 0
        %1362 = vmatpush1.bf16.msra.mxu0 0
        %1363 = vmatprep.subr.bf16.mxu0 0
        %1364 = vmatpush1.bf16.msra.mxu0 0
        %1365 = vmatprep.subr.bf16.mxu0 0
        %1366 = vmatpush1.bf16.msra.mxu0 0
        %1367 = vmatprep.subr.bf16.mxu0 0
        %1368 = vmatpush1.bf16.msra.mxu0 0
        %1369 = vmatprep.mubr.bf16.mxu0 0
        %1370 = vmatmul.mubr.bf16.gmra.mrb[0].mxu0 %v1332
        %v1371 = vpop.f32.mrb[0].mxu0
        %v1372 = vadd.f32 0.0, %v1371
        %v1373 = vpop.f32.mrb[0].mxu0
        %v1374 = vpop.f32.mrb[0].mxu0
        %v1375 = vpop.f32.mrb[0].mxu0
        %1376 = vdwg.mxu0
        %v1377 = vpack.c.bf16 %v1372, %v1372
        %v1378 = vld [vmem:[#allocation12 + $0x8] sm:$0xf]
        %v1379 = vld [vmem:[#allocation12 + $0xc] sm:$0xf]
        %v1382 = vunpack.c.l.b16 %v1378
        %v1383 = vunpack.c.l.b16 %v1379
        %v1384 = vpack.c.b16 %v1383, %v1382
        %v1387 = vsel %vm1134, %v1377, 0
        %1389 = vmatprep.subr.bf16.mxu0 0
        %1390 = vmatpush1.bf16.msra.mxu0 %v1384
        %1391 = vmatprep.subr.bf16.mxu0 0
        %1392 = vmatpush1.bf16.msra.mxu0 0
        %1393 = vmatprep.subr.bf16.mxu0 0
        %1394 = vmatpush1.bf16.msra.mxu0 0
        %1395 = vmatprep.subr.bf16.mxu0 0
        %1396 = vmatpush1.bf16.msra.mxu0 0
        %1397 = vmatprep.subr.bf16.mxu0 0
        %1398 = vmatpush1.bf16.msra.mxu0 0
        %1399 = vmatprep.subr.bf16.mxu0 0
        %1400 = vmatpush1.bf16.msra.mxu0 0
        %1401 = vmatprep.subr.bf16.mxu0 0
        %1402 = vmatpush1.bf16.msra.mxu0 0
        %1403 = vmatprep.subr.bf16.mxu0 0
        %1404 = vmatpush1.bf16.msra.mxu0 0
        %1405 = vmatprep.subr.bf16.mxu0 0
        %1406 = vmatpush1.bf16.msra.mxu0 0
        %1407 = vmatprep.subr.bf16.mxu0 0
        %1408 = vmatpush1.bf16.msra.mxu0 0
        %1409 = vmatprep.subr.bf16.mxu0 0
        %1410 = vmatpush1.bf16.msra.mxu0 0
        %1411 = vmatprep.subr.bf16.mxu0 0
        %1412 = vmatpush1.bf16.msra.mxu0 0
        %1413 = vmatprep.subr.bf16.mxu0 0
        %1414 = vmatpush1.bf16.msra.mxu0 0
        %1415 = vmatprep.subr.bf16.mxu0 0
        %1416 = vmatpush1.bf16.msra.mxu0 0
        %1417 = vmatprep.subr.bf16.mxu0 0
        %1418 = vmatpush1.bf16.msra.mxu0 0
        %1419 = vmatprep.subr.bf16.mxu0 0
        %1420 = vmatpush1.bf16.msra.mxu0 0
        %1421 = vmatprep.mubr.bf16.mxu0 0
        %1422 = vmatmul.mubr.bf16.gmra.mrb[0].mxu0 %v1387
        %v1423 = vpop.f32.mrb[0].mxu0
        %v1424 = vadd.f32 0.0, %v1423
        %v1425 = vpop.f32.mrb[0].mxu0
        %v1426 = vpop.f32.mrb[0].mxu0
        %v1427 = vpop.f32.mrb[0].mxu0
        %1428 = vdwg.mxu0
        %v1431 = vunpack.c.l.b16 %v1253
        %v1432 = vunpack.c.l.b16 %v1254
        %v1433 = vpack.c.b16 %v1432, %v1431
        %v1436 = vsel %vm1134, %v1252, 0
        %1438 = vmatprep.subr.bf16.mxu0 0
        %1439 = vmatpush1.bf16.msra.mxu0 %v1433
        %1440 = vmatprep.subr.bf16.mxu0 0
        %1441 = vmatpush1.bf16.msra.mxu0 0
        %1442 = vmatprep.subr.bf16.mxu0 0
        %1443 = vmatpush1.bf16.msra.mxu0 0
        %1444 = vmatprep.subr.bf16.mxu0 0
        %1445 = vmatpush1.bf16.msra.mxu0 0
        %1446 = vmatprep.subr.bf16.mxu0 0
        %1447 = vmatpush1.bf16.msra.mxu0 0
        %1448 = vmatprep.subr.bf16.mxu0 0
        %1449 = vmatpush1.bf16.msra.mxu0 0
        %1450 = vmatprep.subr.bf16.mxu0 0
        %1451 = vmatpush1.bf16.msra.mxu0 0
        %1452 = vmatprep.subr.bf16.mxu0 0
        %1453 = vmatpush1.bf16.msra.mxu0 0
        %1454 = vmatprep.subr.bf16.mxu0 0
        %1455 = vmatpush1.bf16.msra.mxu0 0
        %1456 = vmatprep.subr.bf16.mxu0 0
        %1457 = vmatpush1.bf16.msra.mxu0 0
        %1458 = vmatprep.subr.bf16.mxu0 0
        %1459 = vmatpush1.bf16.msra.mxu0 0
        %1460 = vmatprep.subr.bf16.mxu0 0
        %1461 = vmatpush1.bf16.msra.mxu0 0
        %1462 = vmatprep.subr.bf16.mxu0 0
        %1463 = vmatpush1.bf16.msra.mxu0 0
        %1464 = vmatprep.subr.bf16.mxu0 0
        %1465 = vmatpush1.bf16.msra.mxu0 0
        %1466 = vmatprep.subr.bf16.mxu0 0
        %1467 = vmatpush1.bf16.msra.mxu0 0
        %1468 = vmatprep.subr.bf16.mxu0 0
        %1469 = vmatpush1.bf16.msra.mxu0 0
        %1470 = vmatprep.mubr.bf16.mxu0 0
        %1471 = vmatmul.mubr.bf16.gmra.mrb[0].mxu0 %v1436
        %v1472 = vpop.f32.mrb[0].mxu0
        %v1473 = vadd.f32 %v1424, %v1472
        %v1474 = vpop.f32.mrb[0].mxu0
        %v1475 = vpop.f32.mrb[0].mxu0
        %v1476 = vpop.f32.mrb[0].mxu0
        %1477 = vdwg.mxu0
        %1478 = vrot.lane.b32.xlu0 %v1128, 96
        %v1479 = vpop.permute.xlu0 %1478
        %1480 = vrot.lane.b32.xlu0 %v1260, 96
        %v1481 = vpop.permute.xlu0 %1480
        %v1483 = vsel %vm1134, %v1479, 0
        %v1486 = vsel %vm1134, %v1481, 0
        %1488 = vmatprep.subr.bf16.mxu0 0
        %1489 = vmatpush1.bf16.xpose.msra.mxu0 %v1486
        %1490 = vmatprep.subr.bf16.mxu0 0
        %1491 = vmatpush1.bf16.xpose.msra.mxu0 0
        %1492 = vmatprep.subr.bf16.mxu0 0
        %1493 = vmatpush1.bf16.xpose.msra.mxu0 0
        %1494 = vmatprep.subr.bf16.mxu0 0
        %1495 = vmatpush1.bf16.xpose.msra.mxu0 0
        %1496 = vmatprep.subr.bf16.mxu0 0
        %1497 = vmatpush1.bf16.xpose.msra.mxu0 0
        %1498 = vmatprep.subr.bf16.mxu0 0
        %1499 = vmatpush1.bf16.xpose.msra.mxu0 0
        %1500 = vmatprep.subr.bf16.mxu0 0
        %1501 = vmatpush1.bf16.xpose.msra.mxu0 0
        %1502 = vmatprep.subr.bf16.mxu0 0
        %1503 = vmatpush1.bf16.xpose.msra.mxu0 0
        %1504 = vmatprep.subr.bf16.mxu0 0
        %1505 = vmatpush1.bf16.xpose.msra.mxu0 0
        %1506 = vmatprep.subr.bf16.mxu0 0
        %1507 = vmatpush1.bf16.xpose.msra.mxu0 0
        %1508 = vmatprep.subr.bf16.mxu0 0
        %1509 = vmatpush1.bf16.xpose.msra.mxu0 0
        %1510 = vmatprep.subr.bf16.mxu0 0
        %1511 = vmatpush1.bf16.xpose.msra.mxu0 0
        %1512 = vmatprep.subr.bf16.mxu0 0
        %1513 = vmatpush1.bf16.xpose.msra.mxu0 0
        %1514 = vmatprep.subr.bf16.mxu0 0
        %1515 = vmatpush1.bf16.xpose.msra.mxu0 0
        %1516 = vmatprep.subr.bf16.mxu0 0
        %1517 = vmatpush1.bf16.xpose.msra.mxu0 0
        %1518 = vmatprep.subr.bf16.mxu0 0
        %1519 = vmatpush1.bf16.xpose.msra.mxu0 0
        %1520 = vmatprep.mubr.bf16.mxu0 0
        %1521 = vmatmul.mubr.bf16.gmra.mrb[0].mxu0 %v1483
        %v1522 = vpop.f32.mrb[0].mxu0
        %v1523 = vadd.f32 0.0, %v1522
        %v1524 = vpop.f32.mrb[0].mxu0
        %v1525 = vpop.f32.mrb[0].mxu0
        %v1526 = vpop.f32.mrb[0].mxu0
        %1527 = vdwg.mxu0
        %v1528 = vmul.f32 %v1523, 0.25
        %v1529 = vadd.f32 %v1528, %v1186
        %v1530 = vsel %vm1189, %v1529, -inf
        %1531 = vmax.xlane.f32.xlu0 %v1530
        %v1532 = vpop.xlane.xlu0 %1531
        %v1533 = vsub.f32 %v1529, %v1532
        %v1534 = vmul.f32 %v1533, 1.442695
        %v1535 = vpow.pop %v1534
        %v1536 = vsel %vm1189, %v1535, 0.0
        %1537 = vadd.xlane.f32.xlu0 %v1536
        %v1538 = vpop.xlane.xlu0 %1537
        %v1539 = vrcp.pop %v1538
        %v1540 = vmul.f32 %v1538, %v1539
        %v1541 = vsub.f32 2.0, %v1540
        %v1542 = vmul.f32 %v1539, %v1541
        %v1543 = vmul.f32 %v1535, %v1542
        %v1544 = vpack.c.bf16 %v1543, %v1543
        %1545 = vrot.lane.b32.xlu0 %v1328, 96
        %v1546 = vpop.permute.xlu0 %1545
        %v1548 = vsel %vm1189, %v1544, 0
        %v1551 = vsel %vm1208, %v1546, 0
        %1553 = vmatprep.subr.bf16.mxu0 0
        %1554 = vmatpush1.bf16.msra.mxu0 %v1551
        %1555 = vmatprep.subr.bf16.mxu0 0
        %1556 = vmatpush1.bf16.msra.mxu0 0
        %1557 = vmatprep.subr.bf16.mxu0 0
        %1558 = vmatpush1.bf16.msra.mxu0 0
        %1559 = vmatprep.subr.bf16.mxu0 0
        %1560 = vmatpush1.bf16.msra.mxu0 0
        %1561 = vmatprep.subr.bf16.mxu0 0
        %1562 = vmatpush1.bf16.msra.mxu0 0
        %1563 = vmatprep.subr.bf16.mxu0 0
        %1564 = vmatpush1.bf16.msra.mxu0 0
        %1565 = vmatprep.subr.bf16.mxu0 0
        %1566 = vmatpush1.bf16.msra.mxu0 0
        %1567 = vmatprep.subr.bf16.mxu0 0
        %1568 = vmatpush1.bf16.msra.mxu0 0
        %1569 = vmatprep.subr.bf16.mxu0 0
        %1570 = vmatpush1.bf16.msra.mxu0 0
        %1571 = vmatprep.subr.bf16.mxu0 0
        %1572 = vmatpush1.bf16.msra.mxu0 0
        %1573 = vmatprep.subr.bf16.mxu0 0
        %1574 = vmatpush1.bf16.msra.mxu0 0
        %1575 = vmatprep.subr.bf16.mxu0 0
        %1576 = vmatpush1.bf16.msra.mxu0 0
        %1577 = vmatprep.subr.bf16.mxu0 0
        %1578 = vmatpush1.bf16.msra.mxu0 0
        %1579 = vmatprep.subr.bf16.mxu0 0
        %1580 = vmatpush1.bf16.msra.mxu0 0
        %1581 = vmatprep.subr.bf16.mxu0 0
        %1582 = vmatpush1.bf16.msra.mxu0 0
        %1583 = vmatprep.subr.bf16.mxu0 0
        %1584 = vmatpush1.bf16.msra.mxu0 0
        %1585 = vmatprep.mubr.bf16.mxu0 0
        %1586 = vmatmul.mubr.bf16.gmra.mrb[0].mxu0 %v1548
        %v1587 = vpop.f32.mrb[0].mxu0
        %v1588 = vadd.f32 0.0, %v1587
        %v1589 = vpop.f32.mrb[0].mxu0
        %v1590 = vpop.f32.mrb[0].mxu0
        %v1591 = vpop.f32.mrb[0].mxu0
        %1592 = vdwg.mxu0
        %v1593 = vpack.c.bf16 %v1588, %v1588
        %v1594 = vld [vmem:[#allocation12 + $0x10] sm:$0xf]
        %v1595 = vld [vmem:[#allocation12 + $0x14] sm:$0xf]
        %v1598 = vunpack.c.l.b16 %v1594
        %v1599 = vunpack.c.l.b16 %v1595
        %v1600 = vpack.c.b16 %v1599, %v1598
        %v1603 = vsel %vm1134, %v1593, 0
        %1605 = vmatprep.subr.bf16.mxu0 0
        %1606 = vmatpush1.bf16.msra.mxu0 %v1600
        %1607 = vmatprep.subr.bf16.mxu0 0
        %1608 = vmatpush1.bf16.msra.mxu0 0
        %1609 = vmatprep.subr.bf16.mxu0 0
        %1610 = vmatpush1.bf16.msra.mxu0 0
        %1611 = vmatprep.subr.bf16.mxu0 0
        %1612 = vmatpush1.bf16.msra.mxu0 0
        %1613 = vmatprep.subr.bf16.mxu0 0
        %1614 = vmatpush1.bf16.msra.mxu0 0
        %1615 = vmatprep.subr.bf16.mxu0 0
        %1616 = vmatpush1.bf16.msra.mxu0 0
        %1617 = vmatprep.subr.bf16.mxu0 0
        %1618 = vmatpush1.bf16.msra.mxu0 0
        %1619 = vmatprep.subr.bf16.mxu0 0
        %1620 = vmatpush1.bf16.msra.mxu0 0
        %1621 = vmatprep.subr.bf16.mxu0 0
        %1622 = vmatpush1.bf16.msra.mxu0 0
        %1623 = vmatprep.subr.bf16.mxu0 0
        %1624 = vmatpush1.bf16.msra.mxu0 0
        %1625 = vmatprep.subr.bf16.mxu0 0
        %1626 = vmatpush1.bf16.msra.mxu0 0
        %1627 = vmatprep.subr.bf16.mxu0 0
        %1628 = vmatpush1.bf16.msra.mxu0 0
        %1629 = vmatprep.subr.bf16.mxu0 0
        %1630 = vmatpush1.bf16.msra.mxu0 0
        %1631 = vmatprep.subr.bf16.mxu0 0
        %1632 = vmatpush1.bf16.msra.mxu0 0
        %1633 = vmatprep.subr.bf16.mxu0 0
        %1634 = vmatpush1.bf16.msra.mxu0 0
        %1635 = vmatprep.subr.bf16.mxu0 0
        %1636 = vmatpush1.bf16.msra.mxu0 0
        %1637 = vmatprep.mubr.bf16.mxu0 0
        %1638 = vmatmul.mubr.bf16.gmra.mrb[0].mxu0 %v1603
        %v1639 = vpop.f32.mrb[0].mxu0
        %v1640 = vadd.f32 0.0, %v1639
        %v1641 = vpop.f32.mrb[0].mxu0
        %v1642 = vpop.f32.mrb[0].mxu0
        %v1643 = vpop.f32.mrb[0].mxu0
        %1644 = vdwg.mxu0
        %v1645 = vadd.f32 %v1473, %v1640
        %1646 = vrot.lane.b32.xlu0 %v1128, 80
        %v1647 = vpop.permute.xlu0 %1646
        %1648 = vrot.lane.b32.xlu0 %v1260, 80
        %v1649 = vpop.permute.xlu0 %1648
        %v1651 = vsel %vm1134, %v1647, 0
        %v1654 = vsel %vm1134, %v1649, 0
        %1656 = vmatprep.subr.bf16.mxu0 0
        %1657 = vmatpush1.bf16.xpose.msra.mxu0 %v1654
        %1658 = vmatprep.subr.bf16.mxu0 0
        %1659 = vmatpush1.bf16.xpose.msra.mxu0 0
        %1660 = vmatprep.subr.bf16.mxu0 0
        %1661 = vmatpush1.bf16.xpose.msra.mxu0 0
        %1662 = vmatprep.subr.bf16.mxu0 0
        %1663 = vmatpush1.bf16.xpose.msra.mxu0 0
        %1664 = vmatprep.subr.bf16.mxu0 0
        %1665 = vmatpush1.bf16.xpose.msra.mxu0 0
        %1666 = vmatprep.subr.bf16.mxu0 0
        %1667 = vmatpush1.bf16.xpose.msra.mxu0 0
        %1668 = vmatprep.subr.bf16.mxu0 0
        %1669 = vmatpush1.bf16.xpose.msra.mxu0 0
        %1670 = vmatprep.subr.bf16.mxu0 0
        %1671 = vmatpush1.bf16.xpose.msra.mxu0 0
        %1672 = vmatprep.subr.bf16.mxu0 0
        %1673 = vmatpush1.bf16.xpose.msra.mxu0 0
        %1674 = vmatprep.subr.bf16.mxu0 0
        %1675 = vmatpush1.bf16.xpose.msra.mxu0 0
        %1676 = vmatprep.subr.bf16.mxu0 0
        %1677 = vmatpush1.bf16.xpose.msra.mxu0 0
        %1678 = vmatprep.subr.bf16.mxu0 0
        %1679 = vmatpush1.bf16.xpose.msra.mxu0 0
        %1680 = vmatprep.subr.bf16.mxu0 0
        %1681 = vmatpush1.bf16.xpose.msra.mxu0 0
        %1682 = vmatprep.subr.bf16.mxu0 0
        %1683 = vmatpush1.bf16.xpose.msra.mxu0 0
        %1684 = vmatprep.subr.bf16.mxu0 0
        %1685 = vmatpush1.bf16.xpose.msra.mxu0 0
        %1686 = vmatprep.subr.bf16.mxu0 0
        %1687 = vmatpush1.bf16.xpose.msra.mxu0 0
        %1688 = vmatprep.mubr.bf16.mxu0 0
        %1689 = vmatmul.mubr.bf16.gmra.mrb[0].mxu0 %v1651
        %v1690 = vpop.f32.mrb[0].mxu0
        %v1691 = vadd.f32 0.0, %v1690
        %v1692 = vpop.f32.mrb[0].mxu0
        %v1693 = vpop.f32.mrb[0].mxu0
        %v1694 = vpop.f32.mrb[0].mxu0
        %1695 = vdwg.mxu0
        %v1696 = vmul.f32 %v1691, 0.25
        %v1697 = vadd.f32 %v1696, %v1186
        %v1698 = vsel %vm1189, %v1697, -inf
        %1699 = vmax.xlane.f32.xlu0 %v1698
        %v1700 = vpop.xlane.xlu0 %1699
        %v1701 = vsub.f32 %v1697, %v1700
        %v1702 = vmul.f32 %v1701, 1.442695
        %v1703 = vpow.pop %v1702
        %v1704 = vsel %vm1189, %v1703, 0.0
        %1705 = vadd.xlane.f32.xlu0 %v1704
        %v1706 = vpop.xlane.xlu0 %1705
        %v1707 = vrcp.pop %v1706
        %v1708 = vmul.f32 %v1706, %v1707
        %v1709 = vsub.f32 2.0, %v1708
        %v1710 = vmul.f32 %v1707, %v1709
        %v1711 = vmul.f32 %v1703, %v1710
        %v1712 = vpack.c.bf16 %v1711, %v1711
        %1713 = vrot.lane.b32.xlu0 %v1328, 80
        %v1714 = vpop.permute.xlu0 %1713
        %v1716 = vsel %vm1189, %v1712, 0
        %v1719 = vsel %vm1208, %v1714, 0
        %1721 = vmatprep.subr.bf16.mxu0 0
        %1722 = vmatpush1.bf16.msra.mxu0 %v1719
        %1723 = vmatprep.subr.bf16.mxu0 0
        %1724 = vmatpush1.bf16.msra.mxu0 0
        %1725 = vmatprep.subr.bf16.mxu0 0
        %1726 = vmatpush1.bf16.msra.mxu0 0
        %1727 = vmatprep.subr.bf16.mxu0 0
        %1728 = vmatpush1.bf16.msra.mxu0 0
        %1729 = vmatprep.subr.bf16.mxu0 0
        %1730 = vmatpush1.bf16.msra.mxu0 0
        %1731 = vmatprep.subr.bf16.mxu0 0
        %1732 = vmatpush1.bf16.msra.mxu0 0
        %1733 = vmatprep.subr.bf16.mxu0 0
        %1734 = vmatpush1.bf16.msra.mxu0 0
        %1735 = vmatprep.subr.bf16.mxu0 0
        %1736 = vmatpush1.bf16.msra.mxu0 0
        %1737 = vmatprep.subr.bf16.mxu0 0
        %1738 = vmatpush1.bf16.msra.mxu0 0
        %1739 = vmatprep.subr.bf16.mxu0 0
        %1740 = vmatpush1.bf16.msra.mxu0 0
        %1741 = vmatprep.subr.bf16.mxu0 0
        %1742 = vmatpush1.bf16.msra.mxu0 0
        %1743 = vmatprep.subr.bf16.mxu0 0
        %1744 = vmatpush1.bf16.msra.mxu0 0
        %1745 = vmatprep.subr.bf16.mxu0 0
        %1746 = vmatpush1.bf16.msra.mxu0 0
        %1747 = vmatprep.subr.bf16.mxu0 0
        %1748 = vmatpush1.bf16.msra.mxu0 0
        %1749 = vmatprep.subr.bf16.mxu0 0
        %1750 = vmatpush1.bf16.msra.mxu0 0
        %1751 = vmatprep.subr.bf16.mxu0 0
        %1752 = vmatpush1.bf16.msra.mxu0 0
        %1753 = vmatprep.mubr.bf16.mxu0 0
        %1754 = vmatmul.mubr.bf16.gmra.mrb[0].mxu0 %v1716
        %v1755 = vpop.f32.mrb[0].mxu0
        %v1756 = vadd.f32 0.0, %v1755
        %v1757 = vpop.f32.mrb[0].mxu0
        %v1758 = vpop.f32.mrb[0].mxu0
        %v1759 = vpop.f32.mrb[0].mxu0
        %1760 = vdwg.mxu0
        %v1761 = vpack.c.bf16 %v1756, %v1756
        %v1762 = vld [vmem:[#allocation12 + $0x18] sm:$0xf]
        %v1763 = vld [vmem:[#allocation12 + $0x1c] sm:$0xf]
        %v1766 = vunpack.c.l.b16 %v1762
        %v1767 = vunpack.c.l.b16 %v1763
        %v1768 = vpack.c.b16 %v1767, %v1766
        %v1771 = vsel %vm1134, %v1761, 0
        %1773 = vmatprep.subr.bf16.mxu0 0
        %1774 = vmatpush1.bf16.msra.mxu0 %v1768
        %1775 = vmatprep.subr.bf16.mxu0 0
        %1776 = vmatpush1.bf16.msra.mxu0 0
        %1777 = vmatprep.subr.bf16.mxu0 0
        %1778 = vmatpush1.bf16.msra.mxu0 0
        %1779 = vmatprep.subr.bf16.mxu0 0
        %1780 = vmatpush1.bf16.msra.mxu0 0
        %1781 = vmatprep.subr.bf16.mxu0 0
        %1782 = vmatpush1.bf16.msra.mxu0 0
        %1783 = vmatprep.subr.bf16.mxu0 0
        %1784 = vmatpush1.bf16.msra.mxu0 0
        %1785 = vmatprep.subr.bf16.mxu0 0
        %1786 = vmatpush1.bf16.msra.mxu0 0
        %1787 = vmatprep.subr.bf16.mxu0 0
        %1788 = vmatpush1.bf16.msra.mxu0 0
        %1789 = vmatprep.subr.bf16.mxu0 0
        %1790 = vmatpush1.bf16.msra.mxu0 0
        %1791 = vmatprep.subr.bf16.mxu0 0
        %1792 = vmatpush1.bf16.msra.mxu0 0
        %1793 = vmatprep.subr.bf16.mxu0 0
        %1794 = vmatpush1.bf16.msra.mxu0 0
        %1795 = vmatprep.subr.bf16.mxu0 0
        %1796 = vmatpush1.bf16.msra.mxu0 0
        %1797 = vmatprep.subr.bf16.mxu0 0
        %1798 = vmatpush1.bf16.msra.mxu0 0
        %1799 = vmatprep.subr.bf16.mxu0 0
        %1800 = vmatpush1.bf16.msra.mxu0 0
        %1801 = vmatprep.subr.bf16.mxu0 0
        %1802 = vmatpush1.bf16.msra.mxu0 0
        %1803 = vmatprep.subr.bf16.mxu0 0
        %1804 = vmatpush1.bf16.msra.mxu0 0
        %1805 = vmatprep.mubr.bf16.mxu0 0
        %1806 = vmatmul.mubr.bf16.gmra.mrb[0].mxu0 %v1771
        %v1807 = vpop.f32.mrb[0].mxu0
        %v1808 = vadd.f32 0.0, %v1807
        %v1809 = vpop.f32.mrb[0].mxu0
        %v1810 = vpop.f32.mrb[0].mxu0
        %v1811 = vpop.f32.mrb[0].mxu0
        %1812 = vdwg.mxu0
        %v1813 = vadd.f32 %v1645, %v1808
        %1814 = vrot.lane.b32.xlu0 %v1128, 64
        %v1815 = vpop.permute.xlu0 %1814
        %1816 = vrot.lane.b32.xlu0 %v1260, 64
        %v1817 = vpop.permute.xlu0 %1816
        %v1819 = vsel %vm1134, %v1815, 0
        %v1822 = vsel %vm1134, %v1817, 0
        %1824 = vmatprep.subr.bf16.mxu0 0
        %1825 = vmatpush1.bf16.xpose.msra.mxu0 %v1822
        %1826 = vmatprep.subr.bf16.mxu0 0
        %1827 = vmatpush1.bf16.xpose.msra.mxu0 0
        %1828 = vmatprep.subr.bf16.mxu0 0
        %1829 = vmatpush1.bf16.xpose.msra.mxu0 0
        %1830 = vmatprep.subr.bf16.mxu0 0
        %1831 = vmatpush1.bf16.xpose.msra.mxu0 0
        %1832 = vmatprep.subr.bf16.mxu0 0
        %1833 = vmatpush1.bf16.xpose.msra.mxu0 0
        %1834 = vmatprep.subr.bf16.mxu0 0
        %1835 = vmatpush1.bf16.xpose.msra.mxu0 0
        %1836 = vmatprep.subr.bf16.mxu0 0
        %1837 = vmatpush1.bf16.xpose.msra.mxu0 0
        %1838 = vmatprep.subr.bf16.mxu0 0
        %1839 = vmatpush1.bf16.xpose.msra.mxu0 0
        %1840 = vmatprep.subr.bf16.mxu0 0
        %1841 = vmatpush1.bf16.xpose.msra.mxu0 0
        %1842 = vmatprep.subr.bf16.mxu0 0
        %1843 = vmatpush1.bf16.xpose.msra.mxu0 0
        %1844 = vmatprep.subr.bf16.mxu0 0
        %1845 = vmatpush1.bf16.xpose.msra.mxu0 0
        %1846 = vmatprep.subr.bf16.mxu0 0
        %1847 = vmatpush1.bf16.xpose.msra.mxu0 0
        %1848 = vmatprep.subr.bf16.mxu0 0
        %1849 = vmatpush1.bf16.xpose.msra.mxu0 0
        %1850 = vmatprep.subr.bf16.mxu0 0
        %1851 = vmatpush1.bf16.xpose.msra.mxu0 0
        %1852 = vmatprep.subr.bf16.mxu0 0
        %1853 = vmatpush1.bf16.xpose.msra.mxu0 0
        %1854 = vmatprep.subr.bf16.mxu0 0
        %1855 = vmatpush1.bf16.xpose.msra.mxu0 0
        %1856 = vmatprep.mubr.bf16.mxu0 0
        %1857 = vmatmul.mubr.bf16.gmra.mrb[0].mxu0 %v1819
        %v1858 = vpop.f32.mrb[0].mxu0
        %v1859 = vadd.f32 0.0, %v1858
        %v1860 = vpop.f32.mrb[0].mxu0
        %v1861 = vpop.f32.mrb[0].mxu0
        %v1862 = vpop.f32.mrb[0].mxu0
        %1863 = vdwg.mxu0
        %v1864 = vmul.f32 %v1859, 0.25
        %v1865 = vadd.f32 %v1864, %v1186
        %v1866 = vsel %vm1189, %v1865, -inf
        %1867 = vmax.xlane.f32.xlu0 %v1866
        %v1868 = vpop.xlane.xlu0 %1867
        %v1869 = vsub.f32 %v1865, %v1868
        %v1870 = vmul.f32 %v1869, 1.442695
        %v1871 = vpow.pop %v1870
        %v1872 = vsel %vm1189, %v1871, 0.0
        %1873 = vadd.xlane.f32.xlu0 %v1872
        %v1874 = vpop.xlane.xlu0 %1873
        %v1875 = vrcp.pop %v1874
        %v1876 = vmul.f32 %v1874, %v1875
        %v1877 = vsub.f32 2.0, %v1876
        %v1878 = vmul.f32 %v1875, %v1877
        %v1879 = vmul.f32 %v1871, %v1878
        %v1880 = vpack.c.bf16 %v1879, %v1879
        %1881 = vrot.lane.b32.xlu0 %v1328, 64
        %v1882 = vpop.permute.xlu0 %1881
        %v1884 = vsel %vm1189, %v1880, 0
        %v1887 = vsel %vm1208, %v1882, 0
        %1889 = vmatprep.subr.bf16.mxu0 0
        %1890 = vmatpush1.bf16.msra.mxu0 %v1887
        %1891 = vmatprep.subr.bf16.mxu0 0
        %1892 = vmatpush1.bf16.msra.mxu0 0
        %1893 = vmatprep.subr.bf16.mxu0 0
        %1894 = vmatpush1.bf16.msra.mxu0 0
        %1895 = vmatprep.subr.bf16.mxu0 0
        %1896 = vmatpush1.bf16.msra.mxu0 0
        %1897 = vmatprep.subr.bf16.mxu0 0
        %1898 = vmatpush1.bf16.msra.mxu0 0
        %1899 = vmatprep.subr.bf16.mxu0 0
        %1900 = vmatpush1.bf16.msra.mxu0 0
        %1901 = vmatprep.subr.bf16.mxu0 0
        %1902 = vmatpush1.bf16.msra.mxu0 0
        %1903 = vmatprep.subr.bf16.mxu0 0
        %1904 = vmatpush1.bf16.msra.mxu0 0
        %1905 = vmatprep.subr.bf16.mxu0 0
        %1906 = vmatpush1.bf16.msra.mxu0 0
        %1907 = vmatprep.subr.bf16.mxu0 0
        %1908 = vmatpush1.bf16.msra.mxu0 0
        %1909 = vmatprep.subr.bf16.mxu0 0
        %1910 = vmatpush1.bf16.msra.mxu0 0
        %1911 = vmatprep.subr.bf16.mxu0 0
        %1912 = vmatpush1.bf16.msra.mxu0 0
        %1913 = vmatprep.subr.bf16.mxu0 0
        %1914 = vmatpush1.bf16.msra.mxu0 0
        %1915 = vmatprep.subr.bf16.mxu0 0
        %1916 = vmatpush1.bf16.msra.mxu0 0
        %1917 = vmatprep.subr.bf16.mxu0 0
        %1918 = vmatpush1.bf16.msra.mxu0 0
        %1919 = vmatprep.subr.bf16.mxu0 0
        %1920 = vmatpush1.bf16.msra.mxu0 0
        %1921 = vmatprep.mubr.bf16.mxu0 0
        %1922 = vmatmul.mubr.bf16.gmra.mrb[0].mxu0 %v1884
        %v1923 = vpop.f32.mrb[0].mxu0
        %v1924 = vadd.f32 0.0, %v1923
        %v1925 = vpop.f32.mrb[0].mxu0
        %v1926 = vpop.f32.mrb[0].mxu0
        %v1927 = vpop.f32.mrb[0].mxu0
        %1928 = vdwg.mxu0
        %v1929 = vpack.c.bf16 %v1924, %v1924
        %v1930 = vld [vmem:[#allocation12 + $0x20] sm:$0xf]
        %v1931 = vld [vmem:[#allocation12 + $0x24] sm:$0xf]
        %v1934 = vunpack.c.l.b16 %v1930
        %v1935 = vunpack.c.l.b16 %v1931
        %v1936 = vpack.c.b16 %v1935, %v1934
        %v1939 = vsel %vm1134, %v1929, 0
        %1941 = vmatprep.subr.bf16.mxu0 0
        %1942 = vmatpush1.bf16.msra.mxu0 %v1936
        %1943 = vmatprep.subr.bf16.mxu0 0
        %1944 = vmatpush1.bf16.msra.mxu0 0
        %1945 = vmatprep.subr.bf16.mxu0 0
        %1946 = vmatpush1.bf16.msra.mxu0 0
        %1947 = vmatprep.subr.bf16.mxu0 0
        %1948 = vmatpush1.bf16.msra.mxu0 0
        %1949 = vmatprep.subr.bf16.mxu0 0
        %1950 = vmatpush1.bf16.msra.mxu0 0
        %1951 = vmatprep.subr.bf16.mxu0 0
        %1952 = vmatpush1.bf16.msra.mxu0 0
        %1953 = vmatprep.subr.bf16.mxu0 0
        %1954 = vmatpush1.bf16.msra.mxu0 0
        %1955 = vmatprep.subr.bf16.mxu0 0
        %1956 = vmatpush1.bf16.msra.mxu0 0
        %1957 = vmatprep.subr.bf16.mxu0 0
        %1958 = vmatpush1.bf16.msra.mxu0 0
        %1959 = vmatprep.subr.bf16.mxu0 0
        %1960 = vmatpush1.bf16.msra.mxu0 0
        %1961 = vmatprep.subr.bf16.mxu0 0
        %1962 = vmatpush1.bf16.msra.mxu0 0
        %1963 = vmatprep.subr.bf16.mxu0 0
        %1964 = vmatpush1.bf16.msra.mxu0 0
        %1965 = vmatprep.subr.bf16.mxu0 0
        %1966 = vmatpush1.bf16.msra.mxu0 0
        %1967 = vmatprep.subr.bf16.mxu0 0
        %1968 = vmatpush1.bf16.msra.mxu0 0
        %1969 = vmatprep.subr.bf16.mxu0 0
        %1970 = vmatpush1.bf16.msra.mxu0 0
        %1971 = vmatprep.subr.bf16.mxu0 0
        %1972 = vmatpush1.bf16.msra.mxu0 0
        %1973 = vmatprep.mubr.bf16.mxu0 0
        %1974 = vmatmul.mubr.bf16.gmra.mrb[0].mxu0 %v1939
        %v1975 = vpop.f32.mrb[0].mxu0
        %v1976 = vadd.f32 0.0, %v1975
        %v1977 = vpop.f32.mrb[0].mxu0
        %v1978 = vpop.f32.mrb[0].mxu0
        %v1979 = vpop.f32.mrb[0].mxu0
        %1980 = vdwg.mxu0
        %v1981 = vadd.f32 %v1813, %v1976
        %1982 = vrot.lane.b32.xlu0 %v1128, 48
        %v1983 = vpop.permute.xlu0 %1982
        %1984 = vrot.lane.b32.xlu0 %v1260, 48
        %v1985 = vpop.permute.xlu0 %1984
        %v1987 = vsel %vm1134, %v1983, 0
        %v1990 = vsel %vm1134, %v1985, 0
        %1992 = vmatprep.subr.bf16.mxu0 0
        %1993 = vmatpush1.bf16.xpose.msra.mxu0 %v1990
        %1994 = vmatprep.subr.bf16.mxu0 0
        %1995 = vmatpush1.bf16.xpose.msra.mxu0 0
        %1996 = vmatprep.subr.bf16.mxu0 0
        %1997 = vmatpush1.bf16.xpose.msra.mxu0 0
        %1998 = vmatprep.subr.bf16.mxu0 0
        %1999 = vmatpush1.bf16.xpose.msra.mxu0 0
        %2000 = vmatprep.subr.bf16.mxu0 0
        %2001 = vmatpush1.bf16.xpose.msra.mxu0 0
        %2002 = vmatprep.subr.bf16.mxu0 0
        %2003 = vmatpush1.bf16.xpose.msra.mxu0 0
        %2004 = vmatprep.subr.bf16.mxu0 0
        %2005 = vmatpush1.bf16.xpose.msra.mxu0 0
        %2006 = vmatprep.subr.bf16.mxu0 0
        %2007 = vmatpush1.bf16.xpose.msra.mxu0 0
        %2008 = vmatprep.subr.bf16.mxu0 0
        %2009 = vmatpush1.bf16.xpose.msra.mxu0 0
        %2010 = vmatprep.subr.bf16.mxu0 0
        %2011 = vmatpush1.bf16.xpose.msra.mxu0 0
        %2012 = vmatprep.subr.bf16.mxu0 0
        %2013 = vmatpush1.bf16.xpose.msra.mxu0 0
        %2014 = vmatprep.subr.bf16.mxu0 0
        %2015 = vmatpush1.bf16.xpose.msra.mxu0 0
        %2016 = vmatprep.subr.bf16.mxu0 0
        %2017 = vmatpush1.bf16.xpose.msra.mxu0 0
        %2018 = vmatprep.subr.bf16.mxu0 0
        %2019 = vmatpush1.bf16.xpose.msra.mxu0 0
        %2020 = vmatprep.subr.bf16.mxu0 0
        %2021 = vmatpush1.bf16.xpose.msra.mxu0 0
        %2022 = vmatprep.subr.bf16.mxu0 0
        %2023 = vmatpush1.bf16.xpose.msra.mxu0 0
        %2024 = vmatprep.mubr.bf16.mxu0 0
        %2025 = vmatmul.mubr.bf16.gmra.mrb[0].mxu0 %v1987
        %v2026 = vpop.f32.mrb[0].mxu0
        %v2027 = vadd.f32 0.0, %v2026
        %v2028 = vpop.f32.mrb[0].mxu0
        %v2029 = vpop.f32.mrb[0].mxu0
        %v2030 = vpop.f32.mrb[0].mxu0
        %2031 = vdwg.mxu0
        %v2032 = vmul.f32 %v2027, 0.25
        %v2033 = vadd.f32 %v2032, %v1186
        %v2034 = vsel %vm1189, %v2033, -inf
        %2035 = vmax.xlane.f32.xlu0 %v2034
        %v2036 = vpop.xlane.xlu0 %2035
        %v2037 = vsub.f32 %v2033, %v2036
        %v2038 = vmul.f32 %v2037, 1.442695
        %v2039 = vpow.pop %v2038
        %v2040 = vsel %vm1189, %v2039, 0.0
        %2041 = vadd.xlane.f32.xlu0 %v2040
        %v2042 = vpop.xlane.xlu0 %2041
        %v2043 = vrcp.pop %v2042
        %v2044 = vmul.f32 %v2042, %v2043
        %v2045 = vsub.f32 2.0, %v2044
        %v2046 = vmul.f32 %v2043, %v2045
        %v2047 = vmul.f32 %v2039, %v2046
        %v2048 = vpack.c.bf16 %v2047, %v2047
        %2049 = vrot.lane.b32.xlu0 %v1328, 48
        %v2050 = vpop.permute.xlu0 %2049
        %v2052 = vsel %vm1189, %v2048, 0
        %v2055 = vsel %vm1208, %v2050, 0
        %2057 = vmatprep.subr.bf16.mxu0 0
        %2058 = vmatpush1.bf16.msra.mxu0 %v2055
        %2059 = vmatprep.subr.bf16.mxu0 0
        %2060 = vmatpush1.bf16.msra.mxu0 0
        %2061 = vmatprep.subr.bf16.mxu0 0
        %2062 = vmatpush1.bf16.msra.mxu0 0
        %2063 = vmatprep.subr.bf16.mxu0 0
        %2064 = vmatpush1.bf16.msra.mxu0 0
        %2065 = vmatprep.subr.bf16.mxu0 0
        %2066 = vmatpush1.bf16.msra.mxu0 0
        %2067 = vmatprep.subr.bf16.mxu0 0
        %2068 = vmatpush1.bf16.msra.mxu0 0
        %2069 = vmatprep.subr.bf16.mxu0 0
        %2070 = vmatpush1.bf16.msra.mxu0 0
        %2071 = vmatprep.subr.bf16.mxu0 0
        %2072 = vmatpush1.bf16.msra.mxu0 0
        %2073 = vmatprep.subr.bf16.mxu0 0
        %2074 = vmatpush1.bf16.msra.mxu0 0
        %2075 = vmatprep.subr.bf16.mxu0 0
        %2076 = vmatpush1.bf16.msra.mxu0 0
        %2077 = vmatprep.subr.bf16.mxu0 0
        %2078 = vmatpush1.bf16.msra.mxu0 0
        %2079 = vmatprep.subr.bf16.mxu0 0
        %2080 = vmatpush1.bf16.msra.mxu0 0
        %2081 = vmatprep.subr.bf16.mxu0 0
        %2082 = vmatpush1.bf16.msra.mxu0 0
        %2083 = vmatprep.subr.bf16.mxu0 0
        %2084 = vmatpush1.bf16.msra.mxu0 0
        %2085 = vmatprep.subr.bf16.mxu0 0
        %2086 = vmatpush1.bf16.msra.mxu0 0
        %2087 = vmatprep.subr.bf16.mxu0 0
        %2088 = vmatpush1.bf16.msra.mxu0 0
        %2089 = vmatprep.mubr.bf16.mxu0 0
        %2090 = vmatmul.mubr.bf16.gmra.mrb[0].mxu0 %v2052
        %v2091 = vpop.f32.mrb[0].mxu0
        %v2092 = vadd.f32 0.0, %v2091
        %v2093 = vpop.f32.mrb[0].mxu0
        %v2094 = vpop.f32.mrb[0].mxu0
        %v2095 = vpop.f32.mrb[0].mxu0
        %2096 = vdwg.mxu0
        %v2097 = vpack.c.bf16 %v2092, %v2092
        %v2098 = vld [vmem:[#allocation12 + $0x28] sm:$0xf]
        %v2099 = vld [vmem:[#allocation12 + $0x2c] sm:$0xf]
        %v2102 = vunpack.c.l.b16 %v2098
        %v2103 = vunpack.c.l.b16 %v2099
        %v2104 = vpack.c.b16 %v2103, %v2102
        %v2107 = vsel %vm1134, %v2097, 0
        %2109 = vmatprep.subr.bf16.mxu0 0
        %2110 = vmatpush1.bf16.msra.mxu0 %v2104
        %2111 = vmatprep.subr.bf16.mxu0 0
        %2112 = vmatpush1.bf16.msra.mxu0 0
        %2113 = vmatprep.subr.bf16.mxu0 0
        %2114 = vmatpush1.bf16.msra.mxu0 0
        %2115 = vmatprep.subr.bf16.mxu0 0
        %2116 = vmatpush1.bf16.msra.mxu0 0
        %2117 = vmatprep.subr.bf16.mxu0 0
        %2118 = vmatpush1.bf16.msra.mxu0 0
        %2119 = vmatprep.subr.bf16.mxu0 0
        %2120 = vmatpush1.bf16.msra.mxu0 0
        %2121 = vmatprep.subr.bf16.mxu0 0
        %2122 = vmatpush1.bf16.msra.mxu0 0
        %2123 = vmatprep.subr.bf16.mxu0 0
        %2124 = vmatpush1.bf16.msra.mxu0 0
        %2125 = vmatprep.subr.bf16.mxu0 0
        %2126 = vmatpush1.bf16.msra.mxu0 0
        %2127 = vmatprep.subr.bf16.mxu0 0
        %2128 = vmatpush1.bf16.msra.mxu0 0
        %2129 = vmatprep.subr.bf16.mxu0 0
        %2130 = vmatpush1.bf16.msra.mxu0 0
        %2131 = vmatprep.subr.bf16.mxu0 0
        %2132 = vmatpush1.bf16.msra.mxu0 0
        %2133 = vmatprep.subr.bf16.mxu0 0
        %2134 = vmatpush1.bf16.msra.mxu0 0
        %2135 = vmatprep.subr.bf16.mxu0 0
        %2136 = vmatpush1.bf16.msra.mxu0 0
        %2137 = vmatprep.subr.bf16.mxu0 0
        %2138 = vmatpush1.bf16.msra.mxu0 0
        %2139 = vmatprep.subr.bf16.mxu0 0
        %2140 = vmatpush1.bf16.msra.mxu0 0
        %2141 = vmatprep.mubr.bf16.mxu0 0
        %2142 = vmatmul.mubr.bf16.gmra.mrb[0].mxu0 %v2107
        %v2143 = vpop.f32.mrb[0].mxu0
        %v2144 = vadd.f32 0.0, %v2143
        %v2145 = vpop.f32.mrb[0].mxu0
        %v2146 = vpop.f32.mrb[0].mxu0
        %v2147 = vpop.f32.mrb[0].mxu0
        %2148 = vdwg.mxu0
        %v2149 = vadd.f32 %v1981, %v2144
        %2150 = vrot.lane.b32.xlu0 %v1128, 32
        %v2151 = vpop.permute.xlu0 %2150
        %2152 = vrot.lane.b32.xlu0 %v1260, 32
        %v2153 = vpop.permute.xlu0 %2152
        %v2155 = vsel %vm1134, %v2151, 0
        %v2158 = vsel %vm1134, %v2153, 0
        %2160 = vmatprep.subr.bf16.mxu0 0
        %2161 = vmatpush1.bf16.xpose.msra.mxu0 %v2158
        %2162 = vmatprep.subr.bf16.mxu0 0
        %2163 = vmatpush1.bf16.xpose.msra.mxu0 0
        %2164 = vmatprep.subr.bf16.mxu0 0
        %2165 = vmatpush1.bf16.xpose.msra.mxu0 0
        %2166 = vmatprep.subr.bf16.mxu0 0
        %2167 = vmatpush1.bf16.xpose.msra.mxu0 0
        %2168 = vmatprep.subr.bf16.mxu0 0
        %2169 = vmatpush1.bf16.xpose.msra.mxu0 0
        %2170 = vmatprep.subr.bf16.mxu0 0
        %2171 = vmatpush1.bf16.xpose.msra.mxu0 0
        %2172 = vmatprep.subr.bf16.mxu0 0
        %2173 = vmatpush1.bf16.xpose.msra.mxu0 0
        %2174 = vmatprep.subr.bf16.mxu0 0
        %2175 = vmatpush1.bf16.xpose.msra.mxu0 0
        %2176 = vmatprep.subr.bf16.mxu0 0
        %2177 = vmatpush1.bf16.xpose.msra.mxu0 0
        %2178 = vmatprep.subr.bf16.mxu0 0
        %2179 = vmatpush1.bf16.xpose.msra.mxu0 0
        %2180 = vmatprep.subr.bf16.mxu0 0
        %2181 = vmatpush1.bf16.xpose.msra.mxu0 0
        %2182 = vmatprep.subr.bf16.mxu0 0
        %2183 = vmatpush1.bf16.xpose.msra.mxu0 0
        %2184 = vmatprep.subr.bf16.mxu0 0
        %2185 = vmatpush1.bf16.xpose.msra.mxu0 0
        %2186 = vmatprep.subr.bf16.mxu0 0
        %2187 = vmatpush1.bf16.xpose.msra.mxu0 0
        %2188 = vmatprep.subr.bf16.mxu0 0
        %2189 = vmatpush1.bf16.xpose.msra.mxu0 0
        %2190 = vmatprep.subr.bf16.mxu0 0
        %2191 = vmatpush1.bf16.xpose.msra.mxu0 0
        %2192 = vmatprep.mubr.bf16.mxu0 0
        %2193 = vmatmul.mubr.bf16.gmra.mrb[0].mxu0 %v2155
        %v2194 = vpop.f32.mrb[0].mxu0
        %v2195 = vadd.f32 0.0, %v2194
        %v2196 = vpop.f32.mrb[0].mxu0
        %v2197 = vpop.f32.mrb[0].mxu0
        %v2198 = vpop.f32.mrb[0].mxu0
        %2199 = vdwg.mxu0
        %v2200 = vmul.f32 %v2195, 0.25
        %v2201 = vadd.f32 %v2200, %v1186
        %v2202 = vsel %vm1189, %v2201, -inf
        %2203 = vmax.xlane.f32.xlu0 %v2202
        %v2204 = vpop.xlane.xlu0 %2203
        %v2205 = vsub.f32 %v2201, %v2204
        %v2206 = vmul.f32 %v2205, 1.442695
        %v2207 = vpow.pop %v2206
        %v2208 = vsel %vm1189, %v2207, 0.0
        %2209 = vadd.xlane.f32.xlu0 %v2208
        %v2210 = vpop.xlane.xlu0 %2209
        %v2211 = vrcp.pop %v2210
        %v2212 = vmul.f32 %v2210, %v2211
        %v2213 = vsub.f32 2.0, %v2212
        %v2214 = vmul.f32 %v2211, %v2213
        %v2215 = vmul.f32 %v2207, %v2214
        %v2216 = vpack.c.bf16 %v2215, %v2215
        %2217 = vrot.lane.b32.xlu0 %v1328, 32
        %v2218 = vpop.permute.xlu0 %2217
        %v2220 = vsel %vm1189, %v2216, 0
        %v2223 = vsel %vm1208, %v2218, 0
        %2225 = vmatprep.subr.bf16.mxu0 0
        %2226 = vmatpush1.bf16.msra.mxu0 %v2223
        %2227 = vmatprep.subr.bf16.mxu0 0
        %2228 = vmatpush1.bf16.msra.mxu0 0
        %2229 = vmatprep.subr.bf16.mxu0 0
        %2230 = vmatpush1.bf16.msra.mxu0 0
        %2231 = vmatprep.subr.bf16.mxu0 0
        %2232 = vmatpush1.bf16.msra.mxu0 0
        %2233 = vmatprep.subr.bf16.mxu0 0
        %2234 = vmatpush1.bf16.msra.mxu0 0
        %2235 = vmatprep.subr.bf16.mxu0 0
        %2236 = vmatpush1.bf16.msra.mxu0 0
        %2237 = vmatprep.subr.bf16.mxu0 0
        %2238 = vmatpush1.bf16.msra.mxu0 0
        %2239 = vmatprep.subr.bf16.mxu0 0
        %2240 = vmatpush1.bf16.msra.mxu0 0
        %2241 = vmatprep.subr.bf16.mxu0 0
        %2242 = vmatpush1.bf16.msra.mxu0 0
        %2243 = vmatprep.subr.bf16.mxu0 0
        %2244 = vmatpush1.bf16.msra.mxu0 0
        %2245 = vmatprep.subr.bf16.mxu0 0
        %2246 = vmatpush1.bf16.msra.mxu0 0
        %2247 = vmatprep.subr.bf16.mxu0 0
        %2248 = vmatpush1.bf16.msra.mxu0 0
        %2249 = vmatprep.subr.bf16.mxu0 0
        %2250 = vmatpush1.bf16.msra.mxu0 0
        %2251 = vmatprep.subr.bf16.mxu0 0
        %2252 = vmatpush1.bf16.msra.mxu0 0
        %2253 = vmatprep.subr.bf16.mxu0 0
        %2254 = vmatpush1.bf16.msra.mxu0 0
        %2255 = vmatprep.subr.bf16.mxu0 0
        %2256 = vmatpush1.bf16.msra.mxu0 0
        %2257 = vmatprep.mubr.bf16.mxu0 0
        %2258 = vmatmul.mubr.bf16.gmra.mrb[0].mxu0 %v2220
        %v2259 = vpop.f32.mrb[0].mxu0
        %v2260 = vadd.f32 0.0, %v2259
        %v2261 = vpop.f32.mrb[0].mxu0
        %v2262 = vpop.f32.mrb[0].mxu0
        %v2263 = vpop.f32.mrb[0].mxu0
        %2264 = vdwg.mxu0
        %v2265 = vpack.c.bf16 %v2260, %v2260
        %v2266 = vld [vmem:[#allocation12 + $0x30] sm:$0xf]
        %v2267 = vld [vmem:[#allocation12 + $0x34] sm:$0xf]
        %v2270 = vunpack.c.l.b16 %v2266
        %v2271 = vunpack.c.l.b16 %v2267
        %v2272 = vpack.c.b16 %v2271, %v2270
        %v2275 = vsel %vm1134, %v2265, 0
        %2277 = vmatprep.subr.bf16.mxu0 0
        %2278 = vmatpush1.bf16.msra.mxu0 %v2272
        %2279 = vmatprep.subr.bf16.mxu0 0
        %2280 = vmatpush1.bf16.msra.mxu0 0
        %2281 = vmatprep.subr.bf16.mxu0 0
        %2282 = vmatpush1.bf16.msra.mxu0 0
        %2283 = vmatprep.subr.bf16.mxu0 0
        %2284 = vmatpush1.bf16.msra.mxu0 0
        %2285 = vmatprep.subr.bf16.mxu0 0
        %2286 = vmatpush1.bf16.msra.mxu0 0
        %2287 = vmatprep.subr.bf16.mxu0 0
        %2288 = vmatpush1.bf16.msra.mxu0 0
        %2289 = vmatprep.subr.bf16.mxu0 0
        %2290 = vmatpush1.bf16.msra.mxu0 0
        %2291 = vmatprep.subr.bf16.mxu0 0
        %2292 = vmatpush1.bf16.msra.mxu0 0
        %2293 = vmatprep.subr.bf16.mxu0 0
        %2294 = vmatpush1.bf16.msra.mxu0 0
        %2295 = vmatprep.subr.bf16.mxu0 0
        %2296 = vmatpush1.bf16.msra.mxu0 0
        %2297 = vmatprep.subr.bf16.mxu0 0
        %2298 = vmatpush1.bf16.msra.mxu0 0
        %2299 = vmatprep.subr.bf16.mxu0 0
        %2300 = vmatpush1.bf16.msra.mxu0 0
        %2301 = vmatprep.subr.bf16.mxu0 0
        %2302 = vmatpush1.bf16.msra.mxu0 0
        %2303 = vmatprep.subr.bf16.mxu0 0
        %2304 = vmatpush1.bf16.msra.mxu0 0
        %2305 = vmatprep.subr.bf16.mxu0 0
        %2306 = vmatpush1.bf16.msra.mxu0 0
        %2307 = vmatprep.subr.bf16.mxu0 0
        %2308 = vmatpush1.bf16.msra.mxu0 0
        %2309 = vmatprep.mubr.bf16.mxu0 0
        %2310 = vmatmul.mubr.bf16.gmra.mrb[0].mxu0 %v2275
        %v2311 = vpop.f32.mrb[0].mxu0
        %v2312 = vadd.f32 0.0, %v2311
        %v2313 = vpop.f32.mrb[0].mxu0
        %v2314 = vpop.f32.mrb[0].mxu0
        %v2315 = vpop.f32.mrb[0].mxu0
        %2316 = vdwg.mxu0
        %v2317 = vadd.f32 %v2149, %v2312
        %2318 = vrot.lane.b32.xlu0 %v1128, 16
        %v2319 = vpop.permute.xlu0 %2318
        %2320 = vrot.lane.b32.xlu0 %v1260, 16
        %v2321 = vpop.permute.xlu0 %2320
        %v2323 = vsel %vm1134, %v2319, 0
        %v2326 = vsel %vm1134, %v2321, 0
        %2328 = vmatprep.subr.bf16.mxu0 0
        %2329 = vmatpush1.bf16.xpose.msra.mxu0 %v2326
        %2330 = vmatprep.subr.bf16.mxu0 0
        %2331 = vmatpush1.bf16.xpose.msra.mxu0 0
        %2332 = vmatprep.subr.bf16.mxu0 0
        %2333 = vmatpush1.bf16.xpose.msra.mxu0 0
        %2334 = vmatprep.subr.bf16.mxu0 0
        %2335 = vmatpush1.bf16.xpose.msra.mxu0 0
        %2336 = vmatprep.subr.bf16.mxu0 0
        %2337 = vmatpush1.bf16.xpose.msra.mxu0 0
        %2338 = vmatprep.subr.bf16.mxu0 0
        %2339 = vmatpush1.bf16.xpose.msra.mxu0 0
        %2340 = vmatprep.subr.bf16.mxu0 0
        %2341 = vmatpush1.bf16.xpose.msra.mxu0 0
        %2342 = vmatprep.subr.bf16.mxu0 0
        %2343 = vmatpush1.bf16.xpose.msra.mxu0 0
        %2344 = vmatprep.subr.bf16.mxu0 0
        %2345 = vmatpush1.bf16.xpose.msra.mxu0 0
        %2346 = vmatprep.subr.bf16.mxu0 0
        %2347 = vmatpush1.bf16.xpose.msra.mxu0 0
        %2348 = vmatprep.subr.bf16.mxu0 0
        %2349 = vmatpush1.bf16.xpose.msra.mxu0 0
        %2350 = vmatprep.subr.bf16.mxu0 0
        %2351 = vmatpush1.bf16.xpose.msra.mxu0 0
        %2352 = vmatprep.subr.bf16.mxu0 0
        %2353 = vmatpush1.bf16.xpose.msra.mxu0 0
        %2354 = vmatprep.subr.bf16.mxu0 0
        %2355 = vmatpush1.bf16.xpose.msra.mxu0 0
        %2356 = vmatprep.subr.bf16.mxu0 0
        %2357 = vmatpush1.bf16.xpose.msra.mxu0 0
        %2358 = vmatprep.subr.bf16.mxu0 0
        %2359 = vmatpush1.bf16.xpose.msra.mxu0 0
        %2360 = vmatprep.mubr.bf16.mxu0 0
        %2361 = vmatmul.mubr.bf16.gmra.mrb[0].mxu0 %v2323
        %v2362 = vpop.f32.mrb[0].mxu0
        %v2363 = vadd.f32 0.0, %v2362
        %v2364 = vpop.f32.mrb[0].mxu0
        %v2365 = vpop.f32.mrb[0].mxu0
        %v2366 = vpop.f32.mrb[0].mxu0
        %2367 = vdwg.mxu0
        %v2368 = vmul.f32 %v2363, 0.25
        %v2369 = vadd.f32 %v2368, %v1186
        %v2370 = vsel %vm1189, %v2369, -inf
        %2371 = vmax.xlane.f32.xlu0 %v2370
        %v2372 = vpop.xlane.xlu0 %2371
        %v2373 = vsub.f32 %v2369, %v2372
        %v2374 = vmul.f32 %v2373, 1.442695
        %v2375 = vpow.pop %v2374
        %v2376 = vsel %vm1189, %v2375, 0.0
        %2377 = vadd.xlane.f32.xlu0 %v2376
        %v2378 = vpop.xlane.xlu0 %2377
        %v2379 = vrcp.pop %v2378
        %v2380 = vmul.f32 %v2378, %v2379
        %v2381 = vsub.f32 2.0, %v2380
        %v2382 = vmul.f32 %v2379, %v2381
        %v2383 = vmul.f32 %v2375, %v2382
        %v2384 = vpack.c.bf16 %v2383, %v2383
        %2385 = vrot.lane.b32.xlu0 %v1328, 16
        %v2386 = vpop.permute.xlu0 %2385
        %v2388 = vsel %vm1189, %v2384, 0
        %v2391 = vsel %vm1208, %v2386, 0
        %2393 = vmatprep.subr.bf16.mxu0 0
        %2394 = vmatpush1.bf16.msra.mxu0 %v2391
        %2395 = vmatprep.subr.bf16.mxu0 0
        %2396 = vmatpush1.bf16.msra.mxu0 0
        %2397 = vmatprep.subr.bf16.mxu0 0
        %2398 = vmatpush1.bf16.msra.mxu0 0
        %2399 = vmatprep.subr.bf16.mxu0 0
        %2400 = vmatpush1.bf16.msra.mxu0 0
        %2401 = vmatprep.subr.bf16.mxu0 0
        %2402 = vmatpush1.bf16.msra.mxu0 0
        %2403 = vmatprep.subr.bf16.mxu0 0
        %2404 = vmatpush1.bf16.msra.mxu0 0
        %2405 = vmatprep.subr.bf16.mxu0 0
        %2406 = vmatpush1.bf16.msra.mxu0 0
        %2407 = vmatprep.subr.bf16.mxu0 0
        %2408 = vmatpush1.bf16.msra.mxu0 0
        %2409 = vmatprep.subr.bf16.mxu0 0
        %2410 = vmatpush1.bf16.msra.mxu0 0
        %2411 = vmatprep.subr.bf16.mxu0 0
        %2412 = vmatpush1.bf16.msra.mxu0 0
        %2413 = vmatprep.subr.bf16.mxu0 0
        %2414 = vmatpush1.bf16.msra.mxu0 0
        %2415 = vmatprep.subr.bf16.mxu0 0
        %2416 = vmatpush1.bf16.msra.mxu0 0
        %2417 = vmatprep.subr.bf16.mxu0 0
        %2418 = vmatpush1.bf16.msra.mxu0 0
        %2419 = vmatprep.subr.bf16.mxu0 0
        %2420 = vmatpush1.bf16.msra.mxu0 0
        %2421 = vmatprep.subr.bf16.mxu0 0
        %2422 = vmatpush1.bf16.msra.mxu0 0
        %2423 = vmatprep.subr.bf16.mxu0 0
        %2424 = vmatpush1.bf16.msra.mxu0 0
        %2425 = vmatprep.mubr.bf16.mxu0 0
        %2426 = vmatmul.mubr.bf16.gmra.mrb[0].mxu0 %v2388
        %v2427 = vpop.f32.mrb[0].mxu0
        %v2428 = vadd.f32 0.0, %v2427
        %v2429 = vpop.f32.mrb[0].mxu0
        %v2430 = vpop.f32.mrb[0].mxu0
        %v2431 = vpop.f32.mrb[0].mxu0
        %2432 = vdwg.mxu0
        %v2433 = vpack.c.bf16 %v2428, %v2428
        %v2434 = vld [vmem:[#allocation12 + $0x38] sm:$0xf]
        %v2435 = vld [vmem:[#allocation12 + $0x3c] sm:$0xf]
        %v2438 = vunpack.c.l.b16 %v2434
        %v2439 = vunpack.c.l.b16 %v2435
        %v2440 = vpack.c.b16 %v2439, %v2438
        %v2443 = vsel %vm1134, %v2433, 0
        %2445 = vmatprep.subr.bf16.mxu0 0
        %2446 = vmatpush1.bf16.msra.mxu0 %v2440
        %2447 = vmatprep.subr.bf16.mxu0 0
        %2448 = vmatpush1.bf16.msra.mxu0 0
        %2449 = vmatprep.subr.bf16.mxu0 0
        %2450 = vmatpush1.bf16.msra.mxu0 0
        %2451 = vmatprep.subr.bf16.mxu0 0
        %2452 = vmatpush1.bf16.msra.mxu0 0
        %2453 = vmatprep.subr.bf16.mxu0 0
        %2454 = vmatpush1.bf16.msra.mxu0 0
        %2455 = vmatprep.subr.bf16.mxu0 0
        %2456 = vmatpush1.bf16.msra.mxu0 0
        %2457 = vmatprep.subr.bf16.mxu0 0
        %2458 = vmatpush1.bf16.msra.mxu0 0
        %2459 = vmatprep.subr.bf16.mxu0 0
        %2460 = vmatpush1.bf16.msra.mxu0 0
        %2461 = vmatprep.subr.bf16.mxu0 0
        %2462 = vmatpush1.bf16.msra.mxu0 0
        %2463 = vmatprep.subr.bf16.mxu0 0
        %2464 = vmatpush1.bf16.msra.mxu0 0
        %2465 = vmatprep.subr.bf16.mxu0 0
        %2466 = vmatpush1.bf16.msra.mxu0 0
        %2467 = vmatprep.subr.bf16.mxu0 0
        %2468 = vmatpush1.bf16.msra.mxu0 0
        %2469 = vmatprep.subr.bf16.mxu0 0
        %2470 = vmatpush1.bf16.msra.mxu0 0
        %2471 = vmatprep.subr.bf16.mxu0 0
        %2472 = vmatpush1.bf16.msra.mxu0 0
        %2473 = vmatprep.subr.bf16.mxu0 0
        %2474 = vmatpush1.bf16.msra.mxu0 0
        %2475 = vmatprep.subr.bf16.mxu0 0
        %2476 = vmatpush1.bf16.msra.mxu0 0
        %2477 = vmatprep.mubr.bf16.mxu0 0
        %2478 = vmatmul.mubr.bf16.gmra.mrb[0].mxu0 %v2443
        %v2479 = vpop.f32.mrb[0].mxu0
        %v2480 = vadd.f32 0.0, %v2479
        %v2481 = vpop.f32.mrb[0].mxu0
        %v2482 = vpop.f32.mrb[0].mxu0
        %v2483 = vpop.f32.mrb[0].mxu0
        %2484 = vdwg.mxu0
        %v2485 = vadd.f32 %v2317, %v2480
        %v2486 = vadd.f32 %v979, %v2485
        %v2487 = vld [vmem:[%s9] sm:$0x1]
        %v2489 = vlaneseq
        %v2490 = vshrl.u32 %v2489, 7
        %v2491 = vsub.s32 0, %v2490
        %v2492 = vrot.slane %v2487, %v2491
        %v2494 = vadd.f32 %v2486, %v2492
        %v2495 = vld [vmem:[%s12] sm:$0x1]
        %v2496 = vld [vmem:[%s13] sm:$0x1]
        %2497 = vadd.xlane.f32.xlu0 %v2494
        %v2498 = vpop.xlane.xlu0 %2497
        %v2499 = vmul.f32 %v2498, %v982
        %v2500 = vsub.f32 %v2494, %v2499
        %v2501 = vmul.f32 %v2500, %v2500
        %2502 = vadd.xlane.f32.xlu0 %v2501
        %v2503 = vpop.xlane.xlu0 %2502
        %v2504 = vmul.f32 %v2503, 0.007874016
        %v2506 = vlaneseq
        %v2507 = vshrl.u32 %v2506, 7
        %v2508 = vsub.s32 0, %v2507
        %v2509 = vrot.slane %v2495, %v2508
        %v2511 = vmul.f32 %v2509, %v2500
        %v2512 = vrsqrt.pop %v2504
        %v2513 = vmul.f32 %v2504, %v2512
        %vm2514 = vcmp.eq.f32.partialorder %v2504, inf
        %v2515 = vsel %vm2514, %v2504, %v2513
        %vm2516 = vcmp.eq.f32.partialorder %v2504, 0.0
        %v2517 = vand.u32 %v2504, 2147483648
        %v2518 = vsel %vm2516, %v2517, %v2515
        %v2519 = vadd.f32 %v2518, 1e-06
        %v2520 = vrcp.pop %v2519
        %v2521 = vmul.f32 %v2519, %v2520
        %v2522 = vsub.f32 2.0, %v2521
        %v2523 = vmul.f32 %v2520, %v2522
        %v2524 = vmul.f32 %v2511, %v2523
        %v2526 = vlaneseq
        %v2527 = vshrl.u32 %v2526, 7
        %v2528 = vsub.s32 0, %v2527
        %v2529 = vrot.slane %v2496, %v2528
        %v2531 = vadd.f32 %v2524, %v2529
        %v2532 = vpack.c.bf16 %v2531, %v2531
        %v2533 = vld [vmem:[#allocation13] sm:$0xff]
        %v2534 = vld [vmem:[#allocation13 + $0x8] sm:$0xff]
        %v2535 = vld [vmem:[#allocation13 + $0x10] sm:$0xff]
        %v2536 = vld [vmem:[#allocation13 + $0x18] sm:$0xff]
        %v2537 = vld [vmem:[#allocation13 + $0x20] sm:$0xff]
        %v2538 = vld [vmem:[#allocation13 + $0x28] sm:$0xff]
        %v2539 = vld [vmem:[#allocation13 + $0x30] sm:$0xff]
        %v2540 = vld [vmem:[#allocation13 + $0x38] sm:$0xff]
        %v2541 = vld [vmem:[#allocation13 + $0x40] sm:$0xff]
        %v2542 = vld [vmem:[#allocation13 + $0x48] sm:$0xff]
        %v2543 = vld [vmem:[#allocation13 + $0x50] sm:$0xff]
        %v2544 = vld [vmem:[#allocation13 + $0x58] sm:$0xff]
        %v2545 = vld [vmem:[#allocation13 + $0x60] sm:$0xff]
        %v2546 = vld [vmem:[#allocation13 + $0x68] sm:$0xff]
        %v2547 = vld [vmem:[#allocation13 + $0x70] sm:$0xff]
        %v2548 = vld [vmem:[#allocation13 + $0x78] sm:$0xff]
        %v2549 = vld [vmem:[%s15] sm:$0x3]
        %v2551 = vlaneseq
        %v2552 = vshrl.u32 %v2551, 7
        %v2553 = vsub.s32 0, %v2552
        %v2554 = vrot.slane %v2549, %v2553
        %v2555 = vlaneseq
        %v2556 = vshrl.u32 %v2555, 7
        %v2557 = vsub.s32 1, %v2556
        %v2558 = vrot.slane %v2549, %v2557
        %v2577 = vunpack.c.l.b16 %v2533
        %v2578 = vunpack.c.h.b16 %v2533
        %v2579 = vunpack.c.l.b16 %v2534
        %v2580 = vunpack.c.h.b16 %v2534
        %v2581 = vunpack.c.l.b16 %v2535
        %v2582 = vunpack.c.h.b16 %v2535
        %v2583 = vunpack.c.l.b16 %v2536
        %v2584 = vunpack.c.h.b16 %v2536
        %v2585 = vunpack.c.l.b16 %v2537
        %v2586 = vunpack.c.h.b16 %v2537
        %v2587 = vunpack.c.l.b16 %v2538
        %v2588 = vunpack.c.h.b16 %v2538
        %v2589 = vunpack.c.l.b16 %v2539
        %v2590 = vunpack.c.h.b16 %v2539
        %v2591 = vunpack.c.l.b16 %v2540
        %v2592 = vunpack.c.h.b16 %v2540
        %v2593 = vunpack.c.l.b16 %v2541
        %v2594 = vunpack.c.h.b16 %v2541
        %v2595 = vunpack.c.l.b16 %v2542
        %v2596 = vunpack.c.h.b16 %v2542
        %v2597 = vunpack.c.l.b16 %v2543
        %v2598 = vunpack.c.h.b16 %v2543
        %v2599 = vunpack.c.l.b16 %v2544
        %v2600 = vunpack.c.h.b16 %v2544
        %v2601 = vunpack.c.l.b16 %v2545
        %v2602 = vunpack.c.h.b16 %v2545
        %v2603 = vunpack.c.l.b16 %v2546
        %v2604 = vunpack.c.h.b16 %v2546
        %v2605 = vunpack.c.l.b16 %v2547
        %v2606 = vunpack.c.h.b16 %v2547
        %v2607 = vunpack.c.l.b16 %v2548
        %v2608 = vunpack.c.h.b16 %v2548
        %v2609 = vpack.c.b16 %v2579, %v2577
        %v2610 = vpack.c.b16 %v2580, %v2578
        %v2611 = vpack.c.b16 %v2583, %v2581
        %v2612 = vpack.c.b16 %v2584, %v2582
        %v2613 = vpack.c.b16 %v2587, %v2585
        %v2614 = vpack.c.b16 %v2588, %v2586
        %v2615 = vpack.c.b16 %v2591, %v2589
        %v2616 = vpack.c.b16 %v2592, %v2590
        %v2617 = vpack.c.b16 %v2595, %v2593
        %v2618 = vpack.c.b16 %v2596, %v2594
        %v2619 = vpack.c.b16 %v2599, %v2597
        %v2620 = vpack.c.b16 %v2600, %v2598
        %v2621 = vpack.c.b16 %v2603, %v2601
        %v2622 = vpack.c.b16 %v2604, %v2602
        %v2623 = vpack.c.b16 %v2607, %v2605
        %v2624 = vpack.c.b16 %v2608, %v2606
        %2641 = vmatprep.subr.bf16.mxu0 %v2610
        %2642 = vmatpush1.bf16.msra.mxu0 %v2609
        %2643 = vmatprep.subr.bf16.mxu0 %v2612
        %2644 = vmatpush1.bf16.msra.mxu0 %v2611
        %2645 = vmatprep.subr.bf16.mxu0 %v2614
        %2646 = vmatpush1.bf16.msra.mxu0 %v2613
        %2647 = vmatprep.subr.bf16.mxu0 %v2616
        %2648 = vmatpush1.bf16.msra.mxu0 %v2615
        %2649 = vmatprep.subr.bf16.mxu0 %v2618
        %2650 = vmatpush1.bf16.msra.mxu0 %v2617
        %2651 = vmatprep.subr.bf16.mxu0 %v2620
        %2652 = vmatpush1.bf16.msra.mxu0 %v2619
        %2653 = vmatprep.subr.bf16.mxu0 %v2622
        %2654 = vmatpush1.bf16.msra.mxu0 %v2621
        %2655 = vmatprep.subr.bf16.mxu0 %v2624
        %2656 = vmatpush1.bf16.msra.mxu0 %v2623
        %2657 = vmatprep.subr.bf16.mxu0 0
        %2658 = vmatpush1.bf16.msra.mxu0 0
        %2659 = vmatprep.subr.bf16.mxu0 0
        %2660 = vmatpush1.bf16.msra.mxu0 0
        %2661 = vmatprep.subr.bf16.mxu0 0
        %2662 = vmatpush1.bf16.msra.mxu0 0
        %2663 = vmatprep.subr.bf16.mxu0 0
        %2664 = vmatpush1.bf16.msra.mxu0 0
        %2665 = vmatprep.subr.bf16.mxu0 0
        %2666 = vmatpush1.bf16.msra.mxu0 0
        %2667 = vmatprep.subr.bf16.mxu0 0
        %2668 = vmatpush1.bf16.msra.mxu0 0
        %2669 = vmatprep.subr.bf16.mxu0 0
        %2670 = vmatpush1.bf16.msra.mxu0 0
        %2671 = vmatprep.subr.bf16.mxu0 0
        %2672 = vmatpush1.bf16.msra.mxu0 0
        %2673 = vmatprep.mubr.bf16.mxu0 0
        %2674 = vmatmul.mubr.bf16.gmra.mrb[0].mxu0 %v2532
        %v2675 = vpop.f32.mrb[0].mxu0
        %v2676 = vadd.f32 %v2554, %v2675
        %v2677 = vpop.f32.mrb[0].mxu0
        %v2678 = vadd.f32 %v2558, %v2677
        %v2679 = vpop.f32.mrb[0].mxu0
        %v2680 = vpop.f32.mrb[0].mxu0
        %2681 = vdwg.mxu0
        %v2682 = vmax.f32 %v2676, 0.0
        %v2683 = vmax.f32 %v2678, 0.0
        %v2684 = vpack.c.bf16 %v2682, %v2682
        %v2685 = vpack.c.bf16 %v2683, %v2683
        %v2686 = vld [vmem:[#allocation15] sm:$0xf]
        %v2687 = vld [vmem:[#allocation15 + $0x4] sm:$0xf]
        %v2688 = vld [vmem:[#allocation15 + $0x8] sm:$0xf]
        %v2689 = vld [vmem:[#allocation15 + $0xc] sm:$0xf]
        %v2690 = vld [vmem:[#allocation15 + $0x10] sm:$0xf]
        %v2691 = vld [vmem:[#allocation15 + $0x14] sm:$0xf]
        %v2692 = vld [vmem:[#allocation15 + $0x18] sm:$0xf]
        %v2693 = vld [vmem:[#allocation15 + $0x1c] sm:$0xf]
        %v2694 = vld [vmem:[#allocation15 + $0x20] sm:$0xf]
        %v2695 = vld [vmem:[#allocation15 + $0x24] sm:$0xf]
        %v2696 = vld [vmem:[#allocation15 + $0x28] sm:$0xf]
        %v2697 = vld [vmem:[#allocation15 + $0x2c] sm:$0xf]
        %v2698 = vld [vmem:[#allocation15 + $0x30] sm:$0xf]
        %v2699 = vld [vmem:[#allocation15 + $0x34] sm:$0xf]
        %v2700 = vld [vmem:[#allocation15 + $0x38] sm:$0xf]
        %v2701 = vld [vmem:[#allocation15 + $0x3c] sm:$0xf]
        %v2702 = vld [vmem:[#allocation15 + $0x40] sm:$0xf]
        %v2703 = vld [vmem:[#allocation15 + $0x44] sm:$0xf]
        %v2704 = vld [vmem:[#allocation15 + $0x48] sm:$0xf]
        %v2705 = vld [vmem:[#allocation15 + $0x4c] sm:$0xf]
        %v2706 = vld [vmem:[#allocation15 + $0x50] sm:$0xf]
        %v2707 = vld [vmem:[#allocation15 + $0x54] sm:$0xf]
        %v2708 = vld [vmem:[#allocation15 + $0x58] sm:$0xf]
        %v2709 = vld [vmem:[#allocation15 + $0x5c] sm:$0xf]
        %v2710 = vld [vmem:[#allocation15 + $0x60] sm:$0xf]
        %v2711 = vld [vmem:[#allocation15 + $0x64] sm:$0xf]
        %v2712 = vld [vmem:[#allocation15 + $0x68] sm:$0xf]
        %v2713 = vld [vmem:[#allocation15 + $0x6c] sm:$0xf]
        %v2714 = vld [vmem:[#allocation15 + $0x70] sm:$0xf]
        %v2715 = vld [vmem:[#allocation15 + $0x74] sm:$0xf]
        %v2716 = vld [vmem:[#allocation15 + $0x78] sm:$0xf]
        %v2717 = vld [vmem:[#allocation15 + $0x7c] sm:$0xf]
        %v2718 = vld [vmem:[%s17] sm:$0x1]
        %v2720 = vlaneseq
        %v2721 = vshrl.u32 %v2720, 7
        %v2722 = vsub.s32 0, %v2721
        %v2723 = vrot.slane %v2718, %v2722
        %v2757 = vunpack.c.l.b16 %v2686
        %v2758 = vunpack.c.l.b16 %v2687
        %v2759 = vunpack.c.l.b16 %v2688
        %v2760 = vunpack.c.l.b16 %v2689
        %v2761 = vunpack.c.l.b16 %v2690
        %v2762 = vunpack.c.l.b16 %v2691
        %v2763 = vunpack.c.l.b16 %v2692
        %v2764 = vunpack.c.l.b16 %v2693
        %v2765 = vunpack.c.l.b16 %v2694
        %v2766 = vunpack.c.l.b16 %v2695
        %v2767 = vunpack.c.l.b16 %v2696
        %v2768 = vunpack.c.l.b16 %v2697
        %v2769 = vunpack.c.l.b16 %v2698
        %v2770 = vunpack.c.l.b16 %v2699
        %v2771 = vunpack.c.l.b16 %v2700
        %v2772 = vunpack.c.l.b16 %v2701
        %v2773 = vunpack.c.l.b16 %v2702
        %v2774 = vunpack.c.l.b16 %v2703
        %v2775 = vunpack.c.l.b16 %v2704
        %v2776 = vunpack.c.l.b16 %v2705
        %v2777 = vunpack.c.l.b16 %v2706
        %v2778 = vunpack.c.l.b16 %v2707
        %v2779 = vunpack.c.l.b16 %v2708
        %v2780 = vunpack.c.l.b16 %v2709
        %v2781 = vunpack.c.l.b16 %v2710
        %v2782 = vunpack.c.l.b16 %v2711
        %v2783 = vunpack.c.l.b16 %v2712
        %v2784 = vunpack.c.l.b16 %v2713
        %v2785 = vunpack.c.l.b16 %v2714
        %v2786 = vunpack.c.l.b16 %v2715
        %v2787 = vunpack.c.l.b16 %v2716
        %v2788 = vunpack.c.l.b16 %v2717
        %v2789 = vpack.c.b16 %v2758, %v2757
        %v2790 = vpack.c.b16 %v2760, %v2759
        %v2791 = vpack.c.b16 %v2762, %v2761
        %v2792 = vpack.c.b16 %v2764, %v2763
        %v2793 = vpack.c.b16 %v2766, %v2765
        %v2794 = vpack.c.b16 %v2768, %v2767
        %v2795 = vpack.c.b16 %v2770, %v2769
        %v2796 = vpack.c.b16 %v2772, %v2771
        %v2797 = vpack.c.b16 %v2774, %v2773
        %v2798 = vpack.c.b16 %v2776, %v2775
        %v2799 = vpack.c.b16 %v2778, %v2777
        %v2800 = vpack.c.b16 %v2780, %v2779
        %v2801 = vpack.c.b16 %v2782, %v2781
        %v2802 = vpack.c.b16 %v2784, %v2783
        %v2803 = vpack.c.b16 %v2786, %v2785
        %v2804 = vpack.c.b16 %v2788, %v2787
        %2821 = vmatprep.subr.bf16.mxu0 0
        %2822 = vmatpush1.bf16.msra.mxu0 %v2789
        %2823 = vmatprep.subr.bf16.mxu0 0
        %2824 = vmatpush1.bf16.msra.mxu0 %v2790
        %2825 = vmatprep.subr.bf16.mxu0 0
        %2826 = vmatpush1.bf16.msra.mxu0 %v2791
        %2827 = vmatprep.subr.bf16.mxu0 0
        %2828 = vmatpush1.bf16.msra.mxu0 %v2792
        %2829 = vmatprep.subr.bf16.mxu0 0
        %2830 = vmatpush1.bf16.msra.mxu0 %v2793
        %2831 = vmatprep.subr.bf16.mxu0 0
        %2832 = vmatpush1.bf16.msra.mxu0 %v2794
        %2833 = vmatprep.subr.bf16.mxu0 0
        %2834 = vmatpush1.bf16.msra.mxu0 %v2795
        %2835 = vmatprep.subr.bf16.mxu0 0
        %2836 = vmatpush1.bf16.msra.mxu0 %v2796
        %2837 = vmatprep.subr.bf16.mxu0 0
        %2838 = vmatpush1.bf16.msra.mxu0 %v2797
        %2839 = vmatprep.subr.bf16.mxu0 0
        %2840 = vmatpush1.bf16.msra.mxu0 %v2798
        %2841 = vmatprep.subr.bf16.mxu0 0
        %2842 = vmatpush1.bf16.msra.mxu0 %v2799
        %2843 = vmatprep.subr.bf16.mxu0 0
        %2844 = vmatpush1.bf16.msra.mxu0 %v2800
        %2845 = vmatprep.subr.bf16.mxu0 0
        %2846 = vmatpush1.bf16.msra.mxu0 %v2801
        %2847 = vmatprep.subr.bf16.mxu0 0
        %2848 = vmatpush1.bf16.msra.mxu0 %v2802
        %2849 = vmatprep.subr.bf16.mxu0 0
        %2850 = vmatpush1.bf16.msra.mxu0 %v2803
        %2851 = vmatprep.subr.bf16.mxu0 0
        %2852 = vmatpush1.bf16.msra.mxu0 %v2804
        %2853 = vmatprep.mubr.bf16.mxu0 %v2685
        %2854 = vmatmul.mubr.bf16.gmra.mrb[0].mxu0 %v2684
        %v2855 = vpop.f32.mrb[0].mxu0
        %v2856 = vadd.f32 %v2723, %v2855
        %v2857 = vpop.f32.mrb[0].mxu0
        %v2858 = vpop.f32.mrb[0].mxu0
        %v2859 = vpop.f32.mrb[0].mxu0
        %2860 = vdwg.mxu0
        %v2861 = vadd.f32 %v2494, %v2856
        %2862 = vst [vmem:[%s702] sm:$0xff] %v2861
        %s2863 = sand.u32 %s448, 1
        %s2864 = scalar_lea.sflag [#allocation6], %s2863
        %s2865 = sand.u32 %s448, 1
        %s2866 = smul.addr %s2865, 8
        %s2867 = scalar_lea.vmem [#allocation16], %s2866
        // Predicated region
        $region125: #{tpu_custom_call.1} parent=91 // pred_check
          %p2868 = pneg %p458
        $region126: #{tpu_custom_call.1} parent=91 // pred_check_branch
          %2870 = sbr.rel (%p2868) target = $region128
        $region127: #{tpu_custom_call.1} parent=91 // pred_region
          %s2872 = ssub.s32 128, 128
          %2873 = vsyncadd %s2864, %s2872
          %s2874 = sadd.s32 %s43, %s42
          %s2875 = smul.addr %s2874, 128
          %s2876 = scalar_lea.hbm %s18, %s2875
          %s2878 = sshll.u32 %s2867, 4
          %s2879 = int_to_ptr.vmem [resolvable:$true] %s2878
          %2881 = dma.vmem_to_hbm [thread:$0]  %s2879, 128, %s2876, %s2864
        $region128: #{tpu_custom_call.1} parent=91 // pred_fallthru
          _
      $region92: #{tpu_custom_call.1} parent=5 // pred_fallthru
        _
      %p2882 = scmp.le.s32.totalorder 2, %s33
      // Predicated region
      $region129: #{tpu_custom_call.1} parent=5 // pred_check
        %p2883 = pneg %p2882
      $region130: #{tpu_custom_call.1} parent=5 // pred_check_branch
        %2885 = sbr.rel (%p2883) target = $region132
      $region131: #{tpu_custom_call.1} parent=5 // pred_region
        %s2886 = ssub.s32 %s33, 2
        // Predicated region
        $region133: #{tpu_custom_call.1} parent=131 // pred_check
          %p2887 = pneg %p464
        $region134: #{tpu_custom_call.1} parent=131 // pred_check_branch
          %2889 = sbr.rel (%p2887) target = $region136
        $region135: #{tpu_custom_call.1} parent=131 // pred_region
          %s2890 = sand.u32 %s449, 1
          %s2891 = scalar_lea.sflag [#allocation6], %s2890
          %s2892 = sand.u32 %s449, 1
          %s2893 = smul.addr %s2892, 8
          %s2894 = scalar_lea.vmem [#allocation16], %s2893
          %2895 = dma.done %s2891, 128
        $region136: #{tpu_custom_call.1} parent=131 // pred_fallthru
          _
      $region132: #{tpu_custom_call.1} parent=5 // pred_fallthru
        _
    $region6: #{tpu_custom_call.1} parent=1 // loop_footer
      %s37 = sadd.s32 1, %s33
    $region7: #{tpu_custom_call.1} parent=1 // loop_footer_branch
      %32 = sbr.rel target = $region3
    $region8: #{tpu_custom_call.1} parent=1 // loop_exit
      _
    %2896 = vsyncpa [#allocation5], 1
    %s2897 = scalar_lea.sflag [#allocation5], 1
    %2898 = vsyncpa %s2897, 1
    %2899 = vsyncpa [#allocation8], 1
    %2900 = vsyncpa [#allocation11], 1
    %2901 = vsyncpa [#allocation14], 1
    %2902 = vsyncpa [#allocation6], 1
    %s2903 = scalar_lea.sflag [#allocation6], 1
    %2904 = vsyncpa %s2903, 1

</llo_original>
